<compile_context>
chip_gen: v7x
topology: tpu7x:2x2x1
jax: 0.10.0
libtpu: 0.0.40
codegen_flags: <defaults>
</compile_context>

<pallas_src>
import jax
import jax.numpy as jnp
from jax import lax
from jax.experimental import pallas as pl
from jax.experimental.pallas import tpu as pltpu


# ---------------------------------------------------------------------------
# Fused Pallas kernel (one sample per grid step)
# ---------------------------------------------------------------------------
def _resnet_block_kernel(x_ref, w1_ref, t1_ref, w2_ref, t2_ref, o_ref,
                         pad_ref, cols_ref, acc_ref):
    """pad -> conv3x3 -> (+shift) -> ReLU -> pad -> conv3x3 -> (+shift) -> +x.

    x_ref : (1, H, W, C) f32   -- conv input AND f32 residual
    w*_ref: (9, C, C)    bf16  -- per-tap weights (dy*3+dx), BN scale pre-folded
    t*_ref: (1, C)       f32   -- folded BN shift
    o_ref : (1, H, W, C) f32
    pad_ref : (H+2, W+2, C) f32 scratch -- reflect-padded field (reused for x and h1)
    cols_ref: ((H+2)*W, C) bf16 scratch -- one width-shifted tap view (MXU LHS)
    acc_ref : (H*W, C)    f32 scratch  -- matmul accumulator
    """
    _, h, w, c = o_ref.shape

    def reflect_pad_into(interior):
        # interior: (h, w, c) f32 value.  Fills the whole (h+2, w+2, c) padded field.
        pad_ref[1:h + 1, 1:w + 1, :] = interior
        pad_ref[0:1, 1:w + 1, :] = interior[1:2]                    # top    <- row 1
        pad_ref[h + 1:h + 2, 1:w + 1, :] = interior[h - 2:h - 1]    # bottom <- row h-2
        pad_ref[:, 0:1, :] = pad_ref[:, 2:3, :]                     # left   <- col 1
        pad_ref[:, w + 1:w + 2, :] = pad_ref[:, w - 1:w, :]         # right  <- col w-2

    def conv3x3(w_ref):
        # 3x3 conv as 9 MXU matmuls accumulated into the f32 VMEM scratch.
        acc_ref[...] = jnp.zeros_like(acc_ref)
        for dx in range(3):                                   # static width-tap loop
            # One width-shifted view of the padded field, cast to bf16 for the MXU.
            cols_ref[...] = pad_ref[:, dx:dx + w, :].astype(
                jnp.bfloat16).reshape(cols_ref.shape)
            for dy in range(3):                               # static row-tap loop
                # dy*w offsets are multiples of 8 (W % 8 == 0) -> aligned slices.
                acc_ref[...] += jnp.dot(
                    cols_ref[dy * w:dy * w + h * w, :],
                    w_ref[dy * 3 + dx],
                    preferred_element_type=jnp.float32)

    # ---- stage 1: reflect-pad -> conv (scale folded into weights) -> +shift -> ReLU
    reflect_pad_into(x_ref[0])
    conv3x3(w1_ref)
    h1 = jnp.maximum(acc_ref[...] + t1_ref[...], 0.0)         # (H*W, C) f32

    # ---- stage 2: reflect-pad (same scratch) -> conv -> +shift -> residual add (f32)
    reflect_pad_into(h1.reshape(h, w, c))
    conv3x3(w2_ref)
    o_ref[0] = (x_ref[0]
                + (acc_ref[...] + t2_ref[...]).reshape(h, w, c)).astype(o_ref.dtype)


# ---------------------------------------------------------------------------
# pallas_call wrapper
# ---------------------------------------------------------------------------
def _resnet_block_call(x_nhwc, w1f, t1, w2f, t2, *, vmem_limit_bytes=32 * 1024 * 1024):
    n, h, w, c = x_nhwc.shape
    hp, wp = h + 2, w + 2

    return pl.pallas_call(
        _resnet_block_kernel,
        out_shape=jax.ShapeDtypeStruct((n, h, w, c), jnp.float32),
        grid_spec=pltpu.PrefetchScalarGridSpec(
            num_scalar_prefetch=0,
            grid=(n,),
            in_specs=[
                pl.BlockSpec((1, h, w, c), lambda b: (b, 0, 0, 0)),  # x (conv in + residual)
                pl.BlockSpec((9, c, c), lambda b: (0, 0, 0)),        # w1 (resident)
                pl.BlockSpec((1, c), lambda b: (0, 0)),              # shift 1
                pl.BlockSpec((9, c, c), lambda b: (0, 0, 0)),        # w2 (resident)
                pl.BlockSpec((1, c), lambda b: (0, 0)),              # shift 2
            ],
            out_specs=pl.BlockSpec((1, h, w, c), lambda b: (b, 0, 0, 0)),
            scratch_shapes=[
                pltpu.VMEM((hp, wp, c), jnp.float32),    # reflect-padded field (x, then h1)
                pltpu.VMEM((hp * w, c), jnp.bfloat16),   # width-tap columns (MXU LHS)
                pltpu.VMEM((h * w, c), jnp.float32),     # f32 accumulator
            ],
        ),
        compiler_params=pltpu.CompilerParams(
            dimension_semantics=("parallel",),           # batch axis -> megacore / 2 TCs
            vmem_limit_bytes=vmem_limit_bytes,
        ),
    )(x_nhwc, w1f, t1, w2f, t2)


def _fold_scale_into_weights(w_hwio, scale):
    """(3,3,Cin,Cout) f32 weights * per-Cout folded BN scale (in f32), then bf16.

    Tap flattening order matches the kernel: tap index = dy*3 + dx.
    """
    cin, cout = w_hwio.shape[2], w_hwio.shape[3]
    wf = w_hwio * scale.reshape(1, 1, 1, cout)           # f32 multiply BEFORE bf16 cast
    return wf.reshape(9, cin, cout).astype(jnp.bfloat16)


def resnet_block_forward(x_nchw, params):
    """ResnetBlock forward: x (N, C, H, W) f32 -> (N, C, H, W) f32."""
    w1, s1, t1, w2, s2, t2 = params
    # TODO(synk): hoist these two transposes to the model boundary when blocks are chained.
    x_nhwc = jnp.transpose(x_nchw, (0, 2, 3, 1))          # channels-last (lane-dense C)
    w1f = _fold_scale_into_weights(w1, s1)
    w2f = _fold_scale_into_weights(w2, s2)
    out = _resnet_block_call(x_nhwc, w1f, t1, w2f, t2)
    return jnp.transpose(out, (0, 3, 1, 2))


# ---------------------------------------------------------------------------
# Parameters & pure-JAX reference
# ---------------------------------------------------------------------------
def init_params(key, dim):
    """Synthetic ResnetBlock parameters; eval-mode BatchNorm folded to scale/shift.

    Conv weights are stored tap-major as (kh, kw, C_in, C_out).
    """
    keys = jax.random.split(key, 10)
    w1 = 0.05 * jax.random.normal(keys[0], (3, 3, dim, dim), jnp.float32)
    w2 = 0.05 * jax.random.normal(keys[1], (3, 3, dim, dim), jnp.float32)

    def folded_bn(kg, kb, km, kv):
        gamma = 1.0 + 0.1 * jax.random.normal(kg, (dim,), jnp.float32)
        beta = 0.1 * jax.random.normal(kb, (dim,), jnp.float32)
        mean = 0.1 * jax.random.normal(km, (dim,), jnp.float32)
        var = 0.5 + jax.random.uniform(kv, (dim,), jnp.float32)
        eps = 1e-5
        scale = gamma * lax.rsqrt(var + eps)
        shift = beta - mean * scale
        return scale.reshape(1, dim), shift.reshape(1, dim)

    s1, t1 = folded_bn(keys[2], keys[3], keys[4], keys[5])
    s2, t2 = folded_bn(keys[6], keys[7], keys[8], keys[9])
    return (w1, s1, t1, w2, s2, t2)


def reference_forward(x_nchw, params):
    """Pure-JAX reference with matching numerics (bf16 MXU operands, f32 everywhere else)."""
    w1, s1, t1, w2, s2, t2 = params
    x = jnp.transpose(x_nchw, (0, 2, 3, 1))               # NHWC

    def conv_bn(a, w, s, t):
        wf = (w * s.reshape(1, 1, 1, -1)).astype(jnp.bfloat16)   # same fold as the kernel
        ap = jnp.pad(a.astype(jnp.bfloat16), ((0, 0), (1, 1), (1, 1), (0, 0)),
                     mode="reflect")
        y = lax.conv_general_dilated(
            ap, wf, window_strides=(1, 1), padding="VALID",
            dimension_numbers=("NHWC", "HWIO", "NHWC"),
            preferred_element_type=jnp.float32)
        return y + t.reshape(1, 1, 1, -1)

    h1 = jnp.maximum(conv_bn(x, w1, s1, t1), 0.0)
    h2 = conv_bn(h1, w2, s2, t2)
    return jnp.transpose(x + h2, (0, 3, 1, 2))


# ---------------------------------------------------------------------------
# Demo / self-check
# ---------------------------------------------------------------------------
if __name__ == "__main__":
    key = jax.random.PRNGKey(0)
    kx, kp = jax.random.split(key)

    # Small-but-representative ResnetBlock shapes: batch=2, dim=128, 16x16 feature map.
    N, C, H, W = 2, 128, 16, 16
    x = jax.random.normal(kx, (N, C, H, W), jnp.float32)
    params = init_params(kp, C)

    fwd = jax.jit(resnet_block_forward)
    out = jax.block_until_ready(fwd(x, params))

    ref = reference_forward(x, params)
    assert out.shape == (N, C, H, W)
    max_err = jnp.max(jnp.abs(out - ref))
    assert jnp.allclose(out, ref, atol=2e-2, rtol=2e-2), (
        f"mismatch vs reference (max abs err {max_err})")

    print("KERNEL_OK")
</pallas_src>

<mosaic_0001>
module attributes {stable_mosaic.version = 11 : i64} {
  func.func @_resnet_block_kernel(%arg0: i32, %arg1: memref<1x16x16x128xf32, #tpu.memory_space<vmem>>, %arg2: memref<9x128x128xbf16, #tpu.memory_space<vmem>>, %arg3: memref<1x128xf32, #tpu.memory_space<vmem>>, %arg4: memref<9x128x128xbf16, #tpu.memory_space<vmem>>, %arg5: memref<1x128xf32, #tpu.memory_space<vmem>>, %arg6: memref<1x16x16x128xf32, #tpu.memory_space<vmem>>, %arg7: memref<18x18x128xf32, #tpu.memory_space<vmem>>, %arg8: memref<288x128xbf16, #tpu.memory_space<vmem>>, %arg9: memref<256x128xf32, #tpu.memory_space<vmem>>) attributes {dimension_semantics = [#tpu.dimension_semantics<parallel>], iteration_bounds = array<i64: 2>, scalar_prefetch = 0 : i64, scratch_operands = 3 : i64, tpu.core_type = #tpu.core_type<tc>, window_params = [{transform_indices = @transform_0, window_bounds = array<i64: 1, 16, 16, 128>}, {pipeline_mode = #tpu.pipeline_mode<synchronous>, transform_indices = @transform_1, window_bounds = array<i64: 9, 128, 128>}, {pipeline_mode = #tpu.pipeline_mode<synchronous>, transform_indices = @transform_2, window_bounds = array<i64: 1, 128>}, {pipeline_mode = #tpu.pipeline_mode<synchronous>, transform_indices = @transform_3, window_bounds = array<i64: 9, 128, 128>}, {pipeline_mode = #tpu.pipeline_mode<synchronous>, transform_indices = @transform_4, window_bounds = array<i64: 1, 128>}, {transform_indices = @transform_5, window_bounds = array<i64: 1, 16, 16, 128>}]} {
    %c0 = arith.constant 0 : index
    %c0_0 = arith.constant 0 : index
    %c0_1 = arith.constant 0 : index
    %c0_2 = arith.constant 0 : index
    %0 = vector.load %arg1[%c0, %c0_0, %c0_1, %c0_2] : memref<1x16x16x128xf32, #tpu.memory_space<vmem>>, vector<1x16x16x128xf32>
    %1 = vector.shape_cast %0 : vector<1x16x16x128xf32> to vector<16x16x128xf32>
    %c1 = arith.constant 1 : index
    %c1_3 = arith.constant 1 : index
    %c0_4 = arith.constant 0 : index
    %2 = vector.load %arg7[%c1, %c1_3, %c0_4] : memref<18x18x128xf32, #tpu.memory_space<vmem>>, vector<16x16x128xf32>
    tpu.vector_store %arg7[%c1, %c1_3, %c0_4], %1 {strides = array<i32>} : memref<18x18x128xf32, #tpu.memory_space<vmem>>, vector<16x16x128xf32>,
    %3 = vector.extract_strided_slice %1 {offsets = [1, 0, 0], sizes = [1, 16, 128], strides = [1, 1, 1]} : vector<16x16x128xf32> to vector<1x16x128xf32>
    %c0_5 = arith.constant 0 : index
    %c1_6 = arith.constant 1 : index
    %c0_7 = arith.constant 0 : index
    %4 = vector.load %arg7[%c0_5, %c1_6, %c0_7] : memref<18x18x128xf32, #tpu.memory_space<vmem>>, vector<1x16x128xf32>
    tpu.vector_store %arg7[%c0_5, %c1_6, %c0_7], %3 {strides = array<i32>} : memref<18x18x128xf32, #tpu.memory_space<vmem>>, vector<1x16x128xf32>,
    %5 = vector.extract_strided_slice %1 {offsets = [14, 0, 0], sizes = [1, 16, 128], strides = [1, 1, 1]} : vector<16x16x128xf32> to vector<1x16x128xf32>
    %c17 = arith.constant 17 : index
    %c1_8 = arith.constant 1 : index
    %c0_9 = arith.constant 0 : index
    %6 = vector.load %arg7[%c17, %c1_8, %c0_9] : memref<18x18x128xf32, #tpu.memory_space<vmem>>, vector<1x16x128xf32>
    tpu.vector_store %arg7[%c17, %c1_8, %c0_9], %5 {strides = array<i32>} : memref<18x18x128xf32, #tpu.memory_space<vmem>>, vector<1x16x128xf32>,
    %c0_10 = arith.constant 0 : index
    %c2 = arith.constant 2 : index
    %c0_11 = arith.constant 0 : index
    %7 = vector.load %arg7[%c0_10, %c2, %c0_11] : memref<18x18x128xf32, #tpu.memory_space<vmem>>, vector<18x1x128xf32>
    %c0_12 = arith.constant 0 : index
    %c0_13 = arith.constant 0 : index
    %c0_14 = arith.constant 0 : index
    %8 = vector.load %arg7[%c0_12, %c0_13, %c0_14] : memref<18x18x128xf32, #tpu.memory_space<vmem>>, vector<18x1x128xf32>
    tpu.vector_store %arg7[%c0_12, %c0_13, %c0_14], %7 {strides = array<i32>} : memref<18x18x128xf32, #tpu.memory_space<vmem>>, vector<18x1x128xf32>,
    %c0_15 = arith.constant 0 : index
    %c15 = arith.constant 15 : index
    %c0_16 = arith.constant 0 : index
    %9 = vector.load %arg7[%c0_15, %c15, %c0_16] : memref<18x18x128xf32, #tpu.memory_space<vmem>>, vector<18x1x128xf32>
    %c0_17 = arith.constant 0 : index
    %c17_18 = arith.constant 17 : index
    %c0_19 = arith.constant 0 : index
    %10 = vector.load %arg7[%c0_17, %c17_18, %c0_19] : memref<18x18x128xf32, #tpu.memory_space<vmem>>, vector<18x1x128xf32>
    tpu.vector_store %arg7[%c0_17, %c17_18, %c0_19], %9 {strides = array<i32>} : memref<18x18x128xf32, #tpu.memory_space<vmem>>, vector<18x1x128xf32>,
    %cst = arith.constant 0.000000e+00 : f32
    %11 = vector.broadcast %cst : f32 to vector<256x128xf32>
    %c0_20 = arith.constant 0 : index
    %c0_21 = arith.constant 0 : index
    %12 = vector.load %arg9[%c0_20, %c0_21] : memref<256x128xf32, #tpu.memory_space<vmem>>, vector<256x128xf32>
    tpu.vector_store %arg9[%c0_20, %c0_21], %11 {strides = array<i32>} : memref<256x128xf32, #tpu.memory_space<vmem>>, vector<256x128xf32>,
    %c0_22 = arith.constant 0 : index
    %c0_23 = arith.constant 0 : index
    %c0_24 = arith.constant 0 : index
    %13 = vector.load %arg7[%c0_22, %c0_23, %c0_24] : memref<18x18x128xf32, #tpu.memory_space<vmem>>, vector<18x16x128xf32>
    %14 = arith.truncf %13 : vector<18x16x128xf32> to vector<18x16x128xbf16>
    %15 = vector.shape_cast %14 : vector<18x16x128xbf16> to vector<288x128xbf16>
    %c0_25 = arith.constant 0 : index
    %c0_26 = arith.constant 0 : index
    %16 = vector.load %arg8[%c0_25, %c0_26] : memref<288x128xbf16, #tpu.memory_space<vmem>>, vector<288x128xbf16>
    tpu.vector_store %arg8[%c0_25, %c0_26], %15 {strides = array<i32>} : memref<288x128xbf16, #tpu.memory_space<vmem>>, vector<288x128xbf16>,
    %c0_27 = arith.constant 0 : index
    %c0_28 = arith.constant 0 : index
    %17 = vector.load %arg9[%c0_27, %c0_28] : memref<256x128xf32, #tpu.memory_space<vmem>>, vector<256x128xf32>
    %c0_29 = arith.constant 0 : index
    %c0_30 = arith.constant 0 : index
    %18 = vector.load %arg8[%c0_29, %c0_30] : memref<288x128xbf16, #tpu.memory_space<vmem>>, vector<256x128xbf16>
    %c0_31 = arith.constant 0 : index
    %c0_32 = arith.constant 0 : index
    %c0_33 = arith.constant 0 : index
    %19 = vector.load %arg2[%c0_31, %c0_32, %c0_33] : memref<9x128x128xbf16, #tpu.memory_space<vmem>>, vector<1x128x128xbf16>
    %20 = vector.shape_cast %19 : vector<1x128x128xbf16> to vector<128x128xbf16>
    %cst_34 = arith.constant dense<0.000000e+00> : vector<256x128xf32>
    %21 = tpu.matmul %18, %20, %cst_34 {dimension_numbers = #tpu.dot_dimension_numbers<[1], [0], [0], [1], [0, 0, 1, 1], [], []>} : vector<256x128xbf16>, vector<128x128xbf16>, vector<256x128xf32> -> vector<256x128xf32>
    %22 = arith.addf %17, %21 : vector<256x128xf32>
    %c0_35 = arith.constant 0 : index
    %c0_36 = arith.constant 0 : index
    %23 = vector.load %arg9[%c0_35, %c0_36] : memref<256x128xf32, #tpu.memory_space<vmem>>, vector<256x128xf32>
    tpu.vector_store %arg9[%c0_35, %c0_36], %22 {strides = array<i32>} : memref<256x128xf32, #tpu.memory_space<vmem>>, vector<256x128xf32>,
    %c0_37 = arith.constant 0 : index
    %c0_38 = arith.constant 0 : index
    %24 = vector.load %arg9[%c0_37, %c0_38] : memref<256x128xf32, #tpu.memory_space<vmem>>, vector<256x128xf32>
    %c16 = arith.constant 16 : index
    %c0_39 = arith.constant 0 : index
    %25 = vector.load %arg8[%c16, %c0_39] : memref<288x128xbf16, #tpu.memory_space<vmem>>, vector<256x128xbf16>
    %c3 = arith.constant 3 : index
    %c0_40 = arith.constant 0 : index
    %c0_41 = arith.constant 0 : index
    %26 = vector.load %arg2[%c3, %c0_40, %c0_41] : memref<9x128x128xbf16, #tpu.memory_space<vmem>>, vector<1x128x128xbf16>
    %27 = vector.shape_cast %26 : vector<1x128x128xbf16> to vector<128x128xbf16>
    %cst_42 = arith.constant dense<0.000000e+00> : vector<256x128xf32>
    %28 = tpu.matmul %25, %27, %cst_42 {dimension_numbers = #tpu.dot_dimension_numbers<[1], [0], [0], [1], [0, 0, 1, 1], [], []>} : vector<256x128xbf16>, vector<128x128xbf16>, vector<256x128xf32> -> vector<256x128xf32>
    %29 = arith.addf %24, %28 : vector<256x128xf32>
    %c0_43 = arith.constant 0 : index
    %c0_44 = arith.constant 0 : index
    %30 = vector.load %arg9[%c0_43, %c0_44] : memref<256x128xf32, #tpu.memory_space<vmem>>, vector<256x128xf32>
    tpu.vector_store %arg9[%c0_43, %c0_44], %29 {strides = array<i32>} : memref<256x128xf32, #tpu.memory_space<vmem>>, vector<256x128xf32>,
    %c0_45 = arith.constant 0 : index
    %c0_46 = arith.constant 0 : index
    %31 = vector.load %arg9[%c0_45, %c0_46] : memref<256x128xf32, #tpu.memory_space<vmem>>, vector<256x128xf32>
    %c32 = arith.constant 32 : index
    %c0_47 = arith.constant 0 : index
    %32 = vector.load %arg8[%c32, %c0_47] : memref<288x128xbf16, #tpu.memory_space<vmem>>, vector<256x128xbf16>
    %c6 = arith.constant 6 : index
    %c0_48 = arith.constant 0 : index
    %c0_49 = arith.constant 0 : index
    %33 = vector.load %arg2[%c6, %c0_48, %c0_49] : memref<9x128x128xbf16, #tpu.memory_space<vmem>>, vector<1x128x128xbf16>
    %34 = vector.shape_cast %33 : vector<1x128x128xbf16> to vector<128x128xbf16>
    %cst_50 = arith.constant dense<0.000000e+00> : vector<256x128xf32>
    %35 = tpu.matmul %32, %34, %cst_50 {dimension_numbers = #tpu.dot_dimension_numbers<[1], [0], [0], [1], [0, 0, 1, 1], [], []>} : vector<256x128xbf16>, vector<128x128xbf16>, vector<256x128xf32> -> vector<256x128xf32>
    %36 = arith.addf %31, %35 : vector<256x128xf32>
    %c0_51 = arith.constant 0 : index
    %c0_52 = arith.constant 0 : index
    %37 = vector.load %arg9[%c0_51, %c0_52] : memref<256x128xf32, #tpu.memory_space<vmem>>, vector<256x128xf32>
    tpu.vector_store %arg9[%c0_51, %c0_52], %36 {strides = array<i32>} : memref<256x128xf32, #tpu.memory_space<vmem>>, vector<256x128xf32>,
    %c0_53 = arith.constant 0 : index
    %c1_54 = arith.constant 1 : index
    %c0_55 = arith.constant 0 : index
    %38 = vector.load %arg7[%c0_53, %c1_54, %c0_55] : memref<18x18x128xf32, #tpu.memory_space<vmem>>, vector<18x16x128xf32>
    %39 = arith.truncf %38 : vector<18x16x128xf32> to vector<18x16x128xbf16>
    %40 = vector.shape_cast %39 : vector<18x16x128xbf16> to vector<288x128xbf16>
    %c0_56 = arith.constant 0 : index
    %c0_57 = arith.constant 0 : index
    %41 = vector.load %arg8[%c0_56, %c0_57] : memref<288x128xbf16, #tpu.memory_space<vmem>>, vector<288x128xbf16>
    tpu.vector_store %arg8[%c0_56, %c0_57], %40 {strides = array<i32>} : memref<288x128xbf16, #tpu.memory_space<vmem>>, vector<288x128xbf16>,
    %c0_58 = arith.constant 0 : index
    %c0_59 = arith.constant 0 : index
    %42 = vector.load %arg9[%c0_58, %c0_59] : memref<256x128xf32, #tpu.memory_space<vmem>>, vector<256x128xf32>
    %c0_60 = arith.constant 0 : index
    %c0_61 = arith.constant 0 : index
    %43 = vector.load %arg8[%c0_60, %c0_61] : memref<288x128xbf16, #tpu.memory_space<vmem>>, vector<256x128xbf16>
    %c1_62 = arith.constant 1 : index
    %c0_63 = arith.constant 0 : index
    %c0_64 = arith.constant 0 : index
    %44 = vector.load %arg2[%c1_62, %c0_63, %c0_64] : memref<9x128x128xbf16, #tpu.memory_space<vmem>>, vector<1x128x128xbf16>
    %45 = vector.shape_cast %44 : vector<1x128x128xbf16> to vector<128x128xbf16>
    %cst_65 = arith.constant dense<0.000000e+00> : vector<256x128xf32>
    %46 = tpu.matmul %43, %45, %cst_65 {dimension_numbers = #tpu.dot_dimension_numbers<[1], [0], [0], [1], [0, 0, 1, 1], [], []>} : vector<256x128xbf16>, vector<128x128xbf16>, vector<256x128xf32> -> vector<256x128xf32>
    %47 = arith.addf %42, %46 : vector<256x128xf32>
    %c0_66 = arith.constant 0 : index
    %c0_67 = arith.constant 0 : index
    %48 = vector.load %arg9[%c0_66, %c0_67] : memref<256x128xf32, #tpu.memory_space<vmem>>, vector<256x128xf32>
    tpu.vector_store %arg9[%c0_66, %c0_67], %47 {strides = array<i32>} : memref<256x128xf32, #tpu.memory_space<vmem>>, vector<256x128xf32>,
    %c0_68 = arith.constant 0 : index
    %c0_69 = arith.constant 0 : index
    %49 = vector.load %arg9[%c0_68, %c0_69] : memref<256x128xf32, #tpu.memory_space<vmem>>, vector<256x128xf32>
    %c16_70 = arith.constant 16 : index
    %c0_71 = arith.constant 0 : index
    %50 = vector.load %arg8[%c16_70, %c0_71] : memref<288x128xbf16, #tpu.memory_space<vmem>>, vector<256x128xbf16>
    %c4 = arith.constant 4 : index
    %c0_72 = arith.constant 0 : index
    %c0_73 = arith.constant 0 : index
    %51 = vector.load %arg2[%c4, %c0_72, %c0_73] : memref<9x128x128xbf16, #tpu.memory_space<vmem>>, vector<1x128x128xbf16>
    %52 = vector.shape_cast %51 : vector<1x128x128xbf16> to vector<128x128xbf16>
    %cst_74 = arith.constant dense<0.000000e+00> : vector<256x128xf32>
    %53 = tpu.matmul %50, %52, %cst_74 {dimension_numbers = #tpu.dot_dimension_numbers<[1], [0], [0], [1], [0, 0, 1, 1], [], []>} : vector<256x128xbf16>, vector<128x128xbf16>, vector<256x128xf32> -> vector<256x128xf32>
    %54 = arith.addf %49, %53 : vector<256x128xf32>
    %c0_75 = arith.constant 0 : index
    %c0_76 = arith.constant 0 : index
    %55 = vector.load %arg9[%c0_75, %c0_76] : memref<256x128xf32, #tpu.memory_space<vmem>>, vector<256x128xf32>
    tpu.vector_store %arg9[%c0_75, %c0_76], %54 {strides = array<i32>} : memref<256x128xf32, #tpu.memory_space<vmem>>, vector<256x128xf32>,
    %c0_77 = arith.constant 0 : index
    %c0_78 = arith.constant 0 : index
    %56 = vector.load %arg9[%c0_77, %c0_78] : memref<256x128xf32, #tpu.memory_space<vmem>>, vector<256x128xf32>
    %c32_79 = arith.constant 32 : index
    %c0_80 = arith.constant 0 : index
    %57 = vector.load %arg8[%c32_79, %c0_80] : memref<288x128xbf16, #tpu.memory_space<vmem>>, vector<256x128xbf16>
    %c7 = arith.constant 7 : index
    %c0_81 = arith.constant 0 : index
    %c0_82 = arith.constant 0 : index
    %58 = vector.load %arg2[%c7, %c0_81, %c0_82] : memref<9x128x128xbf16, #tpu.memory_space<vmem>>, vector<1x128x128xbf16>
    %59 = vector.shape_cast %58 : vector<1x128x128xbf16> to vector<128x128xbf16>
    %cst_83 = arith.constant dense<0.000000e+00> : vector<256x128xf32>
    %60 = tpu.matmul %57, %59, %cst_83 {dimension_numbers = #tpu.dot_dimension_numbers<[1], [0], [0], [1], [0, 0, 1, 1], [], []>} : vector<256x128xbf16>, vector<128x128xbf16>, vector<256x128xf32> -> vector<256x128xf32>
    %61 = arith.addf %56, %60 : vector<256x128xf32>
    %c0_84 = arith.constant 0 : index
    %c0_85 = arith.constant 0 : index
    %62 = vector.load %arg9[%c0_84, %c0_85] : memref<256x128xf32, #tpu.memory_space<vmem>>, vector<256x128xf32>
    tpu.vector_store %arg9[%c0_84, %c0_85], %61 {strides = array<i32>} : memref<256x128xf32, #tpu.memory_space<vmem>>, vector<256x128xf32>,
    %c0_86 = arith.constant 0 : index
    %c2_87 = arith.constant 2 : index
    %c0_88 = arith.constant 0 : index
    %63 = vector.load %arg7[%c0_86, %c2_87, %c0_88] : memref<18x18x128xf32, #tpu.memory_space<vmem>>, vector<18x16x128xf32>
    %64 = arith.truncf %63 : vector<18x16x128xf32> to vector<18x16x128xbf16>
    %65 = vector.shape_cast %64 : vector<18x16x128xbf16> to vector<288x128xbf16>
    %c0_89 = arith.constant 0 : index
    %c0_90 = arith.constant 0 : index
    %66 = vector.load %arg8[%c0_89, %c0_90] : memref<288x128xbf16, #tpu.memory_space<vmem>>, vector<288x128xbf16>
    tpu.vector_store %arg8[%c0_89, %c0_90], %65 {strides = array<i32>} : memref<288x128xbf16, #tpu.memory_space<vmem>>, vector<288x128xbf16>,
    %c0_91 = arith.constant 0 : index
    %c0_92 = arith.constant 0 : index
    %67 = vector.load %arg9[%c0_91, %c0_92] : memref<256x128xf32, #tpu.memory_space<vmem>>, vector<256x128xf32>
    %c0_93 = arith.constant 0 : index
    %c0_94 = arith.constant 0 : index
    %68 = vector.load %arg8[%c0_93, %c0_94] : memref<288x128xbf16, #tpu.memory_space<vmem>>, vector<256x128xbf16>
    %c2_95 = arith.constant 2 : index
    %c0_96 = arith.constant 0 : index
    %c0_97 = arith.constant 0 : index
    %69 = vector.load %arg2[%c2_95, %c0_96, %c0_97] : memref<9x128x128xbf16, #tpu.memory_space<vmem>>, vector<1x128x128xbf16>
    %70 = vector.shape_cast %69 : vector<1x128x128xbf16> to vector<128x128xbf16>
    %cst_98 = arith.constant dense<0.000000e+00> : vector<256x128xf32>
    %71 = tpu.matmul %68, %70, %cst_98 {dimension_numbers = #tpu.dot_dimension_numbers<[1], [0], [0], [1], [0, 0, 1, 1], [], []>} : vector<256x128xbf16>, vector<128x128xbf16>, vector<256x128xf32> -> vector<256x128xf32>
    %72 = arith.addf %67, %71 : vector<256x128xf32>
    %c0_99 = arith.constant 0 : index
    %c0_100 = arith.constant 0 : index
    %73 = vector.load %arg9[%c0_99, %c0_100] : memref<256x128xf32, #tpu.memory_space<vmem>>, vector<256x128xf32>
    tpu.vector_store %arg9[%c0_99, %c0_100], %72 {strides = array<i32>} : memref<256x128xf32, #tpu.memory_space<vmem>>, vector<256x128xf32>,
    %c0_101 = arith.constant 0 : index
    %c0_102 = arith.constant 0 : index
    %74 = vector.load %arg9[%c0_101, %c0_102] : memref<256x128xf32, #tpu.memory_space<vmem>>, vector<256x128xf32>
    %c16_103 = arith.constant 16 : index
    %c0_104 = arith.constant 0 : index
    %75 = vector.load %arg8[%c16_103, %c0_104] : memref<288x128xbf16, #tpu.memory_space<vmem>>, vector<256x128xbf16>
    %c5 = arith.constant 5 : index
    %c0_105 = arith.constant 0 : index
    %c0_106 = arith.constant 0 : index
    %76 = vector.load %arg2[%c5, %c0_105, %c0_106] : memref<9x128x128xbf16, #tpu.memory_space<vmem>>, vector<1x128x128xbf16>
    %77 = vector.shape_cast %76 : vector<1x128x128xbf16> to vector<128x128xbf16>
    %cst_107 = arith.constant dense<0.000000e+00> : vector<256x128xf32>
    %78 = tpu.matmul %75, %77, %cst_107 {dimension_numbers = #tpu.dot_dimension_numbers<[1], [0], [0], [1], [0, 0, 1, 1], [], []>} : vector<256x128xbf16>, vector<128x128xbf16>, vector<256x128xf32> -> vector<256x128xf32>
    %79 = arith.addf %74, %78 : vector<256x128xf32>
    %c0_108 = arith.constant 0 : index
    %c0_109 = arith.constant 0 : index
    %80 = vector.load %arg9[%c0_108, %c0_109] : memref<256x128xf32, #tpu.memory_space<vmem>>, vector<256x128xf32>
    tpu.vector_store %arg9[%c0_108, %c0_109], %79 {strides = array<i32>} : memref<256x128xf32, #tpu.memory_space<vmem>>, vector<256x128xf32>,
    %c0_110 = arith.constant 0 : index
    %c0_111 = arith.constant 0 : index
    %81 = vector.load %arg9[%c0_110, %c0_111] : memref<256x128xf32, #tpu.memory_space<vmem>>, vector<256x128xf32>
    %c32_112 = arith.constant 32 : index
    %c0_113 = arith.constant 0 : index
    %82 = vector.load %arg8[%c32_112, %c0_113] : memref<288x128xbf16, #tpu.memory_space<vmem>>, vector<256x128xbf16>
    %c8 = arith.constant 8 : index
    %c0_114 = arith.constant 0 : index
    %c0_115 = arith.constant 0 : index
    %83 = vector.load %arg2[%c8, %c0_114, %c0_115] : memref<9x128x128xbf16, #tpu.memory_space<vmem>>, vector<1x128x128xbf16>
    %84 = vector.shape_cast %83 : vector<1x128x128xbf16> to vector<128x128xbf16>
    %cst_116 = arith.constant dense<0.000000e+00> : vector<256x128xf32>
    %85 = tpu.matmul %82, %84, %cst_116 {dimension_numbers = #tpu.dot_dimension_numbers<[1], [0], [0], [1], [0, 0, 1, 1], [], []>} : vector<256x128xbf16>, vector<128x128xbf16>, vector<256x128xf32> -> vector<256x128xf32>
    %86 = arith.addf %81, %85 : vector<256x128xf32>
    %c0_117 = arith.constant 0 : index
    %c0_118 = arith.constant 0 : index
    %87 = vector.load %arg9[%c0_117, %c0_118] : memref<256x128xf32, #tpu.memory_space<vmem>>, vector<256x128xf32>
    tpu.vector_store %arg9[%c0_117, %c0_118], %86 {strides = array<i32>} : memref<256x128xf32, #tpu.memory_space<vmem>>, vector<256x128xf32>,
    %c0_119 = arith.constant 0 : index
    %c0_120 = arith.constant 0 : index
    %88 = vector.load %arg9[%c0_119, %c0_120] : memref<256x128xf32, #tpu.memory_space<vmem>>, vector<256x128xf32>
    %c0_121 = arith.constant 0 : index
    %c0_122 = arith.constant 0 : index
    %89 = vector.load %arg3[%c0_121, %c0_122] : memref<1x128xf32, #tpu.memory_space<vmem>>, vector<1x128xf32>
    %90 = vector.broadcast %89 : vector<1x128xf32> to vector<256x128xf32>
    %91 = arith.addf %88, %90 : vector<256x128xf32>
    %cst_123 = arith.constant 0.000000e+00 : f32
    %92 = vector.broadcast %cst_123 : f32 to vector<256x128xf32>
    %93 = arith.maximumf %91, %92 : vector<256x128xf32>
    %94 = vector.shape_cast %93 : vector<256x128xf32> to vector<16x16x128xf32>
    %c1_124 = arith.constant 1 : index
    %c1_125 = arith.constant 1 : index
    %c0_126 = arith.constant 0 : index
    %95 = vector.load %arg7[%c1_124, %c1_125, %c0_126] : memref<18x18x128xf32, #tpu.memory_space<vmem>>, vector<16x16x128xf32>
    tpu.vector_store %arg7[%c1_124, %c1_125, %c0_126], %94 {strides = array<i32>} : memref<18x18x128xf32, #tpu.memory_space<vmem>>, vector<16x16x128xf32>,
    %96 = vector.extract_strided_slice %94 {offsets = [1, 0, 0], sizes = [1, 16, 128], strides = [1, 1, 1]} : vector<16x16x128xf32> to vector<1x16x128xf32>
    %c0_127 = arith.constant 0 : index
    %c1_128 = arith.constant 1 : index
    %c0_129 = arith.constant 0 : index
    %97 = vector.load %arg7[%c0_127, %c1_128, %c0_129] : memref<18x18x128xf32, #tpu.memory_space<vmem>>, vector<1x16x128xf32>
    tpu.vector_store %arg7[%c0_127, %c1_128, %c0_129], %96 {strides = array<i32>} : memref<18x18x128xf32, #tpu.memory_space<vmem>>, vector<1x16x128xf32>,
    %98 = vector.extract_strided_slice %94 {offsets = [14, 0, 0], sizes = [1, 16, 128], strides = [1, 1, 1]} : vector<16x16x128xf32> to vector<1x16x128xf32>
    %c17_130 = arith.constant 17 : index
    %c1_131 = arith.constant 1 : index
    %c0_132 = arith.constant 0 : index
    %99 = vector.load %arg7[%c17_130, %c1_131, %c0_132] : memref<18x18x128xf32, #tpu.memory_space<vmem>>, vector<1x16x128xf32>
    tpu.vector_store %arg7[%c17_130, %c1_131, %c0_132], %98 {strides = array<i32>} : memref<18x18x128xf32, #tpu.memory_space<vmem>>, vector<1x16x128xf32>,
    %c0_133 = arith.constant 0 : index
    %c2_134 = arith.constant 2 : index
    %c0_135 = arith.constant 0 : index
    %100 = vector.load %arg7[%c0_133, %c2_134, %c0_135] : memref<18x18x128xf32, #tpu.memory_space<vmem>>, vector<18x1x128xf32>
    %c0_136 = arith.constant 0 : index
    %c0_137 = arith.constant 0 : index
    %c0_138 = arith.constant 0 : index
    %101 = vector.load %arg7[%c0_136, %c0_137, %c0_138] : memref<18x18x128xf32, #tpu.memory_space<vmem>>, vector<18x1x128xf32>
    tpu.vector_store %arg7[%c0_136, %c0_137, %c0_138], %100 {strides = array<i32>} : memref<18x18x128xf32, #tpu.memory_space<vmem>>, vector<18x1x128xf32>,
    %c0_139 = arith.constant 0 : index
    %c15_140 = arith.constant 15 : index
    %c0_141 = arith.constant 0 : index
    %102 = vector.load %arg7[%c0_139, %c15_140, %c0_141] : memref<18x18x128xf32, #tpu.memory_space<vmem>>, vector<18x1x128xf32>
    %c0_142 = arith.constant 0 : index
    %c17_143 = arith.constant 17 : index
    %c0_144 = arith.constant 0 : index
    %103 = vector.load %arg7[%c0_142, %c17_143, %c0_144] : memref<18x18x128xf32, #tpu.memory_space<vmem>>, vector<18x1x128xf32>
    tpu.vector_store %arg7[%c0_142, %c17_143, %c0_144], %102 {strides = array<i32>} : memref<18x18x128xf32, #tpu.memory_space<vmem>>, vector<18x1x128xf32>,
    %cst_145 = arith.constant 0.000000e+00 : f32
    %104 = vector.broadcast %cst_145 : f32 to vector<256x128xf32>
    %c0_146 = arith.constant 0 : index
    %c0_147 = arith.constant 0 : index
    %105 = vector.load %arg9[%c0_146, %c0_147] : memref<256x128xf32, #tpu.memory_space<vmem>>, vector<256x128xf32>
    tpu.vector_store %arg9[%c0_146, %c0_147], %104 {strides = array<i32>} : memref<256x128xf32, #tpu.memory_space<vmem>>, vector<256x128xf32>,
    %c0_148 = arith.constant 0 : index
    %c0_149 = arith.constant 0 : index
    %c0_150 = arith.constant 0 : index
    %106 = vector.load %arg7[%c0_148, %c0_149, %c0_150] : memref<18x18x128xf32, #tpu.memory_space<vmem>>, vector<18x16x128xf32>
    %107 = arith.truncf %106 : vector<18x16x128xf32> to vector<18x16x128xbf16>
    %108 = vector.shape_cast %107 : vector<18x16x128xbf16> to vector<288x128xbf16>
    %c0_151 = arith.constant 0 : index
    %c0_152 = arith.constant 0 : index
    %109 = vector.load %arg8[%c0_151, %c0_152] : memref<288x128xbf16, #tpu.memory_space<vmem>>, vector<288x128xbf16>
    tpu.vector_store %arg8[%c0_151, %c0_152], %108 {strides = array<i32>} : memref<288x128xbf16, #tpu.memory_space<vmem>>, vector<288x128xbf16>,
    %c0_153 = arith.constant 0 : index
    %c0_154 = arith.constant 0 : index
    %110 = vector.load %arg9[%c0_153, %c0_154] : memref<256x128xf32, #tpu.memory_space<vmem>>, vector<256x128xf32>
    %c0_155 = arith.constant 0 : index
    %c0_156 = arith.constant 0 : index
    %111 = vector.load %arg8[%c0_155, %c0_156] : memref<288x128xbf16, #tpu.memory_space<vmem>>, vector<256x128xbf16>
    %c0_157 = arith.constant 0 : index
    %c0_158 = arith.constant 0 : index
    %c0_159 = arith.constant 0 : index
    %112 = vector.load %arg4[%c0_157, %c0_158, %c0_159] : memref<9x128x128xbf16, #tpu.memory_space<vmem>>, vector<1x128x128xbf16>
    %113 = vector.shape_cast %112 : vector<1x128x128xbf16> to vector<128x128xbf16>
    %cst_160 = arith.constant dense<0.000000e+00> : vector<256x128xf32>
    %114 = tpu.matmul %111, %113, %cst_160 {dimension_numbers = #tpu.dot_dimension_numbers<[1], [0], [0], [1], [0, 0, 1, 1], [], []>} : vector<256x128xbf16>, vector<128x128xbf16>, vector<256x128xf32> -> vector<256x128xf32>
    %115 = arith.addf %110, %114 : vector<256x128xf32>
    %c0_161 = arith.constant 0 : index
    %c0_162 = arith.constant 0 : index
    %116 = vector.load %arg9[%c0_161, %c0_162] : memref<256x128xf32, #tpu.memory_space<vmem>>, vector<256x128xf32>
    tpu.vector_store %arg9[%c0_161, %c0_162], %115 {strides = array<i32>} : memref<256x128xf32, #tpu.memory_space<vmem>>, vector<256x128xf32>,
    %c0_163 = arith.constant 0 : index
    %c0_164 = arith.constant 0 : index
    %117 = vector.load %arg9[%c0_163, %c0_164] : memref<256x128xf32, #tpu.memory_space<vmem>>, vector<256x128xf32>
    %c16_165 = arith.constant 16 : index
    %c0_166 = arith.constant 0 : index
    %118 = vector.load %arg8[%c16_165, %c0_166] : memref<288x128xbf16, #tpu.memory_space<vmem>>, vector<256x128xbf16>
    %c3_167 = arith.constant 3 : index
    %c0_168 = arith.constant 0 : index
    %c0_169 = arith.constant 0 : index
    %119 = vector.load %arg4[%c3_167, %c0_168, %c0_169] : memref<9x128x128xbf16, #tpu.memory_space<vmem>>, vector<1x128x128xbf16>
    %120 = vector.shape_cast %119 : vector<1x128x128xbf16> to vector<128x128xbf16>
    %cst_170 = arith.constant dense<0.000000e+00> : vector<256x128xf32>
    %121 = tpu.matmul %118, %120, %cst_170 {dimension_numbers = #tpu.dot_dimension_numbers<[1], [0], [0], [1], [0, 0, 1, 1], [], []>} : vector<256x128xbf16>, vector<128x128xbf16>, vector<256x128xf32> -> vector<256x128xf32>
    %122 = arith.addf %117, %121 : vector<256x128xf32>
    %c0_171 = arith.constant 0 : index
    %c0_172 = arith.constant 0 : index
    %123 = vector.load %arg9[%c0_171, %c0_172] : memref<256x128xf32, #tpu.memory_space<vmem>>, vector<256x128xf32>
    tpu.vector_store %arg9[%c0_171, %c0_172], %122 {strides = array<i32>} : memref<256x128xf32, #tpu.memory_space<vmem>>, vector<256x128xf32>,
    %c0_173 = arith.constant 0 : index
    %c0_174 = arith.constant 0 : index
    %124 = vector.load %arg9[%c0_173, %c0_174] : memref<256x128xf32, #tpu.memory_space<vmem>>, vector<256x128xf32>
    %c32_175 = arith.constant 32 : index
    %c0_176 = arith.constant 0 : index
    %125 = vector.load %arg8[%c32_175, %c0_176] : memref<288x128xbf16, #tpu.memory_space<vmem>>, vector<256x128xbf16>
    %c6_177 = arith.constant 6 : index
    %c0_178 = arith.constant 0 : index
    %c0_179 = arith.constant 0 : index
    %126 = vector.load %arg4[%c6_177, %c0_178, %c0_179] : memref<9x128x128xbf16, #tpu.memory_space<vmem>>, vector<1x128x128xbf16>
    %127 = vector.shape_cast %126 : vector<1x128x128xbf16> to vector<128x128xbf16>
    %cst_180 = arith.constant dense<0.000000e+00> : vector<256x128xf32>
    %128 = tpu.matmul %125, %127, %cst_180 {dimension_numbers = #tpu.dot_dimension_numbers<[1], [0], [0], [1], [0, 0, 1, 1], [], []>} : vector<256x128xbf16>, vector<128x128xbf16>, vector<256x128xf32> -> vector<256x128xf32>
    %129 = arith.addf %124, %128 : vector<256x128xf32>
    %c0_181 = arith.constant 0 : index
    %c0_182 = arith.constant 0 : index
    %130 = vector.load %arg9[%c0_181, %c0_182] : memref<256x128xf32, #tpu.memory_space<vmem>>, vector<256x128xf32>
    tpu.vector_store %arg9[%c0_181, %c0_182], %129 {strides = array<i32>} : memref<256x128xf32, #tpu.memory_space<vmem>>, vector<256x128xf32>,
    %c0_183 = arith.constant 0 : index
    %c1_184 = arith.constant 1 : index
    %c0_185 = arith.constant 0 : index
    %131 = vector.load %arg7[%c0_183, %c1_184, %c0_185] : memref<18x18x128xf32, #tpu.memory_space<vmem>>, vector<18x16x128xf32>
    %132 = arith.truncf %131 : vector<18x16x128xf32> to vector<18x16x128xbf16>
    %133 = vector.shape_cast %132 : vector<18x16x128xbf16> to vector<288x128xbf16>
    %c0_186 = arith.constant 0 : index
    %c0_187 = arith.constant 0 : index
    %134 = vector.load %arg8[%c0_186, %c0_187] : memref<288x128xbf16, #tpu.memory_space<vmem>>, vector<288x128xbf16>
    tpu.vector_store %arg8[%c0_186, %c0_187], %133 {strides = array<i32>} : memref<288x128xbf16, #tpu.memory_space<vmem>>, vector<288x128xbf16>,
    %c0_188 = arith.constant 0 : index
    %c0_189 = arith.constant 0 : index
    %135 = vector.load %arg9[%c0_188, %c0_189] : memref<256x128xf32, #tpu.memory_space<vmem>>, vector<256x128xf32>
    %c0_190 = arith.constant 0 : index
    %c0_191 = arith.constant 0 : index
    %136 = vector.load %arg8[%c0_190, %c0_191] : memref<288x128xbf16, #tpu.memory_space<vmem>>, vector<256x128xbf16>
    %c1_192 = arith.constant 1 : index
    %c0_193 = arith.constant 0 : index
    %c0_194 = arith.constant 0 : index
    %137 = vector.load %arg4[%c1_192, %c0_193, %c0_194] : memref<9x128x128xbf16, #tpu.memory_space<vmem>>, vector<1x128x128xbf16>
    %138 = vector.shape_cast %137 : vector<1x128x128xbf16> to vector<128x128xbf16>
    %cst_195 = arith.constant dense<0.000000e+00> : vector<256x128xf32>
    %139 = tpu.matmul %136, %138, %cst_195 {dimension_numbers = #tpu.dot_dimension_numbers<[1], [0], [0], [1], [0, 0, 1, 1], [], []>} : vector<256x128xbf16>, vector<128x128xbf16>, vector<256x128xf32> -> vector<256x128xf32>
    %140 = arith.addf %135, %139 : vector<256x128xf32>
    %c0_196 = arith.constant 0 : index
    %c0_197 = arith.constant 0 : index
    %141 = vector.load %arg9[%c0_196, %c0_197] : memref<256x128xf32, #tpu.memory_space<vmem>>, vector<256x128xf32>
    tpu.vector_store %arg9[%c0_196, %c0_197], %140 {strides = array<i32>} : memref<256x128xf32, #tpu.memory_space<vmem>>, vector<256x128xf32>,
    %c0_198 = arith.constant 0 : index
    %c0_199 = arith.constant 0 : index
    %142 = vector.load %arg9[%c0_198, %c0_199] : memref<256x128xf32, #tpu.memory_space<vmem>>, vector<256x128xf32>
    %c16_200 = arith.constant 16 : index
    %c0_201 = arith.constant 0 : index
    %143 = vector.load %arg8[%c16_200, %c0_201] : memref<288x128xbf16, #tpu.memory_space<vmem>>, vector<256x128xbf16>
    %c4_202 = arith.constant 4 : index
    %c0_203 = arith.constant 0 : index
    %c0_204 = arith.constant 0 : index
    %144 = vector.load %arg4[%c4_202, %c0_203, %c0_204] : memref<9x128x128xbf16, #tpu.memory_space<vmem>>, vector<1x128x128xbf16>
    %145 = vector.shape_cast %144 : vector<1x128x128xbf16> to vector<128x128xbf16>
    %cst_205 = arith.constant dense<0.000000e+00> : vector<256x128xf32>
    %146 = tpu.matmul %143, %145, %cst_205 {dimension_numbers = #tpu.dot_dimension_numbers<[1], [0], [0], [1], [0, 0, 1, 1], [], []>} : vector<256x128xbf16>, vector<128x128xbf16>, vector<256x128xf32> -> vector<256x128xf32>
    %147 = arith.addf %142, %146 : vector<256x128xf32>
    %c0_206 = arith.constant 0 : index
    %c0_207 = arith.constant 0 : index
    %148 = vector.load %arg9[%c0_206, %c0_207] : memref<256x128xf32, #tpu.memory_space<vmem>>, vector<256x128xf32>
    tpu.vector_store %arg9[%c0_206, %c0_207], %147 {strides = array<i32>} : memref<256x128xf32, #tpu.memory_space<vmem>>, vector<256x128xf32>,
    %c0_208 = arith.constant 0 : index
    %c0_209 = arith.constant 0 : index
    %149 = vector.load %arg9[%c0_208, %c0_209] : memref<256x128xf32, #tpu.memory_space<vmem>>, vector<256x128xf32>
    %c32_210 = arith.constant 32 : index
    %c0_211 = arith.constant 0 : index
    %150 = vector.load %arg8[%c32_210, %c0_211] : memref<288x128xbf16, #tpu.memory_space<vmem>>, vector<256x128xbf16>
    %c7_212 = arith.constant 7 : index
    %c0_213 = arith.constant 0 : index
    %c0_214 = arith.constant 0 : index
    %151 = vector.load %arg4[%c7_212, %c0_213, %c0_214] : memref<9x128x128xbf16, #tpu.memory_space<vmem>>, vector<1x128x128xbf16>
    %152 = vector.shape_cast %151 : vector<1x128x128xbf16> to vector<128x128xbf16>
    %cst_215 = arith.constant dense<0.000000e+00> : vector<256x128xf32>
    %153 = tpu.matmul %150, %152, %cst_215 {dimension_numbers = #tpu.dot_dimension_numbers<[1], [0], [0], [1], [0, 0, 1, 1], [], []>} : vector<256x128xbf16>, vector<128x128xbf16>, vector<256x128xf32> -> vector<256x128xf32>
    %154 = arith.addf %149, %153 : vector<256x128xf32>
    %c0_216 = arith.constant 0 : index
    %c0_217 = arith.constant 0 : index
    %155 = vector.load %arg9[%c0_216, %c0_217] : memref<256x128xf32, #tpu.memory_space<vmem>>, vector<256x128xf32>
    tpu.vector_store %arg9[%c0_216, %c0_217], %154 {strides = array<i32>} : memref<256x128xf32, #tpu.memory_space<vmem>>, vector<256x128xf32>,
    %c0_218 = arith.constant 0 : index
    %c2_219 = arith.constant 2 : index
    %c0_220 = arith.constant 0 : index
    %156 = vector.load %arg7[%c0_218, %c2_219, %c0_220] : memref<18x18x128xf32, #tpu.memory_space<vmem>>, vector<18x16x128xf32>
    %157 = arith.truncf %156 : vector<18x16x128xf32> to vector<18x16x128xbf16>
    %158 = vector.shape_cast %157 : vector<18x16x128xbf16> to vector<288x128xbf16>
    %c0_221 = arith.constant 0 : index
    %c0_222 = arith.constant 0 : index
    %159 = vector.load %arg8[%c0_221, %c0_222] : memref<288x128xbf16, #tpu.memory_space<vmem>>, vector<288x128xbf16>
    tpu.vector_store %arg8[%c0_221, %c0_222], %158 {strides = array<i32>} : memref<288x128xbf16, #tpu.memory_space<vmem>>, vector<288x128xbf16>,
    %c0_223 = arith.constant 0 : index
    %c0_224 = arith.constant 0 : index
    %160 = vector.load %arg9[%c0_223, %c0_224] : memref<256x128xf32, #tpu.memory_space<vmem>>, vector<256x128xf32>
    %c0_225 = arith.constant 0 : index
    %c0_226 = arith.constant 0 : index
    %161 = vector.load %arg8[%c0_225, %c0_226] : memref<288x128xbf16, #tpu.memory_space<vmem>>, vector<256x128xbf16>
    %c2_227 = arith.constant 2 : index
    %c0_228 = arith.constant 0 : index
    %c0_229 = arith.constant 0 : index
    %162 = vector.load %arg4[%c2_227, %c0_228, %c0_229] : memref<9x128x128xbf16, #tpu.memory_space<vmem>>, vector<1x128x128xbf16>
    %163 = vector.shape_cast %162 : vector<1x128x128xbf16> to vector<128x128xbf16>
    %cst_230 = arith.constant dense<0.000000e+00> : vector<256x128xf32>
    %164 = tpu.matmul %161, %163, %cst_230 {dimension_numbers = #tpu.dot_dimension_numbers<[1], [0], [0], [1], [0, 0, 1, 1], [], []>} : vector<256x128xbf16>, vector<128x128xbf16>, vector<256x128xf32> -> vector<256x128xf32>
    %165 = arith.addf %160, %164 : vector<256x128xf32>
    %c0_231 = arith.constant 0 : index
    %c0_232 = arith.constant 0 : index
    %166 = vector.load %arg9[%c0_231, %c0_232] : memref<256x128xf32, #tpu.memory_space<vmem>>, vector<256x128xf32>
    tpu.vector_store %arg9[%c0_231, %c0_232], %165 {strides = array<i32>} : memref<256x128xf32, #tpu.memory_space<vmem>>, vector<256x128xf32>,
    %c0_233 = arith.constant 0 : index
    %c0_234 = arith.constant 0 : index
    %167 = vector.load %arg9[%c0_233, %c0_234] : memref<256x128xf32, #tpu.memory_space<vmem>>, vector<256x128xf32>
    %c16_235 = arith.constant 16 : index
    %c0_236 = arith.constant 0 : index
    %168 = vector.load %arg8[%c16_235, %c0_236] : memref<288x128xbf16, #tpu.memory_space<vmem>>, vector<256x128xbf16>
    %c5_237 = arith.constant 5 : index
    %c0_238 = arith.constant 0 : index
    %c0_239 = arith.constant 0 : index
    %169 = vector.load %arg4[%c5_237, %c0_238, %c0_239] : memref<9x128x128xbf16, #tpu.memory_space<vmem>>, vector<1x128x128xbf16>
    %170 = vector.shape_cast %169 : vector<1x128x128xbf16> to vector<128x128xbf16>
    %cst_240 = arith.constant dense<0.000000e+00> : vector<256x128xf32>
    %171 = tpu.matmul %168, %170, %cst_240 {dimension_numbers = #tpu.dot_dimension_numbers<[1], [0], [0], [1], [0, 0, 1, 1], [], []>} : vector<256x128xbf16>, vector<128x128xbf16>, vector<256x128xf32> -> vector<256x128xf32>
    %172 = arith.addf %167, %171 : vector<256x128xf32>
    %c0_241 = arith.constant 0 : index
    %c0_242 = arith.constant 0 : index
    %173 = vector.load %arg9[%c0_241, %c0_242] : memref<256x128xf32, #tpu.memory_space<vmem>>, vector<256x128xf32>
    tpu.vector_store %arg9[%c0_241, %c0_242], %172 {strides = array<i32>} : memref<256x128xf32, #tpu.memory_space<vmem>>, vector<256x128xf32>,
    %c0_243 = arith.constant 0 : index
    %c0_244 = arith.constant 0 : index
    %174 = vector.load %arg9[%c0_243, %c0_244] : memref<256x128xf32, #tpu.memory_space<vmem>>, vector<256x128xf32>
    %c32_245 = arith.constant 32 : index
    %c0_246 = arith.constant 0 : index
    %175 = vector.load %arg8[%c32_245, %c0_246] : memref<288x128xbf16, #tpu.memory_space<vmem>>, vector<256x128xbf16>
    %c8_247 = arith.constant 8 : index
    %c0_248 = arith.constant 0 : index
    %c0_249 = arith.constant 0 : index
    %176 = vector.load %arg4[%c8_247, %c0_248, %c0_249] : memref<9x128x128xbf16, #tpu.memory_space<vmem>>, vector<1x128x128xbf16>
    %177 = vector.shape_cast %176 : vector<1x128x128xbf16> to vector<128x128xbf16>
    %cst_250 = arith.constant dense<0.000000e+00> : vector<256x128xf32>
    %178 = tpu.matmul %175, %177, %cst_250 {dimension_numbers = #tpu.dot_dimension_numbers<[1], [0], [0], [1], [0, 0, 1, 1], [], []>} : vector<256x128xbf16>, vector<128x128xbf16>, vector<256x128xf32> -> vector<256x128xf32>
    %179 = arith.addf %174, %178 : vector<256x128xf32>
    %c0_251 = arith.constant 0 : index
    %c0_252 = arith.constant 0 : index
    %180 = vector.load %arg9[%c0_251, %c0_252] : memref<256x128xf32, #tpu.memory_space<vmem>>, vector<256x128xf32>
    tpu.vector_store %arg9[%c0_251, %c0_252], %179 {strides = array<i32>} : memref<256x128xf32, #tpu.memory_space<vmem>>, vector<256x128xf32>,
    %c0_253 = arith.constant 0 : index
    %c0_254 = arith.constant 0 : index
    %c0_255 = arith.constant 0 : index
    %c0_256 = arith.constant 0 : index
    %181 = vector.load %arg1[%c0_253, %c0_254, %c0_255, %c0_256] : memref<1x16x16x128xf32, #tpu.memory_space<vmem>>, vector<1x16x16x128xf32>
    %182 = vector.shape_cast %181 : vector<1x16x16x128xf32> to vector<16x16x128xf32>
    %c0_257 = arith.constant 0 : index
    %c0_258 = arith.constant 0 : index
    %183 = vector.load %arg9[%c0_257, %c0_258] : memref<256x128xf32, #tpu.memory_space<vmem>>, vector<256x128xf32>
    %c0_259 = arith.constant 0 : index
    %c0_260 = arith.constant 0 : index
    %184 = vector.load %arg5[%c0_259, %c0_260] : memref<1x128xf32, #tpu.memory_space<vmem>>, vector<1x128xf32>
    %185 = vector.broadcast %184 : vector<1x128xf32> to vector<256x128xf32>
    %186 = arith.addf %183, %185 : vector<256x128xf32>
    %187 = vector.shape_cast %186 : vector<256x128xf32> to vector<16x16x128xf32>
    %188 = arith.addf %182, %187 : vector<16x16x128xf32>
    %c0_261 = arith.constant 0 : index
    %c0_262 = arith.constant 0 : index
    %c0_263 = arith.constant 0 : index
    %c0_264 = arith.constant 0 : index
    %189 = vector.load %arg6[%c0_261, %c0_262, %c0_263, %c0_264] : memref<1x16x16x128xf32, #tpu.memory_space<vmem>>, vector<1x16x16x128xf32>
    %190 = vector.shape_cast %189 : vector<1x16x16x128xf32> to vector<16x16x128xf32>
    %191 = vector.shape_cast %188 : vector<16x16x128xf32> to vector<1x16x16x128xf32>
    tpu.vector_store %arg6[%c0_261, %c0_262, %c0_263, %c0_264], %191 {strides = array<i32>} : memref<1x16x16x128xf32, #tpu.memory_space<vmem>>, vector<1x16x16x128xf32>,
    return
  }
  func.func @transform_0(%arg0: i32) -> (i32, i32, i32, i32) {
    %c0_i32 = arith.constant 0 : i32
    %c0_i32_0 = arith.constant 0 : i32
    %c0_i32_1 = arith.constant 0 : i32
    %c0_i32_2 = arith.constant 0 : i32
    return %arg0, %c0_i32, %c0_i32_0, %c0_i32_1 : i32, i32, i32, i32
  }
  func.func @transform_1(%arg0: i32) -> (i32, i32, i32) {
    %c0_i32 = arith.constant 0 : i32
    %c0_i32_0 = arith.constant 0 : i32
    %c0_i32_1 = arith.constant 0 : i32
    %c0_i32_2 = arith.constant 0 : i32
    return %c0_i32, %c0_i32_0, %c0_i32_1 : i32, i32, i32
  }
  func.func @transform_2(%arg0: i32) -> (i32, i32) {
    %c0_i32 = arith.constant 0 : i32
    %c0_i32_0 = arith.constant 0 : i32
    %c0_i32_1 = arith.constant 0 : i32
    return %c0_i32, %c0_i32_0 : i32, i32
  }
  func.func @transform_3(%arg0: i32) -> (i32, i32, i32) {
    %c0_i32 = arith.constant 0 : i32
    %c0_i32_0 = arith.constant 0 : i32
    %c0_i32_1 = arith.constant 0 : i32
    %c0_i32_2 = arith.constant 0 : i32
    return %c0_i32, %c0_i32_0, %c0_i32_1 : i32, i32, i32
  }
  func.func @transform_4(%arg0: i32) -> (i32, i32) {
    %c0_i32 = arith.constant 0 : i32
    %c0_i32_0 = arith.constant 0 : i32
    %c0_i32_1 = arith.constant 0 : i32
    return %c0_i32, %c0_i32_0 : i32, i32
  }
  func.func @transform_5(%arg0: i32) -> (i32, i32, i32, i32) {
    %c0_i32 = arith.constant 0 : i32
    %c0_i32_0 = arith.constant 0 : i32
    %c0_i32_1 = arith.constant 0 : i32
    %c0_i32_2 = arith.constant 0 : i32
    return %arg0, %c0_i32, %c0_i32_0, %c0_i32_1 : i32, i32, i32, i32
  }
}

</mosaic_0001>

<llo_original>
// kernel: resnet_block_forward.1
$region0: #{resnet_block_forward.1}
  #allocation0 [shape = 'u32[]', space=smem, size = 0x4, offset = 0x4, fixed_abs, tag = 'smem constant byte address 0x4 - core index']
  #allocation1 [shape = 'u32[144,128]{1,0:T(1,128)}', space=vmem, size = 0x12000, scoped, tag = 'internal scratch']
  #allocation2 [shape = 'f32[18,18,128]{2,1,0:T(8,128)}', space=vmem, size = 0x36000, scoped, tag = 'scratch operand']
  #allocation3 [shape = 'bf16[288,128]{1,0:T(16,128)(2,1)}', space=vmem, size = 0x12000, scoped, tag = 'scratch operand']
  #allocation4 [shape = 'f32[256,128]{1,0:T(8,128)}', space=vmem, size = 0x20000, scoped, tag = 'scratch operand']
  %s0 = inlined_call_operand.vmem [shape: f32[2,16,16,128], index: 0, kind: input, shape index: {}]
  %s1 = inlined_call_operand.vmem [shape: bf16[9,128,128], index: 1, kind: input, shape index: {}]
  %s2 = inlined_call_operand.vmem [shape: f32[1,128], index: 2, kind: input, shape index: {}]
  %s3 = inlined_call_operand.vmem [shape: bf16[9,128,128], index: 3, kind: input, shape index: {}]
  %s4 = inlined_call_operand.vmem [shape: f32[1,128], index: 4, kind: input, shape index: {}]
  %s5 = inlined_call_operand.hbm [shape: f32[2,16,16,128], index: 5, kind: output, shape index: {}]
  %s6 = sld [smem:[#allocation0]]
  $region53: #{resnet_block_forward.1} parent=0
    _
  %s8 = ssub.s32 1, %s6
  %s9 = scalar_select 0, %s8, %s6
  $region1: #{resnet_block_forward.1} parent=0
    #allocation5 [shape = 'u8[262144]{0}', space=vmem, size = 0x40000, scoped, tag = 'output window, operand 0']
    #allocation6 [shape = 's32[2]{0}', space=sflag, size = 0x8, scoped, tag = 'scoped memory for resnet_block_forward.1']
    %10 = vsyncpa [#allocation6], 0
    %s11 = scalar_lea.sflag [#allocation6], 1
    %12 = vsyncpa %s11, 0
    loop: start=0, step=1, limit=4
    $region2: #{resnet_block_forward.1} parent=1 // loop_pre_header
      _
    $region3: #{resnet_block_forward.1} parent=1 // loop_header
      %s14 = sphi 0, %s18
      %p15 = scmp.ge.s32.totalorder %s14, 4
      %s24 = sphi 0, %s26
      %s27 = sphi 0, %s24
      %s28 = sphi 0, %s27
      %s44 = sphi 0, %s28
      %s48 = sphi 0, %s48
      %s50 = sphi 0, %s48
      %s51 = sphi 0, %s50
      %s65 = sphi 0, %s51
      %s69 = sphi 0, %s69
      %s71 = sphi 0, %s69
      %s72 = sphi 0, %s71
      %s86 = sphi 0, %s72
      %s90 = sphi 0, %s90
      %s92 = sphi 0, %s90
      %s93 = sphi 0, %s92
      %s107 = sphi 0, %s93
      %s111 = sphi 0, %s111
      %s113 = sphi 0, %s111
      %s114 = sphi 0, %s113
      %s128 = sphi 0, %s114
      %s134 = sphi 0, %s136
      %s137 = sphi 0, %s134
      %s138 = sphi 0, %s137
      %s154 = sphi 0, %s138
    $region4: #{resnet_block_forward.1} parent=1 // loop_header_branch
      %17 = sbr.rel (%p15) target = $region8
    $region5: #{resnet_block_forward.1} parent=1 // loop_body
      %s19 = ssub.s32 %s14, 1
      %s20 = ssub.s32 %s14, 2
      %s21 = sadd.s32 %s14, 1
      %s22 = ssub.s32 %s14, %s21
      %p23 = scmp.eq.s32.totalorder %s22, 0
      %s25 = sadd.s32 %s24, 1
      %s26 = scalar_select %p23, %s24, %s25
      %p29 = pneg %p23
      %p30 = scmp.eq.s32.totalorder %s14, 1
      %p31 = por %p29, %p30
      %p32 = scmp.ne.s32.totalorder %s24, %s27
      %p33 = scmp.eq.s32.totalorder %s14, 0
      %p34 = por %p32, %p33
      %p35 = scmp.ne.s32.totalorder %s24, %s27
      %p36 = scmp.eq.s32.totalorder %s19, 1
      %p37 = por %p35, %p36
      %p38 = scmp.ne.s32.totalorder %s27, %s28
      %p39 = scmp.eq.s32.totalorder %s19, 0
      %p40 = por %p38, %p39
      %p41 = scmp.ne.s32.totalorder %s27, %s28
      %p42 = scmp.eq.s32.totalorder %s20, 1
      %p43 = por %p41, %p42
      %p45 = scmp.ne.s32.totalorder %s28, %s44
      %p46 = scmp.eq.s32.totalorder %s20, 0
      %p47 = por %p45, %p46
      %s49 = sadd.s32 %s48, 1
      %p52 = scmp.eq.s32.totalorder %s14, 1
      %p53 = scmp.ne.s32.totalorder %s48, %s50
      %p54 = scmp.eq.s32.totalorder %s14, 0
      %p55 = por %p53, %p54
      %p56 = scmp.ne.s32.totalorder %s48, %s50
      %p57 = scmp.eq.s32.totalorder %s19, 1
      %p58 = por %p56, %p57
      %p59 = scmp.ne.s32.totalorder %s50, %s51
      %p60 = scmp.eq.s32.totalorder %s19, 0
      %p61 = por %p59, %p60
      %p62 = scmp.ne.s32.totalorder %s50, %s51
      %p63 = scmp.eq.s32.totalorder %s20, 1
      %p64 = por %p62, %p63
      %p66 = scmp.ne.s32.totalorder %s51, %s65
      %p67 = scmp.eq.s32.totalorder %s20, 0
      %p68 = por %p66, %p67
      %s70 = sadd.s32 %s69, 1
      %p73 = scmp.eq.s32.totalorder %s14, 1
      %p74 = scmp.ne.s32.totalorder %s69, %s71
      %p75 = scmp.eq.s32.totalorder %s14, 0
      %p76 = por %p74, %p75
      %p77 = scmp.ne.s32.totalorder %s69, %s71
      %p78 = scmp.eq.s32.totalorder %s19, 1
      %p79 = por %p77, %p78
      %p80 = scmp.ne.s32.totalorder %s71, %s72
      %p81 = scmp.eq.s32.totalorder %s19, 0
      %p82 = por %p80, %p81
      %p83 = scmp.ne.s32.totalorder %s71, %s72
      %p84 = scmp.eq.s32.totalorder %s20, 1
      %p85 = por %p83, %p84
      %p87 = scmp.ne.s32.totalorder %s72, %s86
      %p88 = scmp.eq.s32.totalorder %s20, 0
      %p89 = por %p87, %p88
      %s91 = sadd.s32 %s90, 1
      %p94 = scmp.eq.s32.totalorder %s14, 1
      %p95 = scmp.ne.s32.totalorder %s90, %s92
      %p96 = scmp.eq.s32.totalorder %s14, 0
      %p97 = por %p95, %p96
      %p98 = scmp.ne.s32.totalorder %s90, %s92
      %p99 = scmp.eq.s32.totalorder %s19, 1
      %p100 = por %p98, %p99
      %p101 = scmp.ne.s32.totalorder %s92, %s93
      %p102 = scmp.eq.s32.totalorder %s19, 0
      %p103 = por %p101, %p102
      %p104 = scmp.ne.s32.totalorder %s92, %s93
      %p105 = scmp.eq.s32.totalorder %s20, 1
      %p106 = por %p104, %p105
      %p108 = scmp.ne.s32.totalorder %s93, %s107
      %p109 = scmp.eq.s32.totalorder %s20, 0
      %p110 = por %p108, %p109
      %s112 = sadd.s32 %s111, 1
      %p115 = scmp.eq.s32.totalorder %s14, 1
      %p116 = scmp.ne.s32.totalorder %s111, %s113
      %p117 = scmp.eq.s32.totalorder %s14, 0
      %p118 = por %p116, %p117
      %p119 = scmp.ne.s32.totalorder %s111, %s113
      %p120 = scmp.eq.s32.totalorder %s19, 1
      %p121 = por %p119, %p120
      %p122 = scmp.ne.s32.totalorder %s113, %s114
      %p123 = scmp.eq.s32.totalorder %s19, 0
      %p124 = por %p122, %p123
      %p125 = scmp.ne.s32.totalorder %s113, %s114
      %p126 = scmp.eq.s32.totalorder %s20, 1
      %p127 = por %p125, %p126
      %p129 = scmp.ne.s32.totalorder %s114, %s128
      %p130 = scmp.eq.s32.totalorder %s20, 0
      %p131 = por %p129, %p130
      %s132 = ssub.s32 %s14, %s21
      %p133 = scmp.eq.s32.totalorder %s132, 0
      %s135 = sadd.s32 %s134, 1
      %s136 = scalar_select %p133, %s134, %s135
      %p139 = pneg %p133
      %p140 = scmp.eq.s32.totalorder %s14, 1
      %p141 = por %p139, %p140
      %p142 = scmp.ne.s32.totalorder %s134, %s137
      %p143 = scmp.eq.s32.totalorder %s14, 0
      %p144 = por %p142, %p143
      %p145 = scmp.ne.s32.totalorder %s134, %s137
      %p146 = scmp.eq.s32.totalorder %s19, 1
      %p147 = por %p145, %p146
      %p148 = scmp.ne.s32.totalorder %s137, %s138
      %p149 = scmp.eq.s32.totalorder %s19, 0
      %p150 = por %p148, %p149
      %p151 = scmp.ne.s32.totalorder %s137, %s138
      %p152 = scmp.eq.s32.totalorder %s20, 1
      %p153 = por %p151, %p152
      %p155 = scmp.ne.s32.totalorder %s138, %s154
      %p156 = scmp.eq.s32.totalorder %s20, 0
      %p157 = por %p155, %p156
      %p158 = scmp.le.s32.totalorder 1, %s14
      %p159 = scmp.lt.s32.totalorder %s14, 3
      %p160 = pnand %p158, %p159
      %p161 = pneg %p160
      // Predicated region
      $region9: #{resnet_block_forward.1} parent=5 // pred_check
        _
      $region10: #{resnet_block_forward.1} parent=5 // pred_check_branch
        %163 = sbr.rel (%p160) target = $region12
      $region11: #{resnet_block_forward.1} parent=5 // pred_region
        %s164 = ssub.s32 %s14, 1
        // Predicated region
        $region13: #{resnet_block_forward.1} parent=11 // pred_check
          %p165 = pneg %p61
        $region14: #{resnet_block_forward.1} parent=11 // pred_check_branch
          %167 = sbr.rel (%p165) target = $region16
        $region15: #{resnet_block_forward.1} parent=11 // pred_region
          _
        $region16: #{resnet_block_forward.1} parent=11 // pred_fallthru
          _
        // Predicated region
        $region17: #{resnet_block_forward.1} parent=11 // pred_check
          %p168 = pneg %p82
        $region18: #{resnet_block_forward.1} parent=11 // pred_check_branch
          %170 = sbr.rel (%p168) target = $region20
        $region19: #{resnet_block_forward.1} parent=11 // pred_region
          _
        $region20: #{resnet_block_forward.1} parent=11 // pred_fallthru
          _
        // Predicated region
        $region21: #{resnet_block_forward.1} parent=11 // pred_check
          %p171 = pneg %p103
        $region22: #{resnet_block_forward.1} parent=11 // pred_check_branch
          %173 = sbr.rel (%p171) target = $region24
        $region23: #{resnet_block_forward.1} parent=11 // pred_region
          _
        $region24: #{resnet_block_forward.1} parent=11 // pred_fallthru
          _
        // Predicated region
        $region25: #{resnet_block_forward.1} parent=11 // pred_check
          %p174 = pneg %p124
        $region26: #{resnet_block_forward.1} parent=11 // pred_check_branch
          %176 = sbr.rel (%p174) target = $region28
        $region27: #{resnet_block_forward.1} parent=11 // pred_region
          _
        $region28: #{resnet_block_forward.1} parent=11 // pred_fallthru
          _
      $region12: #{resnet_block_forward.1} parent=5 // pred_fallthru
        _
      %p177 = scmp.lt.s32.totalorder %s14, 2
      // Predicated region
      $region29: #{resnet_block_forward.1} parent=5 // pred_check
        %p178 = pneg %p177
      $region30: #{resnet_block_forward.1} parent=5 // pred_check_branch
        %180 = sbr.rel (%p178) target = $region32
      $region31: #{resnet_block_forward.1} parent=5 // pred_region
        // Predicated region
        $region33: #{resnet_block_forward.1} parent=31 // pred_check
          %p181 = pneg %p34
        $region34: #{resnet_block_forward.1} parent=31 // pred_check_branch
          %183 = sbr.rel (%p181) target = $region36
        $region35: #{resnet_block_forward.1} parent=31 // pred_region
          %p184 = scmp.lt.s32.totalorder %s14, 1
          %s185 = scalar_select %p184, %s14, 1
          %s186 = smul.addr %s185, 32
          %s187 = smul.addr %s186, 8
          %s188 = scalar_lea.vmem %s0, %s187
        $region36: #{resnet_block_forward.1} parent=31 // pred_fallthru
          _
      $region32: #{resnet_block_forward.1} parent=5 // pred_fallthru
        _
      %p189 = scmp.le.s32.totalorder 1, %s14
      %p190 = scmp.lt.s32.totalorder %s14, 3
      %p191 = pnand %p189, %p190
      %p192 = pneg %p191
      // Predicated region
      $region37: #{resnet_block_forward.1} parent=5 // pred_check
        _
      $region38: #{resnet_block_forward.1} parent=5 // pred_check_branch
        %194 = sbr.rel (%p191) target = $region40
      $region39: #{resnet_block_forward.1} parent=5 // pred_region
        %s195 = ssub.s32 %s14, 1
        %p196 = scmp.lt.s32.totalorder %s19, 1
        %s197 = scalar_select %p196, %s19, 1
        %s198 = smul.addr %s197, 32
        %s199 = smul.addr %s198, 8
        %s200 = scalar_lea.vmem %s0, %s199
        %p201 = pneg %p40
        %p202 = pneg %p37
        %p203 = pneg %p61
        %p204 = pneg %p58
        %p205 = pneg %p82
        %p206 = pneg %p79
        %p207 = pneg %p103
        %p208 = pneg %p100
        %p209 = pneg %p124
        %p210 = pneg %p121
        %p211 = pneg %p150
        %p212 = pneg %p147
        %s213 = sand.u32 %s137, 1
        %s214 = scalar_lea.sflag [#allocation6], %s213
        %s215 = sand.u32 %s137, 1
        %s216 = smul.addr %s215, 256
        %s217 = scalar_lea.vmem [#allocation5], %s216
        %p218 = scmp.lt.s32.totalorder %s19, 1
        %s219 = scalar_select %p218, %s19, 1
        %s220 = smul.addr %s219, 32
        %s221 = smul.addr %s220, 8
        %s222 = scalar_lea.vmem %s0, %s221
        %v224 = vld [vmem:[%s222] sm:$0xff]
        %v225 = vld [vmem:[%s222 + $0x8] sm:$0xff]
        %v226 = vld [vmem:[%s222 + $0x10] sm:$0xff]
        %v227 = vld [vmem:[%s222 + $0x18] sm:$0xff]
        %v228 = vld [vmem:[%s222 + $0x20] sm:$0xff]
        %v229 = vld [vmem:[%s222 + $0x28] sm:$0xff]
        %v230 = vld [vmem:[%s222 + $0x30] sm:$0xff]
        %v231 = vld [vmem:[%s222 + $0x38] sm:$0xff]
        %v232 = vld [vmem:[%s222 + $0x40] sm:$0xff]
        %v233 = vld [vmem:[%s222 + $0x48] sm:$0xff]
        %v234 = vld [vmem:[%s222 + $0x50] sm:$0xff]
        %v235 = vld [vmem:[%s222 + $0x58] sm:$0xff]
        %v236 = vld [vmem:[%s222 + $0x60] sm:$0xff]
        %v237 = vld [vmem:[%s222 + $0x68] sm:$0xff]
        %v238 = vld [vmem:[%s222 + $0x70] sm:$0xff]
        %v239 = vld [vmem:[%s222 + $0x78] sm:$0xff]
        %v240 = vld [vmem:[%s222 + $0x80] sm:$0xff]
        %v241 = vld [vmem:[%s222 + $0x88] sm:$0xff]
        %v242 = vld [vmem:[%s222 + $0x90] sm:$0xff]
        %v243 = vld [vmem:[%s222 + $0x98] sm:$0xff]
        %v244 = vld [vmem:[%s222 + $0xa0] sm:$0xff]
        %v245 = vld [vmem:[%s222 + $0xa8] sm:$0xff]
        %v246 = vld [vmem:[%s222 + $0xb0] sm:$0xff]
        %v247 = vld [vmem:[%s222 + $0xb8] sm:$0xff]
        %v248 = vld [vmem:[%s222 + $0xc0] sm:$0xff]
        %v249 = vld [vmem:[%s222 + $0xc8] sm:$0xff]
        %v250 = vld [vmem:[%s222 + $0xd0] sm:$0xff]
        %v251 = vld [vmem:[%s222 + $0xd8] sm:$0xff]
        %v252 = vld [vmem:[%s222 + $0xe0] sm:$0xff]
        %v253 = vld [vmem:[%s222 + $0xe8] sm:$0xff]
        %v254 = vld [vmem:[%s222 + $0xf0] sm:$0xff]
        %v255 = vld [vmem:[%s222 + $0xf8] sm:$0xff]
        %s256 = scalar_lea.vmem [#allocation2], 24
        %257 = vst [vmem:[%s256 + $0x1] sm:$0xff] %v224
        %258 = vst [vmem:[%s256 + $0x9] sm:$0xff] %v225
        %259 = vst [vmem:[%s256 + $0x19] sm:$0xff] %v226
        %260 = vst [vmem:[%s256 + $0x21] sm:$0xff] %v227
        %261 = vst [vmem:[%s256 + $0x31] sm:$0xff] %v228
        %262 = vst [vmem:[%s256 + $0x39] sm:$0xff] %v229
        %263 = vst [vmem:[%s256 + $0x49] sm:$0xff] %v230
        %264 = vst [vmem:[%s256 + $0x51] sm:$0xff] %v231
        %265 = vst [vmem:[%s256 + $0x61] sm:$0xff] %v232
        %266 = vst [vmem:[%s256 + $0x69] sm:$0xff] %v233
        %267 = vst [vmem:[%s256 + $0x79] sm:$0xff] %v234
        %268 = vst [vmem:[%s256 + $0x81] sm:$0xff] %v235
        %269 = vst [vmem:[%s256 + $0x91] sm:$0xff] %v236
        %270 = vst [vmem:[%s256 + $0x99] sm:$0xff] %v237
        %271 = vst [vmem:[%s256 + $0xa9] sm:$0xff] %v238
        %272 = vst [vmem:[%s256 + $0xb1] sm:$0xff] %v239
        %273 = vst [vmem:[%s256 + $0xc1] sm:$0xff] %v240
        %274 = vst [vmem:[%s256 + $0xc9] sm:$0xff] %v241
        %275 = vst [vmem:[%s256 + $0xd9] sm:$0xff] %v242
        %276 = vst [vmem:[%s256 + $0xe1] sm:$0xff] %v243
        %277 = vst [vmem:[%s256 + $0xf1] sm:$0xff] %v244
        %278 = vst [vmem:[%s256 + $0xf9] sm:$0xff] %v245
        %279 = vst [vmem:[%s256 + $0x109] sm:$0xff] %v246
        %280 = vst [vmem:[%s256 + $0x111] sm:$0xff] %v247
        %281 = vst [vmem:[%s256 + $0x121] sm:$0xff] %v248
        %282 = vst [vmem:[%s256 + $0x129] sm:$0xff] %v249
        %283 = vst [vmem:[%s256 + $0x139] sm:$0xff] %v250
        %284 = vst [vmem:[%s256 + $0x141] sm:$0xff] %v251
        %285 = vst [vmem:[%s256 + $0x151] sm:$0xff] %v252
        %286 = vst [vmem:[%s256 + $0x159] sm:$0xff] %v253
        %287 = vst [vmem:[%s256 + $0x169] sm:$0xff] %v254
        %288 = vst [vmem:[%s256 + $0x171] sm:$0xff] %v255
        %289 = vst [vmem:[#allocation2 + $0x1] sm:$0xff] %v226
        %290 = vst [vmem:[#allocation2 + $0x9] sm:$0xff] %v227
        %s291 = scalar_lea.vmem [#allocation2], 408
        %292 = vst [vmem:[%s291 + $0x1] sm:$0xff] %v252
        %293 = vst [vmem:[%s291 + $0x9] sm:$0xff] %v253
        %v294 = vld [vmem:[#allocation2 + $0x2] sm:$0x1]
        %v295 = vld [vmem:[#allocation2 + $0x1a] sm:$0x1]
        %v296 = vld [vmem:[#allocation2 + $0x32] sm:$0x1]
        %v297 = vld [vmem:[#allocation2 + $0x4a] sm:$0x1]
        %v298 = vld [vmem:[#allocation2 + $0x62] sm:$0x1]
        %v299 = vld [vmem:[#allocation2 + $0x7a] sm:$0x1]
        %v300 = vld [vmem:[#allocation2 + $0x92] sm:$0x1]
        %v301 = vld [vmem:[#allocation2 + $0xaa] sm:$0x1]
        %v302 = vld [vmem:[#allocation2 + $0xc2] sm:$0x1]
        %v303 = vld [vmem:[#allocation2 + $0xda] sm:$0x1]
        %v304 = vld [vmem:[#allocation2 + $0xf2] sm:$0x1]
        %v305 = vld [vmem:[#allocation2 + $0x10a] sm:$0x1]
        %v306 = vld [vmem:[#allocation2 + $0x122] sm:$0x1]
        %v307 = vld [vmem:[#allocation2 + $0x13a] sm:$0x1]
        %v308 = vld [vmem:[#allocation2 + $0x152] sm:$0x1]
        %v309 = vld [vmem:[#allocation2 + $0x16a] sm:$0x1]
        %v310 = vld [vmem:[#allocation2 + $0x182] sm:$0x1]
        %v311 = vld [vmem:[#allocation2 + $0x19a] sm:$0x1]
        %312 = vst [vmem:[#allocation2] sm:$0x1] %v294
        %313 = vst [vmem:[#allocation2 + $0x18] sm:$0x1] %v295
        %314 = vst [vmem:[#allocation2 + $0x30] sm:$0x1] %v296
        %315 = vst [vmem:[#allocation2 + $0x48] sm:$0x1] %v297
        %316 = vst [vmem:[#allocation2 + $0x60] sm:$0x1] %v298
        %317 = vst [vmem:[#allocation2 + $0x78] sm:$0x1] %v299
        %318 = vst [vmem:[#allocation2 + $0x90] sm:$0x1] %v300
        %319 = vst [vmem:[#allocation2 + $0xa8] sm:$0x1] %v301
        %320 = vst [vmem:[#allocation2 + $0xc0] sm:$0x1] %v302
        %321 = vst [vmem:[#allocation2 + $0xd8] sm:$0x1] %v303
        %322 = vst [vmem:[#allocation2 + $0xf0] sm:$0x1] %v304
        %323 = vst [vmem:[#allocation2 + $0x108] sm:$0x1] %v305
        %324 = vst [vmem:[#allocation2 + $0x120] sm:$0x1] %v306
        %325 = vst [vmem:[#allocation2 + $0x138] sm:$0x1] %v307
        %326 = vst [vmem:[#allocation2 + $0x150] sm:$0x1] %v308
        %327 = vst [vmem:[#allocation2 + $0x168] sm:$0x1] %v309
        %328 = vst [vmem:[#allocation2 + $0x180] sm:$0x1] %v310
        %329 = vst [vmem:[#allocation2 + $0x198] sm:$0x1] %v311
        %v330 = vld [vmem:[#allocation2 + $0xf] sm:$0x1]
        %v331 = vld [vmem:[#allocation2 + $0x27] sm:$0x1]
        %v332 = vld [vmem:[#allocation2 + $0x3f] sm:$0x1]
        %v333 = vld [vmem:[#allocation2 + $0x57] sm:$0x1]
        %v334 = vld [vmem:[#allocation2 + $0x6f] sm:$0x1]
        %v335 = vld [vmem:[#allocation2 + $0x87] sm:$0x1]
        %v336 = vld [vmem:[#allocation2 + $0x9f] sm:$0x1]
        %v337 = vld [vmem:[#allocation2 + $0xb7] sm:$0x1]
        %v338 = vld [vmem:[#allocation2 + $0xcf] sm:$0x1]
        %v339 = vld [vmem:[#allocation2 + $0xe7] sm:$0x1]
        %v340 = vld [vmem:[#allocation2 + $0xff] sm:$0x1]
        %v341 = vld [vmem:[#allocation2 + $0x117] sm:$0x1]
        %v342 = vld [vmem:[#allocation2 + $0x12f] sm:$0x1]
        %v343 = vld [vmem:[#allocation2 + $0x147] sm:$0x1]
        %v344 = vld [vmem:[#allocation2 + $0x15f] sm:$0x1]
        %v345 = vld [vmem:[#allocation2 + $0x177] sm:$0x1]
        %v346 = vld [vmem:[#allocation2 + $0x18f] sm:$0x1]
        %v347 = vld [vmem:[#allocation2 + $0x1a7] sm:$0x1]
        %348 = vst [vmem:[#allocation2 + $0x11] sm:$0x1] %v330
        %349 = vst [vmem:[#allocation2 + $0x29] sm:$0x1] %v331
        %350 = vst [vmem:[#allocation2 + $0x41] sm:$0x1] %v332
        %351 = vst [vmem:[#allocation2 + $0x59] sm:$0x1] %v333
        %352 = vst [vmem:[#allocation2 + $0x71] sm:$0x1] %v334
        %353 = vst [vmem:[#allocation2 + $0x89] sm:$0x1] %v335
        %354 = vst [vmem:[#allocation2 + $0xa1] sm:$0x1] %v336
        %355 = vst [vmem:[#allocation2 + $0xb9] sm:$0x1] %v337
        %356 = vst [vmem:[#allocation2 + $0xd1] sm:$0x1] %v338
        %357 = vst [vmem:[#allocation2 + $0xe9] sm:$0x1] %v339
        %358 = vst [vmem:[#allocation2 + $0x101] sm:$0x1] %v340
        %359 = vst [vmem:[#allocation2 + $0x119] sm:$0x1] %v341
        %360 = vst [vmem:[#allocation2 + $0x131] sm:$0x1] %v342
        %361 = vst [vmem:[#allocation2 + $0x149] sm:$0x1] %v343
        %362 = vst [vmem:[#allocation2 + $0x161] sm:$0x1] %v344
        %363 = vst [vmem:[#allocation2 + $0x179] sm:$0x1] %v345
        %364 = vst [vmem:[#allocation2 + $0x191] sm:$0x1] %v346
        %365 = vst [vmem:[#allocation2 + $0x1a9] sm:$0x1] %v347
        %366 = vst [vmem:[#allocation4] sm:$0xff] 0.0
        %367 = vst [vmem:[#allocation4 + $0x8] sm:$0xff] 0.0
        %368 = vst [vmem:[#allocation4 + $0x10] sm:$0xff] 0.0
        %369 = vst [vmem:[#allocation4 + $0x18] sm:$0xff] 0.0
        %370 = vst [vmem:[#allocation4 + $0x20] sm:$0xff] 0.0
        %371 = vst [vmem:[#allocation4 + $0x28] sm:$0xff] 0.0
        %372 = vst [vmem:[#allocation4 + $0x30] sm:$0xff] 0.0
        %373 = vst [vmem:[#allocation4 + $0x38] sm:$0xff] 0.0
        %374 = vst [vmem:[#allocation4 + $0x40] sm:$0xff] 0.0
        %375 = vst [vmem:[#allocation4 + $0x48] sm:$0xff] 0.0
        %376 = vst [vmem:[#allocation4 + $0x50] sm:$0xff] 0.0
        %377 = vst [vmem:[#allocation4 + $0x58] sm:$0xff] 0.0
        %378 = vst [vmem:[#allocation4 + $0x60] sm:$0xff] 0.0
        %379 = vst [vmem:[#allocation4 + $0x68] sm:$0xff] 0.0
        %380 = vst [vmem:[#allocation4 + $0x70] sm:$0xff] 0.0
        %381 = vst [vmem:[#allocation4 + $0x78] sm:$0xff] 0.0
        %382 = vst [vmem:[#allocation4 + $0x80] sm:$0xff] 0.0
        %383 = vst [vmem:[#allocation4 + $0x88] sm:$0xff] 0.0
        %384 = vst [vmem:[#allocation4 + $0x90] sm:$0xff] 0.0
        %385 = vst [vmem:[#allocation4 + $0x98] sm:$0xff] 0.0
        %386 = vst [vmem:[#allocation4 + $0xa0] sm:$0xff] 0.0
        %387 = vst [vmem:[#allocation4 + $0xa8] sm:$0xff] 0.0
        %388 = vst [vmem:[#allocation4 + $0xb0] sm:$0xff] 0.0
        %389 = vst [vmem:[#allocation4 + $0xb8] sm:$0xff] 0.0
        %390 = vst [vmem:[#allocation4 + $0xc0] sm:$0xff] 0.0
        %391 = vst [vmem:[#allocation4 + $0xc8] sm:$0xff] 0.0
        %392 = vst [vmem:[#allocation4 + $0xd0] sm:$0xff] 0.0
        %393 = vst [vmem:[#allocation4 + $0xd8] sm:$0xff] 0.0
        %394 = vst [vmem:[#allocation4 + $0xe0] sm:$0xff] 0.0
        %395 = vst [vmem:[#allocation4 + $0xe8] sm:$0xff] 0.0
        %396 = vst [vmem:[#allocation4 + $0xf0] sm:$0xff] 0.0
        %397 = vst [vmem:[#allocation4 + $0xf8] sm:$0xff] 0.0
        %v398 = vld [vmem:[#allocation2] sm:$0xff]
        %v399 = vld [vmem:[#allocation2 + $0x8] sm:$0xff]
        %v400 = vld [vmem:[#allocation2 + $0x18] sm:$0xff]
        %v401 = vld [vmem:[#allocation2 + $0x20] sm:$0xff]
        %v402 = vld [vmem:[#allocation2 + $0x30] sm:$0xff]
        %v403 = vld [vmem:[#allocation2 + $0x38] sm:$0xff]
        %v404 = vld [vmem:[#allocation2 + $0x48] sm:$0xff]
        %v405 = vld [vmem:[#allocation2 + $0x50] sm:$0xff]
        %v406 = vld [vmem:[#allocation2 + $0x60] sm:$0xff]
        %v407 = vld [vmem:[#allocation2 + $0x68] sm:$0xff]
        %v408 = vld [vmem:[#allocation2 + $0x78] sm:$0xff]
        %v409 = vld [vmem:[#allocation2 + $0x80] sm:$0xff]
        %v410 = vld [vmem:[#allocation2 + $0x90] sm:$0xff]
        %v411 = vld [vmem:[#allocation2 + $0x98] sm:$0xff]
        %v412 = vld [vmem:[#allocation2 + $0xa8] sm:$0xff]
        %v413 = vld [vmem:[#allocation2 + $0xb0] sm:$0xff]
        %v414 = vld [vmem:[#allocation2 + $0xc0] sm:$0xff]
        %v415 = vld [vmem:[#allocation2 + $0xc8] sm:$0xff]
        %v416 = vld [vmem:[#allocation2 + $0xd8] sm:$0xff]
        %v417 = vld [vmem:[#allocation2 + $0xe0] sm:$0xff]
        %v418 = vld [vmem:[#allocation2 + $0xf0] sm:$0xff]
        %v419 = vld [vmem:[#allocation2 + $0xf8] sm:$0xff]
        %v420 = vld [vmem:[#allocation2 + $0x108] sm:$0xff]
        %v421 = vld [vmem:[#allocation2 + $0x110] sm:$0xff]
        %v422 = vld [vmem:[#allocation2 + $0x120] sm:$0xff]
        %v423 = vld [vmem:[#allocation2 + $0x128] sm:$0xff]
        %v424 = vld [vmem:[#allocation2 + $0x138] sm:$0xff]
        %v425 = vld [vmem:[#allocation2 + $0x140] sm:$0xff]
        %v426 = vld [vmem:[#allocation2 + $0x150] sm:$0xff]
        %v427 = vld [vmem:[#allocation2 + $0x158] sm:$0xff]
        %v428 = vld [vmem:[#allocation2 + $0x168] sm:$0xff]
        %v429 = vld [vmem:[#allocation2 + $0x170] sm:$0xff]
        %v430 = vld [vmem:[#allocation2 + $0x180] sm:$0xff]
        %v431 = vld [vmem:[#allocation2 + $0x188] sm:$0xff]
        %v432 = vld [vmem:[#allocation2 + $0x198] sm:$0xff]
        %v433 = vld [vmem:[#allocation2 + $0x1a0] sm:$0xff]
        %v434 = vpack.c.bf16 %v399, %v398
        %v435 = vpack.c.bf16 %v401, %v400
        %v436 = vpack.c.bf16 %v403, %v402
        %v437 = vpack.c.bf16 %v405, %v404
        %v438 = vpack.c.bf16 %v407, %v406
        %v439 = vpack.c.bf16 %v409, %v408
        %v440 = vpack.c.bf16 %v411, %v410
        %v441 = vpack.c.bf16 %v413, %v412
        %v442 = vpack.c.bf16 %v415, %v414
        %v443 = vpack.c.bf16 %v417, %v416
        %v444 = vpack.c.bf16 %v419, %v418
        %v445 = vpack.c.bf16 %v421, %v420
        %v446 = vpack.c.bf16 %v423, %v422
        %v447 = vpack.c.bf16 %v425, %v424
        %v448 = vpack.c.bf16 %v427, %v426
        %v449 = vpack.c.bf16 %v429, %v428
        %v450 = vpack.c.bf16 %v431, %v430
        %v451 = vpack.c.bf16 %v433, %v432
        %452 = vst [vmem:[#allocation3] sm:$0xff] %v434
        %453 = vst [vmem:[#allocation3 + $0x8] sm:$0xff] %v435
        %454 = vst [vmem:[#allocation3 + $0x10] sm:$0xff] %v436
        %455 = vst [vmem:[#allocation3 + $0x18] sm:$0xff] %v437
        %456 = vst [vmem:[#allocation3 + $0x20] sm:$0xff] %v438
        %457 = vst [vmem:[#allocation3 + $0x28] sm:$0xff] %v439
        %458 = vst [vmem:[#allocation3 + $0x30] sm:$0xff] %v440
        %459 = vst [vmem:[#allocation3 + $0x38] sm:$0xff] %v441
        %460 = vst [vmem:[#allocation3 + $0x40] sm:$0xff] %v442
        %461 = vst [vmem:[#allocation3 + $0x48] sm:$0xff] %v443
        %462 = vst [vmem:[#allocation3 + $0x50] sm:$0xff] %v444
        %463 = vst [vmem:[#allocation3 + $0x58] sm:$0xff] %v445
        %464 = vst [vmem:[#allocation3 + $0x60] sm:$0xff] %v446
        %465 = vst [vmem:[#allocation3 + $0x68] sm:$0xff] %v447
        %466 = vst [vmem:[#allocation3 + $0x70] sm:$0xff] %v448
        %467 = vst [vmem:[#allocation3 + $0x78] sm:$0xff] %v449
        %468 = vst [vmem:[#allocation3 + $0x80] sm:$0xff] %v450
        %469 = vst [vmem:[#allocation3 + $0x88] sm:$0xff] %v451
        %v470 = vld [vmem:[#allocation4] sm:$0xff]
        %v471 = vld [vmem:[#allocation4 + $0x8] sm:$0xff]
        %v472 = vld [vmem:[#allocation4 + $0x10] sm:$0xff]
        %v473 = vld [vmem:[#allocation4 + $0x18] sm:$0xff]
        %v474 = vld [vmem:[#allocation4 + $0x20] sm:$0xff]
        %v475 = vld [vmem:[#allocation4 + $0x28] sm:$0xff]
        %v476 = vld [vmem:[#allocation4 + $0x30] sm:$0xff]
        %v477 = vld [vmem:[#allocation4 + $0x38] sm:$0xff]
        %v478 = vld [vmem:[#allocation4 + $0x40] sm:$0xff]
        %v479 = vld [vmem:[#allocation4 + $0x48] sm:$0xff]
        %v480 = vld [vmem:[#allocation4 + $0x50] sm:$0xff]
        %v481 = vld [vmem:[#allocation4 + $0x58] sm:$0xff]
        %v482 = vld [vmem:[#allocation4 + $0x60] sm:$0xff]
        %v483 = vld [vmem:[#allocation4 + $0x68] sm:$0xff]
        %v484 = vld [vmem:[#allocation4 + $0x70] sm:$0xff]
        %v485 = vld [vmem:[#allocation4 + $0x78] sm:$0xff]
        %v486 = vld [vmem:[#allocation4 + $0x80] sm:$0xff]
        %v487 = vld [vmem:[#allocation4 + $0x88] sm:$0xff]
        %v488 = vld [vmem:[#allocation4 + $0x90] sm:$0xff]
        %v489 = vld [vmem:[#allocation4 + $0x98] sm:$0xff]
        %v490 = vld [vmem:[#allocation4 + $0xa0] sm:$0xff]
        %v491 = vld [vmem:[#allocation4 + $0xa8] sm:$0xff]
        %v492 = vld [vmem:[#allocation4 + $0xb0] sm:$0xff]
        %v493 = vld [vmem:[#allocation4 + $0xb8] sm:$0xff]
        %v494 = vld [vmem:[#allocation4 + $0xc0] sm:$0xff]
        %v495 = vld [vmem:[#allocation4 + $0xc8] sm:$0xff]
        %v496 = vld [vmem:[#allocation4 + $0xd0] sm:$0xff]
        %v497 = vld [vmem:[#allocation4 + $0xd8] sm:$0xff]
        %v498 = vld [vmem:[#allocation4 + $0xe0] sm:$0xff]
        %v499 = vld [vmem:[#allocation4 + $0xe8] sm:$0xff]
        %v500 = vld [vmem:[#allocation4 + $0xf0] sm:$0xff]
        %v501 = vld [vmem:[#allocation4 + $0xf8] sm:$0xff]
        %v502 = vld [vmem:[#allocation3] sm:$0xff]
        %v503 = vld [vmem:[#allocation3 + $0x8] sm:$0xff]
        %v504 = vld [vmem:[#allocation3 + $0x10] sm:$0xff]
        %v505 = vld [vmem:[#allocation3 + $0x18] sm:$0xff]
        %v506 = vld [vmem:[#allocation3 + $0x20] sm:$0xff]
        %v507 = vld [vmem:[#allocation3 + $0x28] sm:$0xff]
        %v508 = vld [vmem:[#allocation3 + $0x30] sm:$0xff]
        %v509 = vld [vmem:[#allocation3 + $0x38] sm:$0xff]
        %v510 = vld [vmem:[#allocation3 + $0x40] sm:$0xff]
        %v511 = vld [vmem:[#allocation3 + $0x48] sm:$0xff]
        %v512 = vld [vmem:[#allocation3 + $0x50] sm:$0xff]
        %v513 = vld [vmem:[#allocation3 + $0x58] sm:$0xff]
        %v514 = vld [vmem:[#allocation3 + $0x60] sm:$0xff]
        %v515 = vld [vmem:[#allocation3 + $0x68] sm:$0xff]
        %v516 = vld [vmem:[#allocation3 + $0x70] sm:$0xff]
        %v517 = vld [vmem:[#allocation3 + $0x78] sm:$0xff]
        %v518 = vld [vmem:[%s1] sm:$0xf]
        %v519 = vld [vmem:[%s1 + $0x4] sm:$0xf]
        %v520 = vld [vmem:[%s1 + $0x8] sm:$0xf]
        %v521 = vld [vmem:[%s1 + $0xc] sm:$0xf]
        %v522 = vld [vmem:[%s1 + $0x10] sm:$0xf]
        %v523 = vld [vmem:[%s1 + $0x14] sm:$0xf]
        %v524 = vld [vmem:[%s1 + $0x18] sm:$0xf]
        %v525 = vld [vmem:[%s1 + $0x1c] sm:$0xf]
        %v526 = vld [vmem:[%s1 + $0x20] sm:$0xf]
        %v527 = vld [vmem:[%s1 + $0x24] sm:$0xf]
        %v528 = vld [vmem:[%s1 + $0x28] sm:$0xf]
        %v529 = vld [vmem:[%s1 + $0x2c] sm:$0xf]
        %v530 = vld [vmem:[%s1 + $0x30] sm:$0xf]
        %v531 = vld [vmem:[%s1 + $0x34] sm:$0xf]
        %v532 = vld [vmem:[%s1 + $0x38] sm:$0xf]
        %v533 = vld [vmem:[%s1 + $0x3c] sm:$0xf]
        %v550 = vunpack.c.l.b16 %v518
        %v551 = vunpack.c.l.b16 %v519
        %v552 = vunpack.c.l.b16 %v520
        %v553 = vunpack.c.l.b16 %v521
        %v554 = vunpack.c.l.b16 %v522
        %v555 = vunpack.c.l.b16 %v523
        %v556 = vunpack.c.l.b16 %v524
        %v557 = vunpack.c.l.b16 %v525
        %v558 = vunpack.c.l.b16 %v526
        %v559 = vunpack.c.l.b16 %v527
        %v560 = vunpack.c.l.b16 %v528
        %v561 = vunpack.c.l.b16 %v529
        %v562 = vunpack.c.l.b16 %v530
        %v563 = vunpack.c.l.b16 %v531
        %v564 = vunpack.c.l.b16 %v532
        %v565 = vunpack.c.l.b16 %v533
        %v566 = vpack.c.b16 %v551, %v550
        %v567 = vpack.c.b16 %v553, %v552
        %v568 = vpack.c.b16 %v555, %v554
        %v569 = vpack.c.b16 %v557, %v556
        %v570 = vpack.c.b16 %v559, %v558
        %v571 = vpack.c.b16 %v561, %v560
        %v572 = vpack.c.b16 %v563, %v562
        %v573 = vpack.c.b16 %v565, %v564
        %582 = vmatprep.subr.bf16.mxu0 0
        %583 = vmatpush1.bf16.msra.mxu0 %v566
        %584 = vmatprep.subr.bf16.mxu0 0
        %585 = vmatpush1.bf16.msra.mxu0 %v567
        %586 = vmatprep.subr.bf16.mxu0 0
        %587 = vmatpush1.bf16.msra.mxu0 %v568
        %588 = vmatprep.subr.bf16.mxu0 0
        %589 = vmatpush1.bf16.msra.mxu0 %v569
        %590 = vmatprep.subr.bf16.mxu0 0
        %591 = vmatpush1.bf16.msra.mxu0 %v570
        %592 = vmatprep.subr.bf16.mxu0 0
        %593 = vmatpush1.bf16.msra.mxu0 %v571
        %594 = vmatprep.subr.bf16.mxu0 0
        %595 = vmatpush1.bf16.msra.mxu0 %v572
        %596 = vmatprep.subr.bf16.mxu0 0
        %597 = vmatpush1.bf16.msra.mxu0 %v573
        %598 = vmatprep.subr.bf16.mxu0 0
        %599 = vmatpush1.bf16.msra.mxu0 0
        %600 = vmatprep.subr.bf16.mxu0 0
        %601 = vmatpush1.bf16.msra.mxu0 0
        %602 = vmatprep.subr.bf16.mxu0 0
        %603 = vmatpush1.bf16.msra.mxu0 0
        %604 = vmatprep.subr.bf16.mxu0 0
        %605 = vmatpush1.bf16.msra.mxu0 0
        %606 = vmatprep.subr.bf16.mxu0 0
        %607 = vmatpush1.bf16.msra.mxu0 0
        %608 = vmatprep.subr.bf16.mxu0 0
        %609 = vmatpush1.bf16.msra.mxu0 0
        %610 = vmatprep.subr.bf16.mxu0 0
        %611 = vmatpush1.bf16.msra.mxu0 0
        %612 = vmatprep.subr.bf16.mxu0 0
        %613 = vmatpush1.bf16.msra.mxu0 0
        %614 = vmatprep.mubr.bf16.mxu0 0
        %615 = vmatmul.mubr.bf16.gmra.mrb[0].mxu0 %v502
        %v616 = vpop.f32.mrb[0].mxu0
        %v617 = vadd.f32 0.0, %v616
        %v618 = vpop.f32.mrb[0].mxu0
        %v619 = vpop.f32.mrb[0].mxu0
        %v620 = vadd.f32 0.0, %v619
        %v621 = vpop.f32.mrb[0].mxu0
        %622 = vmatprep.mubr.bf16.mxu0 0
        %623 = vmatmul.mubr.bf16.gmra.mrb[0].mxu0 %v503
        %v624 = vpop.f32.mrb[0].mxu0
        %v625 = vadd.f32 0.0, %v624
        %v626 = vpop.f32.mrb[0].mxu0
        %v627 = vpop.f32.mrb[0].mxu0
        %v628 = vadd.f32 0.0, %v627
        %v629 = vpop.f32.mrb[0].mxu0
        %630 = vmatprep.mubr.bf16.mxu0 0
        %631 = vmatmul.mubr.bf16.gmra.mrb[0].mxu0 %v504
        %v632 = vpop.f32.mrb[0].mxu0
        %v633 = vadd.f32 0.0, %v632
        %v634 = vpop.f32.mrb[0].mxu0
        %v635 = vpop.f32.mrb[0].mxu0
        %v636 = vadd.f32 0.0, %v635
        %v637 = vpop.f32.mrb[0].mxu0
        %638 = vmatprep.mubr.bf16.mxu0 0
        %639 = vmatmul.mubr.bf16.gmra.mrb[0].mxu0 %v505
        %v640 = vpop.f32.mrb[0].mxu0
        %v641 = vadd.f32 0.0, %v640
        %v642 = vpop.f32.mrb[0].mxu0
        %v643 = vpop.f32.mrb[0].mxu0
        %v644 = vadd.f32 0.0, %v643
        %v645 = vpop.f32.mrb[0].mxu0
        %646 = vmatprep.mubr.bf16.mxu0 0
        %647 = vmatmul.mubr.bf16.gmra.mrb[0].mxu0 %v506
        %v648 = vpop.f32.mrb[0].mxu0
        %v649 = vadd.f32 0.0, %v648
        %v650 = vpop.f32.mrb[0].mxu0
        %v651 = vpop.f32.mrb[0].mxu0
        %v652 = vadd.f32 0.0, %v651
        %v653 = vpop.f32.mrb[0].mxu0
        %654 = vmatprep.mubr.bf16.mxu0 0
        %655 = vmatmul.mubr.bf16.gmra.mrb[0].mxu0 %v507
        %v656 = vpop.f32.mrb[0].mxu0
        %v657 = vadd.f32 0.0, %v656
        %v658 = vpop.f32.mrb[0].mxu0
        %v659 = vpop.f32.mrb[0].mxu0
        %v660 = vadd.f32 0.0, %v659
        %v661 = vpop.f32.mrb[0].mxu0
        %662 = vmatprep.mubr.bf16.mxu0 0
        %663 = vmatmul.mubr.bf16.gmra.mrb[0].mxu0 %v508
        %v664 = vpop.f32.mrb[0].mxu0
        %v665 = vadd.f32 0.0, %v664
        %v666 = vpop.f32.mrb[0].mxu0
        %v667 = vpop.f32.mrb[0].mxu0
        %v668 = vadd.f32 0.0, %v667
        %v669 = vpop.f32.mrb[0].mxu0
        %670 = vmatprep.mubr.bf16.mxu0 0
        %671 = vmatmul.mubr.bf16.gmra.mrb[0].mxu0 %v509
        %v672 = vpop.f32.mrb[0].mxu0
        %v673 = vadd.f32 0.0, %v672
        %v674 = vpop.f32.mrb[0].mxu0
        %v675 = vpop.f32.mrb[0].mxu0
        %v676 = vadd.f32 0.0, %v675
        %v677 = vpop.f32.mrb[0].mxu0
        %678 = vmatprep.mubr.bf16.mxu0 0
        %679 = vmatmul.mubr.bf16.gmra.mrb[0].mxu0 %v510
        %v680 = vpop.f32.mrb[0].mxu0
        %v681 = vadd.f32 0.0, %v680
        %v682 = vpop.f32.mrb[0].mxu0
        %v683 = vpop.f32.mrb[0].mxu0
        %v684 = vadd.f32 0.0, %v683
        %v685 = vpop.f32.mrb[0].mxu0
        %686 = vmatprep.mubr.bf16.mxu0 0
        %687 = vmatmul.mubr.bf16.gmra.mrb[0].mxu0 %v511
        %v688 = vpop.f32.mrb[0].mxu0
        %v689 = vadd.f32 0.0, %v688
        %v690 = vpop.f32.mrb[0].mxu0
        %v691 = vpop.f32.mrb[0].mxu0
        %v692 = vadd.f32 0.0, %v691
        %v693 = vpop.f32.mrb[0].mxu0
        %694 = vmatprep.mubr.bf16.mxu0 0
        %695 = vmatmul.mubr.bf16.gmra.mrb[0].mxu0 %v512
        %v696 = vpop.f32.mrb[0].mxu0
        %v697 = vadd.f32 0.0, %v696
        %v698 = vpop.f32.mrb[0].mxu0
        %v699 = vpop.f32.mrb[0].mxu0
        %v700 = vadd.f32 0.0, %v699
        %v701 = vpop.f32.mrb[0].mxu0
        %702 = vmatprep.mubr.bf16.mxu0 0
        %703 = vmatmul.mubr.bf16.gmra.mrb[0].mxu0 %v513
        %v704 = vpop.f32.mrb[0].mxu0
        %v705 = vadd.f32 0.0, %v704
        %v706 = vpop.f32.mrb[0].mxu0
        %v707 = vpop.f32.mrb[0].mxu0
        %v708 = vadd.f32 0.0, %v707
        %v709 = vpop.f32.mrb[0].mxu0
        %710 = vmatprep.mubr.bf16.mxu0 0
        %711 = vmatmul.mubr.bf16.gmra.mrb[0].mxu0 %v514
        %v712 = vpop.f32.mrb[0].mxu0
        %v713 = vadd.f32 0.0, %v712
        %v714 = vpop.f32.mrb[0].mxu0
        %v715 = vpop.f32.mrb[0].mxu0
        %v716 = vadd.f32 0.0, %v715
        %v717 = vpop.f32.mrb[0].mxu0
        %718 = vmatprep.mubr.bf16.mxu0 0
        %719 = vmatmul.mubr.bf16.gmra.mrb[0].mxu0 %v515
        %v720 = vpop.f32.mrb[0].mxu0
        %v721 = vadd.f32 0.0, %v720
        %v722 = vpop.f32.mrb[0].mxu0
        %v723 = vpop.f32.mrb[0].mxu0
        %v724 = vadd.f32 0.0, %v723
        %v725 = vpop.f32.mrb[0].mxu0
        %726 = vmatprep.mubr.bf16.mxu0 0
        %727 = vmatmul.mubr.bf16.gmra.mrb[0].mxu0 %v516
        %v728 = vpop.f32.mrb[0].mxu0
        %v729 = vadd.f32 0.0, %v728
        %v730 = vpop.f32.mrb[0].mxu0
        %v731 = vpop.f32.mrb[0].mxu0
        %v732 = vadd.f32 0.0, %v731
        %v733 = vpop.f32.mrb[0].mxu0
        %734 = vmatprep.mubr.bf16.mxu0 0
        %735 = vmatmul.mubr.bf16.gmra.mrb[0].mxu0 %v517
        %v736 = vpop.f32.mrb[0].mxu0
        %v737 = vadd.f32 0.0, %v736
        %v738 = vpop.f32.mrb[0].mxu0
        %v739 = vpop.f32.mrb[0].mxu0
        %v740 = vadd.f32 0.0, %v739
        %v741 = vpop.f32.mrb[0].mxu0
        %742 = vdwg.mxu0
        %v743 = vadd.f32 %v470, %v617
        %v744 = vadd.f32 %v471, %v620
        %v745 = vadd.f32 %v472, %v625
        %v746 = vadd.f32 %v473, %v628
        %v747 = vadd.f32 %v474, %v633
        %v748 = vadd.f32 %v475, %v636
        %v749 = vadd.f32 %v476, %v641
        %v750 = vadd.f32 %v477, %v644
        %v751 = vadd.f32 %v478, %v649
        %v752 = vadd.f32 %v479, %v652
        %v753 = vadd.f32 %v480, %v657
        %v754 = vadd.f32 %v481, %v660
        %v755 = vadd.f32 %v482, %v665
        %v756 = vadd.f32 %v483, %v668
        %v757 = vadd.f32 %v484, %v673
        %v758 = vadd.f32 %v485, %v676
        %v759 = vadd.f32 %v486, %v681
        %v760 = vadd.f32 %v487, %v684
        %v761 = vadd.f32 %v488, %v689
        %v762 = vadd.f32 %v489, %v692
        %v763 = vadd.f32 %v490, %v697
        %v764 = vadd.f32 %v491, %v700
        %v765 = vadd.f32 %v492, %v705
        %v766 = vadd.f32 %v493, %v708
        %v767 = vadd.f32 %v494, %v713
        %v768 = vadd.f32 %v495, %v716
        %v769 = vadd.f32 %v496, %v721
        %v770 = vadd.f32 %v497, %v724
        %v771 = vadd.f32 %v498, %v729
        %v772 = vadd.f32 %v499, %v732
        %v773 = vadd.f32 %v500, %v737
        %v774 = vadd.f32 %v501, %v740
        %775 = vst [vmem:[#allocation4] sm:$0xff] %v743
        %776 = vst [vmem:[#allocation4 + $0x8] sm:$0xff] %v744
        %777 = vst [vmem:[#allocation4 + $0x10] sm:$0xff] %v745
        %778 = vst [vmem:[#allocation4 + $0x18] sm:$0xff] %v746
        %779 = vst [vmem:[#allocation4 + $0x20] sm:$0xff] %v747
        %780 = vst [vmem:[#allocation4 + $0x28] sm:$0xff] %v748
        %781 = vst [vmem:[#allocation4 + $0x30] sm:$0xff] %v749
        %782 = vst [vmem:[#allocation4 + $0x38] sm:$0xff] %v750
        %783 = vst [vmem:[#allocation4 + $0x40] sm:$0xff] %v751
        %784 = vst [vmem:[#allocation4 + $0x48] sm:$0xff] %v752
        %785 = vst [vmem:[#allocation4 + $0x50] sm:$0xff] %v753
        %786 = vst [vmem:[#allocation4 + $0x58] sm:$0xff] %v754
        %787 = vst [vmem:[#allocation4 + $0x60] sm:$0xff] %v755
        %788 = vst [vmem:[#allocation4 + $0x68] sm:$0xff] %v756
        %789 = vst [vmem:[#allocation4 + $0x70] sm:$0xff] %v757
        %790 = vst [vmem:[#allocation4 + $0x78] sm:$0xff] %v758
        %791 = vst [vmem:[#allocation4 + $0x80] sm:$0xff] %v759
        %792 = vst [vmem:[#allocation4 + $0x88] sm:$0xff] %v760
        %793 = vst [vmem:[#allocation4 + $0x90] sm:$0xff] %v761
        %794 = vst [vmem:[#allocation4 + $0x98] sm:$0xff] %v762
        %795 = vst [vmem:[#allocation4 + $0xa0] sm:$0xff] %v763
        %796 = vst [vmem:[#allocation4 + $0xa8] sm:$0xff] %v764
        %797 = vst [vmem:[#allocation4 + $0xb0] sm:$0xff] %v765
        %798 = vst [vmem:[#allocation4 + $0xb8] sm:$0xff] %v766
        %799 = vst [vmem:[#allocation4 + $0xc0] sm:$0xff] %v767
        %800 = vst [vmem:[#allocation4 + $0xc8] sm:$0xff] %v768
        %801 = vst [vmem:[#allocation4 + $0xd0] sm:$0xff] %v769
        %802 = vst [vmem:[#allocation4 + $0xd8] sm:$0xff] %v770
        %803 = vst [vmem:[#allocation4 + $0xe0] sm:$0xff] %v771
        %804 = vst [vmem:[#allocation4 + $0xe8] sm:$0xff] %v772
        %805 = vst [vmem:[#allocation4 + $0xf0] sm:$0xff] %v773
        %806 = vst [vmem:[#allocation4 + $0xf8] sm:$0xff] %v774
        %v807 = vld [vmem:[#allocation4] sm:$0xff]
        %v808 = vld [vmem:[#allocation4 + $0x8] sm:$0xff]
        %v809 = vld [vmem:[#allocation4 + $0x10] sm:$0xff]
        %v810 = vld [vmem:[#allocation4 + $0x18] sm:$0xff]
        %v811 = vld [vmem:[#allocation4 + $0x20] sm:$0xff]
        %v812 = vld [vmem:[#allocation4 + $0x28] sm:$0xff]
        %v813 = vld [vmem:[#allocation4 + $0x30] sm:$0xff]
        %v814 = vld [vmem:[#allocation4 + $0x38] sm:$0xff]
        %v815 = vld [vmem:[#allocation4 + $0x40] sm:$0xff]
        %v816 = vld [vmem:[#allocation4 + $0x48] sm:$0xff]
        %v817 = vld [vmem:[#allocation4 + $0x50] sm:$0xff]
        %v818 = vld [vmem:[#allocation4 + $0x58] sm:$0xff]
        %v819 = vld [vmem:[#allocation4 + $0x60] sm:$0xff]
        %v820 = vld [vmem:[#allocation4 + $0x68] sm:$0xff]
        %v821 = vld [vmem:[#allocation4 + $0x70] sm:$0xff]
        %v822 = vld [vmem:[#allocation4 + $0x78] sm:$0xff]
        %v823 = vld [vmem:[#allocation4 + $0x80] sm:$0xff]
        %v824 = vld [vmem:[#allocation4 + $0x88] sm:$0xff]
        %v825 = vld [vmem:[#allocation4 + $0x90] sm:$0xff]
        %v826 = vld [vmem:[#allocation4 + $0x98] sm:$0xff]
        %v827 = vld [vmem:[#allocation4 + $0xa0] sm:$0xff]
        %v828 = vld [vmem:[#allocation4 + $0xa8] sm:$0xff]
        %v829 = vld [vmem:[#allocation4 + $0xb0] sm:$0xff]
        %v830 = vld [vmem:[#allocation4 + $0xb8] sm:$0xff]
        %v831 = vld [vmem:[#allocation4 + $0xc0] sm:$0xff]
        %v832 = vld [vmem:[#allocation4 + $0xc8] sm:$0xff]
        %v833 = vld [vmem:[#allocation4 + $0xd0] sm:$0xff]
        %v834 = vld [vmem:[#allocation4 + $0xd8] sm:$0xff]
        %v835 = vld [vmem:[#allocation4 + $0xe0] sm:$0xff]
        %v836 = vld [vmem:[#allocation4 + $0xe8] sm:$0xff]
        %v837 = vld [vmem:[#allocation4 + $0xf0] sm:$0xff]
        %v838 = vld [vmem:[#allocation4 + $0xf8] sm:$0xff]
        %v839 = vld [vmem:[#allocation3 + $0x8] sm:$0xff]
        %v840 = vld [vmem:[#allocation3 + $0x10] sm:$0xff]
        %v841 = vld [vmem:[#allocation3 + $0x18] sm:$0xff]
        %v842 = vld [vmem:[#allocation3 + $0x20] sm:$0xff]
        %v843 = vld [vmem:[#allocation3 + $0x28] sm:$0xff]
        %v844 = vld [vmem:[#allocation3 + $0x30] sm:$0xff]
        %v845 = vld [vmem:[#allocation3 + $0x38] sm:$0xff]
        %v846 = vld [vmem:[#allocation3 + $0x40] sm:$0xff]
        %v847 = vld [vmem:[#allocation3 + $0x48] sm:$0xff]
        %v848 = vld [vmem:[#allocation3 + $0x50] sm:$0xff]
        %v849 = vld [vmem:[#allocation3 + $0x58] sm:$0xff]
        %v850 = vld [vmem:[#allocation3 + $0x60] sm:$0xff]
        %v851 = vld [vmem:[#allocation3 + $0x68] sm:$0xff]
        %v852 = vld [vmem:[#allocation3 + $0x70] sm:$0xff]
        %v853 = vld [vmem:[#allocation3 + $0x78] sm:$0xff]
        %v854 = vld [vmem:[#allocation3 + $0x80] sm:$0xff]
        %s855 = scalar_lea.vmem %s1, 192
        %v856 = vld [vmem:[%s855] sm:$0xf]
        %v857 = vld [vmem:[%s855 + $0x4] sm:$0xf]
        %v858 = vld [vmem:[%s855 + $0x8] sm:$0xf]
        %v859 = vld [vmem:[%s855 + $0xc] sm:$0xf]
        %v860 = vld [vmem:[%s855 + $0x10] sm:$0xf]
        %v861 = vld [vmem:[%s855 + $0x14] sm:$0xf]
        %v862 = vld [vmem:[%s855 + $0x18] sm:$0xf]
        %v863 = vld [vmem:[%s855 + $0x1c] sm:$0xf]
        %v864 = vld [vmem:[%s855 + $0x20] sm:$0xf]
        %v865 = vld [vmem:[%s855 + $0x24] sm:$0xf]
        %v866 = vld [vmem:[%s855 + $0x28] sm:$0xf]
        %v867 = vld [vmem:[%s855 + $0x2c] sm:$0xf]
        %v868 = vld [vmem:[%s855 + $0x30] sm:$0xf]
        %v869 = vld [vmem:[%s855 + $0x34] sm:$0xf]
        %v870 = vld [vmem:[%s855 + $0x38] sm:$0xf]
        %v871 = vld [vmem:[%s855 + $0x3c] sm:$0xf]
        %v888 = vunpack.c.l.b16 %v856
        %v889 = vunpack.c.l.b16 %v857
        %v890 = vunpack.c.l.b16 %v858
        %v891 = vunpack.c.l.b16 %v859
        %v892 = vunpack.c.l.b16 %v860
        %v893 = vunpack.c.l.b16 %v861
        %v894 = vunpack.c.l.b16 %v862
        %v895 = vunpack.c.l.b16 %v863
        %v896 = vunpack.c.l.b16 %v864
        %v897 = vunpack.c.l.b16 %v865
        %v898 = vunpack.c.l.b16 %v866
        %v899 = vunpack.c.l.b16 %v867
        %v900 = vunpack.c.l.b16 %v868
        %v901 = vunpack.c.l.b16 %v869
        %v902 = vunpack.c.l.b16 %v870
        %v903 = vunpack.c.l.b16 %v871
        %v904 = vpack.c.b16 %v889, %v888
        %v905 = vpack.c.b16 %v891, %v890
        %v906 = vpack.c.b16 %v893, %v892
        %v907 = vpack.c.b16 %v895, %v894
        %v908 = vpack.c.b16 %v897, %v896
        %v909 = vpack.c.b16 %v899, %v898
        %v910 = vpack.c.b16 %v901, %v900
        %v911 = vpack.c.b16 %v903, %v902
        %920 = vmatprep.subr.bf16.mxu0 0
        %921 = vmatpush1.bf16.msra.mxu0 %v904
        %922 = vmatprep.subr.bf16.mxu0 0
        %923 = vmatpush1.bf16.msra.mxu0 %v905
        %924 = vmatprep.subr.bf16.mxu0 0
        %925 = vmatpush1.bf16.msra.mxu0 %v906
        %926 = vmatprep.subr.bf16.mxu0 0
        %927 = vmatpush1.bf16.msra.mxu0 %v907
        %928 = vmatprep.subr.bf16.mxu0 0
        %929 = vmatpush1.bf16.msra.mxu0 %v908
        %930 = vmatprep.subr.bf16.mxu0 0
        %931 = vmatpush1.bf16.msra.mxu0 %v909
        %932 = vmatprep.subr.bf16.mxu0 0
        %933 = vmatpush1.bf16.msra.mxu0 %v910
        %934 = vmatprep.subr.bf16.mxu0 0
        %935 = vmatpush1.bf16.msra.mxu0 %v911
        %936 = vmatprep.subr.bf16.mxu0 0
        %937 = vmatpush1.bf16.msra.mxu0 0
        %938 = vmatprep.subr.bf16.mxu0 0
        %939 = vmatpush1.bf16.msra.mxu0 0
        %940 = vmatprep.subr.bf16.mxu0 0
        %941 = vmatpush1.bf16.msra.mxu0 0
        %942 = vmatprep.subr.bf16.mxu0 0
        %943 = vmatpush1.bf16.msra.mxu0 0
        %944 = vmatprep.subr.bf16.mxu0 0
        %945 = vmatpush1.bf16.msra.mxu0 0
        %946 = vmatprep.subr.bf16.mxu0 0
        %947 = vmatpush1.bf16.msra.mxu0 0
        %948 = vmatprep.subr.bf16.mxu0 0
        %949 = vmatpush1.bf16.msra.mxu0 0
        %950 = vmatprep.subr.bf16.mxu0 0
        %951 = vmatpush1.bf16.msra.mxu0 0
        %952 = vmatprep.mubr.bf16.mxu0 0
        %953 = vmatmul.mubr.bf16.gmra.mrb[0].mxu0 %v839
        %v954 = vpop.f32.mrb[0].mxu0
        %v955 = vadd.f32 0.0, %v954
        %v956 = vpop.f32.mrb[0].mxu0
        %v957 = vpop.f32.mrb[0].mxu0
        %v958 = vadd.f32 0.0, %v957
        %v959 = vpop.f32.mrb[0].mxu0
        %960 = vmatprep.mubr.bf16.mxu0 0
        %961 = vmatmul.mubr.bf16.gmra.mrb[0].mxu0 %v840
        %v962 = vpop.f32.mrb[0].mxu0
        %v963 = vadd.f32 0.0, %v962
        %v964 = vpop.f32.mrb[0].mxu0
        %v965 = vpop.f32.mrb[0].mxu0
        %v966 = vadd.f32 0.0, %v965
        %v967 = vpop.f32.mrb[0].mxu0
        %968 = vmatprep.mubr.bf16.mxu0 0
        %969 = vmatmul.mubr.bf16.gmra.mrb[0].mxu0 %v841
        %v970 = vpop.f32.mrb[0].mxu0
        %v971 = vadd.f32 0.0, %v970
        %v972 = vpop.f32.mrb[0].mxu0
        %v973 = vpop.f32.mrb[0].mxu0
        %v974 = vadd.f32 0.0, %v973
        %v975 = vpop.f32.mrb[0].mxu0
        %976 = vmatprep.mubr.bf16.mxu0 0
        %977 = vmatmul.mubr.bf16.gmra.mrb[0].mxu0 %v842
        %v978 = vpop.f32.mrb[0].mxu0
        %v979 = vadd.f32 0.0, %v978
        %v980 = vpop.f32.mrb[0].mxu0
        %v981 = vpop.f32.mrb[0].mxu0
        %v982 = vadd.f32 0.0, %v981
        %v983 = vpop.f32.mrb[0].mxu0
        %984 = vmatprep.mubr.bf16.mxu0 0
        %985 = vmatmul.mubr.bf16.gmra.mrb[0].mxu0 %v843
        %v986 = vpop.f32.mrb[0].mxu0
        %v987 = vadd.f32 0.0, %v986
        %v988 = vpop.f32.mrb[0].mxu0
        %v989 = vpop.f32.mrb[0].mxu0
        %v990 = vadd.f32 0.0, %v989
        %v991 = vpop.f32.mrb[0].mxu0
        %992 = vmatprep.mubr.bf16.mxu0 0
        %993 = vmatmul.mubr.bf16.gmra.mrb[0].mxu0 %v844
        %v994 = vpop.f32.mrb[0].mxu0
        %v995 = vadd.f32 0.0, %v994
        %v996 = vpop.f32.mrb[0].mxu0
        %v997 = vpop.f32.mrb[0].mxu0
        %v998 = vadd.f32 0.0, %v997
        %v999 = vpop.f32.mrb[0].mxu0
        %1000 = vmatprep.mubr.bf16.mxu0 0
        %1001 = vmatmul.mubr.bf16.gmra.mrb[0].mxu0 %v845
        %v1002 = vpop.f32.mrb[0].mxu0
        %v1003 = vadd.f32 0.0, %v1002
        %v1004 = vpop.f32.mrb[0].mxu0
        %v1005 = vpop.f32.mrb[0].mxu0
        %v1006 = vadd.f32 0.0, %v1005
        %v1007 = vpop.f32.mrb[0].mxu0
        %1008 = vmatprep.mubr.bf16.mxu0 0
        %1009 = vmatmul.mubr.bf16.gmra.mrb[0].mxu0 %v846
        %v1010 = vpop.f32.mrb[0].mxu0
        %v1011 = vadd.f32 0.0, %v1010
        %v1012 = vpop.f32.mrb[0].mxu0
        %v1013 = vpop.f32.mrb[0].mxu0
        %v1014 = vadd.f32 0.0, %v1013
        %v1015 = vpop.f32.mrb[0].mxu0
        %1016 = vmatprep.mubr.bf16.mxu0 0
        %1017 = vmatmul.mubr.bf16.gmra.mrb[0].mxu0 %v847
        %v1018 = vpop.f32.mrb[0].mxu0
        %v1019 = vadd.f32 0.0, %v1018
        %v1020 = vpop.f32.mrb[0].mxu0
        %v1021 = vpop.f32.mrb[0].mxu0
        %v1022 = vadd.f32 0.0, %v1021
        %v1023 = vpop.f32.mrb[0].mxu0
        %1024 = vmatprep.mubr.bf16.mxu0 0
        %1025 = vmatmul.mubr.bf16.gmra.mrb[0].mxu0 %v848
        %v1026 = vpop.f32.mrb[0].mxu0
        %v1027 = vadd.f32 0.0, %v1026
        %v1028 = vpop.f32.mrb[0].mxu0
        %v1029 = vpop.f32.mrb[0].mxu0
        %v1030 = vadd.f32 0.0, %v1029
        %v1031 = vpop.f32.mrb[0].mxu0
        %1032 = vmatprep.mubr.bf16.mxu0 0
        %1033 = vmatmul.mubr.bf16.gmra.mrb[0].mxu0 %v849
        %v1034 = vpop.f32.mrb[0].mxu0
        %v1035 = vadd.f32 0.0, %v1034
        %v1036 = vpop.f32.mrb[0].mxu0
        %v1037 = vpop.f32.mrb[0].mxu0
        %v1038 = vadd.f32 0.0, %v1037
        %v1039 = vpop.f32.mrb[0].mxu0
        %1040 = vmatprep.mubr.bf16.mxu0 0
        %1041 = vmatmul.mubr.bf16.gmra.mrb[0].mxu0 %v850
        %v1042 = vpop.f32.mrb[0].mxu0
        %v1043 = vadd.f32 0.0, %v1042
        %v1044 = vpop.f32.mrb[0].mxu0
        %v1045 = vpop.f32.mrb[0].mxu0
        %v1046 = vadd.f32 0.0, %v1045
        %v1047 = vpop.f32.mrb[0].mxu0
        %1048 = vmatprep.mubr.bf16.mxu0 0
        %1049 = vmatmul.mubr.bf16.gmra.mrb[0].mxu0 %v851
        %v1050 = vpop.f32.mrb[0].mxu0
        %v1051 = vadd.f32 0.0, %v1050
        %v1052 = vpop.f32.mrb[0].mxu0
        %v1053 = vpop.f32.mrb[0].mxu0
        %v1054 = vadd.f32 0.0, %v1053
        %v1055 = vpop.f32.mrb[0].mxu0
        %1056 = vmatprep.mubr.bf16.mxu0 0
        %1057 = vmatmul.mubr.bf16.gmra.mrb[0].mxu0 %v852
        %v1058 = vpop.f32.mrb[0].mxu0
        %v1059 = vadd.f32 0.0, %v1058
        %v1060 = vpop.f32.mrb[0].mxu0
        %v1061 = vpop.f32.mrb[0].mxu0
        %v1062 = vadd.f32 0.0, %v1061
        %v1063 = vpop.f32.mrb[0].mxu0
        %1064 = vmatprep.mubr.bf16.mxu0 0
        %1065 = vmatmul.mubr.bf16.gmra.mrb[0].mxu0 %v853
        %v1066 = vpop.f32.mrb[0].mxu0
        %v1067 = vadd.f32 0.0, %v1066
        %v1068 = vpop.f32.mrb[0].mxu0
        %v1069 = vpop.f32.mrb[0].mxu0
        %v1070 = vadd.f32 0.0, %v1069
        %v1071 = vpop.f32.mrb[0].mxu0
        %1072 = vmatprep.mubr.bf16.mxu0 0
        %1073 = vmatmul.mubr.bf16.gmra.mrb[0].mxu0 %v854
        %v1074 = vpop.f32.mrb[0].mxu0
        %v1075 = vadd.f32 0.0, %v1074
        %v1076 = vpop.f32.mrb[0].mxu0
        %v1077 = vpop.f32.mrb[0].mxu0
        %v1078 = vadd.f32 0.0, %v1077
        %v1079 = vpop.f32.mrb[0].mxu0
        %1080 = vdwg.mxu0
        %v1081 = vadd.f32 %v807, %v955
        %v1082 = vadd.f32 %v808, %v958
        %v1083 = vadd.f32 %v809, %v963
        %v1084 = vadd.f32 %v810, %v966
        %v1085 = vadd.f32 %v811, %v971
        %v1086 = vadd.f32 %v812, %v974
        %v1087 = vadd.f32 %v813, %v979
        %v1088 = vadd.f32 %v814, %v982
        %v1089 = vadd.f32 %v815, %v987
        %v1090 = vadd.f32 %v816, %v990
        %v1091 = vadd.f32 %v817, %v995
        %v1092 = vadd.f32 %v818, %v998
        %v1093 = vadd.f32 %v819, %v1003
        %v1094 = vadd.f32 %v820, %v1006
        %v1095 = vadd.f32 %v821, %v1011
        %v1096 = vadd.f32 %v822, %v1014
        %v1097 = vadd.f32 %v823, %v1019
        %v1098 = vadd.f32 %v824, %v1022
        %v1099 = vadd.f32 %v825, %v1027
        %v1100 = vadd.f32 %v826, %v1030
        %v1101 = vadd.f32 %v827, %v1035
        %v1102 = vadd.f32 %v828, %v1038
        %v1103 = vadd.f32 %v829, %v1043
        %v1104 = vadd.f32 %v830, %v1046
        %v1105 = vadd.f32 %v831, %v1051
        %v1106 = vadd.f32 %v832, %v1054
        %v1107 = vadd.f32 %v833, %v1059
        %v1108 = vadd.f32 %v834, %v1062
        %v1109 = vadd.f32 %v835, %v1067
        %v1110 = vadd.f32 %v836, %v1070
        %v1111 = vadd.f32 %v837, %v1075
        %v1112 = vadd.f32 %v838, %v1078
        %1113 = vst [vmem:[#allocation4] sm:$0xff] %v1081
        %1114 = vst [vmem:[#allocation4 + $0x8] sm:$0xff] %v1082
        %1115 = vst [vmem:[#allocation4 + $0x10] sm:$0xff] %v1083
        %1116 = vst [vmem:[#allocation4 + $0x18] sm:$0xff] %v1084
        %1117 = vst [vmem:[#allocation4 + $0x20] sm:$0xff] %v1085
        %1118 = vst [vmem:[#allocation4 + $0x28] sm:$0xff] %v1086
        %1119 = vst [vmem:[#allocation4 + $0x30] sm:$0xff] %v1087
        %1120 = vst [vmem:[#allocation4 + $0x38] sm:$0xff] %v1088
        %1121 = vst [vmem:[#allocation4 + $0x40] sm:$0xff] %v1089
        %1122 = vst [vmem:[#allocation4 + $0x48] sm:$0xff] %v1090
        %1123 = vst [vmem:[#allocation4 + $0x50] sm:$0xff] %v1091
        %1124 = vst [vmem:[#allocation4 + $0x58] sm:$0xff] %v1092
        %1125 = vst [vmem:[#allocation4 + $0x60] sm:$0xff] %v1093
        %1126 = vst [vmem:[#allocation4 + $0x68] sm:$0xff] %v1094
        %1127 = vst [vmem:[#allocation4 + $0x70] sm:$0xff] %v1095
        %1128 = vst [vmem:[#allocation4 + $0x78] sm:$0xff] %v1096
        %1129 = vst [vmem:[#allocation4 + $0x80] sm:$0xff] %v1097
        %1130 = vst [vmem:[#allocation4 + $0x88] sm:$0xff] %v1098
        %1131 = vst [vmem:[#allocation4 + $0x90] sm:$0xff] %v1099
        %1132 = vst [vmem:[#allocation4 + $0x98] sm:$0xff] %v1100
        %1133 = vst [vmem:[#allocation4 + $0xa0] sm:$0xff] %v1101
        %1134 = vst [vmem:[#allocation4 + $0xa8] sm:$0xff] %v1102
        %1135 = vst [vmem:[#allocation4 + $0xb0] sm:$0xff] %v1103
        %1136 = vst [vmem:[#allocation4 + $0xb8] sm:$0xff] %v1104
        %1137 = vst [vmem:[#allocation4 + $0xc0] sm:$0xff] %v1105
        %1138 = vst [vmem:[#allocation4 + $0xc8] sm:$0xff] %v1106
        %1139 = vst [vmem:[#allocation4 + $0xd0] sm:$0xff] %v1107
        %1140 = vst [vmem:[#allocation4 + $0xd8] sm:$0xff] %v1108
        %1141 = vst [vmem:[#allocation4 + $0xe0] sm:$0xff] %v1109
        %1142 = vst [vmem:[#allocation4 + $0xe8] sm:$0xff] %v1110
        %1143 = vst [vmem:[#allocation4 + $0xf0] sm:$0xff] %v1111
        %1144 = vst [vmem:[#allocation4 + $0xf8] sm:$0xff] %v1112
        %v1145 = vld [vmem:[#allocation4] sm:$0xff]
        %v1146 = vld [vmem:[#allocation4 + $0x8] sm:$0xff]
        %v1147 = vld [vmem:[#allocation4 + $0x10] sm:$0xff]
        %v1148 = vld [vmem:[#allocation4 + $0x18] sm:$0xff]
        %v1149 = vld [vmem:[#allocation4 + $0x20] sm:$0xff]
        %v1150 = vld [vmem:[#allocation4 + $0x28] sm:$0xff]
        %v1151 = vld [vmem:[#allocation4 + $0x30] sm:$0xff]
        %v1152 = vld [vmem:[#allocation4 + $0x38] sm:$0xff]
        %v1153 = vld [vmem:[#allocation4 + $0x40] sm:$0xff]
        %v1154 = vld [vmem:[#allocation4 + $0x48] sm:$0xff]
        %v1155 = vld [vmem:[#allocation4 + $0x50] sm:$0xff]
        %v1156 = vld [vmem:[#allocation4 + $0x58] sm:$0xff]
        %v1157 = vld [vmem:[#allocation4 + $0x60] sm:$0xff]
        %v1158 = vld [vmem:[#allocation4 + $0x68] sm:$0xff]
        %v1159 = vld [vmem:[#allocation4 + $0x70] sm:$0xff]
        %v1160 = vld [vmem:[#allocation4 + $0x78] sm:$0xff]
        %v1161 = vld [vmem:[#allocation4 + $0x80] sm:$0xff]
        %v1162 = vld [vmem:[#allocation4 + $0x88] sm:$0xff]
        %v1163 = vld [vmem:[#allocation4 + $0x90] sm:$0xff]
        %v1164 = vld [vmem:[#allocation4 + $0x98] sm:$0xff]
        %v1165 = vld [vmem:[#allocation4 + $0xa0] sm:$0xff]
        %v1166 = vld [vmem:[#allocation4 + $0xa8] sm:$0xff]
        %v1167 = vld [vmem:[#allocation4 + $0xb0] sm:$0xff]
        %v1168 = vld [vmem:[#allocation4 + $0xb8] sm:$0xff]
        %v1169 = vld [vmem:[#allocation4 + $0xc0] sm:$0xff]
        %v1170 = vld [vmem:[#allocation4 + $0xc8] sm:$0xff]
        %v1171 = vld [vmem:[#allocation4 + $0xd0] sm:$0xff]
        %v1172 = vld [vmem:[#allocation4 + $0xd8] sm:$0xff]
        %v1173 = vld [vmem:[#allocation4 + $0xe0] sm:$0xff]
        %v1174 = vld [vmem:[#allocation4 + $0xe8] sm:$0xff]
        %v1175 = vld [vmem:[#allocation4 + $0xf0] sm:$0xff]
        %v1176 = vld [vmem:[#allocation4 + $0xf8] sm:$0xff]
        %v1177 = vld [vmem:[#allocation3 + $0x10] sm:$0xff]
        %v1178 = vld [vmem:[#allocation3 + $0x18] sm:$0xff]
        %v1179 = vld [vmem:[#allocation3 + $0x20] sm:$0xff]
        %v1180 = vld [vmem:[#allocation3 + $0x28] sm:$0xff]
        %v1181 = vld [vmem:[#allocation3 + $0x30] sm:$0xff]
        %v1182 = vld [vmem:[#allocation3 + $0x38] sm:$0xff]
        %v1183 = vld [vmem:[#allocation3 + $0x40] sm:$0xff]
        %v1184 = vld [vmem:[#allocation3 + $0x48] sm:$0xff]
        %v1185 = vld [vmem:[#allocation3 + $0x50] sm:$0xff]
        %v1186 = vld [vmem:[#allocation3 + $0x58] sm:$0xff]
        %v1187 = vld [vmem:[#allocation3 + $0x60] sm:$0xff]
        %v1188 = vld [vmem:[#allocation3 + $0x68] sm:$0xff]
        %v1189 = vld [vmem:[#allocation3 + $0x70] sm:$0xff]
        %v1190 = vld [vmem:[#allocation3 + $0x78] sm:$0xff]
        %v1191 = vld [vmem:[#allocation3 + $0x80] sm:$0xff]
        %v1192 = vld [vmem:[#allocation3 + $0x88] sm:$0xff]
        %s1193 = scalar_lea.vmem %s1, 384
        %v1194 = vld [vmem:[%s1193] sm:$0xf]
        %v1195 = vld [vmem:[%s1193 + $0x4] sm:$0xf]
        %v1196 = vld [vmem:[%s1193 + $0x8] sm:$0xf]
        %v1197 = vld [vmem:[%s1193 + $0xc] sm:$0xf]
        %v1198 = vld [vmem:[%s1193 + $0x10] sm:$0xf]
        %v1199 = vld [vmem:[%s1193 + $0x14] sm:$0xf]
        %v1200 = vld [vmem:[%s1193 + $0x18] sm:$0xf]
        %v1201 = vld [vmem:[%s1193 + $0x1c] sm:$0xf]
        %v1202 = vld [vmem:[%s1193 + $0x20] sm:$0xf]
        %v1203 = vld [vmem:[%s1193 + $0x24] sm:$0xf]
        %v1204 = vld [vmem:[%s1193 + $0x28] sm:$0xf]
        %v1205 = vld [vmem:[%s1193 + $0x2c] sm:$0xf]
        %v1206 = vld [vmem:[%s1193 + $0x30] sm:$0xf]
        %v1207 = vld [vmem:[%s1193 + $0x34] sm:$0xf]
        %v1208 = vld [vmem:[%s1193 + $0x38] sm:$0xf]
        %v1209 = vld [vmem:[%s1193 + $0x3c] sm:$0xf]
        %v1226 = vunpack.c.l.b16 %v1194
        %v1227 = vunpack.c.l.b16 %v1195
        %v1228 = vunpack.c.l.b16 %v1196
        %v1229 = vunpack.c.l.b16 %v1197
        %v1230 = vunpack.c.l.b16 %v1198
        %v1231 = vunpack.c.l.b16 %v1199
        %v1232 = vunpack.c.l.b16 %v1200
        %v1233 = vunpack.c.l.b16 %v1201
        %v1234 = vunpack.c.l.b16 %v1202
        %v1235 = vunpack.c.l.b16 %v1203
        %v1236 = vunpack.c.l.b16 %v1204
        %v1237 = vunpack.c.l.b16 %v1205
        %v1238 = vunpack.c.l.b16 %v1206
        %v1239 = vunpack.c.l.b16 %v1207
        %v1240 = vunpack.c.l.b16 %v1208
        %v1241 = vunpack.c.l.b16 %v1209
        %v1242 = vpack.c.b16 %v1227, %v1226
        %v1243 = vpack.c.b16 %v1229, %v1228
        %v1244 = vpack.c.b16 %v1231, %v1230
        %v1245 = vpack.c.b16 %v1233, %v1232
        %v1246 = vpack.c.b16 %v1235, %v1234
        %v1247 = vpack.c.b16 %v1237, %v1236
        %v1248 = vpack.c.b16 %v1239, %v1238
        %v1249 = vpack.c.b16 %v1241, %v1240
        %1258 = vmatprep.subr.bf16.mxu0 0
        %1259 = vmatpush1.bf16.msra.mxu0 %v1242
        %1260 = vmatprep.subr.bf16.mxu0 0
        %1261 = vmatpush1.bf16.msra.mxu0 %v1243
        %1262 = vmatprep.subr.bf16.mxu0 0
        %1263 = vmatpush1.bf16.msra.mxu0 %v1244
        %1264 = vmatprep.subr.bf16.mxu0 0
        %1265 = vmatpush1.bf16.msra.mxu0 %v1245
        %1266 = vmatprep.subr.bf16.mxu0 0
        %1267 = vmatpush1.bf16.msra.mxu0 %v1246
        %1268 = vmatprep.subr.bf16.mxu0 0
        %1269 = vmatpush1.bf16.msra.mxu0 %v1247
        %1270 = vmatprep.subr.bf16.mxu0 0
        %1271 = vmatpush1.bf16.msra.mxu0 %v1248
        %1272 = vmatprep.subr.bf16.mxu0 0
        %1273 = vmatpush1.bf16.msra.mxu0 %v1249
        %1274 = vmatprep.subr.bf16.mxu0 0
        %1275 = vmatpush1.bf16.msra.mxu0 0
        %1276 = vmatprep.subr.bf16.mxu0 0
        %1277 = vmatpush1.bf16.msra.mxu0 0
        %1278 = vmatprep.subr.bf16.mxu0 0
        %1279 = vmatpush1.bf16.msra.mxu0 0
        %1280 = vmatprep.subr.bf16.mxu0 0
        %1281 = vmatpush1.bf16.msra.mxu0 0
        %1282 = vmatprep.subr.bf16.mxu0 0
        %1283 = vmatpush1.bf16.msra.mxu0 0
        %1284 = vmatprep.subr.bf16.mxu0 0
        %1285 = vmatpush1.bf16.msra.mxu0 0
        %1286 = vmatprep.subr.bf16.mxu0 0
        %1287 = vmatpush1.bf16.msra.mxu0 0
        %1288 = vmatprep.subr.bf16.mxu0 0
        %1289 = vmatpush1.bf16.msra.mxu0 0
        %1290 = vmatprep.mubr.bf16.mxu0 0
        %1291 = vmatmul.mubr.bf16.gmra.mrb[0].mxu0 %v1177
        %v1292 = vpop.f32.mrb[0].mxu0
        %v1293 = vadd.f32 0.0, %v1292
        %v1294 = vpop.f32.mrb[0].mxu0
        %v1295 = vpop.f32.mrb[0].mxu0
        %v1296 = vadd.f32 0.0, %v1295
        %v1297 = vpop.f32.mrb[0].mxu0
        %1298 = vmatprep.mubr.bf16.mxu0 0
        %1299 = vmatmul.mubr.bf16.gmra.mrb[0].mxu0 %v1178
        %v1300 = vpop.f32.mrb[0].mxu0
        %v1301 = vadd.f32 0.0, %v1300
        %v1302 = vpop.f32.mrb[0].mxu0
        %v1303 = vpop.f32.mrb[0].mxu0
        %v1304 = vadd.f32 0.0, %v1303
        %v1305 = vpop.f32.mrb[0].mxu0
        %1306 = vmatprep.mubr.bf16.mxu0 0
        %1307 = vmatmul.mubr.bf16.gmra.mrb[0].mxu0 %v1179
        %v1308 = vpop.f32.mrb[0].mxu0
        %v1309 = vadd.f32 0.0, %v1308
        %v1310 = vpop.f32.mrb[0].mxu0
        %v1311 = vpop.f32.mrb[0].mxu0
        %v1312 = vadd.f32 0.0, %v1311
        %v1313 = vpop.f32.mrb[0].mxu0
        %1314 = vmatprep.mubr.bf16.mxu0 0
        %1315 = vmatmul.mubr.bf16.gmra.mrb[0].mxu0 %v1180
        %v1316 = vpop.f32.mrb[0].mxu0
        %v1317 = vadd.f32 0.0, %v1316
        %v1318 = vpop.f32.mrb[0].mxu0
        %v1319 = vpop.f32.mrb[0].mxu0
        %v1320 = vadd.f32 0.0, %v1319
        %v1321 = vpop.f32.mrb[0].mxu0
        %1322 = vmatprep.mubr.bf16.mxu0 0
        %1323 = vmatmul.mubr.bf16.gmra.mrb[0].mxu0 %v1181
        %v1324 = vpop.f32.mrb[0].mxu0
        %v1325 = vadd.f32 0.0, %v1324
        %v1326 = vpop.f32.mrb[0].mxu0
        %v1327 = vpop.f32.mrb[0].mxu0
        %v1328 = vadd.f32 0.0, %v1327
        %v1329 = vpop.f32.mrb[0].mxu0
        %1330 = vmatprep.mubr.bf16.mxu0 0
        %1331 = vmatmul.mubr.bf16.gmra.mrb[0].mxu0 %v1182
        %v1332 = vpop.f32.mrb[0].mxu0
        %v1333 = vadd.f32 0.0, %v1332
        %v1334 = vpop.f32.mrb[0].mxu0
        %v1335 = vpop.f32.mrb[0].mxu0
        %v1336 = vadd.f32 0.0, %v1335
        %v1337 = vpop.f32.mrb[0].mxu0
        %1338 = vmatprep.mubr.bf16.mxu0 0
        %1339 = vmatmul.mubr.bf16.gmra.mrb[0].mxu0 %v1183
        %v1340 = vpop.f32.mrb[0].mxu0
        %v1341 = vadd.f32 0.0, %v1340
        %v1342 = vpop.f32.mrb[0].mxu0
        %v1343 = vpop.f32.mrb[0].mxu0
        %v1344 = vadd.f32 0.0, %v1343
        %v1345 = vpop.f32.mrb[0].mxu0
        %1346 = vmatprep.mubr.bf16.mxu0 0
        %1347 = vmatmul.mubr.bf16.gmra.mrb[0].mxu0 %v1184
        %v1348 = vpop.f32.mrb[0].mxu0
        %v1349 = vadd.f32 0.0, %v1348
        %v1350 = vpop.f32.mrb[0].mxu0
        %v1351 = vpop.f32.mrb[0].mxu0
        %v1352 = vadd.f32 0.0, %v1351
        %v1353 = vpop.f32.mrb[0].mxu0
        %1354 = vmatprep.mubr.bf16.mxu0 0
        %1355 = vmatmul.mubr.bf16.gmra.mrb[0].mxu0 %v1185
        %v1356 = vpop.f32.mrb[0].mxu0
        %v1357 = vadd.f32 0.0, %v1356
        %v1358 = vpop.f32.mrb[0].mxu0
        %v1359 = vpop.f32.mrb[0].mxu0
        %v1360 = vadd.f32 0.0, %v1359
        %v1361 = vpop.f32.mrb[0].mxu0
        %1362 = vmatprep.mubr.bf16.mxu0 0
        %1363 = vmatmul.mubr.bf16.gmra.mrb[0].mxu0 %v1186
        %v1364 = vpop.f32.mrb[0].mxu0
        %v1365 = vadd.f32 0.0, %v1364
        %v1366 = vpop.f32.mrb[0].mxu0
        %v1367 = vpop.f32.mrb[0].mxu0
        %v1368 = vadd.f32 0.0, %v1367
        %v1369 = vpop.f32.mrb[0].mxu0
        %1370 = vmatprep.mubr.bf16.mxu0 0
        %1371 = vmatmul.mubr.bf16.gmra.mrb[0].mxu0 %v1187
        %v1372 = vpop.f32.mrb[0].mxu0
        %v1373 = vadd.f32 0.0, %v1372
        %v1374 = vpop.f32.mrb[0].mxu0
        %v1375 = vpop.f32.mrb[0].mxu0
        %v1376 = vadd.f32 0.0, %v1375
        %v1377 = vpop.f32.mrb[0].mxu0
        %1378 = vmatprep.mubr.bf16.mxu0 0
        %1379 = vmatmul.mubr.bf16.gmra.mrb[0].mxu0 %v1188
        %v1380 = vpop.f32.mrb[0].mxu0
        %v1381 = vadd.f32 0.0, %v1380
        %v1382 = vpop.f32.mrb[0].mxu0
        %v1383 = vpop.f32.mrb[0].mxu0
        %v1384 = vadd.f32 0.0, %v1383
        %v1385 = vpop.f32.mrb[0].mxu0
        %1386 = vmatprep.mubr.bf16.mxu0 0
        %1387 = vmatmul.mubr.bf16.gmra.mrb[0].mxu0 %v1189
        %v1388 = vpop.f32.mrb[0].mxu0
        %v1389 = vadd.f32 0.0, %v1388
        %v1390 = vpop.f32.mrb[0].mxu0
        %v1391 = vpop.f32.mrb[0].mxu0
        %v1392 = vadd.f32 0.0, %v1391
        %v1393 = vpop.f32.mrb[0].mxu0
        %1394 = vmatprep.mubr.bf16.mxu0 0
        %1395 = vmatmul.mubr.bf16.gmra.mrb[0].mxu0 %v1190
        %v1396 = vpop.f32.mrb[0].mxu0
        %v1397 = vadd.f32 0.0, %v1396
        %v1398 = vpop.f32.mrb[0].mxu0
        %v1399 = vpop.f32.mrb[0].mxu0
        %v1400 = vadd.f32 0.0, %v1399
        %v1401 = vpop.f32.mrb[0].mxu0
        %1402 = vmatprep.mubr.bf16.mxu0 0
        %1403 = vmatmul.mubr.bf16.gmra.mrb[0].mxu0 %v1191
        %v1404 = vpop.f32.mrb[0].mxu0
        %v1405 = vadd.f32 0.0, %v1404
        %v1406 = vpop.f32.mrb[0].mxu0
        %v1407 = vpop.f32.mrb[0].mxu0
        %v1408 = vadd.f32 0.0, %v1407
        %v1409 = vpop.f32.mrb[0].mxu0
        %1410 = vmatprep.mubr.bf16.mxu0 0
        %1411 = vmatmul.mubr.bf16.gmra.mrb[0].mxu0 %v1192
        %v1412 = vpop.f32.mrb[0].mxu0
        %v1413 = vadd.f32 0.0, %v1412
        %v1414 = vpop.f32.mrb[0].mxu0
        %v1415 = vpop.f32.mrb[0].mxu0
        %v1416 = vadd.f32 0.0, %v1415
        %v1417 = vpop.f32.mrb[0].mxu0
        %1418 = vdwg.mxu0
        %v1419 = vadd.f32 %v1145, %v1293
        %v1420 = vadd.f32 %v1146, %v1296
        %v1421 = vadd.f32 %v1147, %v1301
        %v1422 = vadd.f32 %v1148, %v1304
        %v1423 = vadd.f32 %v1149, %v1309
        %v1424 = vadd.f32 %v1150, %v1312
        %v1425 = vadd.f32 %v1151, %v1317
        %v1426 = vadd.f32 %v1152, %v1320
        %v1427 = vadd.f32 %v1153, %v1325
        %v1428 = vadd.f32 %v1154, %v1328
        %v1429 = vadd.f32 %v1155, %v1333
        %v1430 = vadd.f32 %v1156, %v1336
        %v1431 = vadd.f32 %v1157, %v1341
        %v1432 = vadd.f32 %v1158, %v1344
        %v1433 = vadd.f32 %v1159, %v1349
        %v1434 = vadd.f32 %v1160, %v1352
        %v1435 = vadd.f32 %v1161, %v1357
        %v1436 = vadd.f32 %v1162, %v1360
        %v1437 = vadd.f32 %v1163, %v1365
        %v1438 = vadd.f32 %v1164, %v1368
        %v1439 = vadd.f32 %v1165, %v1373
        %v1440 = vadd.f32 %v1166, %v1376
        %v1441 = vadd.f32 %v1167, %v1381
        %v1442 = vadd.f32 %v1168, %v1384
        %v1443 = vadd.f32 %v1169, %v1389
        %v1444 = vadd.f32 %v1170, %v1392
        %v1445 = vadd.f32 %v1171, %v1397
        %v1446 = vadd.f32 %v1172, %v1400
        %v1447 = vadd.f32 %v1173, %v1405
        %v1448 = vadd.f32 %v1174, %v1408
        %v1449 = vadd.f32 %v1175, %v1413
        %v1450 = vadd.f32 %v1176, %v1416
        %1451 = vst [vmem:[#allocation4] sm:$0xff] %v1419
        %1452 = vst [vmem:[#allocation4 + $0x8] sm:$0xff] %v1420
        %1453 = vst [vmem:[#allocation4 + $0x10] sm:$0xff] %v1421
        %1454 = vst [vmem:[#allocation4 + $0x18] sm:$0xff] %v1422
        %1455 = vst [vmem:[#allocation4 + $0x20] sm:$0xff] %v1423
        %1456 = vst [vmem:[#allocation4 + $0x28] sm:$0xff] %v1424
        %1457 = vst [vmem:[#allocation4 + $0x30] sm:$0xff] %v1425
        %1458 = vst [vmem:[#allocation4 + $0x38] sm:$0xff] %v1426
        %1459 = vst [vmem:[#allocation4 + $0x40] sm:$0xff] %v1427
        %1460 = vst [vmem:[#allocation4 + $0x48] sm:$0xff] %v1428
        %1461 = vst [vmem:[#allocation4 + $0x50] sm:$0xff] %v1429
        %1462 = vst [vmem:[#allocation4 + $0x58] sm:$0xff] %v1430
        %1463 = vst [vmem:[#allocation4 + $0x60] sm:$0xff] %v1431
        %1464 = vst [vmem:[#allocation4 + $0x68] sm:$0xff] %v1432
        %1465 = vst [vmem:[#allocation4 + $0x70] sm:$0xff] %v1433
        %1466 = vst [vmem:[#allocation4 + $0x78] sm:$0xff] %v1434
        %1467 = vst [vmem:[#allocation4 + $0x80] sm:$0xff] %v1435
        %1468 = vst [vmem:[#allocation4 + $0x88] sm:$0xff] %v1436
        %1469 = vst [vmem:[#allocation4 + $0x90] sm:$0xff] %v1437
        %1470 = vst [vmem:[#allocation4 + $0x98] sm:$0xff] %v1438
        %1471 = vst [vmem:[#allocation4 + $0xa0] sm:$0xff] %v1439
        %1472 = vst [vmem:[#allocation4 + $0xa8] sm:$0xff] %v1440
        %1473 = vst [vmem:[#allocation4 + $0xb0] sm:$0xff] %v1441
        %1474 = vst [vmem:[#allocation4 + $0xb8] sm:$0xff] %v1442
        %1475 = vst [vmem:[#allocation4 + $0xc0] sm:$0xff] %v1443
        %1476 = vst [vmem:[#allocation4 + $0xc8] sm:$0xff] %v1444
        %1477 = vst [vmem:[#allocation4 + $0xd0] sm:$0xff] %v1445
        %1478 = vst [vmem:[#allocation4 + $0xd8] sm:$0xff] %v1446
        %1479 = vst [vmem:[#allocation4 + $0xe0] sm:$0xff] %v1447
        %1480 = vst [vmem:[#allocation4 + $0xe8] sm:$0xff] %v1448
        %1481 = vst [vmem:[#allocation4 + $0xf0] sm:$0xff] %v1449
        %1482 = vst [vmem:[#allocation4 + $0xf8] sm:$0xff] %v1450
        %v1483 = vld [vmem:[#allocation2 + $0x1] sm:$0xff]
        %v1484 = vld [vmem:[#allocation2 + $0x9] sm:$0xff]
        %v1485 = vld [vmem:[#allocation2 + $0x19] sm:$0xff]
        %v1486 = vld [vmem:[#allocation2 + $0x21] sm:$0xff]
        %v1487 = vld [vmem:[#allocation2 + $0x31] sm:$0xff]
        %v1488 = vld [vmem:[#allocation2 + $0x39] sm:$0xff]
        %v1489 = vld [vmem:[#allocation2 + $0x49] sm:$0xff]
        %v1490 = vld [vmem:[#allocation2 + $0x51] sm:$0xff]
        %v1491 = vld [vmem:[#allocation2 + $0x61] sm:$0xff]
        %v1492 = vld [vmem:[#allocation2 + $0x69] sm:$0xff]
        %v1493 = vld [vmem:[#allocation2 + $0x79] sm:$0xff]
        %v1494 = vld [vmem:[#allocation2 + $0x81] sm:$0xff]
        %v1495 = vld [vmem:[#allocation2 + $0x91] sm:$0xff]
        %v1496 = vld [vmem:[#allocation2 + $0x99] sm:$0xff]
        %v1497 = vld [vmem:[#allocation2 + $0xa9] sm:$0xff]
        %v1498 = vld [vmem:[#allocation2 + $0xb1] sm:$0xff]
        %v1499 = vld [vmem:[#allocation2 + $0xc1] sm:$0xff]
        %v1500 = vld [vmem:[#allocation2 + $0xc9] sm:$0xff]
        %v1501 = vld [vmem:[#allocation2 + $0xd9] sm:$0xff]
        %v1502 = vld [vmem:[#allocation2 + $0xe1] sm:$0xff]
        %v1503 = vld [vmem:[#allocation2 + $0xf1] sm:$0xff]
        %v1504 = vld [vmem:[#allocation2 + $0xf9] sm:$0xff]
        %v1505 = vld [vmem:[#allocation2 + $0x109] sm:$0xff]
        %v1506 = vld [vmem:[#allocation2 + $0x111] sm:$0xff]
        %v1507 = vld [vmem:[#allocation2 + $0x121] sm:$0xff]
        %v1508 = vld [vmem:[#allocation2 + $0x129] sm:$0xff]
        %v1509 = vld [vmem:[#allocation2 + $0x139] sm:$0xff]
        %v1510 = vld [vmem:[#allocation2 + $0x141] sm:$0xff]
        %v1511 = vld [vmem:[#allocation2 + $0x151] sm:$0xff]
        %v1512 = vld [vmem:[#allocation2 + $0x159] sm:$0xff]
        %v1513 = vld [vmem:[#allocation2 + $0x169] sm:$0xff]
        %v1514 = vld [vmem:[#allocation2 + $0x171] sm:$0xff]
        %v1515 = vld [vmem:[#allocation2 + $0x181] sm:$0xff]
        %v1516 = vld [vmem:[#allocation2 + $0x189] sm:$0xff]
        %v1517 = vld [vmem:[#allocation2 + $0x199] sm:$0xff]
        %v1518 = vld [vmem:[#allocation2 + $0x1a1] sm:$0xff]
        %v1519 = vpack.c.bf16 %v1484, %v1483
        %v1520 = vpack.c.bf16 %v1486, %v1485
        %v1521 = vpack.c.bf16 %v1488, %v1487
        %v1522 = vpack.c.bf16 %v1490, %v1489
        %v1523 = vpack.c.bf16 %v1492, %v1491
        %v1524 = vpack.c.bf16 %v1494, %v1493
        %v1525 = vpack.c.bf16 %v1496, %v1495
        %v1526 = vpack.c.bf16 %v1498, %v1497
        %v1527 = vpack.c.bf16 %v1500, %v1499
        %v1528 = vpack.c.bf16 %v1502, %v1501
        %v1529 = vpack.c.bf16 %v1504, %v1503
        %v1530 = vpack.c.bf16 %v1506, %v1505
        %v1531 = vpack.c.bf16 %v1508, %v1507
        %v1532 = vpack.c.bf16 %v1510, %v1509
        %v1533 = vpack.c.bf16 %v1512, %v1511
        %v1534 = vpack.c.bf16 %v1514, %v1513
        %v1535 = vpack.c.bf16 %v1516, %v1515
        %v1536 = vpack.c.bf16 %v1518, %v1517
        %1537 = vst [vmem:[#allocation3] sm:$0xff] %v1519
        %1538 = vst [vmem:[#allocation3 + $0x8] sm:$0xff] %v1520
        %1539 = vst [vmem:[#allocation3 + $0x10] sm:$0xff] %v1521
        %1540 = vst [vmem:[#allocation3 + $0x18] sm:$0xff] %v1522
        %1541 = vst [vmem:[#allocation3 + $0x20] sm:$0xff] %v1523
        %1542 = vst [vmem:[#allocation3 + $0x28] sm:$0xff] %v1524
        %1543 = vst [vmem:[#allocation3 + $0x30] sm:$0xff] %v1525
        %1544 = vst [vmem:[#allocation3 + $0x38] sm:$0xff] %v1526
        %1545 = vst [vmem:[#allocation3 + $0x40] sm:$0xff] %v1527
        %1546 = vst [vmem:[#allocation3 + $0x48] sm:$0xff] %v1528
        %1547 = vst [vmem:[#allocation3 + $0x50] sm:$0xff] %v1529
        %1548 = vst [vmem:[#allocation3 + $0x58] sm:$0xff] %v1530
        %1549 = vst [vmem:[#allocation3 + $0x60] sm:$0xff] %v1531
        %1550 = vst [vmem:[#allocation3 + $0x68] sm:$0xff] %v1532
        %1551 = vst [vmem:[#allocation3 + $0x70] sm:$0xff] %v1533
        %1552 = vst [vmem:[#allocation3 + $0x78] sm:$0xff] %v1534
        %1553 = vst [vmem:[#allocation3 + $0x80] sm:$0xff] %v1535
        %1554 = vst [vmem:[#allocation3 + $0x88] sm:$0xff] %v1536
        %v1555 = vld [vmem:[#allocation4] sm:$0xff]
        %v1556 = vld [vmem:[#allocation4 + $0x8] sm:$0xff]
        %v1557 = vld [vmem:[#allocation4 + $0x10] sm:$0xff]
        %v1558 = vld [vmem:[#allocation4 + $0x18] sm:$0xff]
        %v1559 = vld [vmem:[#allocation4 + $0x20] sm:$0xff]
        %v1560 = vld [vmem:[#allocation4 + $0x28] sm:$0xff]
        %v1561 = vld [vmem:[#allocation4 + $0x30] sm:$0xff]
        %v1562 = vld [vmem:[#allocation4 + $0x38] sm:$0xff]
        %v1563 = vld [vmem:[#allocation4 + $0x40] sm:$0xff]
        %v1564 = vld [vmem:[#allocation4 + $0x48] sm:$0xff]
        %v1565 = vld [vmem:[#allocation4 + $0x50] sm:$0xff]
        %v1566 = vld [vmem:[#allocation4 + $0x58] sm:$0xff]
        %v1567 = vld [vmem:[#allocation4 + $0x60] sm:$0xff]
        %v1568 = vld [vmem:[#allocation4 + $0x68] sm:$0xff]
        %v1569 = vld [vmem:[#allocation4 + $0x70] sm:$0xff]
        %v1570 = vld [vmem:[#allocation4 + $0x78] sm:$0xff]
        %v1571 = vld [vmem:[#allocation4 + $0x80] sm:$0xff]
        %v1572 = vld [vmem:[#allocation4 + $0x88] sm:$0xff]
        %v1573 = vld [vmem:[#allocation4 + $0x90] sm:$0xff]
        %v1574 = vld [vmem:[#allocation4 + $0x98] sm:$0xff]
        %v1575 = vld [vmem:[#allocation4 + $0xa0] sm:$0xff]
        %v1576 = vld [vmem:[#allocation4 + $0xa8] sm:$0xff]
        %v1577 = vld [vmem:[#allocation4 + $0xb0] sm:$0xff]
        %v1578 = vld [vmem:[#allocation4 + $0xb8] sm:$0xff]
        %v1579 = vld [vmem:[#allocation4 + $0xc0] sm:$0xff]
        %v1580 = vld [vmem:[#allocation4 + $0xc8] sm:$0xff]
        %v1581 = vld [vmem:[#allocation4 + $0xd0] sm:$0xff]
        %v1582 = vld [vmem:[#allocation4 + $0xd8] sm:$0xff]
        %v1583 = vld [vmem:[#allocation4 + $0xe0] sm:$0xff]
        %v1584 = vld [vmem:[#allocation4 + $0xe8] sm:$0xff]
        %v1585 = vld [vmem:[#allocation4 + $0xf0] sm:$0xff]
        %v1586 = vld [vmem:[#allocation4 + $0xf8] sm:$0xff]
        %v1587 = vld [vmem:[#allocation3] sm:$0xff]
        %v1588 = vld [vmem:[#allocation3 + $0x8] sm:$0xff]
        %v1589 = vld [vmem:[#allocation3 + $0x10] sm:$0xff]
        %v1590 = vld [vmem:[#allocation3 + $0x18] sm:$0xff]
        %v1591 = vld [vmem:[#allocation3 + $0x20] sm:$0xff]
        %v1592 = vld [vmem:[#allocation3 + $0x28] sm:$0xff]
        %v1593 = vld [vmem:[#allocation3 + $0x30] sm:$0xff]
        %v1594 = vld [vmem:[#allocation3 + $0x38] sm:$0xff]
        %v1595 = vld [vmem:[#allocation3 + $0x40] sm:$0xff]
        %v1596 = vld [vmem:[#allocation3 + $0x48] sm:$0xff]
        %v1597 = vld [vmem:[#allocation3 + $0x50] sm:$0xff]
        %v1598 = vld [vmem:[#allocation3 + $0x58] sm:$0xff]
        %v1599 = vld [vmem:[#allocation3 + $0x60] sm:$0xff]
        %v1600 = vld [vmem:[#allocation3 + $0x68] sm:$0xff]
        %v1601 = vld [vmem:[#allocation3 + $0x70] sm:$0xff]
        %v1602 = vld [vmem:[#allocation3 + $0x78] sm:$0xff]
        %s1603 = scalar_lea.vmem %s1, 64
        %v1604 = vld [vmem:[%s1603] sm:$0xf]
        %v1605 = vld [vmem:[%s1603 + $0x4] sm:$0xf]
        %v1606 = vld [vmem:[%s1603 + $0x8] sm:$0xf]
        %v1607 = vld [vmem:[%s1603 + $0xc] sm:$0xf]
        %v1608 = vld [vmem:[%s1603 + $0x10] sm:$0xf]
        %v1609 = vld [vmem:[%s1603 + $0x14] sm:$0xf]
        %v1610 = vld [vmem:[%s1603 + $0x18] sm:$0xf]
        %v1611 = vld [vmem:[%s1603 + $0x1c] sm:$0xf]
        %v1612 = vld [vmem:[%s1603 + $0x20] sm:$0xf]
        %v1613 = vld [vmem:[%s1603 + $0x24] sm:$0xf]
        %v1614 = vld [vmem:[%s1603 + $0x28] sm:$0xf]
        %v1615 = vld [vmem:[%s1603 + $0x2c] sm:$0xf]
        %v1616 = vld [vmem:[%s1603 + $0x30] sm:$0xf]
        %v1617 = vld [vmem:[%s1603 + $0x34] sm:$0xf]
        %v1618 = vld [vmem:[%s1603 + $0x38] sm:$0xf]
        %v1619 = vld [vmem:[%s1603 + $0x3c] sm:$0xf]
        %v1636 = vunpack.c.l.b16 %v1604
        %v1637 = vunpack.c.l.b16 %v1605
        %v1638 = vunpack.c.l.b16 %v1606
        %v1639 = vunpack.c.l.b16 %v1607
        %v1640 = vunpack.c.l.b16 %v1608
        %v1641 = vunpack.c.l.b16 %v1609
        %v1642 = vunpack.c.l.b16 %v1610
        %v1643 = vunpack.c.l.b16 %v1611
        %v1644 = vunpack.c.l.b16 %v1612
        %v1645 = vunpack.c.l.b16 %v1613
        %v1646 = vunpack.c.l.b16 %v1614
        %v1647 = vunpack.c.l.b16 %v1615
        %v1648 = vunpack.c.l.b16 %v1616
        %v1649 = vunpack.c.l.b16 %v1617
        %v1650 = vunpack.c.l.b16 %v1618
        %v1651 = vunpack.c.l.b16 %v1619
        %v1652 = vpack.c.b16 %v1637, %v1636
        %v1653 = vpack.c.b16 %v1639, %v1638
        %v1654 = vpack.c.b16 %v1641, %v1640
        %v1655 = vpack.c.b16 %v1643, %v1642
        %v1656 = vpack.c.b16 %v1645, %v1644
        %v1657 = vpack.c.b16 %v1647, %v1646
        %v1658 = vpack.c.b16 %v1649, %v1648
        %v1659 = vpack.c.b16 %v1651, %v1650
        %1668 = vmatprep.subr.bf16.mxu0 0
        %1669 = vmatpush1.bf16.msra.mxu0 %v1652
        %1670 = vmatprep.subr.bf16.mxu0 0
        %1671 = vmatpush1.bf16.msra.mxu0 %v1653
        %1672 = vmatprep.subr.bf16.mxu0 0
        %1673 = vmatpush1.bf16.msra.mxu0 %v1654
        %1674 = vmatprep.subr.bf16.mxu0 0
        %1675 = vmatpush1.bf16.msra.mxu0 %v1655
        %1676 = vmatprep.subr.bf16.mxu0 0
        %1677 = vmatpush1.bf16.msra.mxu0 %v1656
        %1678 = vmatprep.subr.bf16.mxu0 0
        %1679 = vmatpush1.bf16.msra.mxu0 %v1657
        %1680 = vmatprep.subr.bf16.mxu0 0
        %1681 = vmatpush1.bf16.msra.mxu0 %v1658
        %1682 = vmatprep.subr.bf16.mxu0 0
        %1683 = vmatpush1.bf16.msra.mxu0 %v1659
        %1684 = vmatprep.subr.bf16.mxu0 0
        %1685 = vmatpush1.bf16.msra.mxu0 0
        %1686 = vmatprep.subr.bf16.mxu0 0
        %1687 = vmatpush1.bf16.msra.mxu0 0
        %1688 = vmatprep.subr.bf16.mxu0 0
        %1689 = vmatpush1.bf16.msra.mxu0 0
        %1690 = vmatprep.subr.bf16.mxu0 0
        %1691 = vmatpush1.bf16.msra.mxu0 0
        %1692 = vmatprep.subr.bf16.mxu0 0
        %1693 = vmatpush1.bf16.msra.mxu0 0
        %1694 = vmatprep.subr.bf16.mxu0 0
        %1695 = vmatpush1.bf16.msra.mxu0 0
        %1696 = vmatprep.subr.bf16.mxu0 0
        %1697 = vmatpush1.bf16.msra.mxu0 0
        %1698 = vmatprep.subr.bf16.mxu0 0
        %1699 = vmatpush1.bf16.msra.mxu0 0
        %1700 = vmatprep.mubr.bf16.mxu0 0
        %1701 = vmatmul.mubr.bf16.gmra.mrb[0].mxu0 %v1587
        %v1702 = vpop.f32.mrb[0].mxu0
        %v1703 = vadd.f32 0.0, %v1702
        %v1704 = vpop.f32.mrb[0].mxu0
        %v1705 = vpop.f32.mrb[0].mxu0
        %v1706 = vadd.f32 0.0, %v1705
        %v1707 = vpop.f32.mrb[0].mxu0
        %1708 = vmatprep.mubr.bf16.mxu0 0
        %1709 = vmatmul.mubr.bf16.gmra.mrb[0].mxu0 %v1588
        %v1710 = vpop.f32.mrb[0].mxu0
        %v1711 = vadd.f32 0.0, %v1710
        %v1712 = vpop.f32.mrb[0].mxu0
        %v1713 = vpop.f32.mrb[0].mxu0
        %v1714 = vadd.f32 0.0, %v1713
        %v1715 = vpop.f32.mrb[0].mxu0
        %1716 = vmatprep.mubr.bf16.mxu0 0
        %1717 = vmatmul.mubr.bf16.gmra.mrb[0].mxu0 %v1589
        %v1718 = vpop.f32.mrb[0].mxu0
        %v1719 = vadd.f32 0.0, %v1718
        %v1720 = vpop.f32.mrb[0].mxu0
        %v1721 = vpop.f32.mrb[0].mxu0
        %v1722 = vadd.f32 0.0, %v1721
        %v1723 = vpop.f32.mrb[0].mxu0
        %1724 = vmatprep.mubr.bf16.mxu0 0
        %1725 = vmatmul.mubr.bf16.gmra.mrb[0].mxu0 %v1590
        %v1726 = vpop.f32.mrb[0].mxu0
        %v1727 = vadd.f32 0.0, %v1726
        %v1728 = vpop.f32.mrb[0].mxu0
        %v1729 = vpop.f32.mrb[0].mxu0
        %v1730 = vadd.f32 0.0, %v1729
        %v1731 = vpop.f32.mrb[0].mxu0
        %1732 = vmatprep.mubr.bf16.mxu0 0
        %1733 = vmatmul.mubr.bf16.gmra.mrb[0].mxu0 %v1591
        %v1734 = vpop.f32.mrb[0].mxu0
        %v1735 = vadd.f32 0.0, %v1734
        %v1736 = vpop.f32.mrb[0].mxu0
        %v1737 = vpop.f32.mrb[0].mxu0
        %v1738 = vadd.f32 0.0, %v1737
        %v1739 = vpop.f32.mrb[0].mxu0
        %1740 = vmatprep.mubr.bf16.mxu0 0
        %1741 = vmatmul.mubr.bf16.gmra.mrb[0].mxu0 %v1592
        %v1742 = vpop.f32.mrb[0].mxu0
        %v1743 = vadd.f32 0.0, %v1742
        %v1744 = vpop.f32.mrb[0].mxu0
        %v1745 = vpop.f32.mrb[0].mxu0
        %v1746 = vadd.f32 0.0, %v1745
        %v1747 = vpop.f32.mrb[0].mxu0
        %1748 = vmatprep.mubr.bf16.mxu0 0
        %1749 = vmatmul.mubr.bf16.gmra.mrb[0].mxu0 %v1593
        %v1750 = vpop.f32.mrb[0].mxu0
        %v1751 = vadd.f32 0.0, %v1750
        %v1752 = vpop.f32.mrb[0].mxu0
        %v1753 = vpop.f32.mrb[0].mxu0
        %v1754 = vadd.f32 0.0, %v1753
        %v1755 = vpop.f32.mrb[0].mxu0
        %1756 = vmatprep.mubr.bf16.mxu0 0
        %1757 = vmatmul.mubr.bf16.gmra.mrb[0].mxu0 %v1594
        %v1758 = vpop.f32.mrb[0].mxu0
        %v1759 = vadd.f32 0.0, %v1758
        %v1760 = vpop.f32.mrb[0].mxu0
        %v1761 = vpop.f32.mrb[0].mxu0
        %v1762 = vadd.f32 0.0, %v1761
        %v1763 = vpop.f32.mrb[0].mxu0
        %1764 = vmatprep.mubr.bf16.mxu0 0
        %1765 = vmatmul.mubr.bf16.gmra.mrb[0].mxu0 %v1595
        %v1766 = vpop.f32.mrb[0].mxu0
        %v1767 = vadd.f32 0.0, %v1766
        %v1768 = vpop.f32.mrb[0].mxu0
        %v1769 = vpop.f32.mrb[0].mxu0
        %v1770 = vadd.f32 0.0, %v1769
        %v1771 = vpop.f32.mrb[0].mxu0
        %1772 = vmatprep.mubr.bf16.mxu0 0
        %1773 = vmatmul.mubr.bf16.gmra.mrb[0].mxu0 %v1596
        %v1774 = vpop.f32.mrb[0].mxu0
        %v1775 = vadd.f32 0.0, %v1774
        %v1776 = vpop.f32.mrb[0].mxu0
        %v1777 = vpop.f32.mrb[0].mxu0
        %v1778 = vadd.f32 0.0, %v1777
        %v1779 = vpop.f32.mrb[0].mxu0
        %1780 = vmatprep.mubr.bf16.mxu0 0
        %1781 = vmatmul.mubr.bf16.gmra.mrb[0].mxu0 %v1597
        %v1782 = vpop.f32.mrb[0].mxu0
        %v1783 = vadd.f32 0.0, %v1782
        %v1784 = vpop.f32.mrb[0].mxu0
        %v1785 = vpop.f32.mrb[0].mxu0
        %v1786 = vadd.f32 0.0, %v1785
        %v1787 = vpop.f32.mrb[0].mxu0
        %1788 = vmatprep.mubr.bf16.mxu0 0
        %1789 = vmatmul.mubr.bf16.gmra.mrb[0].mxu0 %v1598
        %v1790 = vpop.f32.mrb[0].mxu0
        %v1791 = vadd.f32 0.0, %v1790
        %v1792 = vpop.f32.mrb[0].mxu0
        %v1793 = vpop.f32.mrb[0].mxu0
        %v1794 = vadd.f32 0.0, %v1793
        %v1795 = vpop.f32.mrb[0].mxu0
        %1796 = vmatprep.mubr.bf16.mxu0 0
        %1797 = vmatmul.mubr.bf16.gmra.mrb[0].mxu0 %v1599
        %v1798 = vpop.f32.mrb[0].mxu0
        %v1799 = vadd.f32 0.0, %v1798
        %v1800 = vpop.f32.mrb[0].mxu0
        %v1801 = vpop.f32.mrb[0].mxu0
        %v1802 = vadd.f32 0.0, %v1801
        %v1803 = vpop.f32.mrb[0].mxu0
        %1804 = vmatprep.mubr.bf16.mxu0 0
        %1805 = vmatmul.mubr.bf16.gmra.mrb[0].mxu0 %v1600
        %v1806 = vpop.f32.mrb[0].mxu0
        %v1807 = vadd.f32 0.0, %v1806
        %v1808 = vpop.f32.mrb[0].mxu0
        %v1809 = vpop.f32.mrb[0].mxu0
        %v1810 = vadd.f32 0.0, %v1809
        %v1811 = vpop.f32.mrb[0].mxu0
        %1812 = vmatprep.mubr.bf16.mxu0 0
        %1813 = vmatmul.mubr.bf16.gmra.mrb[0].mxu0 %v1601
        %v1814 = vpop.f32.mrb[0].mxu0
        %v1815 = vadd.f32 0.0, %v1814
        %v1816 = vpop.f32.mrb[0].mxu0
        %v1817 = vpop.f32.mrb[0].mxu0
        %v1818 = vadd.f32 0.0, %v1817
        %v1819 = vpop.f32.mrb[0].mxu0
        %1820 = vmatprep.mubr.bf16.mxu0 0
        %1821 = vmatmul.mubr.bf16.gmra.mrb[0].mxu0 %v1602
        %v1822 = vpop.f32.mrb[0].mxu0
        %v1823 = vadd.f32 0.0, %v1822
        %v1824 = vpop.f32.mrb[0].mxu0
        %v1825 = vpop.f32.mrb[0].mxu0
        %v1826 = vadd.f32 0.0, %v1825
        %v1827 = vpop.f32.mrb[0].mxu0
        %1828 = vdwg.mxu0
        %v1829 = vadd.f32 %v1555, %v1703
        %v1830 = vadd.f32 %v1556, %v1706
        %v1831 = vadd.f32 %v1557, %v1711
        %v1832 = vadd.f32 %v1558, %v1714
        %v1833 = vadd.f32 %v1559, %v1719
        %v1834 = vadd.f32 %v1560, %v1722
        %v1835 = vadd.f32 %v1561, %v1727
        %v1836 = vadd.f32 %v1562, %v1730
        %v1837 = vadd.f32 %v1563, %v1735
        %v1838 = vadd.f32 %v1564, %v1738
        %v1839 = vadd.f32 %v1565, %v1743
        %v1840 = vadd.f32 %v1566, %v1746
        %v1841 = vadd.f32 %v1567, %v1751
        %v1842 = vadd.f32 %v1568, %v1754
        %v1843 = vadd.f32 %v1569, %v1759
        %v1844 = vadd.f32 %v1570, %v1762
        %v1845 = vadd.f32 %v1571, %v1767
        %v1846 = vadd.f32 %v1572, %v1770
        %v1847 = vadd.f32 %v1573, %v1775
        %v1848 = vadd.f32 %v1574, %v1778
        %v1849 = vadd.f32 %v1575, %v1783
        %v1850 = vadd.f32 %v1576, %v1786
        %v1851 = vadd.f32 %v1577, %v1791
        %v1852 = vadd.f32 %v1578, %v1794
        %v1853 = vadd.f32 %v1579, %v1799
        %v1854 = vadd.f32 %v1580, %v1802
        %v1855 = vadd.f32 %v1581, %v1807
        %v1856 = vadd.f32 %v1582, %v1810
        %v1857 = vadd.f32 %v1583, %v1815
        %v1858 = vadd.f32 %v1584, %v1818
        %v1859 = vadd.f32 %v1585, %v1823
        %v1860 = vadd.f32 %v1586, %v1826
        %1861 = vst [vmem:[#allocation4] sm:$0xff] %v1829
        %1862 = vst [vmem:[#allocation4 + $0x8] sm:$0xff] %v1830
        %1863 = vst [vmem:[#allocation4 + $0x10] sm:$0xff] %v1831
        %1864 = vst [vmem:[#allocation4 + $0x18] sm:$0xff] %v1832
        %1865 = vst [vmem:[#allocation4 + $0x20] sm:$0xff] %v1833
        %1866 = vst [vmem:[#allocation4 + $0x28] sm:$0xff] %v1834
        %1867 = vst [vmem:[#allocation4 + $0x30] sm:$0xff] %v1835
        %1868 = vst [vmem:[#allocation4 + $0x38] sm:$0xff] %v1836
        %1869 = vst [vmem:[#allocation4 + $0x40] sm:$0xff] %v1837
        %1870 = vst [vmem:[#allocation4 + $0x48] sm:$0xff] %v1838
        %1871 = vst [vmem:[#allocation4 + $0x50] sm:$0xff] %v1839
        %1872 = vst [vmem:[#allocation4 + $0x58] sm:$0xff] %v1840
        %1873 = vst [vmem:[#allocation4 + $0x60] sm:$0xff] %v1841
        %1874 = vst [vmem:[#allocation4 + $0x68] sm:$0xff] %v1842
        %1875 = vst [vmem:[#allocation4 + $0x70] sm:$0xff] %v1843
        %1876 = vst [vmem:[#allocation4 + $0x78] sm:$0xff] %v1844
        %1877 = vst [vmem:[#allocation4 + $0x80] sm:$0xff] %v1845
        %1878 = vst [vmem:[#allocation4 + $0x88] sm:$0xff] %v1846
        %1879 = vst [vmem:[#allocation4 + $0x90] sm:$0xff] %v1847
        %1880 = vst [vmem:[#allocation4 + $0x98] sm:$0xff] %v1848
        %1881 = vst [vmem:[#allocation4 + $0xa0] sm:$0xff] %v1849
        %1882 = vst [vmem:[#allocation4 + $0xa8] sm:$0xff] %v1850
        %1883 = vst [vmem:[#allocation4 + $0xb0] sm:$0xff] %v1851
        %1884 = vst [vmem:[#allocation4 + $0xb8] sm:$0xff] %v1852
        %1885 = vst [vmem:[#allocation4 + $0xc0] sm:$0xff] %v1853
        %1886 = vst [vmem:[#allocation4 + $0xc8] sm:$0xff] %v1854
        %1887 = vst [vmem:[#allocation4 + $0xd0] sm:$0xff] %v1855
        %1888 = vst [vmem:[#allocation4 + $0xd8] sm:$0xff] %v1856
        %1889 = vst [vmem:[#allocation4 + $0xe0] sm:$0xff] %v1857
        %1890 = vst [vmem:[#allocation4 + $0xe8] sm:$0xff] %v1858
        %1891 = vst [vmem:[#allocation4 + $0xf0] sm:$0xff] %v1859
        %1892 = vst [vmem:[#allocation4 + $0xf8] sm:$0xff] %v1860
        %v1893 = vld [vmem:[#allocation4] sm:$0xff]
        %v1894 = vld [vmem:[#allocation4 + $0x8] sm:$0xff]
        %v1895 = vld [vmem:[#allocation4 + $0x10] sm:$0xff]
        %v1896 = vld [vmem:[#allocation4 + $0x18] sm:$0xff]
        %v1897 = vld [vmem:[#allocation4 + $0x20] sm:$0xff]
        %v1898 = vld [vmem:[#allocation4 + $0x28] sm:$0xff]
        %v1899 = vld [vmem:[#allocation4 + $0x30] sm:$0xff]
        %v1900 = vld [vmem:[#allocation4 + $0x38] sm:$0xff]
        %v1901 = vld [vmem:[#allocation4 + $0x40] sm:$0xff]
        %v1902 = vld [vmem:[#allocation4 + $0x48] sm:$0xff]
        %v1903 = vld [vmem:[#allocation4 + $0x50] sm:$0xff]
        %v1904 = vld [vmem:[#allocation4 + $0x58] sm:$0xff]
        %v1905 = vld [vmem:[#allocation4 + $0x60] sm:$0xff]
        %v1906 = vld [vmem:[#allocation4 + $0x68] sm:$0xff]
        %v1907 = vld [vmem:[#allocation4 + $0x70] sm:$0xff]
        %v1908 = vld [vmem:[#allocation4 + $0x78] sm:$0xff]
        %v1909 = vld [vmem:[#allocation4 + $0x80] sm:$0xff]
        %v1910 = vld [vmem:[#allocation4 + $0x88] sm:$0xff]
        %v1911 = vld [vmem:[#allocation4 + $0x90] sm:$0xff]
        %v1912 = vld [vmem:[#allocation4 + $0x98] sm:$0xff]
        %v1913 = vld [vmem:[#allocation4 + $0xa0] sm:$0xff]
        %v1914 = vld [vmem:[#allocation4 + $0xa8] sm:$0xff]
        %v1915 = vld [vmem:[#allocation4 + $0xb0] sm:$0xff]
        %v1916 = vld [vmem:[#allocation4 + $0xb8] sm:$0xff]
        %v1917 = vld [vmem:[#allocation4 + $0xc0] sm:$0xff]
        %v1918 = vld [vmem:[#allocation4 + $0xc8] sm:$0xff]
        %v1919 = vld [vmem:[#allocation4 + $0xd0] sm:$0xff]
        %v1920 = vld [vmem:[#allocation4 + $0xd8] sm:$0xff]
        %v1921 = vld [vmem:[#allocation4 + $0xe0] sm:$0xff]
        %v1922 = vld [vmem:[#allocation4 + $0xe8] sm:$0xff]
        %v1923 = vld [vmem:[#allocation4 + $0xf0] sm:$0xff]
        %v1924 = vld [vmem:[#allocation4 + $0xf8] sm:$0xff]
        %v1925 = vld [vmem:[#allocation3 + $0x8] sm:$0xff]
        %v1926 = vld [vmem:[#allocation3 + $0x10] sm:$0xff]
        %v1927 = vld [vmem:[#allocation3 + $0x18] sm:$0xff]
        %v1928 = vld [vmem:[#allocation3 + $0x20] sm:$0xff]
        %v1929 = vld [vmem:[#allocation3 + $0x28] sm:$0xff]
        %v1930 = vld [vmem:[#allocation3 + $0x30] sm:$0xff]
        %v1931 = vld [vmem:[#allocation3 + $0x38] sm:$0xff]
        %v1932 = vld [vmem:[#allocation3 + $0x40] sm:$0xff]
        %v1933 = vld [vmem:[#allocation3 + $0x48] sm:$0xff]
        %v1934 = vld [vmem:[#allocation3 + $0x50] sm:$0xff]
        %v1935 = vld [vmem:[#allocation3 + $0x58] sm:$0xff]
        %v1936 = vld [vmem:[#allocation3 + $0x60] sm:$0xff]
        %v1937 = vld [vmem:[#allocation3 + $0x68] sm:$0xff]
        %v1938 = vld [vmem:[#allocation3 + $0x70] sm:$0xff]
        %v1939 = vld [vmem:[#allocation3 + $0x78] sm:$0xff]
        %v1940 = vld [vmem:[#allocation3 + $0x80] sm:$0xff]
        %s1941 = scalar_lea.vmem %s1, 256
        %v1942 = vld [vmem:[%s1941] sm:$0xf]
        %v1943 = vld [vmem:[%s1941 + $0x4] sm:$0xf]
        %v1944 = vld [vmem:[%s1941 + $0x8] sm:$0xf]
        %v1945 = vld [vmem:[%s1941 + $0xc] sm:$0xf]
        %v1946 = vld [vmem:[%s1941 + $0x10] sm:$0xf]
        %v1947 = vld [vmem:[%s1941 + $0x14] sm:$0xf]
        %v1948 = vld [vmem:[%s1941 + $0x18] sm:$0xf]
        %v1949 = vld [vmem:[%s1941 + $0x1c] sm:$0xf]
        %v1950 = vld [vmem:[%s1941 + $0x20] sm:$0xf]
        %v1951 = vld [vmem:[%s1941 + $0x24] sm:$0xf]
        %v1952 = vld [vmem:[%s1941 + $0x28] sm:$0xf]
        %v1953 = vld [vmem:[%s1941 + $0x2c] sm:$0xf]
        %v1954 = vld [vmem:[%s1941 + $0x30] sm:$0xf]
        %v1955 = vld [vmem:[%s1941 + $0x34] sm:$0xf]
        %v1956 = vld [vmem:[%s1941 + $0x38] sm:$0xf]
        %v1957 = vld [vmem:[%s1941 + $0x3c] sm:$0xf]
        %v1974 = vunpack.c.l.b16 %v1942
        %v1975 = vunpack.c.l.b16 %v1943
        %v1976 = vunpack.c.l.b16 %v1944
        %v1977 = vunpack.c.l.b16 %v1945
        %v1978 = vunpack.c.l.b16 %v1946
        %v1979 = vunpack.c.l.b16 %v1947
        %v1980 = vunpack.c.l.b16 %v1948
        %v1981 = vunpack.c.l.b16 %v1949
        %v1982 = vunpack.c.l.b16 %v1950
        %v1983 = vunpack.c.l.b16 %v1951
        %v1984 = vunpack.c.l.b16 %v1952
        %v1985 = vunpack.c.l.b16 %v1953
        %v1986 = vunpack.c.l.b16 %v1954
        %v1987 = vunpack.c.l.b16 %v1955
        %v1988 = vunpack.c.l.b16 %v1956
        %v1989 = vunpack.c.l.b16 %v1957
        %v1990 = vpack.c.b16 %v1975, %v1974
        %v1991 = vpack.c.b16 %v1977, %v1976
        %v1992 = vpack.c.b16 %v1979, %v1978
        %v1993 = vpack.c.b16 %v1981, %v1980
        %v1994 = vpack.c.b16 %v1983, %v1982
        %v1995 = vpack.c.b16 %v1985, %v1984
        %v1996 = vpack.c.b16 %v1987, %v1986
        %v1997 = vpack.c.b16 %v1989, %v1988
        %2006 = vmatprep.subr.bf16.mxu0 0
        %2007 = vmatpush1.bf16.msra.mxu0 %v1990
        %2008 = vmatprep.subr.bf16.mxu0 0
        %2009 = vmatpush1.bf16.msra.mxu0 %v1991
        %2010 = vmatprep.subr.bf16.mxu0 0
        %2011 = vmatpush1.bf16.msra.mxu0 %v1992
        %2012 = vmatprep.subr.bf16.mxu0 0
        %2013 = vmatpush1.bf16.msra.mxu0 %v1993
        %2014 = vmatprep.subr.bf16.mxu0 0
        %2015 = vmatpush1.bf16.msra.mxu0 %v1994
        %2016 = vmatprep.subr.bf16.mxu0 0
        %2017 = vmatpush1.bf16.msra.mxu0 %v1995
        %2018 = vmatprep.subr.bf16.mxu0 0
        %2019 = vmatpush1.bf16.msra.mxu0 %v1996
        %2020 = vmatprep.subr.bf16.mxu0 0
        %2021 = vmatpush1.bf16.msra.mxu0 %v1997
        %2022 = vmatprep.subr.bf16.mxu0 0
        %2023 = vmatpush1.bf16.msra.mxu0 0
        %2024 = vmatprep.subr.bf16.mxu0 0
        %2025 = vmatpush1.bf16.msra.mxu0 0
        %2026 = vmatprep.subr.bf16.mxu0 0
        %2027 = vmatpush1.bf16.msra.mxu0 0
        %2028 = vmatprep.subr.bf16.mxu0 0
        %2029 = vmatpush1.bf16.msra.mxu0 0
        %2030 = vmatprep.subr.bf16.mxu0 0
        %2031 = vmatpush1.bf16.msra.mxu0 0
        %2032 = vmatprep.subr.bf16.mxu0 0
        %2033 = vmatpush1.bf16.msra.mxu0 0
        %2034 = vmatprep.subr.bf16.mxu0 0
        %2035 = vmatpush1.bf16.msra.mxu0 0
        %2036 = vmatprep.subr.bf16.mxu0 0
        %2037 = vmatpush1.bf16.msra.mxu0 0
        %2038 = vmatprep.mubr.bf16.mxu0 0
        %2039 = vmatmul.mubr.bf16.gmra.mrb[0].mxu0 %v1925
        %v2040 = vpop.f32.mrb[0].mxu0
        %v2041 = vadd.f32 0.0, %v2040
        %v2042 = vpop.f32.mrb[0].mxu0
        %v2043 = vpop.f32.mrb[0].mxu0
        %v2044 = vadd.f32 0.0, %v2043
        %v2045 = vpop.f32.mrb[0].mxu0
        %2046 = vmatprep.mubr.bf16.mxu0 0
        %2047 = vmatmul.mubr.bf16.gmra.mrb[0].mxu0 %v1926
        %v2048 = vpop.f32.mrb[0].mxu0
        %v2049 = vadd.f32 0.0, %v2048
        %v2050 = vpop.f32.mrb[0].mxu0
        %v2051 = vpop.f32.mrb[0].mxu0
        %v2052 = vadd.f32 0.0, %v2051
        %v2053 = vpop.f32.mrb[0].mxu0
        %2054 = vmatprep.mubr.bf16.mxu0 0
        %2055 = vmatmul.mubr.bf16.gmra.mrb[0].mxu0 %v1927
        %v2056 = vpop.f32.mrb[0].mxu0
        %v2057 = vadd.f32 0.0, %v2056
        %v2058 = vpop.f32.mrb[0].mxu0
        %v2059 = vpop.f32.mrb[0].mxu0
        %v2060 = vadd.f32 0.0, %v2059
        %v2061 = vpop.f32.mrb[0].mxu0
        %2062 = vmatprep.mubr.bf16.mxu0 0
        %2063 = vmatmul.mubr.bf16.gmra.mrb[0].mxu0 %v1928
        %v2064 = vpop.f32.mrb[0].mxu0
        %v2065 = vadd.f32 0.0, %v2064
        %v2066 = vpop.f32.mrb[0].mxu0
        %v2067 = vpop.f32.mrb[0].mxu0
        %v2068 = vadd.f32 0.0, %v2067
        %v2069 = vpop.f32.mrb[0].mxu0
        %2070 = vmatprep.mubr.bf16.mxu0 0
        %2071 = vmatmul.mubr.bf16.gmra.mrb[0].mxu0 %v1929
        %v2072 = vpop.f32.mrb[0].mxu0
        %v2073 = vadd.f32 0.0, %v2072
        %v2074 = vpop.f32.mrb[0].mxu0
        %v2075 = vpop.f32.mrb[0].mxu0
        %v2076 = vadd.f32 0.0, %v2075
        %v2077 = vpop.f32.mrb[0].mxu0
        %2078 = vmatprep.mubr.bf16.mxu0 0
        %2079 = vmatmul.mubr.bf16.gmra.mrb[0].mxu0 %v1930
        %v2080 = vpop.f32.mrb[0].mxu0
        %v2081 = vadd.f32 0.0, %v2080
        %v2082 = vpop.f32.mrb[0].mxu0
        %v2083 = vpop.f32.mrb[0].mxu0
        %v2084 = vadd.f32 0.0, %v2083
        %v2085 = vpop.f32.mrb[0].mxu0
        %2086 = vmatprep.mubr.bf16.mxu0 0
        %2087 = vmatmul.mubr.bf16.gmra.mrb[0].mxu0 %v1931
        %v2088 = vpop.f32.mrb[0].mxu0
        %v2089 = vadd.f32 0.0, %v2088
        %v2090 = vpop.f32.mrb[0].mxu0
        %v2091 = vpop.f32.mrb[0].mxu0
        %v2092 = vadd.f32 0.0, %v2091
        %v2093 = vpop.f32.mrb[0].mxu0
        %2094 = vmatprep.mubr.bf16.mxu0 0
        %2095 = vmatmul.mubr.bf16.gmra.mrb[0].mxu0 %v1932
        %v2096 = vpop.f32.mrb[0].mxu0
        %v2097 = vadd.f32 0.0, %v2096
        %v2098 = vpop.f32.mrb[0].mxu0
        %v2099 = vpop.f32.mrb[0].mxu0
        %v2100 = vadd.f32 0.0, %v2099
        %v2101 = vpop.f32.mrb[0].mxu0
        %2102 = vmatprep.mubr.bf16.mxu0 0
        %2103 = vmatmul.mubr.bf16.gmra.mrb[0].mxu0 %v1933
        %v2104 = vpop.f32.mrb[0].mxu0
        %v2105 = vadd.f32 0.0, %v2104
        %v2106 = vpop.f32.mrb[0].mxu0
        %v2107 = vpop.f32.mrb[0].mxu0
        %v2108 = vadd.f32 0.0, %v2107
        %v2109 = vpop.f32.mrb[0].mxu0
        %2110 = vmatprep.mubr.bf16.mxu0 0
        %2111 = vmatmul.mubr.bf16.gmra.mrb[0].mxu0 %v1934
        %v2112 = vpop.f32.mrb[0].mxu0
        %v2113 = vadd.f32 0.0, %v2112
        %v2114 = vpop.f32.mrb[0].mxu0
        %v2115 = vpop.f32.mrb[0].mxu0
        %v2116 = vadd.f32 0.0, %v2115
        %v2117 = vpop.f32.mrb[0].mxu0
        %2118 = vmatprep.mubr.bf16.mxu0 0
        %2119 = vmatmul.mubr.bf16.gmra.mrb[0].mxu0 %v1935
        %v2120 = vpop.f32.mrb[0].mxu0
        %v2121 = vadd.f32 0.0, %v2120
        %v2122 = vpop.f32.mrb[0].mxu0
        %v2123 = vpop.f32.mrb[0].mxu0
        %v2124 = vadd.f32 0.0, %v2123
        %v2125 = vpop.f32.mrb[0].mxu0
        %2126 = vmatprep.mubr.bf16.mxu0 0
        %2127 = vmatmul.mubr.bf16.gmra.mrb[0].mxu0 %v1936
        %v2128 = vpop.f32.mrb[0].mxu0
        %v2129 = vadd.f32 0.0, %v2128
        %v2130 = vpop.f32.mrb[0].mxu0
        %v2131 = vpop.f32.mrb[0].mxu0
        %v2132 = vadd.f32 0.0, %v2131
        %v2133 = vpop.f32.mrb[0].mxu0
        %2134 = vmatprep.mubr.bf16.mxu0 0
        %2135 = vmatmul.mubr.bf16.gmra.mrb[0].mxu0 %v1937
        %v2136 = vpop.f32.mrb[0].mxu0
        %v2137 = vadd.f32 0.0, %v2136
        %v2138 = vpop.f32.mrb[0].mxu0
        %v2139 = vpop.f32.mrb[0].mxu0
        %v2140 = vadd.f32 0.0, %v2139
        %v2141 = vpop.f32.mrb[0].mxu0
        %2142 = vmatprep.mubr.bf16.mxu0 0
        %2143 = vmatmul.mubr.bf16.gmra.mrb[0].mxu0 %v1938
        %v2144 = vpop.f32.mrb[0].mxu0
        %v2145 = vadd.f32 0.0, %v2144
        %v2146 = vpop.f32.mrb[0].mxu0
        %v2147 = vpop.f32.mrb[0].mxu0
        %v2148 = vadd.f32 0.0, %v2147
        %v2149 = vpop.f32.mrb[0].mxu0
        %2150 = vmatprep.mubr.bf16.mxu0 0
        %2151 = vmatmul.mubr.bf16.gmra.mrb[0].mxu0 %v1939
        %v2152 = vpop.f32.mrb[0].mxu0
        %v2153 = vadd.f32 0.0, %v2152
        %v2154 = vpop.f32.mrb[0].mxu0
        %v2155 = vpop.f32.mrb[0].mxu0
        %v2156 = vadd.f32 0.0, %v2155
        %v2157 = vpop.f32.mrb[0].mxu0
        %2158 = vmatprep.mubr.bf16.mxu0 0
        %2159 = vmatmul.mubr.bf16.gmra.mrb[0].mxu0 %v1940
        %v2160 = vpop.f32.mrb[0].mxu0
        %v2161 = vadd.f32 0.0, %v2160
        %v2162 = vpop.f32.mrb[0].mxu0
        %v2163 = vpop.f32.mrb[0].mxu0
        %v2164 = vadd.f32 0.0, %v2163
        %v2165 = vpop.f32.mrb[0].mxu0
        %2166 = vdwg.mxu0
        %v2167 = vadd.f32 %v1893, %v2041
        %v2168 = vadd.f32 %v1894, %v2044
        %v2169 = vadd.f32 %v1895, %v2049
        %v2170 = vadd.f32 %v1896, %v2052
        %v2171 = vadd.f32 %v1897, %v2057
        %v2172 = vadd.f32 %v1898, %v2060
        %v2173 = vadd.f32 %v1899, %v2065
        %v2174 = vadd.f32 %v1900, %v2068
        %v2175 = vadd.f32 %v1901, %v2073
        %v2176 = vadd.f32 %v1902, %v2076
        %v2177 = vadd.f32 %v1903, %v2081
        %v2178 = vadd.f32 %v1904, %v2084
        %v2179 = vadd.f32 %v1905, %v2089
        %v2180 = vadd.f32 %v1906, %v2092
        %v2181 = vadd.f32 %v1907, %v2097
        %v2182 = vadd.f32 %v1908, %v2100
        %v2183 = vadd.f32 %v1909, %v2105
        %v2184 = vadd.f32 %v1910, %v2108
        %v2185 = vadd.f32 %v1911, %v2113
        %v2186 = vadd.f32 %v1912, %v2116
        %v2187 = vadd.f32 %v1913, %v2121
        %v2188 = vadd.f32 %v1914, %v2124
        %v2189 = vadd.f32 %v1915, %v2129
        %v2190 = vadd.f32 %v1916, %v2132
        %v2191 = vadd.f32 %v1917, %v2137
        %v2192 = vadd.f32 %v1918, %v2140
        %v2193 = vadd.f32 %v1919, %v2145
        %v2194 = vadd.f32 %v1920, %v2148
        %v2195 = vadd.f32 %v1921, %v2153
        %v2196 = vadd.f32 %v1922, %v2156
        %v2197 = vadd.f32 %v1923, %v2161
        %v2198 = vadd.f32 %v1924, %v2164
        %2199 = vst [vmem:[#allocation4] sm:$0xff] %v2167
        %2200 = vst [vmem:[#allocation4 + $0x8] sm:$0xff] %v2168
        %2201 = vst [vmem:[#allocation4 + $0x10] sm:$0xff] %v2169
        %2202 = vst [vmem:[#allocation4 + $0x18] sm:$0xff] %v2170
        %2203 = vst [vmem:[#allocation4 + $0x20] sm:$0xff] %v2171
        %2204 = vst [vmem:[#allocation4 + $0x28] sm:$0xff] %v2172
        %2205 = vst [vmem:[#allocation4 + $0x30] sm:$0xff] %v2173
        %2206 = vst [vmem:[#allocation4 + $0x38] sm:$0xff] %v2174
        %2207 = vst [vmem:[#allocation4 + $0x40] sm:$0xff] %v2175
        %2208 = vst [vmem:[#allocation4 + $0x48] sm:$0xff] %v2176
        %2209 = vst [vmem:[#allocation4 + $0x50] sm:$0xff] %v2177
        %2210 = vst [vmem:[#allocation4 + $0x58] sm:$0xff] %v2178
        %2211 = vst [vmem:[#allocation4 + $0x60] sm:$0xff] %v2179
        %2212 = vst [vmem:[#allocation4 + $0x68] sm:$0xff] %v2180
        %2213 = vst [vmem:[#allocation4 + $0x70] sm:$0xff] %v2181
        %2214 = vst [vmem:[#allocation4 + $0x78] sm:$0xff] %v2182
        %2215 = vst [vmem:[#allocation4 + $0x80] sm:$0xff] %v2183
        %2216 = vst [vmem:[#allocation4 + $0x88] sm:$0xff] %v2184
        %2217 = vst [vmem:[#allocation4 + $0x90] sm:$0xff] %v2185
        %2218 = vst [vmem:[#allocation4 + $0x98] sm:$0xff] %v2186
        %2219 = vst [vmem:[#allocation4 + $0xa0] sm:$0xff] %v2187
        %2220 = vst [vmem:[#allocation4 + $0xa8] sm:$0xff] %v2188
        %2221 = vst [vmem:[#allocation4 + $0xb0] sm:$0xff] %v2189
        %2222 = vst [vmem:[#allocation4 + $0xb8] sm:$0xff] %v2190
        %2223 = vst [vmem:[#allocation4 + $0xc0] sm:$0xff] %v2191
        %2224 = vst [vmem:[#allocation4 + $0xc8] sm:$0xff] %v2192
        %2225 = vst [vmem:[#allocation4 + $0xd0] sm:$0xff] %v2193
        %2226 = vst [vmem:[#allocation4 + $0xd8] sm:$0xff] %v2194
        %2227 = vst [vmem:[#allocation4 + $0xe0] sm:$0xff] %v2195
        %2228 = vst [vmem:[#allocation4 + $0xe8] sm:$0xff] %v2196
        %2229 = vst [vmem:[#allocation4 + $0xf0] sm:$0xff] %v2197
        %2230 = vst [vmem:[#allocation4 + $0xf8] sm:$0xff] %v2198
        %v2231 = vld [vmem:[#allocation4] sm:$0xff]
        %v2232 = vld [vmem:[#allocation4 + $0x8] sm:$0xff]
        %v2233 = vld [vmem:[#allocation4 + $0x10] sm:$0xff]
        %v2234 = vld [vmem:[#allocation4 + $0x18] sm:$0xff]
        %v2235 = vld [vmem:[#allocation4 + $0x20] sm:$0xff]
        %v2236 = vld [vmem:[#allocation4 + $0x28] sm:$0xff]
        %v2237 = vld [vmem:[#allocation4 + $0x30] sm:$0xff]
        %v2238 = vld [vmem:[#allocation4 + $0x38] sm:$0xff]
        %v2239 = vld [vmem:[#allocation4 + $0x40] sm:$0xff]
        %v2240 = vld [vmem:[#allocation4 + $0x48] sm:$0xff]
        %v2241 = vld [vmem:[#allocation4 + $0x50] sm:$0xff]
        %v2242 = vld [vmem:[#allocation4 + $0x58] sm:$0xff]
        %v2243 = vld [vmem:[#allocation4 + $0x60] sm:$0xff]
        %v2244 = vld [vmem:[#allocation4 + $0x68] sm:$0xff]
        %v2245 = vld [vmem:[#allocation4 + $0x70] sm:$0xff]
        %v2246 = vld [vmem:[#allocation4 + $0x78] sm:$0xff]
        %v2247 = vld [vmem:[#allocation4 + $0x80] sm:$0xff]
        %v2248 = vld [vmem:[#allocation4 + $0x88] sm:$0xff]
        %v2249 = vld [vmem:[#allocation4 + $0x90] sm:$0xff]
        %v2250 = vld [vmem:[#allocation4 + $0x98] sm:$0xff]
        %v2251 = vld [vmem:[#allocation4 + $0xa0] sm:$0xff]
        %v2252 = vld [vmem:[#allocation4 + $0xa8] sm:$0xff]
        %v2253 = vld [vmem:[#allocation4 + $0xb0] sm:$0xff]
        %v2254 = vld [vmem:[#allocation4 + $0xb8] sm:$0xff]
        %v2255 = vld [vmem:[#allocation4 + $0xc0] sm:$0xff]
        %v2256 = vld [vmem:[#allocation4 + $0xc8] sm:$0xff]
        %v2257 = vld [vmem:[#allocation4 + $0xd0] sm:$0xff]
        %v2258 = vld [vmem:[#allocation4 + $0xd8] sm:$0xff]
        %v2259 = vld [vmem:[#allocation4 + $0xe0] sm:$0xff]
        %v2260 = vld [vmem:[#allocation4 + $0xe8] sm:$0xff]
        %v2261 = vld [vmem:[#allocation4 + $0xf0] sm:$0xff]
        %v2262 = vld [vmem:[#allocation4 + $0xf8] sm:$0xff]
        %v2263 = vld [vmem:[#allocation3 + $0x10] sm:$0xff]
        %v2264 = vld [vmem:[#allocation3 + $0x18] sm:$0xff]
        %v2265 = vld [vmem:[#allocation3 + $0x20] sm:$0xff]
        %v2266 = vld [vmem:[#allocation3 + $0x28] sm:$0xff]
        %v2267 = vld [vmem:[#allocation3 + $0x30] sm:$0xff]
        %v2268 = vld [vmem:[#allocation3 + $0x38] sm:$0xff]
        %v2269 = vld [vmem:[#allocation3 + $0x40] sm:$0xff]
        %v2270 = vld [vmem:[#allocation3 + $0x48] sm:$0xff]
        %v2271 = vld [vmem:[#allocation3 + $0x50] sm:$0xff]
        %v2272 = vld [vmem:[#allocation3 + $0x58] sm:$0xff]
        %v2273 = vld [vmem:[#allocation3 + $0x60] sm:$0xff]
        %v2274 = vld [vmem:[#allocation3 + $0x68] sm:$0xff]
        %v2275 = vld [vmem:[#allocation3 + $0x70] sm:$0xff]
        %v2276 = vld [vmem:[#allocation3 + $0x78] sm:$0xff]
        %v2277 = vld [vmem:[#allocation3 + $0x80] sm:$0xff]
        %v2278 = vld [vmem:[#allocation3 + $0x88] sm:$0xff]
        %s2279 = scalar_lea.vmem %s1, 448
        %v2280 = vld [vmem:[%s2279] sm:$0xf]
        %v2281 = vld [vmem:[%s2279 + $0x4] sm:$0xf]
        %v2282 = vld [vmem:[%s2279 + $0x8] sm:$0xf]
        %v2283 = vld [vmem:[%s2279 + $0xc] sm:$0xf]
        %v2284 = vld [vmem:[%s2279 + $0x10] sm:$0xf]
        %v2285 = vld [vmem:[%s2279 + $0x14] sm:$0xf]
        %v2286 = vld [vmem:[%s2279 + $0x18] sm:$0xf]
        %v2287 = vld [vmem:[%s2279 + $0x1c] sm:$0xf]
        %v2288 = vld [vmem:[%s2279 + $0x20] sm:$0xf]
        %v2289 = vld [vmem:[%s2279 + $0x24] sm:$0xf]
        %v2290 = vld [vmem:[%s2279 + $0x28] sm:$0xf]
        %v2291 = vld [vmem:[%s2279 + $0x2c] sm:$0xf]
        %v2292 = vld [vmem:[%s2279 + $0x30] sm:$0xf]
        %v2293 = vld [vmem:[%s2279 + $0x34] sm:$0xf]
        %v2294 = vld [vmem:[%s2279 + $0x38] sm:$0xf]
        %v2295 = vld [vmem:[%s2279 + $0x3c] sm:$0xf]
        %v2312 = vunpack.c.l.b16 %v2280
        %v2313 = vunpack.c.l.b16 %v2281
        %v2314 = vunpack.c.l.b16 %v2282
        %v2315 = vunpack.c.l.b16 %v2283
        %v2316 = vunpack.c.l.b16 %v2284
        %v2317 = vunpack.c.l.b16 %v2285
        %v2318 = vunpack.c.l.b16 %v2286
        %v2319 = vunpack.c.l.b16 %v2287
        %v2320 = vunpack.c.l.b16 %v2288
        %v2321 = vunpack.c.l.b16 %v2289
        %v2322 = vunpack.c.l.b16 %v2290
        %v2323 = vunpack.c.l.b16 %v2291
        %v2324 = vunpack.c.l.b16 %v2292
        %v2325 = vunpack.c.l.b16 %v2293
        %v2326 = vunpack.c.l.b16 %v2294
        %v2327 = vunpack.c.l.b16 %v2295
        %v2328 = vpack.c.b16 %v2313, %v2312
        %v2329 = vpack.c.b16 %v2315, %v2314
        %v2330 = vpack.c.b16 %v2317, %v2316
        %v2331 = vpack.c.b16 %v2319, %v2318
        %v2332 = vpack.c.b16 %v2321, %v2320
        %v2333 = vpack.c.b16 %v2323, %v2322
        %v2334 = vpack.c.b16 %v2325, %v2324
        %v2335 = vpack.c.b16 %v2327, %v2326
        %2344 = vmatprep.subr.bf16.mxu0 0
        %2345 = vmatpush1.bf16.msra.mxu0 %v2328
        %2346 = vmatprep.subr.bf16.mxu0 0
        %2347 = vmatpush1.bf16.msra.mxu0 %v2329
        %2348 = vmatprep.subr.bf16.mxu0 0
        %2349 = vmatpush1.bf16.msra.mxu0 %v2330
        %2350 = vmatprep.subr.bf16.mxu0 0
        %2351 = vmatpush1.bf16.msra.mxu0 %v2331
        %2352 = vmatprep.subr.bf16.mxu0 0
        %2353 = vmatpush1.bf16.msra.mxu0 %v2332
        %2354 = vmatprep.subr.bf16.mxu0 0
        %2355 = vmatpush1.bf16.msra.mxu0 %v2333
        %2356 = vmatprep.subr.bf16.mxu0 0
        %2357 = vmatpush1.bf16.msra.mxu0 %v2334
        %2358 = vmatprep.subr.bf16.mxu0 0
        %2359 = vmatpush1.bf16.msra.mxu0 %v2335
        %2360 = vmatprep.subr.bf16.mxu0 0
        %2361 = vmatpush1.bf16.msra.mxu0 0
        %2362 = vmatprep.subr.bf16.mxu0 0
        %2363 = vmatpush1.bf16.msra.mxu0 0
        %2364 = vmatprep.subr.bf16.mxu0 0
        %2365 = vmatpush1.bf16.msra.mxu0 0
        %2366 = vmatprep.subr.bf16.mxu0 0
        %2367 = vmatpush1.bf16.msra.mxu0 0
        %2368 = vmatprep.subr.bf16.mxu0 0
        %2369 = vmatpush1.bf16.msra.mxu0 0
        %2370 = vmatprep.subr.bf16.mxu0 0
        %2371 = vmatpush1.bf16.msra.mxu0 0
        %2372 = vmatprep.subr.bf16.mxu0 0
        %2373 = vmatpush1.bf16.msra.mxu0 0
        %2374 = vmatprep.subr.bf16.mxu0 0
        %2375 = vmatpush1.bf16.msra.mxu0 0
        %2376 = vmatprep.mubr.bf16.mxu0 0
        %2377 = vmatmul.mubr.bf16.gmra.mrb[0].mxu0 %v2263
        %v2378 = vpop.f32.mrb[0].mxu0
        %v2379 = vadd.f32 0.0, %v2378
        %v2380 = vpop.f32.mrb[0].mxu0
        %v2381 = vpop.f32.mrb[0].mxu0
        %v2382 = vadd.f32 0.0, %v2381
        %v2383 = vpop.f32.mrb[0].mxu0
        %2384 = vmatprep.mubr.bf16.mxu0 0
        %2385 = vmatmul.mubr.bf16.gmra.mrb[0].mxu0 %v2264
        %v2386 = vpop.f32.mrb[0].mxu0
        %v2387 = vadd.f32 0.0, %v2386
        %v2388 = vpop.f32.mrb[0].mxu0
        %v2389 = vpop.f32.mrb[0].mxu0
        %v2390 = vadd.f32 0.0, %v2389
        %v2391 = vpop.f32.mrb[0].mxu0
        %2392 = vmatprep.mubr.bf16.mxu0 0
        %2393 = vmatmul.mubr.bf16.gmra.mrb[0].mxu0 %v2265
        %v2394 = vpop.f32.mrb[0].mxu0
        %v2395 = vadd.f32 0.0, %v2394
        %v2396 = vpop.f32.mrb[0].mxu0
        %v2397 = vpop.f32.mrb[0].mxu0
        %v2398 = vadd.f32 0.0, %v2397
        %v2399 = vpop.f32.mrb[0].mxu0
        %2400 = vmatprep.mubr.bf16.mxu0 0
        %2401 = vmatmul.mubr.bf16.gmra.mrb[0].mxu0 %v2266
        %v2402 = vpop.f32.mrb[0].mxu0
        %v2403 = vadd.f32 0.0, %v2402
        %v2404 = vpop.f32.mrb[0].mxu0
        %v2405 = vpop.f32.mrb[0].mxu0
        %v2406 = vadd.f32 0.0, %v2405
        %v2407 = vpop.f32.mrb[0].mxu0
        %2408 = vmatprep.mubr.bf16.mxu0 0
        %2409 = vmatmul.mubr.bf16.gmra.mrb[0].mxu0 %v2267
        %v2410 = vpop.f32.mrb[0].mxu0
        %v2411 = vadd.f32 0.0, %v2410
        %v2412 = vpop.f32.mrb[0].mxu0
        %v2413 = vpop.f32.mrb[0].mxu0
        %v2414 = vadd.f32 0.0, %v2413
        %v2415 = vpop.f32.mrb[0].mxu0
        %2416 = vmatprep.mubr.bf16.mxu0 0
        %2417 = vmatmul.mubr.bf16.gmra.mrb[0].mxu0 %v2268
        %v2418 = vpop.f32.mrb[0].mxu0
        %v2419 = vadd.f32 0.0, %v2418
        %v2420 = vpop.f32.mrb[0].mxu0
        %v2421 = vpop.f32.mrb[0].mxu0
        %v2422 = vadd.f32 0.0, %v2421
        %v2423 = vpop.f32.mrb[0].mxu0
        %2424 = vmatprep.mubr.bf16.mxu0 0
        %2425 = vmatmul.mubr.bf16.gmra.mrb[0].mxu0 %v2269
        %v2426 = vpop.f32.mrb[0].mxu0
        %v2427 = vadd.f32 0.0, %v2426
        %v2428 = vpop.f32.mrb[0].mxu0
        %v2429 = vpop.f32.mrb[0].mxu0
        %v2430 = vadd.f32 0.0, %v2429
        %v2431 = vpop.f32.mrb[0].mxu0
        %2432 = vmatprep.mubr.bf16.mxu0 0
        %2433 = vmatmul.mubr.bf16.gmra.mrb[0].mxu0 %v2270
        %v2434 = vpop.f32.mrb[0].mxu0
        %v2435 = vadd.f32 0.0, %v2434
        %v2436 = vpop.f32.mrb[0].mxu0
        %v2437 = vpop.f32.mrb[0].mxu0
        %v2438 = vadd.f32 0.0, %v2437
        %v2439 = vpop.f32.mrb[0].mxu0
        %2440 = vmatprep.mubr.bf16.mxu0 0
        %2441 = vmatmul.mubr.bf16.gmra.mrb[0].mxu0 %v2271
        %v2442 = vpop.f32.mrb[0].mxu0
        %v2443 = vadd.f32 0.0, %v2442
        %v2444 = vpop.f32.mrb[0].mxu0
        %v2445 = vpop.f32.mrb[0].mxu0
        %v2446 = vadd.f32 0.0, %v2445
        %v2447 = vpop.f32.mrb[0].mxu0
        %2448 = vmatprep.mubr.bf16.mxu0 0
        %2449 = vmatmul.mubr.bf16.gmra.mrb[0].mxu0 %v2272
        %v2450 = vpop.f32.mrb[0].mxu0
        %v2451 = vadd.f32 0.0, %v2450
        %v2452 = vpop.f32.mrb[0].mxu0
        %v2453 = vpop.f32.mrb[0].mxu0
        %v2454 = vadd.f32 0.0, %v2453
        %v2455 = vpop.f32.mrb[0].mxu0
        %2456 = vmatprep.mubr.bf16.mxu0 0
        %2457 = vmatmul.mubr.bf16.gmra.mrb[0].mxu0 %v2273
        %v2458 = vpop.f32.mrb[0].mxu0
        %v2459 = vadd.f32 0.0, %v2458
        %v2460 = vpop.f32.mrb[0].mxu0
        %v2461 = vpop.f32.mrb[0].mxu0
        %v2462 = vadd.f32 0.0, %v2461
        %v2463 = vpop.f32.mrb[0].mxu0
        %2464 = vmatprep.mubr.bf16.mxu0 0
        %2465 = vmatmul.mubr.bf16.gmra.mrb[0].mxu0 %v2274
        %v2466 = vpop.f32.mrb[0].mxu0
        %v2467 = vadd.f32 0.0, %v2466
        %v2468 = vpop.f32.mrb[0].mxu0
        %v2469 = vpop.f32.mrb[0].mxu0
        %v2470 = vadd.f32 0.0, %v2469
        %v2471 = vpop.f32.mrb[0].mxu0
        %2472 = vmatprep.mubr.bf16.mxu0 0
        %2473 = vmatmul.mubr.bf16.gmra.mrb[0].mxu0 %v2275
        %v2474 = vpop.f32.mrb[0].mxu0
        %v2475 = vadd.f32 0.0, %v2474
        %v2476 = vpop.f32.mrb[0].mxu0
        %v2477 = vpop.f32.mrb[0].mxu0
        %v2478 = vadd.f32 0.0, %v2477
        %v2479 = vpop.f32.mrb[0].mxu0
        %2480 = vmatprep.mubr.bf16.mxu0 0
        %2481 = vmatmul.mubr.bf16.gmra.mrb[0].mxu0 %v2276
        %v2482 = vpop.f32.mrb[0].mxu0
        %v2483 = vadd.f32 0.0, %v2482
        %v2484 = vpop.f32.mrb[0].mxu0
        %v2485 = vpop.f32.mrb[0].mxu0
        %v2486 = vadd.f32 0.0, %v2485
        %v2487 = vpop.f32.mrb[0].mxu0
        %2488 = vmatprep.mubr.bf16.mxu0 0
        %2489 = vmatmul.mubr.bf16.gmra.mrb[0].mxu0 %v2277
        %v2490 = vpop.f32.mrb[0].mxu0
        %v2491 = vadd.f32 0.0, %v2490
        %v2492 = vpop.f32.mrb[0].mxu0
        %v2493 = vpop.f32.mrb[0].mxu0
        %v2494 = vadd.f32 0.0, %v2493
        %v2495 = vpop.f32.mrb[0].mxu0
        %2496 = vmatprep.mubr.bf16.mxu0 0
        %2497 = vmatmul.mubr.bf16.gmra.mrb[0].mxu0 %v2278
        %v2498 = vpop.f32.mrb[0].mxu0
        %v2499 = vadd.f32 0.0, %v2498
        %v2500 = vpop.f32.mrb[0].mxu0
        %v2501 = vpop.f32.mrb[0].mxu0
        %v2502 = vadd.f32 0.0, %v2501
        %v2503 = vpop.f32.mrb[0].mxu0
        %2504 = vdwg.mxu0
        %v2505 = vadd.f32 %v2231, %v2379
        %v2506 = vadd.f32 %v2232, %v2382
        %v2507 = vadd.f32 %v2233, %v2387
        %v2508 = vadd.f32 %v2234, %v2390
        %v2509 = vadd.f32 %v2235, %v2395
        %v2510 = vadd.f32 %v2236, %v2398
        %v2511 = vadd.f32 %v2237, %v2403
        %v2512 = vadd.f32 %v2238, %v2406
        %v2513 = vadd.f32 %v2239, %v2411
        %v2514 = vadd.f32 %v2240, %v2414
        %v2515 = vadd.f32 %v2241, %v2419
        %v2516 = vadd.f32 %v2242, %v2422
        %v2517 = vadd.f32 %v2243, %v2427
        %v2518 = vadd.f32 %v2244, %v2430
        %v2519 = vadd.f32 %v2245, %v2435
        %v2520 = vadd.f32 %v2246, %v2438
        %v2521 = vadd.f32 %v2247, %v2443
        %v2522 = vadd.f32 %v2248, %v2446
        %v2523 = vadd.f32 %v2249, %v2451
        %v2524 = vadd.f32 %v2250, %v2454
        %v2525 = vadd.f32 %v2251, %v2459
        %v2526 = vadd.f32 %v2252, %v2462
        %v2527 = vadd.f32 %v2253, %v2467
        %v2528 = vadd.f32 %v2254, %v2470
        %v2529 = vadd.f32 %v2255, %v2475
        %v2530 = vadd.f32 %v2256, %v2478
        %v2531 = vadd.f32 %v2257, %v2483
        %v2532 = vadd.f32 %v2258, %v2486
        %v2533 = vadd.f32 %v2259, %v2491
        %v2534 = vadd.f32 %v2260, %v2494
        %v2535 = vadd.f32 %v2261, %v2499
        %v2536 = vadd.f32 %v2262, %v2502
        %2537 = vst [vmem:[#allocation4] sm:$0xff] %v2505
        %2538 = vst [vmem:[#allocation4 + $0x8] sm:$0xff] %v2506
        %2539 = vst [vmem:[#allocation4 + $0x10] sm:$0xff] %v2507
        %2540 = vst [vmem:[#allocation4 + $0x18] sm:$0xff] %v2508
        %2541 = vst [vmem:[#allocation4 + $0x20] sm:$0xff] %v2509
        %2542 = vst [vmem:[#allocation4 + $0x28] sm:$0xff] %v2510
        %2543 = vst [vmem:[#allocation4 + $0x30] sm:$0xff] %v2511
        %2544 = vst [vmem:[#allocation4 + $0x38] sm:$0xff] %v2512
        %2545 = vst [vmem:[#allocation4 + $0x40] sm:$0xff] %v2513
        %2546 = vst [vmem:[#allocation4 + $0x48] sm:$0xff] %v2514
        %2547 = vst [vmem:[#allocation4 + $0x50] sm:$0xff] %v2515
        %2548 = vst [vmem:[#allocation4 + $0x58] sm:$0xff] %v2516
        %2549 = vst [vmem:[#allocation4 + $0x60] sm:$0xff] %v2517
        %2550 = vst [vmem:[#allocation4 + $0x68] sm:$0xff] %v2518
        %2551 = vst [vmem:[#allocation4 + $0x70] sm:$0xff] %v2519
        %2552 = vst [vmem:[#allocation4 + $0x78] sm:$0xff] %v2520
        %2553 = vst [vmem:[#allocation4 + $0x80] sm:$0xff] %v2521
        %2554 = vst [vmem:[#allocation4 + $0x88] sm:$0xff] %v2522
        %2555 = vst [vmem:[#allocation4 + $0x90] sm:$0xff] %v2523
        %2556 = vst [vmem:[#allocation4 + $0x98] sm:$0xff] %v2524
        %2557 = vst [vmem:[#allocation4 + $0xa0] sm:$0xff] %v2525
        %2558 = vst [vmem:[#allocation4 + $0xa8] sm:$0xff] %v2526
        %2559 = vst [vmem:[#allocation4 + $0xb0] sm:$0xff] %v2527
        %2560 = vst [vmem:[#allocation4 + $0xb8] sm:$0xff] %v2528
        %2561 = vst [vmem:[#allocation4 + $0xc0] sm:$0xff] %v2529
        %2562 = vst [vmem:[#allocation4 + $0xc8] sm:$0xff] %v2530
        %2563 = vst [vmem:[#allocation4 + $0xd0] sm:$0xff] %v2531
        %2564 = vst [vmem:[#allocation4 + $0xd8] sm:$0xff] %v2532
        %2565 = vst [vmem:[#allocation4 + $0xe0] sm:$0xff] %v2533
        %2566 = vst [vmem:[#allocation4 + $0xe8] sm:$0xff] %v2534
        %2567 = vst [vmem:[#allocation4 + $0xf0] sm:$0xff] %v2535
        %2568 = vst [vmem:[#allocation4 + $0xf8] sm:$0xff] %v2536
        %v2569 = vld [vmem:[#allocation2 + $0x2] sm:$0xff]
        %v2570 = vld [vmem:[#allocation2 + $0xa] sm:$0xff]
        %v2571 = vld [vmem:[#allocation2 + $0x1a] sm:$0xff]
        %v2572 = vld [vmem:[#allocation2 + $0x22] sm:$0xff]
        %v2573 = vld [vmem:[#allocation2 + $0x32] sm:$0xff]
        %v2574 = vld [vmem:[#allocation2 + $0x3a] sm:$0xff]
        %v2575 = vld [vmem:[#allocation2 + $0x4a] sm:$0xff]
        %v2576 = vld [vmem:[#allocation2 + $0x52] sm:$0xff]
        %v2577 = vld [vmem:[#allocation2 + $0x62] sm:$0xff]
        %v2578 = vld [vmem:[#allocation2 + $0x6a] sm:$0xff]
        %v2579 = vld [vmem:[#allocation2 + $0x7a] sm:$0xff]
        %v2580 = vld [vmem:[#allocation2 + $0x82] sm:$0xff]
        %v2581 = vld [vmem:[#allocation2 + $0x92] sm:$0xff]
        %v2582 = vld [vmem:[#allocation2 + $0x9a] sm:$0xff]
        %v2583 = vld [vmem:[#allocation2 + $0xaa] sm:$0xff]
        %v2584 = vld [vmem:[#allocation2 + $0xb2] sm:$0xff]
        %v2585 = vld [vmem:[#allocation2 + $0xc2] sm:$0xff]
        %v2586 = vld [vmem:[#allocation2 + $0xca] sm:$0xff]
        %v2587 = vld [vmem:[#allocation2 + $0xda] sm:$0xff]
        %v2588 = vld [vmem:[#allocation2 + $0xe2] sm:$0xff]
        %v2589 = vld [vmem:[#allocation2 + $0xf2] sm:$0xff]
        %v2590 = vld [vmem:[#allocation2 + $0xfa] sm:$0xff]
        %v2591 = vld [vmem:[#allocation2 + $0x10a] sm:$0xff]
        %v2592 = vld [vmem:[#allocation2 + $0x112] sm:$0xff]
        %v2593 = vld [vmem:[#allocation2 + $0x122] sm:$0xff]
        %v2594 = vld [vmem:[#allocation2 + $0x12a] sm:$0xff]
        %v2595 = vld [vmem:[#allocation2 + $0x13a] sm:$0xff]
        %v2596 = vld [vmem:[#allocation2 + $0x142] sm:$0xff]
        %v2597 = vld [vmem:[#allocation2 + $0x152] sm:$0xff]
        %v2598 = vld [vmem:[#allocation2 + $0x15a] sm:$0xff]
        %v2599 = vld [vmem:[#allocation2 + $0x16a] sm:$0xff]
        %v2600 = vld [vmem:[#allocation2 + $0x172] sm:$0xff]
        %v2601 = vld [vmem:[#allocation2 + $0x182] sm:$0xff]
        %v2602 = vld [vmem:[#allocation2 + $0x18a] sm:$0xff]
        %v2603 = vld [vmem:[#allocation2 + $0x19a] sm:$0xff]
        %v2604 = vld [vmem:[#allocation2 + $0x1a2] sm:$0xff]
        %v2605 = vpack.c.bf16 %v2570, %v2569
        %v2606 = vpack.c.bf16 %v2572, %v2571
        %v2607 = vpack.c.bf16 %v2574, %v2573
        %v2608 = vpack.c.bf16 %v2576, %v2575
        %v2609 = vpack.c.bf16 %v2578, %v2577
        %v2610 = vpack.c.bf16 %v2580, %v2579
        %v2611 = vpack.c.bf16 %v2582, %v2581
        %v2612 = vpack.c.bf16 %v2584, %v2583
        %v2613 = vpack.c.bf16 %v2586, %v2585
        %v2614 = vpack.c.bf16 %v2588, %v2587
        %v2615 = vpack.c.bf16 %v2590, %v2589
        %v2616 = vpack.c.bf16 %v2592, %v2591
        %v2617 = vpack.c.bf16 %v2594, %v2593
        %v2618 = vpack.c.bf16 %v2596, %v2595
        %v2619 = vpack.c.bf16 %v2598, %v2597
        %v2620 = vpack.c.bf16 %v2600, %v2599
        %v2621 = vpack.c.bf16 %v2602, %v2601
        %v2622 = vpack.c.bf16 %v2604, %v2603
        %2623 = vst [vmem:[#allocation3] sm:$0xff] %v2605
        %2624 = vst [vmem:[#allocation3 + $0x8] sm:$0xff] %v2606
        %2625 = vst [vmem:[#allocation3 + $0x10] sm:$0xff] %v2607
        %2626 = vst [vmem:[#allocation3 + $0x18] sm:$0xff] %v2608
        %2627 = vst [vmem:[#allocation3 + $0x20] sm:$0xff] %v2609
        %2628 = vst [vmem:[#allocation3 + $0x28] sm:$0xff] %v2610
        %2629 = vst [vmem:[#allocation3 + $0x30] sm:$0xff] %v2611
        %2630 = vst [vmem:[#allocation3 + $0x38] sm:$0xff] %v2612
        %2631 = vst [vmem:[#allocation3 + $0x40] sm:$0xff] %v2613
        %2632 = vst [vmem:[#allocation3 + $0x48] sm:$0xff] %v2614
        %2633 = vst [vmem:[#allocation3 + $0x50] sm:$0xff] %v2615
        %2634 = vst [vmem:[#allocation3 + $0x58] sm:$0xff] %v2616
        %2635 = vst [vmem:[#allocation3 + $0x60] sm:$0xff] %v2617
        %2636 = vst [vmem:[#allocation3 + $0x68] sm:$0xff] %v2618
        %2637 = vst [vmem:[#allocation3 + $0x70] sm:$0xff] %v2619
        %2638 = vst [vmem:[#allocation3 + $0x78] sm:$0xff] %v2620
        %2639 = vst [vmem:[#allocation3 + $0x80] sm:$0xff] %v2621
        %2640 = vst [vmem:[#allocation3 + $0x88] sm:$0xff] %v2622
        %v2641 = vld [vmem:[#allocation4] sm:$0xff]
        %v2642 = vld [vmem:[#allocation4 + $0x8] sm:$0xff]
        %v2643 = vld [vmem:[#allocation4 + $0x10] sm:$0xff]
        %v2644 = vld [vmem:[#allocation4 + $0x18] sm:$0xff]
        %v2645 = vld [vmem:[#allocation4 + $0x20] sm:$0xff]
        %v2646 = vld [vmem:[#allocation4 + $0x28] sm:$0xff]
        %v2647 = vld [vmem:[#allocation4 + $0x30] sm:$0xff]
        %v2648 = vld [vmem:[#allocation4 + $0x38] sm:$0xff]
        %v2649 = vld [vmem:[#allocation4 + $0x40] sm:$0xff]
        %v2650 = vld [vmem:[#allocation4 + $0x48] sm:$0xff]
        %v2651 = vld [vmem:[#allocation4 + $0x50] sm:$0xff]
        %v2652 = vld [vmem:[#allocation4 + $0x58] sm:$0xff]
        %v2653 = vld [vmem:[#allocation4 + $0x60] sm:$0xff]
        %v2654 = vld [vmem:[#allocation4 + $0x68] sm:$0xff]
        %v2655 = vld [vmem:[#allocation4 + $0x70] sm:$0xff]
        %v2656 = vld [vmem:[#allocation4 + $0x78] sm:$0xff]
        %v2657 = vld [vmem:[#allocation4 + $0x80] sm:$0xff]
        %v2658 = vld [vmem:[#allocation4 + $0x88] sm:$0xff]
        %v2659 = vld [vmem:[#allocation4 + $0x90] sm:$0xff]
        %v2660 = vld [vmem:[#allocation4 + $0x98] sm:$0xff]
        %v2661 = vld [vmem:[#allocation4 + $0xa0] sm:$0xff]
        %v2662 = vld [vmem:[#allocation4 + $0xa8] sm:$0xff]
        %v2663 = vld [vmem:[#allocation4 + $0xb0] sm:$0xff]
        %v2664 = vld [vmem:[#allocation4 + $0xb8] sm:$0xff]
        %v2665 = vld [vmem:[#allocation4 + $0xc0] sm:$0xff]
        %v2666 = vld [vmem:[#allocation4 + $0xc8] sm:$0xff]
        %v2667 = vld [vmem:[#allocation4 + $0xd0] sm:$0xff]
        %v2668 = vld [vmem:[#allocation4 + $0xd8] sm:$0xff]
        %v2669 = vld [vmem:[#allocation4 + $0xe0] sm:$0xff]
        %v2670 = vld [vmem:[#allocation4 + $0xe8] sm:$0xff]
        %v2671 = vld [vmem:[#allocation4 + $0xf0] sm:$0xff]
        %v2672 = vld [vmem:[#allocation4 + $0xf8] sm:$0xff]
        %v2673 = vld [vmem:[#allocation3] sm:$0xff]
        %v2674 = vld [vmem:[#allocation3 + $0x8] sm:$0xff]
        %v2675 = vld [vmem:[#allocation3 + $0x10] sm:$0xff]
        %v2676 = vld [vmem:[#allocation3 + $0x18] sm:$0xff]
        %v2677 = vld [vmem:[#allocation3 + $0x20] sm:$0xff]
        %v2678 = vld [vmem:[#allocation3 + $0x28] sm:$0xff]
        %v2679 = vld [vmem:[#allocation3 + $0x30] sm:$0xff]
        %v2680 = vld [vmem:[#allocation3 + $0x38] sm:$0xff]
        %v2681 = vld [vmem:[#allocation3 + $0x40] sm:$0xff]
        %v2682 = vld [vmem:[#allocation3 + $0x48] sm:$0xff]
        %v2683 = vld [vmem:[#allocation3 + $0x50] sm:$0xff]
        %v2684 = vld [vmem:[#allocation3 + $0x58] sm:$0xff]
        %v2685 = vld [vmem:[#allocation3 + $0x60] sm:$0xff]
        %v2686 = vld [vmem:[#allocation3 + $0x68] sm:$0xff]
        %v2687 = vld [vmem:[#allocation3 + $0x70] sm:$0xff]
        %v2688 = vld [vmem:[#allocation3 + $0x78] sm:$0xff]
        %s2689 = scalar_lea.vmem %s1, 128
        %v2690 = vld [vmem:[%s2689] sm:$0xf]
        %v2691 = vld [vmem:[%s2689 + $0x4] sm:$0xf]
        %v2692 = vld [vmem:[%s2689 + $0x8] sm:$0xf]
        %v2693 = vld [vmem:[%s2689 + $0xc] sm:$0xf]
        %v2694 = vld [vmem:[%s2689 + $0x10] sm:$0xf]
        %v2695 = vld [vmem:[%s2689 + $0x14] sm:$0xf]
        %v2696 = vld [vmem:[%s2689 + $0x18] sm:$0xf]
        %v2697 = vld [vmem:[%s2689 + $0x1c] sm:$0xf]
        %v2698 = vld [vmem:[%s2689 + $0x20] sm:$0xf]
        %v2699 = vld [vmem:[%s2689 + $0x24] sm:$0xf]
        %v2700 = vld [vmem:[%s2689 + $0x28] sm:$0xf]
        %v2701 = vld [vmem:[%s2689 + $0x2c] sm:$0xf]
        %v2702 = vld [vmem:[%s2689 + $0x30] sm:$0xf]
        %v2703 = vld [vmem:[%s2689 + $0x34] sm:$0xf]
        %v2704 = vld [vmem:[%s2689 + $0x38] sm:$0xf]
        %v2705 = vld [vmem:[%s2689 + $0x3c] sm:$0xf]
        %v2722 = vunpack.c.l.b16 %v2690
        %v2723 = vunpack.c.l.b16 %v2691
        %v2724 = vunpack.c.l.b16 %v2692
        %v2725 = vunpack.c.l.b16 %v2693
        %v2726 = vunpack.c.l.b16 %v2694
        %v2727 = vunpack.c.l.b16 %v2695
        %v2728 = vunpack.c.l.b16 %v2696
        %v2729 = vunpack.c.l.b16 %v2697
        %v2730 = vunpack.c.l.b16 %v2698
        %v2731 = vunpack.c.l.b16 %v2699
        %v2732 = vunpack.c.l.b16 %v2700
        %v2733 = vunpack.c.l.b16 %v2701
        %v2734 = vunpack.c.l.b16 %v2702
        %v2735 = vunpack.c.l.b16 %v2703
        %v2736 = vunpack.c.l.b16 %v2704
        %v2737 = vunpack.c.l.b16 %v2705
        %v2738 = vpack.c.b16 %v2723, %v2722
        %v2739 = vpack.c.b16 %v2725, %v2724
        %v2740 = vpack.c.b16 %v2727, %v2726
        %v2741 = vpack.c.b16 %v2729, %v2728
        %v2742 = vpack.c.b16 %v2731, %v2730
        %v2743 = vpack.c.b16 %v2733, %v2732
        %v2744 = vpack.c.b16 %v2735, %v2734
        %v2745 = vpack.c.b16 %v2737, %v2736
        %2754 = vmatprep.subr.bf16.mxu0 0
        %2755 = vmatpush1.bf16.msra.mxu0 %v2738
        %2756 = vmatprep.subr.bf16.mxu0 0
        %2757 = vmatpush1.bf16.msra.mxu0 %v2739
        %2758 = vmatprep.subr.bf16.mxu0 0
        %2759 = vmatpush1.bf16.msra.mxu0 %v2740
        %2760 = vmatprep.subr.bf16.mxu0 0
        %2761 = vmatpush1.bf16.msra.mxu0 %v2741
        %2762 = vmatprep.subr.bf16.mxu0 0
        %2763 = vmatpush1.bf16.msra.mxu0 %v2742
        %2764 = vmatprep.subr.bf16.mxu0 0
        %2765 = vmatpush1.bf16.msra.mxu0 %v2743
        %2766 = vmatprep.subr.bf16.mxu0 0
        %2767 = vmatpush1.bf16.msra.mxu0 %v2744
        %2768 = vmatprep.subr.bf16.mxu0 0
        %2769 = vmatpush1.bf16.msra.mxu0 %v2745
        %2770 = vmatprep.subr.bf16.mxu0 0
        %2771 = vmatpush1.bf16.msra.mxu0 0
        %2772 = vmatprep.subr.bf16.mxu0 0
        %2773 = vmatpush1.bf16.msra.mxu0 0
        %2774 = vmatprep.subr.bf16.mxu0 0
        %2775 = vmatpush1.bf16.msra.mxu0 0
        %2776 = vmatprep.subr.bf16.mxu0 0
        %2777 = vmatpush1.bf16.msra.mxu0 0
        %2778 = vmatprep.subr.bf16.mxu0 0
        %2779 = vmatpush1.bf16.msra.mxu0 0
        %2780 = vmatprep.subr.bf16.mxu0 0
        %2781 = vmatpush1.bf16.msra.mxu0 0
        %2782 = vmatprep.subr.bf16.mxu0 0
        %2783 = vmatpush1.bf16.msra.mxu0 0
        %2784 = vmatprep.subr.bf16.mxu0 0
        %2785 = vmatpush1.bf16.msra.mxu0 0
        %2786 = vmatprep.mubr.bf16.mxu0 0
        %2787 = vmatmul.mubr.bf16.gmra.mrb[0].mxu0 %v2673
        %v2788 = vpop.f32.mrb[0].mxu0
        %v2789 = vadd.f32 0.0, %v2788
        %v2790 = vpop.f32.mrb[0].mxu0
        %v2791 = vpop.f32.mrb[0].mxu0
        %v2792 = vadd.f32 0.0, %v2791
        %v2793 = vpop.f32.mrb[0].mxu0
        %2794 = vmatprep.mubr.bf16.mxu0 0
        %2795 = vmatmul.mubr.bf16.gmra.mrb[0].mxu0 %v2674
        %v2796 = vpop.f32.mrb[0].mxu0
        %v2797 = vadd.f32 0.0, %v2796
        %v2798 = vpop.f32.mrb[0].mxu0
        %v2799 = vpop.f32.mrb[0].mxu0
        %v2800 = vadd.f32 0.0, %v2799
        %v2801 = vpop.f32.mrb[0].mxu0
        %2802 = vmatprep.mubr.bf16.mxu0 0
        %2803 = vmatmul.mubr.bf16.gmra.mrb[0].mxu0 %v2675
        %v2804 = vpop.f32.mrb[0].mxu0
        %v2805 = vadd.f32 0.0, %v2804
        %v2806 = vpop.f32.mrb[0].mxu0
        %v2807 = vpop.f32.mrb[0].mxu0
        %v2808 = vadd.f32 0.0, %v2807
        %v2809 = vpop.f32.mrb[0].mxu0
        %2810 = vmatprep.mubr.bf16.mxu0 0
        %2811 = vmatmul.mubr.bf16.gmra.mrb[0].mxu0 %v2676
        %v2812 = vpop.f32.mrb[0].mxu0
        %v2813 = vadd.f32 0.0, %v2812
        %v2814 = vpop.f32.mrb[0].mxu0
        %v2815 = vpop.f32.mrb[0].mxu0
        %v2816 = vadd.f32 0.0, %v2815
        %v2817 = vpop.f32.mrb[0].mxu0
        %2818 = vmatprep.mubr.bf16.mxu0 0
        %2819 = vmatmul.mubr.bf16.gmra.mrb[0].mxu0 %v2677
        %v2820 = vpop.f32.mrb[0].mxu0
        %v2821 = vadd.f32 0.0, %v2820
        %v2822 = vpop.f32.mrb[0].mxu0
        %v2823 = vpop.f32.mrb[0].mxu0
        %v2824 = vadd.f32 0.0, %v2823
        %v2825 = vpop.f32.mrb[0].mxu0
        %2826 = vmatprep.mubr.bf16.mxu0 0
        %2827 = vmatmul.mubr.bf16.gmra.mrb[0].mxu0 %v2678
        %v2828 = vpop.f32.mrb[0].mxu0
        %v2829 = vadd.f32 0.0, %v2828
        %v2830 = vpop.f32.mrb[0].mxu0
        %v2831 = vpop.f32.mrb[0].mxu0
        %v2832 = vadd.f32 0.0, %v2831
        %v2833 = vpop.f32.mrb[0].mxu0
        %2834 = vmatprep.mubr.bf16.mxu0 0
        %2835 = vmatmul.mubr.bf16.gmra.mrb[0].mxu0 %v2679
        %v2836 = vpop.f32.mrb[0].mxu0
        %v2837 = vadd.f32 0.0, %v2836
        %v2838 = vpop.f32.mrb[0].mxu0
        %v2839 = vpop.f32.mrb[0].mxu0
        %v2840 = vadd.f32 0.0, %v2839
        %v2841 = vpop.f32.mrb[0].mxu0
        %2842 = vmatprep.mubr.bf16.mxu0 0
        %2843 = vmatmul.mubr.bf16.gmra.mrb[0].mxu0 %v2680
        %v2844 = vpop.f32.mrb[0].mxu0
        %v2845 = vadd.f32 0.0, %v2844
        %v2846 = vpop.f32.mrb[0].mxu0
        %v2847 = vpop.f32.mrb[0].mxu0
        %v2848 = vadd.f32 0.0, %v2847
        %v2849 = vpop.f32.mrb[0].mxu0
        %2850 = vmatprep.mubr.bf16.mxu0 0
        %2851 = vmatmul.mubr.bf16.gmra.mrb[0].mxu0 %v2681
        %v2852 = vpop.f32.mrb[0].mxu0
        %v2853 = vadd.f32 0.0, %v2852
        %v2854 = vpop.f32.mrb[0].mxu0
        %v2855 = vpop.f32.mrb[0].mxu0
        %v2856 = vadd.f32 0.0, %v2855
        %v2857 = vpop.f32.mrb[0].mxu0
        %2858 = vmatprep.mubr.bf16.mxu0 0
        %2859 = vmatmul.mubr.bf16.gmra.mrb[0].mxu0 %v2682
        %v2860 = vpop.f32.mrb[0].mxu0
        %v2861 = vadd.f32 0.0, %v2860
        %v2862 = vpop.f32.mrb[0].mxu0
        %v2863 = vpop.f32.mrb[0].mxu0
        %v2864 = vadd.f32 0.0, %v2863
        %v2865 = vpop.f32.mrb[0].mxu0
        %2866 = vmatprep.mubr.bf16.mxu0 0
        %2867 = vmatmul.mubr.bf16.gmra.mrb[0].mxu0 %v2683
        %v2868 = vpop.f32.mrb[0].mxu0
        %v2869 = vadd.f32 0.0, %v2868
        %v2870 = vpop.f32.mrb[0].mxu0
        %v2871 = vpop.f32.mrb[0].mxu0
        %v2872 = vadd.f32 0.0, %v2871
        %v2873 = vpop.f32.mrb[0].mxu0
        %2874 = vmatprep.mubr.bf16.mxu0 0
        %2875 = vmatmul.mubr.bf16.gmra.mrb[0].mxu0 %v2684
        %v2876 = vpop.f32.mrb[0].mxu0
        %v2877 = vadd.f32 0.0, %v2876
        %v2878 = vpop.f32.mrb[0].mxu0
        %v2879 = vpop.f32.mrb[0].mxu0
        %v2880 = vadd.f32 0.0, %v2879
        %v2881 = vpop.f32.mrb[0].mxu0
        %2882 = vmatprep.mubr.bf16.mxu0 0
        %2883 = vmatmul.mubr.bf16.gmra.mrb[0].mxu0 %v2685
        %v2884 = vpop.f32.mrb[0].mxu0
        %v2885 = vadd.f32 0.0, %v2884
        %v2886 = vpop.f32.mrb[0].mxu0
        %v2887 = vpop.f32.mrb[0].mxu0
        %v2888 = vadd.f32 0.0, %v2887
        %v2889 = vpop.f32.mrb[0].mxu0
        %2890 = vmatprep.mubr.bf16.mxu0 0
        %2891 = vmatmul.mubr.bf16.gmra.mrb[0].mxu0 %v2686
        %v2892 = vpop.f32.mrb[0].mxu0
        %v2893 = vadd.f32 0.0, %v2892
        %v2894 = vpop.f32.mrb[0].mxu0
        %v2895 = vpop.f32.mrb[0].mxu0
        %v2896 = vadd.f32 0.0, %v2895
        %v2897 = vpop.f32.mrb[0].mxu0
        %2898 = vmatprep.mubr.bf16.mxu0 0
        %2899 = vmatmul.mubr.bf16.gmra.mrb[0].mxu0 %v2687
        %v2900 = vpop.f32.mrb[0].mxu0
        %v2901 = vadd.f32 0.0, %v2900
        %v2902 = vpop.f32.mrb[0].mxu0
        %v2903 = vpop.f32.mrb[0].mxu0
        %v2904 = vadd.f32 0.0, %v2903
        %v2905 = vpop.f32.mrb[0].mxu0
        %2906 = vmatprep.mubr.bf16.mxu0 0
        %2907 = vmatmul.mubr.bf16.gmra.mrb[0].mxu0 %v2688
        %v2908 = vpop.f32.mrb[0].mxu0
        %v2909 = vadd.f32 0.0, %v2908
        %v2910 = vpop.f32.mrb[0].mxu0
        %v2911 = vpop.f32.mrb[0].mxu0
        %v2912 = vadd.f32 0.0, %v2911
        %v2913 = vpop.f32.mrb[0].mxu0
        %2914 = vdwg.mxu0
        %v2915 = vadd.f32 %v2641, %v2789
        %v2916 = vadd.f32 %v2642, %v2792
        %v2917 = vadd.f32 %v2643, %v2797
        %v2918 = vadd.f32 %v2644, %v2800
        %v2919 = vadd.f32 %v2645, %v2805
        %v2920 = vadd.f32 %v2646, %v2808
        %v2921 = vadd.f32 %v2647, %v2813
        %v2922 = vadd.f32 %v2648, %v2816
        %v2923 = vadd.f32 %v2649, %v2821
        %v2924 = vadd.f32 %v2650, %v2824
        %v2925 = vadd.f32 %v2651, %v2829
        %v2926 = vadd.f32 %v2652, %v2832
        %v2927 = vadd.f32 %v2653, %v2837
        %v2928 = vadd.f32 %v2654, %v2840
        %v2929 = vadd.f32 %v2655, %v2845
        %v2930 = vadd.f32 %v2656, %v2848
        %v2931 = vadd.f32 %v2657, %v2853
        %v2932 = vadd.f32 %v2658, %v2856
        %v2933 = vadd.f32 %v2659, %v2861
        %v2934 = vadd.f32 %v2660, %v2864
        %v2935 = vadd.f32 %v2661, %v2869
        %v2936 = vadd.f32 %v2662, %v2872
        %v2937 = vadd.f32 %v2663, %v2877
        %v2938 = vadd.f32 %v2664, %v2880
        %v2939 = vadd.f32 %v2665, %v2885
        %v2940 = vadd.f32 %v2666, %v2888
        %v2941 = vadd.f32 %v2667, %v2893
        %v2942 = vadd.f32 %v2668, %v2896
        %v2943 = vadd.f32 %v2669, %v2901
        %v2944 = vadd.f32 %v2670, %v2904
        %v2945 = vadd.f32 %v2671, %v2909
        %v2946 = vadd.f32 %v2672, %v2912
        %2947 = vst [vmem:[#allocation4] sm:$0xff] %v2915
        %2948 = vst [vmem:[#allocation4 + $0x8] sm:$0xff] %v2916
        %2949 = vst [vmem:[#allocation4 + $0x10] sm:$0xff] %v2917
        %2950 = vst [vmem:[#allocation4 + $0x18] sm:$0xff] %v2918
        %2951 = vst [vmem:[#allocation4 + $0x20] sm:$0xff] %v2919
        %2952 = vst [vmem:[#allocation4 + $0x28] sm:$0xff] %v2920
        %2953 = vst [vmem:[#allocation4 + $0x30] sm:$0xff] %v2921
        %2954 = vst [vmem:[#allocation4 + $0x38] sm:$0xff] %v2922
        %2955 = vst [vmem:[#allocation4 + $0x40] sm:$0xff] %v2923
        %2956 = vst [vmem:[#allocation4 + $0x48] sm:$0xff] %v2924
        %2957 = vst [vmem:[#allocation4 + $0x50] sm:$0xff] %v2925
        %2958 = vst [vmem:[#allocation4 + $0x58] sm:$0xff] %v2926
        %2959 = vst [vmem:[#allocation4 + $0x60] sm:$0xff] %v2927
        %2960 = vst [vmem:[#allocation4 + $0x68] sm:$0xff] %v2928
        %2961 = vst [vmem:[#allocation4 + $0x70] sm:$0xff] %v2929
        %2962 = vst [vmem:[#allocation4 + $0x78] sm:$0xff] %v2930
        %2963 = vst [vmem:[#allocation4 + $0x80] sm:$0xff] %v2931
        %2964 = vst [vmem:[#allocation4 + $0x88] sm:$0xff] %v2932
        %2965 = vst [vmem:[#allocation4 + $0x90] sm:$0xff] %v2933
        %2966 = vst [vmem:[#allocation4 + $0x98] sm:$0xff] %v2934
        %2967 = vst [vmem:[#allocation4 + $0xa0] sm:$0xff] %v2935
        %2968 = vst [vmem:[#allocation4 + $0xa8] sm:$0xff] %v2936
        %2969 = vst [vmem:[#allocation4 + $0xb0] sm:$0xff] %v2937
        %2970 = vst [vmem:[#allocation4 + $0xb8] sm:$0xff] %v2938
        %2971 = vst [vmem:[#allocation4 + $0xc0] sm:$0xff] %v2939
        %2972 = vst [vmem:[#allocation4 + $0xc8] sm:$0xff] %v2940
        %2973 = vst [vmem:[#allocation4 + $0xd0] sm:$0xff] %v2941
        %2974 = vst [vmem:[#allocation4 + $0xd8] sm:$0xff] %v2942
        %2975 = vst [vmem:[#allocation4 + $0xe0] sm:$0xff] %v2943
        %2976 = vst [vmem:[#allocation4 + $0xe8] sm:$0xff] %v2944
        %2977 = vst [vmem:[#allocation4 + $0xf0] sm:$0xff] %v2945
        %2978 = vst [vmem:[#allocation4 + $0xf8] sm:$0xff] %v2946
        %v2979 = vld [vmem:[#allocation4] sm:$0xff]
        %v2980 = vld [vmem:[#allocation4 + $0x8] sm:$0xff]
        %v2981 = vld [vmem:[#allocation4 + $0x10] sm:$0xff]
        %v2982 = vld [vmem:[#allocation4 + $0x18] sm:$0xff]
        %v2983 = vld [vmem:[#allocation4 + $0x20] sm:$0xff]
        %v2984 = vld [vmem:[#allocation4 + $0x28] sm:$0xff]
        %v2985 = vld [vmem:[#allocation4 + $0x30] sm:$0xff]
        %v2986 = vld [vmem:[#allocation4 + $0x38] sm:$0xff]
        %v2987 = vld [vmem:[#allocation4 + $0x40] sm:$0xff]
        %v2988 = vld [vmem:[#allocation4 + $0x48] sm:$0xff]
        %v2989 = vld [vmem:[#allocation4 + $0x50] sm:$0xff]
        %v2990 = vld [vmem:[#allocation4 + $0x58] sm:$0xff]
        %v2991 = vld [vmem:[#allocation4 + $0x60] sm:$0xff]
        %v2992 = vld [vmem:[#allocation4 + $0x68] sm:$0xff]
        %v2993 = vld [vmem:[#allocation4 + $0x70] sm:$0xff]
        %v2994 = vld [vmem:[#allocation4 + $0x78] sm:$0xff]
        %v2995 = vld [vmem:[#allocation4 + $0x80] sm:$0xff]
        %v2996 = vld [vmem:[#allocation4 + $0x88] sm:$0xff]
        %v2997 = vld [vmem:[#allocation4 + $0x90] sm:$0xff]
        %v2998 = vld [vmem:[#allocation4 + $0x98] sm:$0xff]
        %v2999 = vld [vmem:[#allocation4 + $0xa0] sm:$0xff]
        %v3000 = vld [vmem:[#allocation4 + $0xa8] sm:$0xff]
        %v3001 = vld [vmem:[#allocation4 + $0xb0] sm:$0xff]
        %v3002 = vld [vmem:[#allocation4 + $0xb8] sm:$0xff]
        %v3003 = vld [vmem:[#allocation4 + $0xc0] sm:$0xff]
        %v3004 = vld [vmem:[#allocation4 + $0xc8] sm:$0xff]
        %v3005 = vld [vmem:[#allocation4 + $0xd0] sm:$0xff]
        %v3006 = vld [vmem:[#allocation4 + $0xd8] sm:$0xff]
        %v3007 = vld [vmem:[#allocation4 + $0xe0] sm:$0xff]
        %v3008 = vld [vmem:[#allocation4 + $0xe8] sm:$0xff]
        %v3009 = vld [vmem:[#allocation4 + $0xf0] sm:$0xff]
        %v3010 = vld [vmem:[#allocation4 + $0xf8] sm:$0xff]
        %v3011 = vld [vmem:[#allocation3 + $0x8] sm:$0xff]
        %v3012 = vld [vmem:[#allocation3 + $0x10] sm:$0xff]
        %v3013 = vld [vmem:[#allocation3 + $0x18] sm:$0xff]
        %v3014 = vld [vmem:[#allocation3 + $0x20] sm:$0xff]
        %v3015 = vld [vmem:[#allocation3 + $0x28] sm:$0xff]
        %v3016 = vld [vmem:[#allocation3 + $0x30] sm:$0xff]
        %v3017 = vld [vmem:[#allocation3 + $0x38] sm:$0xff]
        %v3018 = vld [vmem:[#allocation3 + $0x40] sm:$0xff]
        %v3019 = vld [vmem:[#allocation3 + $0x48] sm:$0xff]
        %v3020 = vld [vmem:[#allocation3 + $0x50] sm:$0xff]
        %v3021 = vld [vmem:[#allocation3 + $0x58] sm:$0xff]
        %v3022 = vld [vmem:[#allocation3 + $0x60] sm:$0xff]
        %v3023 = vld [vmem:[#allocation3 + $0x68] sm:$0xff]
        %v3024 = vld [vmem:[#allocation3 + $0x70] sm:$0xff]
        %v3025 = vld [vmem:[#allocation3 + $0x78] sm:$0xff]
        %v3026 = vld [vmem:[#allocation3 + $0x80] sm:$0xff]
        %s3027 = scalar_lea.vmem %s1, 320
        %v3028 = vld [vmem:[%s3027] sm:$0xf]
        %v3029 = vld [vmem:[%s3027 + $0x4] sm:$0xf]
        %v3030 = vld [vmem:[%s3027 + $0x8] sm:$0xf]
        %v3031 = vld [vmem:[%s3027 + $0xc] sm:$0xf]
        %v3032 = vld [vmem:[%s3027 + $0x10] sm:$0xf]
        %v3033 = vld [vmem:[%s3027 + $0x14] sm:$0xf]
        %v3034 = vld [vmem:[%s3027 + $0x18] sm:$0xf]
        %v3035 = vld [vmem:[%s3027 + $0x1c] sm:$0xf]
        %v3036 = vld [vmem:[%s3027 + $0x20] sm:$0xf]
        %v3037 = vld [vmem:[%s3027 + $0x24] sm:$0xf]
        %v3038 = vld [vmem:[%s3027 + $0x28] sm:$0xf]
        %v3039 = vld [vmem:[%s3027 + $0x2c] sm:$0xf]
        %v3040 = vld [vmem:[%s3027 + $0x30] sm:$0xf]
        %v3041 = vld [vmem:[%s3027 + $0x34] sm:$0xf]
        %v3042 = vld [vmem:[%s3027 + $0x38] sm:$0xf]
        %v3043 = vld [vmem:[%s3027 + $0x3c] sm:$0xf]
        %v3060 = vunpack.c.l.b16 %v3028
        %v3061 = vunpack.c.l.b16 %v3029
        %v3062 = vunpack.c.l.b16 %v3030
        %v3063 = vunpack.c.l.b16 %v3031
        %v3064 = vunpack.c.l.b16 %v3032
        %v3065 = vunpack.c.l.b16 %v3033
        %v3066 = vunpack.c.l.b16 %v3034
        %v3067 = vunpack.c.l.b16 %v3035
        %v3068 = vunpack.c.l.b16 %v3036
        %v3069 = vunpack.c.l.b16 %v3037
        %v3070 = vunpack.c.l.b16 %v3038
        %v3071 = vunpack.c.l.b16 %v3039
        %v3072 = vunpack.c.l.b16 %v3040
        %v3073 = vunpack.c.l.b16 %v3041
        %v3074 = vunpack.c.l.b16 %v3042
        %v3075 = vunpack.c.l.b16 %v3043
        %v3076 = vpack.c.b16 %v3061, %v3060
        %v3077 = vpack.c.b16 %v3063, %v3062
        %v3078 = vpack.c.b16 %v3065, %v3064
        %v3079 = vpack.c.b16 %v3067, %v3066
        %v3080 = vpack.c.b16 %v3069, %v3068
        %v3081 = vpack.c.b16 %v3071, %v3070
        %v3082 = vpack.c.b16 %v3073, %v3072
        %v3083 = vpack.c.b16 %v3075, %v3074
        %3092 = vmatprep.subr.bf16.mxu0 0
        %3093 = vmatpush1.bf16.msra.mxu0 %v3076
        %3094 = vmatprep.subr.bf16.mxu0 0
        %3095 = vmatpush1.bf16.msra.mxu0 %v3077
        %3096 = vmatprep.subr.bf16.mxu0 0
        %3097 = vmatpush1.bf16.msra.mxu0 %v3078
        %3098 = vmatprep.subr.bf16.mxu0 0
        %3099 = vmatpush1.bf16.msra.mxu0 %v3079
        %3100 = vmatprep.subr.bf16.mxu0 0
        %3101 = vmatpush1.bf16.msra.mxu0 %v3080
        %3102 = vmatprep.subr.bf16.mxu0 0
        %3103 = vmatpush1.bf16.msra.mxu0 %v3081
        %3104 = vmatprep.subr.bf16.mxu0 0
        %3105 = vmatpush1.bf16.msra.mxu0 %v3082
        %3106 = vmatprep.subr.bf16.mxu0 0
        %3107 = vmatpush1.bf16.msra.mxu0 %v3083
        %3108 = vmatprep.subr.bf16.mxu0 0
        %3109 = vmatpush1.bf16.msra.mxu0 0
        %3110 = vmatprep.subr.bf16.mxu0 0
        %3111 = vmatpush1.bf16.msra.mxu0 0
        %3112 = vmatprep.subr.bf16.mxu0 0
        %3113 = vmatpush1.bf16.msra.mxu0 0
        %3114 = vmatprep.subr.bf16.mxu0 0
        %3115 = vmatpush1.bf16.msra.mxu0 0
        %3116 = vmatprep.subr.bf16.mxu0 0
        %3117 = vmatpush1.bf16.msra.mxu0 0
        %3118 = vmatprep.subr.bf16.mxu0 0
        %3119 = vmatpush1.bf16.msra.mxu0 0
        %3120 = vmatprep.subr.bf16.mxu0 0
        %3121 = vmatpush1.bf16.msra.mxu0 0
        %3122 = vmatprep.subr.bf16.mxu0 0
        %3123 = vmatpush1.bf16.msra.mxu0 0
        %3124 = vmatprep.mubr.bf16.mxu0 0
        %3125 = vmatmul.mubr.bf16.gmra.mrb[0].mxu0 %v3011
        %v3126 = vpop.f32.mrb[0].mxu0
        %v3127 = vadd.f32 0.0, %v3126
        %v3128 = vpop.f32.mrb[0].mxu0
        %v3129 = vpop.f32.mrb[0].mxu0
        %v3130 = vadd.f32 0.0, %v3129
        %v3131 = vpop.f32.mrb[0].mxu0
        %3132 = vmatprep.mubr.bf16.mxu0 0
        %3133 = vmatmul.mubr.bf16.gmra.mrb[0].mxu0 %v3012
        %v3134 = vpop.f32.mrb[0].mxu0
        %v3135 = vadd.f32 0.0, %v3134
        %v3136 = vpop.f32.mrb[0].mxu0
        %v3137 = vpop.f32.mrb[0].mxu0
        %v3138 = vadd.f32 0.0, %v3137
        %v3139 = vpop.f32.mrb[0].mxu0
        %3140 = vmatprep.mubr.bf16.mxu0 0
        %3141 = vmatmul.mubr.bf16.gmra.mrb[0].mxu0 %v3013
        %v3142 = vpop.f32.mrb[0].mxu0
        %v3143 = vadd.f32 0.0, %v3142
        %v3144 = vpop.f32.mrb[0].mxu0
        %v3145 = vpop.f32.mrb[0].mxu0
        %v3146 = vadd.f32 0.0, %v3145
        %v3147 = vpop.f32.mrb[0].mxu0
        %3148 = vmatprep.mubr.bf16.mxu0 0
        %3149 = vmatmul.mubr.bf16.gmra.mrb[0].mxu0 %v3014
        %v3150 = vpop.f32.mrb[0].mxu0
        %v3151 = vadd.f32 0.0, %v3150
        %v3152 = vpop.f32.mrb[0].mxu0
        %v3153 = vpop.f32.mrb[0].mxu0
        %v3154 = vadd.f32 0.0, %v3153
        %v3155 = vpop.f32.mrb[0].mxu0
        %3156 = vmatprep.mubr.bf16.mxu0 0
        %3157 = vmatmul.mubr.bf16.gmra.mrb[0].mxu0 %v3015
        %v3158 = vpop.f32.mrb[0].mxu0
        %v3159 = vadd.f32 0.0, %v3158
        %v3160 = vpop.f32.mrb[0].mxu0
        %v3161 = vpop.f32.mrb[0].mxu0
        %v3162 = vadd.f32 0.0, %v3161
        %v3163 = vpop.f32.mrb[0].mxu0
        %3164 = vmatprep.mubr.bf16.mxu0 0
        %3165 = vmatmul.mubr.bf16.gmra.mrb[0].mxu0 %v3016
        %v3166 = vpop.f32.mrb[0].mxu0
        %v3167 = vadd.f32 0.0, %v3166
        %v3168 = vpop.f32.mrb[0].mxu0
        %v3169 = vpop.f32.mrb[0].mxu0
        %v3170 = vadd.f32 0.0, %v3169
        %v3171 = vpop.f32.mrb[0].mxu0
        %3172 = vmatprep.mubr.bf16.mxu0 0
        %3173 = vmatmul.mubr.bf16.gmra.mrb[0].mxu0 %v3017
        %v3174 = vpop.f32.mrb[0].mxu0
        %v3175 = vadd.f32 0.0, %v3174
        %v3176 = vpop.f32.mrb[0].mxu0
        %v3177 = vpop.f32.mrb[0].mxu0
        %v3178 = vadd.f32 0.0, %v3177
        %v3179 = vpop.f32.mrb[0].mxu0
        %3180 = vmatprep.mubr.bf16.mxu0 0
        %3181 = vmatmul.mubr.bf16.gmra.mrb[0].mxu0 %v3018
        %v3182 = vpop.f32.mrb[0].mxu0
        %v3183 = vadd.f32 0.0, %v3182
        %v3184 = vpop.f32.mrb[0].mxu0
        %v3185 = vpop.f32.mrb[0].mxu0
        %v3186 = vadd.f32 0.0, %v3185
        %v3187 = vpop.f32.mrb[0].mxu0
        %3188 = vmatprep.mubr.bf16.mxu0 0
        %3189 = vmatmul.mubr.bf16.gmra.mrb[0].mxu0 %v3019
        %v3190 = vpop.f32.mrb[0].mxu0
        %v3191 = vadd.f32 0.0, %v3190
        %v3192 = vpop.f32.mrb[0].mxu0
        %v3193 = vpop.f32.mrb[0].mxu0
        %v3194 = vadd.f32 0.0, %v3193
        %v3195 = vpop.f32.mrb[0].mxu0
        %3196 = vmatprep.mubr.bf16.mxu0 0
        %3197 = vmatmul.mubr.bf16.gmra.mrb[0].mxu0 %v3020
        %v3198 = vpop.f32.mrb[0].mxu0
        %v3199 = vadd.f32 0.0, %v3198
        %v3200 = vpop.f32.mrb[0].mxu0
        %v3201 = vpop.f32.mrb[0].mxu0
        %v3202 = vadd.f32 0.0, %v3201
        %v3203 = vpop.f32.mrb[0].mxu0
        %3204 = vmatprep.mubr.bf16.mxu0 0
        %3205 = vmatmul.mubr.bf16.gmra.mrb[0].mxu0 %v3021
        %v3206 = vpop.f32.mrb[0].mxu0
        %v3207 = vadd.f32 0.0, %v3206
        %v3208 = vpop.f32.mrb[0].mxu0
        %v3209 = vpop.f32.mrb[0].mxu0
        %v3210 = vadd.f32 0.0, %v3209
        %v3211 = vpop.f32.mrb[0].mxu0
        %3212 = vmatprep.mubr.bf16.mxu0 0
        %3213 = vmatmul.mubr.bf16.gmra.mrb[0].mxu0 %v3022
        %v3214 = vpop.f32.mrb[0].mxu0
        %v3215 = vadd.f32 0.0, %v3214
        %v3216 = vpop.f32.mrb[0].mxu0
        %v3217 = vpop.f32.mrb[0].mxu0
        %v3218 = vadd.f32 0.0, %v3217
        %v3219 = vpop.f32.mrb[0].mxu0
        %3220 = vmatprep.mubr.bf16.mxu0 0
        %3221 = vmatmul.mubr.bf16.gmra.mrb[0].mxu0 %v3023
        %v3222 = vpop.f32.mrb[0].mxu0
        %v3223 = vadd.f32 0.0, %v3222
        %v3224 = vpop.f32.mrb[0].mxu0
        %v3225 = vpop.f32.mrb[0].mxu0
        %v3226 = vadd.f32 0.0, %v3225
        %v3227 = vpop.f32.mrb[0].mxu0
        %3228 = vmatprep.mubr.bf16.mxu0 0
        %3229 = vmatmul.mubr.bf16.gmra.mrb[0].mxu0 %v3024
        %v3230 = vpop.f32.mrb[0].mxu0
        %v3231 = vadd.f32 0.0, %v3230
        %v3232 = vpop.f32.mrb[0].mxu0
        %v3233 = vpop.f32.mrb[0].mxu0
        %v3234 = vadd.f32 0.0, %v3233
        %v3235 = vpop.f32.mrb[0].mxu0
        %3236 = vmatprep.mubr.bf16.mxu0 0
        %3237 = vmatmul.mubr.bf16.gmra.mrb[0].mxu0 %v3025
        %v3238 = vpop.f32.mrb[0].mxu0
        %v3239 = vadd.f32 0.0, %v3238
        %v3240 = vpop.f32.mrb[0].mxu0
        %v3241 = vpop.f32.mrb[0].mxu0
        %v3242 = vadd.f32 0.0, %v3241
        %v3243 = vpop.f32.mrb[0].mxu0
        %3244 = vmatprep.mubr.bf16.mxu0 0
        %3245 = vmatmul.mubr.bf16.gmra.mrb[0].mxu0 %v3026
        %v3246 = vpop.f32.mrb[0].mxu0
        %v3247 = vadd.f32 0.0, %v3246
        %v3248 = vpop.f32.mrb[0].mxu0
        %v3249 = vpop.f32.mrb[0].mxu0
        %v3250 = vadd.f32 0.0, %v3249
        %v3251 = vpop.f32.mrb[0].mxu0
        %3252 = vdwg.mxu0
        %v3253 = vadd.f32 %v2979, %v3127
        %v3254 = vadd.f32 %v2980, %v3130
        %v3255 = vadd.f32 %v2981, %v3135
        %v3256 = vadd.f32 %v2982, %v3138
        %v3257 = vadd.f32 %v2983, %v3143
        %v3258 = vadd.f32 %v2984, %v3146
        %v3259 = vadd.f32 %v2985, %v3151
        %v3260 = vadd.f32 %v2986, %v3154
        %v3261 = vadd.f32 %v2987, %v3159
        %v3262 = vadd.f32 %v2988, %v3162
        %v3263 = vadd.f32 %v2989, %v3167
        %v3264 = vadd.f32 %v2990, %v3170
        %v3265 = vadd.f32 %v2991, %v3175
        %v3266 = vadd.f32 %v2992, %v3178
        %v3267 = vadd.f32 %v2993, %v3183
        %v3268 = vadd.f32 %v2994, %v3186
        %v3269 = vadd.f32 %v2995, %v3191
        %v3270 = vadd.f32 %v2996, %v3194
        %v3271 = vadd.f32 %v2997, %v3199
        %v3272 = vadd.f32 %v2998, %v3202
        %v3273 = vadd.f32 %v2999, %v3207
        %v3274 = vadd.f32 %v3000, %v3210
        %v3275 = vadd.f32 %v3001, %v3215
        %v3276 = vadd.f32 %v3002, %v3218
        %v3277 = vadd.f32 %v3003, %v3223
        %v3278 = vadd.f32 %v3004, %v3226
        %v3279 = vadd.f32 %v3005, %v3231
        %v3280 = vadd.f32 %v3006, %v3234
        %v3281 = vadd.f32 %v3007, %v3239
        %v3282 = vadd.f32 %v3008, %v3242
        %v3283 = vadd.f32 %v3009, %v3247
        %v3284 = vadd.f32 %v3010, %v3250
        %3285 = vst [vmem:[#allocation4] sm:$0xff] %v3253
        %3286 = vst [vmem:[#allocation4 + $0x8] sm:$0xff] %v3254
        %3287 = vst [vmem:[#allocation4 + $0x10] sm:$0xff] %v3255
        %3288 = vst [vmem:[#allocation4 + $0x18] sm:$0xff] %v3256
        %3289 = vst [vmem:[#allocation4 + $0x20] sm:$0xff] %v3257
        %3290 = vst [vmem:[#allocation4 + $0x28] sm:$0xff] %v3258
        %3291 = vst [vmem:[#allocation4 + $0x30] sm:$0xff] %v3259
        %3292 = vst [vmem:[#allocation4 + $0x38] sm:$0xff] %v3260
        %3293 = vst [vmem:[#allocation4 + $0x40] sm:$0xff] %v3261
        %3294 = vst [vmem:[#allocation4 + $0x48] sm:$0xff] %v3262
        %3295 = vst [vmem:[#allocation4 + $0x50] sm:$0xff] %v3263
        %3296 = vst [vmem:[#allocation4 + $0x58] sm:$0xff] %v3264
        %3297 = vst [vmem:[#allocation4 + $0x60] sm:$0xff] %v3265
        %3298 = vst [vmem:[#allocation4 + $0x68] sm:$0xff] %v3266
        %3299 = vst [vmem:[#allocation4 + $0x70] sm:$0xff] %v3267
        %3300 = vst [vmem:[#allocation4 + $0x78] sm:$0xff] %v3268
        %3301 = vst [vmem:[#allocation4 + $0x80] sm:$0xff] %v3269
        %3302 = vst [vmem:[#allocation4 + $0x88] sm:$0xff] %v3270
        %3303 = vst [vmem:[#allocation4 + $0x90] sm:$0xff] %v3271
        %3304 = vst [vmem:[#allocation4 + $0x98] sm:$0xff] %v3272
        %3305 = vst [vmem:[#allocation4 + $0xa0] sm:$0xff] %v3273
        %3306 = vst [vmem:[#allocation4 + $0xa8] sm:$0xff] %v3274
        %3307 = vst [vmem:[#allocation4 + $0xb0] sm:$0xff] %v3275
        %3308 = vst [vmem:[#allocation4 + $0xb8] sm:$0xff] %v3276
        %3309 = vst [vmem:[#allocation4 + $0xc0] sm:$0xff] %v3277
        %3310 = vst [vmem:[#allocation4 + $0xc8] sm:$0xff] %v3278
        %3311 = vst [vmem:[#allocation4 + $0xd0] sm:$0xff] %v3279
        %3312 = vst [vmem:[#allocation4 + $0xd8] sm:$0xff] %v3280
        %3313 = vst [vmem:[#allocation4 + $0xe0] sm:$0xff] %v3281
        %3314 = vst [vmem:[#allocation4 + $0xe8] sm:$0xff] %v3282
        %3315 = vst [vmem:[#allocation4 + $0xf0] sm:$0xff] %v3283
        %3316 = vst [vmem:[#allocation4 + $0xf8] sm:$0xff] %v3284
        %v3317 = vld [vmem:[#allocation4] sm:$0xff]
        %v3318 = vld [vmem:[#allocation4 + $0x8] sm:$0xff]
        %v3319 = vld [vmem:[#allocation4 + $0x10] sm:$0xff]
        %v3320 = vld [vmem:[#allocation4 + $0x18] sm:$0xff]
        %v3321 = vld [vmem:[#allocation4 + $0x20] sm:$0xff]
        %v3322 = vld [vmem:[#allocation4 + $0x28] sm:$0xff]
        %v3323 = vld [vmem:[#allocation4 + $0x30] sm:$0xff]
        %v3324 = vld [vmem:[#allocation4 + $0x38] sm:$0xff]
        %v3325 = vld [vmem:[#allocation4 + $0x40] sm:$0xff]
        %v3326 = vld [vmem:[#allocation4 + $0x48] sm:$0xff]
        %v3327 = vld [vmem:[#allocation4 + $0x50] sm:$0xff]
        %v3328 = vld [vmem:[#allocation4 + $0x58] sm:$0xff]
        %v3329 = vld [vmem:[#allocation4 + $0x60] sm:$0xff]
        %v3330 = vld [vmem:[#allocation4 + $0x68] sm:$0xff]
        %v3331 = vld [vmem:[#allocation4 + $0x70] sm:$0xff]
        %v3332 = vld [vmem:[#allocation4 + $0x78] sm:$0xff]
        %v3333 = vld [vmem:[#allocation4 + $0x80] sm:$0xff]
        %v3334 = vld [vmem:[#allocation4 + $0x88] sm:$0xff]
        %v3335 = vld [vmem:[#allocation4 + $0x90] sm:$0xff]
        %v3336 = vld [vmem:[#allocation4 + $0x98] sm:$0xff]
        %v3337 = vld [vmem:[#allocation4 + $0xa0] sm:$0xff]
        %v3338 = vld [vmem:[#allocation4 + $0xa8] sm:$0xff]
        %v3339 = vld [vmem:[#allocation4 + $0xb0] sm:$0xff]
        %v3340 = vld [vmem:[#allocation4 + $0xb8] sm:$0xff]
        %v3341 = vld [vmem:[#allocation4 + $0xc0] sm:$0xff]
        %v3342 = vld [vmem:[#allocation4 + $0xc8] sm:$0xff]
        %v3343 = vld [vmem:[#allocation4 + $0xd0] sm:$0xff]
        %v3344 = vld [vmem:[#allocation4 + $0xd8] sm:$0xff]
        %v3345 = vld [vmem:[#allocation4 + $0xe0] sm:$0xff]
        %v3346 = vld [vmem:[#allocation4 + $0xe8] sm:$0xff]
        %v3347 = vld [vmem:[#allocation4 + $0xf0] sm:$0xff]
        %v3348 = vld [vmem:[#allocation4 + $0xf8] sm:$0xff]
        %v3349 = vld [vmem:[#allocation3 + $0x10] sm:$0xff]
        %v3350 = vld [vmem:[#allocation3 + $0x18] sm:$0xff]
        %v3351 = vld [vmem:[#allocation3 + $0x20] sm:$0xff]
        %v3352 = vld [vmem:[#allocation3 + $0x28] sm:$0xff]
        %v3353 = vld [vmem:[#allocation3 + $0x30] sm:$0xff]
        %v3354 = vld [vmem:[#allocation3 + $0x38] sm:$0xff]
        %v3355 = vld [vmem:[#allocation3 + $0x40] sm:$0xff]
        %v3356 = vld [vmem:[#allocation3 + $0x48] sm:$0xff]
        %v3357 = vld [vmem:[#allocation3 + $0x50] sm:$0xff]
        %v3358 = vld [vmem:[#allocation3 + $0x58] sm:$0xff]
        %v3359 = vld [vmem:[#allocation3 + $0x60] sm:$0xff]
        %v3360 = vld [vmem:[#allocation3 + $0x68] sm:$0xff]
        %v3361 = vld [vmem:[#allocation3 + $0x70] sm:$0xff]
        %v3362 = vld [vmem:[#allocation3 + $0x78] sm:$0xff]
        %v3363 = vld [vmem:[#allocation3 + $0x80] sm:$0xff]
        %v3364 = vld [vmem:[#allocation3 + $0x88] sm:$0xff]
        %s3365 = scalar_lea.vmem %s1, 512
        %v3366 = vld [vmem:[%s3365] sm:$0xf]
        %v3367 = vld [vmem:[%s3365 + $0x4] sm:$0xf]
        %v3368 = vld [vmem:[%s3365 + $0x8] sm:$0xf]
        %v3369 = vld [vmem:[%s3365 + $0xc] sm:$0xf]
        %v3370 = vld [vmem:[%s3365 + $0x10] sm:$0xf]
        %v3371 = vld [vmem:[%s3365 + $0x14] sm:$0xf]
        %v3372 = vld [vmem:[%s3365 + $0x18] sm:$0xf]
        %v3373 = vld [vmem:[%s3365 + $0x1c] sm:$0xf]
        %v3374 = vld [vmem:[%s3365 + $0x20] sm:$0xf]
        %v3375 = vld [vmem:[%s3365 + $0x24] sm:$0xf]
        %v3376 = vld [vmem:[%s3365 + $0x28] sm:$0xf]
        %v3377 = vld [vmem:[%s3365 + $0x2c] sm:$0xf]
        %v3378 = vld [vmem:[%s3365 + $0x30] sm:$0xf]
        %v3379 = vld [vmem:[%s3365 + $0x34] sm:$0xf]
        %v3380 = vld [vmem:[%s3365 + $0x38] sm:$0xf]
        %v3381 = vld [vmem:[%s3365 + $0x3c] sm:$0xf]
        %v3398 = vunpack.c.l.b16 %v3366
        %v3399 = vunpack.c.l.b16 %v3367
        %v3400 = vunpack.c.l.b16 %v3368
        %v3401 = vunpack.c.l.b16 %v3369
        %v3402 = vunpack.c.l.b16 %v3370
        %v3403 = vunpack.c.l.b16 %v3371
        %v3404 = vunpack.c.l.b16 %v3372
        %v3405 = vunpack.c.l.b16 %v3373
        %v3406 = vunpack.c.l.b16 %v3374
        %v3407 = vunpack.c.l.b16 %v3375
        %v3408 = vunpack.c.l.b16 %v3376
        %v3409 = vunpack.c.l.b16 %v3377
        %v3410 = vunpack.c.l.b16 %v3378
        %v3411 = vunpack.c.l.b16 %v3379
        %v3412 = vunpack.c.l.b16 %v3380
        %v3413 = vunpack.c.l.b16 %v3381
        %v3414 = vpack.c.b16 %v3399, %v3398
        %v3415 = vpack.c.b16 %v3401, %v3400
        %v3416 = vpack.c.b16 %v3403, %v3402
        %v3417 = vpack.c.b16 %v3405, %v3404
        %v3418 = vpack.c.b16 %v3407, %v3406
        %v3419 = vpack.c.b16 %v3409, %v3408
        %v3420 = vpack.c.b16 %v3411, %v3410
        %v3421 = vpack.c.b16 %v3413, %v3412
        %3430 = vmatprep.subr.bf16.mxu0 0
        %3431 = vmatpush1.bf16.msra.mxu0 %v3414
        %3432 = vmatprep.subr.bf16.mxu0 0
        %3433 = vmatpush1.bf16.msra.mxu0 %v3415
        %3434 = vmatprep.subr.bf16.mxu0 0
        %3435 = vmatpush1.bf16.msra.mxu0 %v3416
        %3436 = vmatprep.subr.bf16.mxu0 0
        %3437 = vmatpush1.bf16.msra.mxu0 %v3417
        %3438 = vmatprep.subr.bf16.mxu0 0
        %3439 = vmatpush1.bf16.msra.mxu0 %v3418
        %3440 = vmatprep.subr.bf16.mxu0 0
        %3441 = vmatpush1.bf16.msra.mxu0 %v3419
        %3442 = vmatprep.subr.bf16.mxu0 0
        %3443 = vmatpush1.bf16.msra.mxu0 %v3420
        %3444 = vmatprep.subr.bf16.mxu0 0
        %3445 = vmatpush1.bf16.msra.mxu0 %v3421
        %3446 = vmatprep.subr.bf16.mxu0 0
        %3447 = vmatpush1.bf16.msra.mxu0 0
        %3448 = vmatprep.subr.bf16.mxu0 0
        %3449 = vmatpush1.bf16.msra.mxu0 0
        %3450 = vmatprep.subr.bf16.mxu0 0
        %3451 = vmatpush1.bf16.msra.mxu0 0
        %3452 = vmatprep.subr.bf16.mxu0 0
        %3453 = vmatpush1.bf16.msra.mxu0 0
        %3454 = vmatprep.subr.bf16.mxu0 0
        %3455 = vmatpush1.bf16.msra.mxu0 0
        %3456 = vmatprep.subr.bf16.mxu0 0
        %3457 = vmatpush1.bf16.msra.mxu0 0
        %3458 = vmatprep.subr.bf16.mxu0 0
        %3459 = vmatpush1.bf16.msra.mxu0 0
        %3460 = vmatprep.subr.bf16.mxu0 0
        %3461 = vmatpush1.bf16.msra.mxu0 0
        %3462 = vmatprep.mubr.bf16.mxu0 0
        %3463 = vmatmul.mubr.bf16.gmra.mrb[0].mxu0 %v3349
        %v3464 = vpop.f32.mrb[0].mxu0
        %v3465 = vadd.f32 0.0, %v3464
        %v3466 = vpop.f32.mrb[0].mxu0
        %v3467 = vpop.f32.mrb[0].mxu0
        %v3468 = vadd.f32 0.0, %v3467
        %v3469 = vpop.f32.mrb[0].mxu0
        %3470 = vmatprep.mubr.bf16.mxu0 0
        %3471 = vmatmul.mubr.bf16.gmra.mrb[0].mxu0 %v3350
        %v3472 = vpop.f32.mrb[0].mxu0
        %v3473 = vadd.f32 0.0, %v3472
        %v3474 = vpop.f32.mrb[0].mxu0
        %v3475 = vpop.f32.mrb[0].mxu0
        %v3476 = vadd.f32 0.0, %v3475
        %v3477 = vpop.f32.mrb[0].mxu0
        %3478 = vmatprep.mubr.bf16.mxu0 0
        %3479 = vmatmul.mubr.bf16.gmra.mrb[0].mxu0 %v3351
        %v3480 = vpop.f32.mrb[0].mxu0
        %v3481 = vadd.f32 0.0, %v3480
        %v3482 = vpop.f32.mrb[0].mxu0
        %v3483 = vpop.f32.mrb[0].mxu0
        %v3484 = vadd.f32 0.0, %v3483
        %v3485 = vpop.f32.mrb[0].mxu0
        %3486 = vmatprep.mubr.bf16.mxu0 0
        %3487 = vmatmul.mubr.bf16.gmra.mrb[0].mxu0 %v3352
        %v3488 = vpop.f32.mrb[0].mxu0
        %v3489 = vadd.f32 0.0, %v3488
        %v3490 = vpop.f32.mrb[0].mxu0
        %v3491 = vpop.f32.mrb[0].mxu0
        %v3492 = vadd.f32 0.0, %v3491
        %v3493 = vpop.f32.mrb[0].mxu0
        %3494 = vmatprep.mubr.bf16.mxu0 0
        %3495 = vmatmul.mubr.bf16.gmra.mrb[0].mxu0 %v3353
        %v3496 = vpop.f32.mrb[0].mxu0
        %v3497 = vadd.f32 0.0, %v3496
        %v3498 = vpop.f32.mrb[0].mxu0
        %v3499 = vpop.f32.mrb[0].mxu0
        %v3500 = vadd.f32 0.0, %v3499
        %v3501 = vpop.f32.mrb[0].mxu0
        %3502 = vmatprep.mubr.bf16.mxu0 0
        %3503 = vmatmul.mubr.bf16.gmra.mrb[0].mxu0 %v3354
        %v3504 = vpop.f32.mrb[0].mxu0
        %v3505 = vadd.f32 0.0, %v3504
        %v3506 = vpop.f32.mrb[0].mxu0
        %v3507 = vpop.f32.mrb[0].mxu0
        %v3508 = vadd.f32 0.0, %v3507
        %v3509 = vpop.f32.mrb[0].mxu0
        %3510 = vmatprep.mubr.bf16.mxu0 0
        %3511 = vmatmul.mubr.bf16.gmra.mrb[0].mxu0 %v3355
        %v3512 = vpop.f32.mrb[0].mxu0
        %v3513 = vadd.f32 0.0, %v3512
        %v3514 = vpop.f32.mrb[0].mxu0
        %v3515 = vpop.f32.mrb[0].mxu0
        %v3516 = vadd.f32 0.0, %v3515
        %v3517 = vpop.f32.mrb[0].mxu0
        %3518 = vmatprep.mubr.bf16.mxu0 0
        %3519 = vmatmul.mubr.bf16.gmra.mrb[0].mxu0 %v3356
        %v3520 = vpop.f32.mrb[0].mxu0
        %v3521 = vadd.f32 0.0, %v3520
        %v3522 = vpop.f32.mrb[0].mxu0
        %v3523 = vpop.f32.mrb[0].mxu0
        %v3524 = vadd.f32 0.0, %v3523
        %v3525 = vpop.f32.mrb[0].mxu0
        %3526 = vmatprep.mubr.bf16.mxu0 0
        %3527 = vmatmul.mubr.bf16.gmra.mrb[0].mxu0 %v3357
        %v3528 = vpop.f32.mrb[0].mxu0
        %v3529 = vadd.f32 0.0, %v3528
        %v3530 = vpop.f32.mrb[0].mxu0
        %v3531 = vpop.f32.mrb[0].mxu0
        %v3532 = vadd.f32 0.0, %v3531
        %v3533 = vpop.f32.mrb[0].mxu0
        %3534 = vmatprep.mubr.bf16.mxu0 0
        %3535 = vmatmul.mubr.bf16.gmra.mrb[0].mxu0 %v3358
        %v3536 = vpop.f32.mrb[0].mxu0
        %v3537 = vadd.f32 0.0, %v3536
        %v3538 = vpop.f32.mrb[0].mxu0
        %v3539 = vpop.f32.mrb[0].mxu0
        %v3540 = vadd.f32 0.0, %v3539
        %v3541 = vpop.f32.mrb[0].mxu0
        %3542 = vmatprep.mubr.bf16.mxu0 0
        %3543 = vmatmul.mubr.bf16.gmra.mrb[0].mxu0 %v3359
        %v3544 = vpop.f32.mrb[0].mxu0
        %v3545 = vadd.f32 0.0, %v3544
        %v3546 = vpop.f32.mrb[0].mxu0
        %v3547 = vpop.f32.mrb[0].mxu0
        %v3548 = vadd.f32 0.0, %v3547
        %v3549 = vpop.f32.mrb[0].mxu0
        %3550 = vmatprep.mubr.bf16.mxu0 0
        %3551 = vmatmul.mubr.bf16.gmra.mrb[0].mxu0 %v3360
        %v3552 = vpop.f32.mrb[0].mxu0
        %v3553 = vadd.f32 0.0, %v3552
        %v3554 = vpop.f32.mrb[0].mxu0
        %v3555 = vpop.f32.mrb[0].mxu0
        %v3556 = vadd.f32 0.0, %v3555
        %v3557 = vpop.f32.mrb[0].mxu0
        %3558 = vmatprep.mubr.bf16.mxu0 0
        %3559 = vmatmul.mubr.bf16.gmra.mrb[0].mxu0 %v3361
        %v3560 = vpop.f32.mrb[0].mxu0
        %v3561 = vadd.f32 0.0, %v3560
        %v3562 = vpop.f32.mrb[0].mxu0
        %v3563 = vpop.f32.mrb[0].mxu0
        %v3564 = vadd.f32 0.0, %v3563
        %v3565 = vpop.f32.mrb[0].mxu0
        %3566 = vmatprep.mubr.bf16.mxu0 0
        %3567 = vmatmul.mubr.bf16.gmra.mrb[0].mxu0 %v3362
        %v3568 = vpop.f32.mrb[0].mxu0
        %v3569 = vadd.f32 0.0, %v3568
        %v3570 = vpop.f32.mrb[0].mxu0
        %v3571 = vpop.f32.mrb[0].mxu0
        %v3572 = vadd.f32 0.0, %v3571
        %v3573 = vpop.f32.mrb[0].mxu0
        %3574 = vmatprep.mubr.bf16.mxu0 0
        %3575 = vmatmul.mubr.bf16.gmra.mrb[0].mxu0 %v3363
        %v3576 = vpop.f32.mrb[0].mxu0
        %v3577 = vadd.f32 0.0, %v3576
        %v3578 = vpop.f32.mrb[0].mxu0
        %v3579 = vpop.f32.mrb[0].mxu0
        %v3580 = vadd.f32 0.0, %v3579
        %v3581 = vpop.f32.mrb[0].mxu0
        %3582 = vmatprep.mubr.bf16.mxu0 0
        %3583 = vmatmul.mubr.bf16.gmra.mrb[0].mxu0 %v3364
        %v3584 = vpop.f32.mrb[0].mxu0
        %v3585 = vadd.f32 0.0, %v3584
        %v3586 = vpop.f32.mrb[0].mxu0
        %v3587 = vpop.f32.mrb[0].mxu0
        %v3588 = vadd.f32 0.0, %v3587
        %v3589 = vpop.f32.mrb[0].mxu0
        %3590 = vdwg.mxu0
        %v3591 = vadd.f32 %v3317, %v3465
        %v3592 = vadd.f32 %v3318, %v3468
        %v3593 = vadd.f32 %v3319, %v3473
        %v3594 = vadd.f32 %v3320, %v3476
        %v3595 = vadd.f32 %v3321, %v3481
        %v3596 = vadd.f32 %v3322, %v3484
        %v3597 = vadd.f32 %v3323, %v3489
        %v3598 = vadd.f32 %v3324, %v3492
        %v3599 = vadd.f32 %v3325, %v3497
        %v3600 = vadd.f32 %v3326, %v3500
        %v3601 = vadd.f32 %v3327, %v3505
        %v3602 = vadd.f32 %v3328, %v3508
        %v3603 = vadd.f32 %v3329, %v3513
        %v3604 = vadd.f32 %v3330, %v3516
        %v3605 = vadd.f32 %v3331, %v3521
        %v3606 = vadd.f32 %v3332, %v3524
        %v3607 = vadd.f32 %v3333, %v3529
        %v3608 = vadd.f32 %v3334, %v3532
        %v3609 = vadd.f32 %v3335, %v3537
        %v3610 = vadd.f32 %v3336, %v3540
        %v3611 = vadd.f32 %v3337, %v3545
        %v3612 = vadd.f32 %v3338, %v3548
        %v3613 = vadd.f32 %v3339, %v3553
        %v3614 = vadd.f32 %v3340, %v3556
        %v3615 = vadd.f32 %v3341, %v3561
        %v3616 = vadd.f32 %v3342, %v3564
        %v3617 = vadd.f32 %v3343, %v3569
        %v3618 = vadd.f32 %v3344, %v3572
        %v3619 = vadd.f32 %v3345, %v3577
        %v3620 = vadd.f32 %v3346, %v3580
        %v3621 = vadd.f32 %v3347, %v3585
        %v3622 = vadd.f32 %v3348, %v3588
        %3623 = vst [vmem:[#allocation4] sm:$0xff] %v3591
        %3624 = vst [vmem:[#allocation4 + $0x8] sm:$0xff] %v3592
        %3625 = vst [vmem:[#allocation4 + $0x10] sm:$0xff] %v3593
        %3626 = vst [vmem:[#allocation4 + $0x18] sm:$0xff] %v3594
        %3627 = vst [vmem:[#allocation4 + $0x20] sm:$0xff] %v3595
        %3628 = vst [vmem:[#allocation4 + $0x28] sm:$0xff] %v3596
        %3629 = vst [vmem:[#allocation4 + $0x30] sm:$0xff] %v3597
        %3630 = vst [vmem:[#allocation4 + $0x38] sm:$0xff] %v3598
        %3631 = vst [vmem:[#allocation4 + $0x40] sm:$0xff] %v3599
        %3632 = vst [vmem:[#allocation4 + $0x48] sm:$0xff] %v3600
        %3633 = vst [vmem:[#allocation4 + $0x50] sm:$0xff] %v3601
        %3634 = vst [vmem:[#allocation4 + $0x58] sm:$0xff] %v3602
        %3635 = vst [vmem:[#allocation4 + $0x60] sm:$0xff] %v3603
        %3636 = vst [vmem:[#allocation4 + $0x68] sm:$0xff] %v3604
        %3637 = vst [vmem:[#allocation4 + $0x70] sm:$0xff] %v3605
        %3638 = vst [vmem:[#allocation4 + $0x78] sm:$0xff] %v3606
        %3639 = vst [vmem:[#allocation4 + $0x80] sm:$0xff] %v3607
        %3640 = vst [vmem:[#allocation4 + $0x88] sm:$0xff] %v3608
        %3641 = vst [vmem:[#allocation4 + $0x90] sm:$0xff] %v3609
        %3642 = vst [vmem:[#allocation4 + $0x98] sm:$0xff] %v3610
        %3643 = vst [vmem:[#allocation4 + $0xa0] sm:$0xff] %v3611
        %3644 = vst [vmem:[#allocation4 + $0xa8] sm:$0xff] %v3612
        %3645 = vst [vmem:[#allocation4 + $0xb0] sm:$0xff] %v3613
        %3646 = vst [vmem:[#allocation4 + $0xb8] sm:$0xff] %v3614
        %3647 = vst [vmem:[#allocation4 + $0xc0] sm:$0xff] %v3615
        %3648 = vst [vmem:[#allocation4 + $0xc8] sm:$0xff] %v3616
        %3649 = vst [vmem:[#allocation4 + $0xd0] sm:$0xff] %v3617
        %3650 = vst [vmem:[#allocation4 + $0xd8] sm:$0xff] %v3618
        %3651 = vst [vmem:[#allocation4 + $0xe0] sm:$0xff] %v3619
        %3652 = vst [vmem:[#allocation4 + $0xe8] sm:$0xff] %v3620
        %3653 = vst [vmem:[#allocation4 + $0xf0] sm:$0xff] %v3621
        %3654 = vst [vmem:[#allocation4 + $0xf8] sm:$0xff] %v3622
        %v3655 = vld [vmem:[#allocation4] sm:$0xff]
        %v3656 = vld [vmem:[#allocation4 + $0x8] sm:$0xff]
        %v3657 = vld [vmem:[#allocation4 + $0x10] sm:$0xff]
        %v3658 = vld [vmem:[#allocation4 + $0x18] sm:$0xff]
        %v3659 = vld [vmem:[#allocation4 + $0x20] sm:$0xff]
        %v3660 = vld [vmem:[#allocation4 + $0x28] sm:$0xff]
        %v3661 = vld [vmem:[#allocation4 + $0x30] sm:$0xff]
        %v3662 = vld [vmem:[#allocation4 + $0x38] sm:$0xff]
        %v3663 = vld [vmem:[#allocation4 + $0x40] sm:$0xff]
        %v3664 = vld [vmem:[#allocation4 + $0x48] sm:$0xff]
        %v3665 = vld [vmem:[#allocation4 + $0x50] sm:$0xff]
        %v3666 = vld [vmem:[#allocation4 + $0x58] sm:$0xff]
        %v3667 = vld [vmem:[#allocation4 + $0x60] sm:$0xff]
        %v3668 = vld [vmem:[#allocation4 + $0x68] sm:$0xff]
        %v3669 = vld [vmem:[#allocation4 + $0x70] sm:$0xff]
        %v3670 = vld [vmem:[#allocation4 + $0x78] sm:$0xff]
        %v3671 = vld [vmem:[#allocation4 + $0x80] sm:$0xff]
        %v3672 = vld [vmem:[#allocation4 + $0x88] sm:$0xff]
        %v3673 = vld [vmem:[#allocation4 + $0x90] sm:$0xff]
        %v3674 = vld [vmem:[#allocation4 + $0x98] sm:$0xff]
        %v3675 = vld [vmem:[#allocation4 + $0xa0] sm:$0xff]
        %v3676 = vld [vmem:[#allocation4 + $0xa8] sm:$0xff]
        %v3677 = vld [vmem:[#allocation4 + $0xb0] sm:$0xff]
        %v3678 = vld [vmem:[#allocation4 + $0xb8] sm:$0xff]
        %v3679 = vld [vmem:[#allocation4 + $0xc0] sm:$0xff]
        %v3680 = vld [vmem:[#allocation4 + $0xc8] sm:$0xff]
        %v3681 = vld [vmem:[#allocation4 + $0xd0] sm:$0xff]
        %v3682 = vld [vmem:[#allocation4 + $0xd8] sm:$0xff]
        %v3683 = vld [vmem:[#allocation4 + $0xe0] sm:$0xff]
        %v3684 = vld [vmem:[#allocation4 + $0xe8] sm:$0xff]
        %v3685 = vld [vmem:[#allocation4 + $0xf0] sm:$0xff]
        %v3686 = vld [vmem:[#allocation4 + $0xf8] sm:$0xff]
        %v3687 = vld [vmem:[%s2] sm:$0x1]
        %v3689 = vlaneseq
        %v3690 = vshrl.u32 %v3689, 7
        %v3691 = vsub.s32 0, %v3690
        %v3692 = vrot.slane %v3687, %v3691
        %v3694 = vadd.f32 %v3655, %v3692
        %v3695 = vadd.f32 %v3656, %v3692
        %v3696 = vadd.f32 %v3657, %v3692
        %v3697 = vadd.f32 %v3658, %v3692
        %v3698 = vadd.f32 %v3659, %v3692
        %v3699 = vadd.f32 %v3660, %v3692
        %v3700 = vadd.f32 %v3661, %v3692
        %v3701 = vadd.f32 %v3662, %v3692
        %v3702 = vadd.f32 %v3663, %v3692
        %v3703 = vadd.f32 %v3664, %v3692
        %v3704 = vadd.f32 %v3665, %v3692
        %v3705 = vadd.f32 %v3666, %v3692
        %v3706 = vadd.f32 %v3667, %v3692
        %v3707 = vadd.f32 %v3668, %v3692
        %v3708 = vadd.f32 %v3669, %v3692
        %v3709 = vadd.f32 %v3670, %v3692
        %v3710 = vadd.f32 %v3671, %v3692
        %v3711 = vadd.f32 %v3672, %v3692
        %v3712 = vadd.f32 %v3673, %v3692
        %v3713 = vadd.f32 %v3674, %v3692
        %v3714 = vadd.f32 %v3675, %v3692
        %v3715 = vadd.f32 %v3676, %v3692
        %v3716 = vadd.f32 %v3677, %v3692
        %v3717 = vadd.f32 %v3678, %v3692
        %v3718 = vadd.f32 %v3679, %v3692
        %v3719 = vadd.f32 %v3680, %v3692
        %v3720 = vadd.f32 %v3681, %v3692
        %v3721 = vadd.f32 %v3682, %v3692
        %v3722 = vadd.f32 %v3683, %v3692
        %v3723 = vadd.f32 %v3684, %v3692
        %v3724 = vadd.f32 %v3685, %v3692
        %v3725 = vadd.f32 %v3686, %v3692
        %v3726 = vmax.f32 %v3694, 0.0
        %v3727 = vmax.f32 %v3695, 0.0
        %v3728 = vmax.f32 %v3696, 0.0
        %v3729 = vmax.f32 %v3697, 0.0
        %v3730 = vmax.f32 %v3698, 0.0
        %v3731 = vmax.f32 %v3699, 0.0
        %v3732 = vmax.f32 %v3700, 0.0
        %v3733 = vmax.f32 %v3701, 0.0
        %v3734 = vmax.f32 %v3702, 0.0
        %v3735 = vmax.f32 %v3703, 0.0
        %v3736 = vmax.f32 %v3704, 0.0
        %v3737 = vmax.f32 %v3705, 0.0
        %v3738 = vmax.f32 %v3706, 0.0
        %v3739 = vmax.f32 %v3707, 0.0
        %v3740 = vmax.f32 %v3708, 0.0
        %v3741 = vmax.f32 %v3709, 0.0
        %v3742 = vmax.f32 %v3710, 0.0
        %v3743 = vmax.f32 %v3711, 0.0
        %v3744 = vmax.f32 %v3712, 0.0
        %v3745 = vmax.f32 %v3713, 0.0
        %v3746 = vmax.f32 %v3714, 0.0
        %v3747 = vmax.f32 %v3715, 0.0
        %v3748 = vmax.f32 %v3716, 0.0
        %v3749 = vmax.f32 %v3717, 0.0
        %v3750 = vmax.f32 %v3718, 0.0
        %v3751 = vmax.f32 %v3719, 0.0
        %v3752 = vmax.f32 %v3720, 0.0
        %v3753 = vmax.f32 %v3721, 0.0
        %v3754 = vmax.f32 %v3722, 0.0
        %v3755 = vmax.f32 %v3723, 0.0
        %v3756 = vmax.f32 %v3724, 0.0
        %v3757 = vmax.f32 %v3725, 0.0
        %3758 = vst [vmem:[%s256 + $0x1] sm:$0xff] %v3726
        %3759 = vst [vmem:[%s256 + $0x9] sm:$0xff] %v3727
        %3760 = vst [vmem:[%s256 + $0x19] sm:$0xff] %v3728
        %3761 = vst [vmem:[%s256 + $0x21] sm:$0xff] %v3729
        %3762 = vst [vmem:[%s256 + $0x31] sm:$0xff] %v3730
        %3763 = vst [vmem:[%s256 + $0x39] sm:$0xff] %v3731
        %3764 = vst [vmem:[%s256 + $0x49] sm:$0xff] %v3732
        %3765 = vst [vmem:[%s256 + $0x51] sm:$0xff] %v3733
        %3766 = vst [vmem:[%s256 + $0x61] sm:$0xff] %v3734
        %3767 = vst [vmem:[%s256 + $0x69] sm:$0xff] %v3735
        %3768 = vst [vmem:[%s256 + $0x79] sm:$0xff] %v3736
        %3769 = vst [vmem:[%s256 + $0x81] sm:$0xff] %v3737
        %3770 = vst [vmem:[%s256 + $0x91] sm:$0xff] %v3738
        %3771 = vst [vmem:[%s256 + $0x99] sm:$0xff] %v3739
        %3772 = vst [vmem:[%s256 + $0xa9] sm:$0xff] %v3740
        %3773 = vst [vmem:[%s256 + $0xb1] sm:$0xff] %v3741
        %3774 = vst [vmem:[%s256 + $0xc1] sm:$0xff] %v3742
        %3775 = vst [vmem:[%s256 + $0xc9] sm:$0xff] %v3743
        %3776 = vst [vmem:[%s256 + $0xd9] sm:$0xff] %v3744
        %3777 = vst [vmem:[%s256 + $0xe1] sm:$0xff] %v3745
        %3778 = vst [vmem:[%s256 + $0xf1] sm:$0xff] %v3746
        %3779 = vst [vmem:[%s256 + $0xf9] sm:$0xff] %v3747
        %3780 = vst [vmem:[%s256 + $0x109] sm:$0xff] %v3748
        %3781 = vst [vmem:[%s256 + $0x111] sm:$0xff] %v3749
        %3782 = vst [vmem:[%s256 + $0x121] sm:$0xff] %v3750
        %3783 = vst [vmem:[%s256 + $0x129] sm:$0xff] %v3751
        %3784 = vst [vmem:[%s256 + $0x139] sm:$0xff] %v3752
        %3785 = vst [vmem:[%s256 + $0x141] sm:$0xff] %v3753
        %3786 = vst [vmem:[%s256 + $0x151] sm:$0xff] %v3754
        %3787 = vst [vmem:[%s256 + $0x159] sm:$0xff] %v3755
        %3788 = vst [vmem:[%s256 + $0x169] sm:$0xff] %v3756
        %3789 = vst [vmem:[%s256 + $0x171] sm:$0xff] %v3757
        %3790 = vst [vmem:[#allocation2 + $0x1] sm:$0xff] %v3728
        %3791 = vst [vmem:[#allocation2 + $0x9] sm:$0xff] %v3729
        %3792 = vst [vmem:[%s291 + $0x1] sm:$0xff] %v3754
        %3793 = vst [vmem:[%s291 + $0x9] sm:$0xff] %v3755
        %v3794 = vld [vmem:[#allocation2 + $0x2] sm:$0x1]
        %v3795 = vld [vmem:[#allocation2 + $0x1a] sm:$0x1]
        %v3796 = vld [vmem:[#allocation2 + $0x32] sm:$0x1]
        %v3797 = vld [vmem:[#allocation2 + $0x4a] sm:$0x1]
        %v3798 = vld [vmem:[#allocation2 + $0x62] sm:$0x1]
        %v3799 = vld [vmem:[#allocation2 + $0x7a] sm:$0x1]
        %v3800 = vld [vmem:[#allocation2 + $0x92] sm:$0x1]
        %v3801 = vld [vmem:[#allocation2 + $0xaa] sm:$0x1]
        %v3802 = vld [vmem:[#allocation2 + $0xc2] sm:$0x1]
        %v3803 = vld [vmem:[#allocation2 + $0xda] sm:$0x1]
        %v3804 = vld [vmem:[#allocation2 + $0xf2] sm:$0x1]
        %v3805 = vld [vmem:[#allocation2 + $0x10a] sm:$0x1]
        %v3806 = vld [vmem:[#allocation2 + $0x122] sm:$0x1]
        %v3807 = vld [vmem:[#allocation2 + $0x13a] sm:$0x1]
        %v3808 = vld [vmem:[#allocation2 + $0x152] sm:$0x1]
        %v3809 = vld [vmem:[#allocation2 + $0x16a] sm:$0x1]
        %v3810 = vld [vmem:[#allocation2 + $0x182] sm:$0x1]
        %v3811 = vld [vmem:[#allocation2 + $0x19a] sm:$0x1]
        %3812 = vst [vmem:[#allocation2] sm:$0x1] %v3794
        %3813 = vst [vmem:[#allocation2 + $0x18] sm:$0x1] %v3795
        %3814 = vst [vmem:[#allocation2 + $0x30] sm:$0x1] %v3796
        %3815 = vst [vmem:[#allocation2 + $0x48] sm:$0x1] %v3797
        %3816 = vst [vmem:[#allocation2 + $0x60] sm:$0x1] %v3798
        %3817 = vst [vmem:[#allocation2 + $0x78] sm:$0x1] %v3799
        %3818 = vst [vmem:[#allocation2 + $0x90] sm:$0x1] %v3800
        %3819 = vst [vmem:[#allocation2 + $0xa8] sm:$0x1] %v3801
        %3820 = vst [vmem:[#allocation2 + $0xc0] sm:$0x1] %v3802
        %3821 = vst [vmem:[#allocation2 + $0xd8] sm:$0x1] %v3803
        %3822 = vst [vmem:[#allocation2 + $0xf0] sm:$0x1] %v3804
        %3823 = vst [vmem:[#allocation2 + $0x108] sm:$0x1] %v3805
        %3824 = vst [vmem:[#allocation2 + $0x120] sm:$0x1] %v3806
        %3825 = vst [vmem:[#allocation2 + $0x138] sm:$0x1] %v3807
        %3826 = vst [vmem:[#allocation2 + $0x150] sm:$0x1] %v3808
        %3827 = vst [vmem:[#allocation2 + $0x168] sm:$0x1] %v3809
        %3828 = vst [vmem:[#allocation2 + $0x180] sm:$0x1] %v3810
        %3829 = vst [vmem:[#allocation2 + $0x198] sm:$0x1] %v3811
        %v3830 = vld [vmem:[#allocation2 + $0xf] sm:$0x1]
        %v3831 = vld [vmem:[#allocation2 + $0x27] sm:$0x1]
        %v3832 = vld [vmem:[#allocation2 + $0x3f] sm:$0x1]
        %v3833 = vld [vmem:[#allocation2 + $0x57] sm:$0x1]
        %v3834 = vld [vmem:[#allocation2 + $0x6f] sm:$0x1]
        %v3835 = vld [vmem:[#allocation2 + $0x87] sm:$0x1]
        %v3836 = vld [vmem:[#allocation2 + $0x9f] sm:$0x1]
        %v3837 = vld [vmem:[#allocation2 + $0xb7] sm:$0x1]
        %v3838 = vld [vmem:[#allocation2 + $0xcf] sm:$0x1]
        %v3839 = vld [vmem:[#allocation2 + $0xe7] sm:$0x1]
        %v3840 = vld [vmem:[#allocation2 + $0xff] sm:$0x1]
        %v3841 = vld [vmem:[#allocation2 + $0x117] sm:$0x1]
        %v3842 = vld [vmem:[#allocation2 + $0x12f] sm:$0x1]
        %v3843 = vld [vmem:[#allocation2 + $0x147] sm:$0x1]
        %v3844 = vld [vmem:[#allocation2 + $0x15f] sm:$0x1]
        %v3845 = vld [vmem:[#allocation2 + $0x177] sm:$0x1]
        %v3846 = vld [vmem:[#allocation2 + $0x18f] sm:$0x1]
        %v3847 = vld [vmem:[#allocation2 + $0x1a7] sm:$0x1]
        %3848 = vst [vmem:[#allocation2 + $0x11] sm:$0x1] %v3830
        %3849 = vst [vmem:[#allocation2 + $0x29] sm:$0x1] %v3831
        %3850 = vst [vmem:[#allocation2 + $0x41] sm:$0x1] %v3832
        %3851 = vst [vmem:[#allocation2 + $0x59] sm:$0x1] %v3833
        %3852 = vst [vmem:[#allocation2 + $0x71] sm:$0x1] %v3834
        %3853 = vst [vmem:[#allocation2 + $0x89] sm:$0x1] %v3835
        %3854 = vst [vmem:[#allocation2 + $0xa1] sm:$0x1] %v3836
        %3855 = vst [vmem:[#allocation2 + $0xb9] sm:$0x1] %v3837
        %3856 = vst [vmem:[#allocation2 + $0xd1] sm:$0x1] %v3838
        %3857 = vst [vmem:[#allocation2 + $0xe9] sm:$0x1] %v3839
        %3858 = vst [vmem:[#allocation2 + $0x101] sm:$0x1] %v3840
        %3859 = vst [vmem:[#allocation2 + $0x119] sm:$0x1] %v3841
        %3860 = vst [vmem:[#allocation2 + $0x131] sm:$0x1] %v3842
        %3861 = vst [vmem:[#allocation2 + $0x149] sm:$0x1] %v3843
        %3862 = vst [vmem:[#allocation2 + $0x161] sm:$0x1] %v3844
        %3863 = vst [vmem:[#allocation2 + $0x179] sm:$0x1] %v3845
        %3864 = vst [vmem:[#allocation2 + $0x191] sm:$0x1] %v3846
        %3865 = vst [vmem:[#allocation2 + $0x1a9] sm:$0x1] %v3847
        %3866 = vst [vmem:[#allocation4] sm:$0xff] 0.0
        %3867 = vst [vmem:[#allocation4 + $0x8] sm:$0xff] 0.0
        %3868 = vst [vmem:[#allocation4 + $0x10] sm:$0xff] 0.0
        %3869 = vst [vmem:[#allocation4 + $0x18] sm:$0xff] 0.0
        %3870 = vst [vmem:[#allocation4 + $0x20] sm:$0xff] 0.0
        %3871 = vst [vmem:[#allocation4 + $0x28] sm:$0xff] 0.0
        %3872 = vst [vmem:[#allocation4 + $0x30] sm:$0xff] 0.0
        %3873 = vst [vmem:[#allocation4 + $0x38] sm:$0xff] 0.0
        %3874 = vst [vmem:[#allocation4 + $0x40] sm:$0xff] 0.0
        %3875 = vst [vmem:[#allocation4 + $0x48] sm:$0xff] 0.0
        %3876 = vst [vmem:[#allocation4 + $0x50] sm:$0xff] 0.0
        %3877 = vst [vmem:[#allocation4 + $0x58] sm:$0xff] 0.0
        %3878 = vst [vmem:[#allocation4 + $0x60] sm:$0xff] 0.0
        %3879 = vst [vmem:[#allocation4 + $0x68] sm:$0xff] 0.0
        %3880 = vst [vmem:[#allocation4 + $0x70] sm:$0xff] 0.0
        %3881 = vst [vmem:[#allocation4 + $0x78] sm:$0xff] 0.0
        %3882 = vst [vmem:[#allocation4 + $0x80] sm:$0xff] 0.0
        %3883 = vst [vmem:[#allocation4 + $0x88] sm:$0xff] 0.0
        %3884 = vst [vmem:[#allocation4 + $0x90] sm:$0xff] 0.0
        %3885 = vst [vmem:[#allocation4 + $0x98] sm:$0xff] 0.0
        %3886 = vst [vmem:[#allocation4 + $0xa0] sm:$0xff] 0.0
        %3887 = vst [vmem:[#allocation4 + $0xa8] sm:$0xff] 0.0
        %3888 = vst [vmem:[#allocation4 + $0xb0] sm:$0xff] 0.0
        %3889 = vst [vmem:[#allocation4 + $0xb8] sm:$0xff] 0.0
        %3890 = vst [vmem:[#allocation4 + $0xc0] sm:$0xff] 0.0
        %3891 = vst [vmem:[#allocation4 + $0xc8] sm:$0xff] 0.0
        %3892 = vst [vmem:[#allocation4 + $0xd0] sm:$0xff] 0.0
        %3893 = vst [vmem:[#allocation4 + $0xd8] sm:$0xff] 0.0
        %3894 = vst [vmem:[#allocation4 + $0xe0] sm:$0xff] 0.0
        %3895 = vst [vmem:[#allocation4 + $0xe8] sm:$0xff] 0.0
        %3896 = vst [vmem:[#allocation4 + $0xf0] sm:$0xff] 0.0
        %3897 = vst [vmem:[#allocation4 + $0xf8] sm:$0xff] 0.0
        %v3898 = vld [vmem:[#allocation2] sm:$0xff]
        %v3899 = vld [vmem:[#allocation2 + $0x8] sm:$0xff]
        %v3900 = vld [vmem:[#allocation2 + $0x18] sm:$0xff]
        %v3901 = vld [vmem:[#allocation2 + $0x20] sm:$0xff]
        %v3902 = vld [vmem:[#allocation2 + $0x30] sm:$0xff]
        %v3903 = vld [vmem:[#allocation2 + $0x38] sm:$0xff]
        %v3904 = vld [vmem:[#allocation2 + $0x48] sm:$0xff]
        %v3905 = vld [vmem:[#allocation2 + $0x50] sm:$0xff]
        %v3906 = vld [vmem:[#allocation2 + $0x60] sm:$0xff]
        %v3907 = vld [vmem:[#allocation2 + $0x68] sm:$0xff]
        %v3908 = vld [vmem:[#allocation2 + $0x78] sm:$0xff]
        %v3909 = vld [vmem:[#allocation2 + $0x80] sm:$0xff]
        %v3910 = vld [vmem:[#allocation2 + $0x90] sm:$0xff]
        %v3911 = vld [vmem:[#allocation2 + $0x98] sm:$0xff]
        %v3912 = vld [vmem:[#allocation2 + $0xa8] sm:$0xff]
        %v3913 = vld [vmem:[#allocation2 + $0xb0] sm:$0xff]
        %v3914 = vld [vmem:[#allocation2 + $0xc0] sm:$0xff]
        %v3915 = vld [vmem:[#allocation2 + $0xc8] sm:$0xff]
        %v3916 = vld [vmem:[#allocation2 + $0xd8] sm:$0xff]
        %v3917 = vld [vmem:[#allocation2 + $0xe0] sm:$0xff]
        %v3918 = vld [vmem:[#allocation2 + $0xf0] sm:$0xff]
        %v3919 = vld [vmem:[#allocation2 + $0xf8] sm:$0xff]
        %v3920 = vld [vmem:[#allocation2 + $0x108] sm:$0xff]
        %v3921 = vld [vmem:[#allocation2 + $0x110] sm:$0xff]
        %v3922 = vld [vmem:[#allocation2 + $0x120] sm:$0xff]
        %v3923 = vld [vmem:[#allocation2 + $0x128] sm:$0xff]
        %v3924 = vld [vmem:[#allocation2 + $0x138] sm:$0xff]
        %v3925 = vld [vmem:[#allocation2 + $0x140] sm:$0xff]
        %v3926 = vld [vmem:[#allocation2 + $0x150] sm:$0xff]
        %v3927 = vld [vmem:[#allocation2 + $0x158] sm:$0xff]
        %v3928 = vld [vmem:[#allocation2 + $0x168] sm:$0xff]
        %v3929 = vld [vmem:[#allocation2 + $0x170] sm:$0xff]
        %v3930 = vld [vmem:[#allocation2 + $0x180] sm:$0xff]
        %v3931 = vld [vmem:[#allocation2 + $0x188] sm:$0xff]
        %v3932 = vld [vmem:[#allocation2 + $0x198] sm:$0xff]
        %v3933 = vld [vmem:[#allocation2 + $0x1a0] sm:$0xff]
        %v3934 = vpack.c.bf16 %v3899, %v3898
        %v3935 = vpack.c.bf16 %v3901, %v3900
        %v3936 = vpack.c.bf16 %v3903, %v3902
        %v3937 = vpack.c.bf16 %v3905, %v3904
        %v3938 = vpack.c.bf16 %v3907, %v3906
        %v3939 = vpack.c.bf16 %v3909, %v3908
        %v3940 = vpack.c.bf16 %v3911, %v3910
        %v3941 = vpack.c.bf16 %v3913, %v3912
        %v3942 = vpack.c.bf16 %v3915, %v3914
        %v3943 = vpack.c.bf16 %v3917, %v3916
        %v3944 = vpack.c.bf16 %v3919, %v3918
        %v3945 = vpack.c.bf16 %v3921, %v3920
        %v3946 = vpack.c.bf16 %v3923, %v3922
        %v3947 = vpack.c.bf16 %v3925, %v3924
        %v3948 = vpack.c.bf16 %v3927, %v3926
        %v3949 = vpack.c.bf16 %v3929, %v3928
        %v3950 = vpack.c.bf16 %v3931, %v3930
        %v3951 = vpack.c.bf16 %v3933, %v3932
        %3952 = vst [vmem:[#allocation3] sm:$0xff] %v3934
        %3953 = vst [vmem:[#allocation3 + $0x8] sm:$0xff] %v3935
        %3954 = vst [vmem:[#allocation3 + $0x10] sm:$0xff] %v3936
        %3955 = vst [vmem:[#allocation3 + $0x18] sm:$0xff] %v3937
        %3956 = vst [vmem:[#allocation3 + $0x20] sm:$0xff] %v3938
        %3957 = vst [vmem:[#allocation3 + $0x28] sm:$0xff] %v3939
        %3958 = vst [vmem:[#allocation3 + $0x30] sm:$0xff] %v3940
        %3959 = vst [vmem:[#allocation3 + $0x38] sm:$0xff] %v3941
        %3960 = vst [vmem:[#allocation3 + $0x40] sm:$0xff] %v3942
        %3961 = vst [vmem:[#allocation3 + $0x48] sm:$0xff] %v3943
        %3962 = vst [vmem:[#allocation3 + $0x50] sm:$0xff] %v3944
        %3963 = vst [vmem:[#allocation3 + $0x58] sm:$0xff] %v3945
        %3964 = vst [vmem:[#allocation3 + $0x60] sm:$0xff] %v3946
        %3965 = vst [vmem:[#allocation3 + $0x68] sm:$0xff] %v3947
        %3966 = vst [vmem:[#allocation3 + $0x70] sm:$0xff] %v3948
        %3967 = vst [vmem:[#allocation3 + $0x78] sm:$0xff] %v3949
        %3968 = vst [vmem:[#allocation3 + $0x80] sm:$0xff] %v3950
        %3969 = vst [vmem:[#allocation3 + $0x88] sm:$0xff] %v3951
        %v3970 = vld [vmem:[#allocation4] sm:$0xff]
        %v3971 = vld [vmem:[#allocation4 + $0x8] sm:$0xff]
        %v3972 = vld [vmem:[#allocation4 + $0x10] sm:$0xff]
        %v3973 = vld [vmem:[#allocation4 + $0x18] sm:$0xff]
        %v3974 = vld [vmem:[#allocation4 + $0x20] sm:$0xff]
        %v3975 = vld [vmem:[#allocation4 + $0x28] sm:$0xff]
        %v3976 = vld [vmem:[#allocation4 + $0x30] sm:$0xff]
        %v3977 = vld [vmem:[#allocation4 + $0x38] sm:$0xff]
        %v3978 = vld [vmem:[#allocation4 + $0x40] sm:$0xff]
        %v3979 = vld [vmem:[#allocation4 + $0x48] sm:$0xff]
        %v3980 = vld [vmem:[#allocation4 + $0x50] sm:$0xff]
        %v3981 = vld [vmem:[#allocation4 + $0x58] sm:$0xff]
        %v3982 = vld [vmem:[#allocation4 + $0x60] sm:$0xff]
        %v3983 = vld [vmem:[#allocation4 + $0x68] sm:$0xff]
        %v3984 = vld [vmem:[#allocation4 + $0x70] sm:$0xff]
        %v3985 = vld [vmem:[#allocation4 + $0x78] sm:$0xff]
        %v3986 = vld [vmem:[#allocation4 + $0x80] sm:$0xff]
        %v3987 = vld [vmem:[#allocation4 + $0x88] sm:$0xff]
        %v3988 = vld [vmem:[#allocation4 + $0x90] sm:$0xff]
        %v3989 = vld [vmem:[#allocation4 + $0x98] sm:$0xff]
        %v3990 = vld [vmem:[#allocation4 + $0xa0] sm:$0xff]
        %v3991 = vld [vmem:[#allocation4 + $0xa8] sm:$0xff]
        %v3992 = vld [vmem:[#allocation4 + $0xb0] sm:$0xff]
        %v3993 = vld [vmem:[#allocation4 + $0xb8] sm:$0xff]
        %v3994 = vld [vmem:[#allocation4 + $0xc0] sm:$0xff]
        %v3995 = vld [vmem:[#allocation4 + $0xc8] sm:$0xff]
        %v3996 = vld [vmem:[#allocation4 + $0xd0] sm:$0xff]
        %v3997 = vld [vmem:[#allocation4 + $0xd8] sm:$0xff]
        %v3998 = vld [vmem:[#allocation4 + $0xe0] sm:$0xff]
        %v3999 = vld [vmem:[#allocation4 + $0xe8] sm:$0xff]
        %v4000 = vld [vmem:[#allocation4 + $0xf0] sm:$0xff]
        %v4001 = vld [vmem:[#allocation4 + $0xf8] sm:$0xff]
        %v4002 = vld [vmem:[#allocation3] sm:$0xff]
        %v4003 = vld [vmem:[#allocation3 + $0x8] sm:$0xff]
        %v4004 = vld [vmem:[#allocation3 + $0x10] sm:$0xff]
        %v4005 = vld [vmem:[#allocation3 + $0x18] sm:$0xff]
        %v4006 = vld [vmem:[#allocation3 + $0x20] sm:$0xff]
        %v4007 = vld [vmem:[#allocation3 + $0x28] sm:$0xff]
        %v4008 = vld [vmem:[#allocation3 + $0x30] sm:$0xff]
        %v4009 = vld [vmem:[#allocation3 + $0x38] sm:$0xff]
        %v4010 = vld [vmem:[#allocation3 + $0x40] sm:$0xff]
        %v4011 = vld [vmem:[#allocation3 + $0x48] sm:$0xff]
        %v4012 = vld [vmem:[#allocation3 + $0x50] sm:$0xff]
        %v4013 = vld [vmem:[#allocation3 + $0x58] sm:$0xff]
        %v4014 = vld [vmem:[#allocation3 + $0x60] sm:$0xff]
        %v4015 = vld [vmem:[#allocation3 + $0x68] sm:$0xff]
        %v4016 = vld [vmem:[#allocation3 + $0x70] sm:$0xff]
        %v4017 = vld [vmem:[#allocation3 + $0x78] sm:$0xff]
        %v4018 = vld [vmem:[%s3] sm:$0xf]
        %v4019 = vld [vmem:[%s3 + $0x4] sm:$0xf]
        %v4020 = vld [vmem:[%s3 + $0x8] sm:$0xf]
        %v4021 = vld [vmem:[%s3 + $0xc] sm:$0xf]
        %v4022 = vld [vmem:[%s3 + $0x10] sm:$0xf]
        %v4023 = vld [vmem:[%s3 + $0x14] sm:$0xf]
        %v4024 = vld [vmem:[%s3 + $0x18] sm:$0xf]
        %v4025 = vld [vmem:[%s3 + $0x1c] sm:$0xf]
        %v4026 = vld [vmem:[%s3 + $0x20] sm:$0xf]
        %v4027 = vld [vmem:[%s3 + $0x24] sm:$0xf]
        %v4028 = vld [vmem:[%s3 + $0x28] sm:$0xf]
        %v4029 = vld [vmem:[%s3 + $0x2c] sm:$0xf]
        %v4030 = vld [vmem:[%s3 + $0x30] sm:$0xf]
        %v4031 = vld [vmem:[%s3 + $0x34] sm:$0xf]
        %v4032 = vld [vmem:[%s3 + $0x38] sm:$0xf]
        %v4033 = vld [vmem:[%s3 + $0x3c] sm:$0xf]
        %v4050 = vunpack.c.l.b16 %v4018
        %v4051 = vunpack.c.l.b16 %v4019
        %v4052 = vunpack.c.l.b16 %v4020
        %v4053 = vunpack.c.l.b16 %v4021
        %v4054 = vunpack.c.l.b16 %v4022
        %v4055 = vunpack.c.l.b16 %v4023
        %v4056 = vunpack.c.l.b16 %v4024
        %v4057 = vunpack.c.l.b16 %v4025
        %v4058 = vunpack.c.l.b16 %v4026
        %v4059 = vunpack.c.l.b16 %v4027
        %v4060 = vunpack.c.l.b16 %v4028
        %v4061 = vunpack.c.l.b16 %v4029
        %v4062 = vunpack.c.l.b16 %v4030
        %v4063 = vunpack.c.l.b16 %v4031
        %v4064 = vunpack.c.l.b16 %v4032
        %v4065 = vunpack.c.l.b16 %v4033
        %v4066 = vpack.c.b16 %v4051, %v4050
        %v4067 = vpack.c.b16 %v4053, %v4052
        %v4068 = vpack.c.b16 %v4055, %v4054
        %v4069 = vpack.c.b16 %v4057, %v4056
        %v4070 = vpack.c.b16 %v4059, %v4058
        %v4071 = vpack.c.b16 %v4061, %v4060
        %v4072 = vpack.c.b16 %v4063, %v4062
        %v4073 = vpack.c.b16 %v4065, %v4064
        %4082 = vmatprep.subr.bf16.mxu0 0
        %4083 = vmatpush1.bf16.msra.mxu0 %v4066
        %4084 = vmatprep.subr.bf16.mxu0 0
        %4085 = vmatpush1.bf16.msra.mxu0 %v4067
        %4086 = vmatprep.subr.bf16.mxu0 0
        %4087 = vmatpush1.bf16.msra.mxu0 %v4068
        %4088 = vmatprep.subr.bf16.mxu0 0
        %4089 = vmatpush1.bf16.msra.mxu0 %v4069
        %4090 = vmatprep.subr.bf16.mxu0 0
        %4091 = vmatpush1.bf16.msra.mxu0 %v4070
        %4092 = vmatprep.subr.bf16.mxu0 0
        %4093 = vmatpush1.bf16.msra.mxu0 %v4071
        %4094 = vmatprep.subr.bf16.mxu0 0
        %4095 = vmatpush1.bf16.msra.mxu0 %v4072
        %4096 = vmatprep.subr.bf16.mxu0 0
        %4097 = vmatpush1.bf16.msra.mxu0 %v4073
        %4098 = vmatprep.subr.bf16.mxu0 0
        %4099 = vmatpush1.bf16.msra.mxu0 0
        %4100 = vmatprep.subr.bf16.mxu0 0
        %4101 = vmatpush1.bf16.msra.mxu0 0
        %4102 = vmatprep.subr.bf16.mxu0 0
        %4103 = vmatpush1.bf16.msra.mxu0 0
        %4104 = vmatprep.subr.bf16.mxu0 0
        %4105 = vmatpush1.bf16.msra.mxu0 0
        %4106 = vmatprep.subr.bf16.mxu0 0
        %4107 = vmatpush1.bf16.msra.mxu0 0
        %4108 = vmatprep.subr.bf16.mxu0 0
        %4109 = vmatpush1.bf16.msra.mxu0 0
        %4110 = vmatprep.subr.bf16.mxu0 0
        %4111 = vmatpush1.bf16.msra.mxu0 0
        %4112 = vmatprep.subr.bf16.mxu0 0
        %4113 = vmatpush1.bf16.msra.mxu0 0
        %4114 = vmatprep.mubr.bf16.mxu0 0
        %4115 = vmatmul.mubr.bf16.gmra.mrb[0].mxu0 %v4002
        %v4116 = vpop.f32.mrb[0].mxu0
        %v4117 = vadd.f32 0.0, %v4116
        %v4118 = vpop.f32.mrb[0].mxu0
        %v4119 = vpop.f32.mrb[0].mxu0
        %v4120 = vadd.f32 0.0, %v4119
        %v4121 = vpop.f32.mrb[0].mxu0
        %4122 = vmatprep.mubr.bf16.mxu0 0
        %4123 = vmatmul.mubr.bf16.gmra.mrb[0].mxu0 %v4003
        %v4124 = vpop.f32.mrb[0].mxu0
        %v4125 = vadd.f32 0.0, %v4124
        %v4126 = vpop.f32.mrb[0].mxu0
        %v4127 = vpop.f32.mrb[0].mxu0
        %v4128 = vadd.f32 0.0, %v4127
        %v4129 = vpop.f32.mrb[0].mxu0
        %4130 = vmatprep.mubr.bf16.mxu0 0
        %4131 = vmatmul.mubr.bf16.gmra.mrb[0].mxu0 %v4004
        %v4132 = vpop.f32.mrb[0].mxu0
        %v4133 = vadd.f32 0.0, %v4132
        %v4134 = vpop.f32.mrb[0].mxu0
        %v4135 = vpop.f32.mrb[0].mxu0
        %v4136 = vadd.f32 0.0, %v4135
        %v4137 = vpop.f32.mrb[0].mxu0
        %4138 = vmatprep.mubr.bf16.mxu0 0
        %4139 = vmatmul.mubr.bf16.gmra.mrb[0].mxu0 %v4005
        %v4140 = vpop.f32.mrb[0].mxu0
        %v4141 = vadd.f32 0.0, %v4140
        %v4142 = vpop.f32.mrb[0].mxu0
        %v4143 = vpop.f32.mrb[0].mxu0
        %v4144 = vadd.f32 0.0, %v4143
        %v4145 = vpop.f32.mrb[0].mxu0
        %4146 = vmatprep.mubr.bf16.mxu0 0
        %4147 = vmatmul.mubr.bf16.gmra.mrb[0].mxu0 %v4006
        %v4148 = vpop.f32.mrb[0].mxu0
        %v4149 = vadd.f32 0.0, %v4148
        %v4150 = vpop.f32.mrb[0].mxu0
        %v4151 = vpop.f32.mrb[0].mxu0
        %v4152 = vadd.f32 0.0, %v4151
        %v4153 = vpop.f32.mrb[0].mxu0
        %4154 = vmatprep.mubr.bf16.mxu0 0
        %4155 = vmatmul.mubr.bf16.gmra.mrb[0].mxu0 %v4007
        %v4156 = vpop.f32.mrb[0].mxu0
        %v4157 = vadd.f32 0.0, %v4156
        %v4158 = vpop.f32.mrb[0].mxu0
        %v4159 = vpop.f32.mrb[0].mxu0
        %v4160 = vadd.f32 0.0, %v4159
        %v4161 = vpop.f32.mrb[0].mxu0
        %4162 = vmatprep.mubr.bf16.mxu0 0
        %4163 = vmatmul.mubr.bf16.gmra.mrb[0].mxu0 %v4008
        %v4164 = vpop.f32.mrb[0].mxu0
        %v4165 = vadd.f32 0.0, %v4164
        %v4166 = vpop.f32.mrb[0].mxu0
        %v4167 = vpop.f32.mrb[0].mxu0
        %v4168 = vadd.f32 0.0, %v4167
        %v4169 = vpop.f32.mrb[0].mxu0
        %4170 = vmatprep.mubr.bf16.mxu0 0
        %4171 = vmatmul.mubr.bf16.gmra.mrb[0].mxu0 %v4009
        %v4172 = vpop.f32.mrb[0].mxu0
        %v4173 = vadd.f32 0.0, %v4172
        %v4174 = vpop.f32.mrb[0].mxu0
        %v4175 = vpop.f32.mrb[0].mxu0
        %v4176 = vadd.f32 0.0, %v4175
        %v4177 = vpop.f32.mrb[0].mxu0
        %4178 = vmatprep.mubr.bf16.mxu0 0
        %4179 = vmatmul.mubr.bf16.gmra.mrb[0].mxu0 %v4010
        %v4180 = vpop.f32.mrb[0].mxu0
        %v4181 = vadd.f32 0.0, %v4180
        %v4182 = vpop.f32.mrb[0].mxu0
        %v4183 = vpop.f32.mrb[0].mxu0
        %v4184 = vadd.f32 0.0, %v4183
        %v4185 = vpop.f32.mrb[0].mxu0
        %4186 = vmatprep.mubr.bf16.mxu0 0
        %4187 = vmatmul.mubr.bf16.gmra.mrb[0].mxu0 %v4011
        %v4188 = vpop.f32.mrb[0].mxu0
        %v4189 = vadd.f32 0.0, %v4188
        %v4190 = vpop.f32.mrb[0].mxu0
        %v4191 = vpop.f32.mrb[0].mxu0
        %v4192 = vadd.f32 0.0, %v4191
        %v4193 = vpop.f32.mrb[0].mxu0
        %4194 = vmatprep.mubr.bf16.mxu0 0
        %4195 = vmatmul.mubr.bf16.gmra.mrb[0].mxu0 %v4012
        %v4196 = vpop.f32.mrb[0].mxu0
        %v4197 = vadd.f32 0.0, %v4196
        %v4198 = vpop.f32.mrb[0].mxu0
        %v4199 = vpop.f32.mrb[0].mxu0
        %v4200 = vadd.f32 0.0, %v4199
        %v4201 = vpop.f32.mrb[0].mxu0
        %4202 = vmatprep.mubr.bf16.mxu0 0
        %4203 = vmatmul.mubr.bf16.gmra.mrb[0].mxu0 %v4013
        %v4204 = vpop.f32.mrb[0].mxu0
        %v4205 = vadd.f32 0.0, %v4204
        %v4206 = vpop.f32.mrb[0].mxu0
        %v4207 = vpop.f32.mrb[0].mxu0
        %v4208 = vadd.f32 0.0, %v4207
        %v4209 = vpop.f32.mrb[0].mxu0
        %4210 = vmatprep.mubr.bf16.mxu0 0
        %4211 = vmatmul.mubr.bf16.gmra.mrb[0].mxu0 %v4014
        %v4212 = vpop.f32.mrb[0].mxu0
        %v4213 = vadd.f32 0.0, %v4212
        %v4214 = vpop.f32.mrb[0].mxu0
        %v4215 = vpop.f32.mrb[0].mxu0
        %v4216 = vadd.f32 0.0, %v4215
        %v4217 = vpop.f32.mrb[0].mxu0
        %4218 = vmatprep.mubr.bf16.mxu0 0
        %4219 = vmatmul.mubr.bf16.gmra.mrb[0].mxu0 %v4015
        %v4220 = vpop.f32.mrb[0].mxu0
        %v4221 = vadd.f32 0.0, %v4220
        %v4222 = vpop.f32.mrb[0].mxu0
        %v4223 = vpop.f32.mrb[0].mxu0
        %v4224 = vadd.f32 0.0, %v4223
        %v4225 = vpop.f32.mrb[0].mxu0
        %4226 = vmatprep.mubr.bf16.mxu0 0
        %4227 = vmatmul.mubr.bf16.gmra.mrb[0].mxu0 %v4016
        %v4228 = vpop.f32.mrb[0].mxu0
        %v4229 = vadd.f32 0.0, %v4228
        %v4230 = vpop.f32.mrb[0].mxu0
        %v4231 = vpop.f32.mrb[0].mxu0
        %v4232 = vadd.f32 0.0, %v4231
        %v4233 = vpop.f32.mrb[0].mxu0
        %4234 = vmatprep.mubr.bf16.mxu0 0
        %4235 = vmatmul.mubr.bf16.gmra.mrb[0].mxu0 %v4017
        %v4236 = vpop.f32.mrb[0].mxu0
        %v4237 = vadd.f32 0.0, %v4236
        %v4238 = vpop.f32.mrb[0].mxu0
        %v4239 = vpop.f32.mrb[0].mxu0
        %v4240 = vadd.f32 0.0, %v4239
        %v4241 = vpop.f32.mrb[0].mxu0
        %4242 = vdwg.mxu0
        %v4243 = vadd.f32 %v3970, %v4117
        %v4244 = vadd.f32 %v3971, %v4120
        %v4245 = vadd.f32 %v3972, %v4125
        %v4246 = vadd.f32 %v3973, %v4128
        %v4247 = vadd.f32 %v3974, %v4133
        %v4248 = vadd.f32 %v3975, %v4136
        %v4249 = vadd.f32 %v3976, %v4141
        %v4250 = vadd.f32 %v3977, %v4144
        %v4251 = vadd.f32 %v3978, %v4149
        %v4252 = vadd.f32 %v3979, %v4152
        %v4253 = vadd.f32 %v3980, %v4157
        %v4254 = vadd.f32 %v3981, %v4160
        %v4255 = vadd.f32 %v3982, %v4165
        %v4256 = vadd.f32 %v3983, %v4168
        %v4257 = vadd.f32 %v3984, %v4173
        %v4258 = vadd.f32 %v3985, %v4176
        %v4259 = vadd.f32 %v3986, %v4181
        %v4260 = vadd.f32 %v3987, %v4184
        %v4261 = vadd.f32 %v3988, %v4189
        %v4262 = vadd.f32 %v3989, %v4192
        %v4263 = vadd.f32 %v3990, %v4197
        %v4264 = vadd.f32 %v3991, %v4200
        %v4265 = vadd.f32 %v3992, %v4205
        %v4266 = vadd.f32 %v3993, %v4208
        %v4267 = vadd.f32 %v3994, %v4213
        %v4268 = vadd.f32 %v3995, %v4216
        %v4269 = vadd.f32 %v3996, %v4221
        %v4270 = vadd.f32 %v3997, %v4224
        %v4271 = vadd.f32 %v3998, %v4229
        %v4272 = vadd.f32 %v3999, %v4232
        %v4273 = vadd.f32 %v4000, %v4237
        %v4274 = vadd.f32 %v4001, %v4240
        %4275 = vst [vmem:[#allocation4] sm:$0xff] %v4243
        %4276 = vst [vmem:[#allocation4 + $0x8] sm:$0xff] %v4244
        %4277 = vst [vmem:[#allocation4 + $0x10] sm:$0xff] %v4245
        %4278 = vst [vmem:[#allocation4 + $0x18] sm:$0xff] %v4246
        %4279 = vst [vmem:[#allocation4 + $0x20] sm:$0xff] %v4247
        %4280 = vst [vmem:[#allocation4 + $0x28] sm:$0xff] %v4248
        %4281 = vst [vmem:[#allocation4 + $0x30] sm:$0xff] %v4249
        %4282 = vst [vmem:[#allocation4 + $0x38] sm:$0xff] %v4250
        %4283 = vst [vmem:[#allocation4 + $0x40] sm:$0xff] %v4251
        %4284 = vst [vmem:[#allocation4 + $0x48] sm:$0xff] %v4252
        %4285 = vst [vmem:[#allocation4 + $0x50] sm:$0xff] %v4253
        %4286 = vst [vmem:[#allocation4 + $0x58] sm:$0xff] %v4254
        %4287 = vst [vmem:[#allocation4 + $0x60] sm:$0xff] %v4255
        %4288 = vst [vmem:[#allocation4 + $0x68] sm:$0xff] %v4256
        %4289 = vst [vmem:[#allocation4 + $0x70] sm:$0xff] %v4257
        %4290 = vst [vmem:[#allocation4 + $0x78] sm:$0xff] %v4258
        %4291 = vst [vmem:[#allocation4 + $0x80] sm:$0xff] %v4259
        %4292 = vst [vmem:[#allocation4 + $0x88] sm:$0xff] %v4260
        %4293 = vst [vmem:[#allocation4 + $0x90] sm:$0xff] %v4261
        %4294 = vst [vmem:[#allocation4 + $0x98] sm:$0xff] %v4262
        %4295 = vst [vmem:[#allocation4 + $0xa0] sm:$0xff] %v4263
        %4296 = vst [vmem:[#allocation4 + $0xa8] sm:$0xff] %v4264
        %4297 = vst [vmem:[#allocation4 + $0xb0] sm:$0xff] %v4265
        %4298 = vst [vmem:[#allocation4 + $0xb8] sm:$0xff] %v4266
        %4299 = vst [vmem:[#allocation4 + $0xc0] sm:$0xff] %v4267
        %4300 = vst [vmem:[#allocation4 + $0xc8] sm:$0xff] %v4268
        %4301 = vst [vmem:[#allocation4 + $0xd0] sm:$0xff] %v4269
        %4302 = vst [vmem:[#allocation4 + $0xd8] sm:$0xff] %v4270
        %4303 = vst [vmem:[#allocation4 + $0xe0] sm:$0xff] %v4271
        %4304 = vst [vmem:[#allocation4 + $0xe8] sm:$0xff] %v4272
        %4305 = vst [vmem:[#allocation4 + $0xf0] sm:$0xff] %v4273
        %4306 = vst [vmem:[#allocation4 + $0xf8] sm:$0xff] %v4274
        %v4307 = vld [vmem:[#allocation4] sm:$0xff]
        %v4308 = vld [vmem:[#allocation4 + $0x8] sm:$0xff]
        %v4309 = vld [vmem:[#allocation4 + $0x10] sm:$0xff]
        %v4310 = vld [vmem:[#allocation4 + $0x18] sm:$0xff]
        %v4311 = vld [vmem:[#allocation4 + $0x20] sm:$0xff]
        %v4312 = vld [vmem:[#allocation4 + $0x28] sm:$0xff]
        %v4313 = vld [vmem:[#allocation4 + $0x30] sm:$0xff]
        %v4314 = vld [vmem:[#allocation4 + $0x38] sm:$0xff]
        %v4315 = vld [vmem:[#allocation4 + $0x40] sm:$0xff]
        %v4316 = vld [vmem:[#allocation4 + $0x48] sm:$0xff]
        %v4317 = vld [vmem:[#allocation4 + $0x50] sm:$0xff]
        %v4318 = vld [vmem:[#allocation4 + $0x58] sm:$0xff]
        %v4319 = vld [vmem:[#allocation4 + $0x60] sm:$0xff]
        %v4320 = vld [vmem:[#allocation4 + $0x68] sm:$0xff]
        %v4321 = vld [vmem:[#allocation4 + $0x70] sm:$0xff]
        %v4322 = vld [vmem:[#allocation4 + $0x78] sm:$0xff]
        %v4323 = vld [vmem:[#allocation4 + $0x80] sm:$0xff]
        %v4324 = vld [vmem:[#allocation4 + $0x88] sm:$0xff]
        %v4325 = vld [vmem:[#allocation4 + $0x90] sm:$0xff]
        %v4326 = vld [vmem:[#allocation4 + $0x98] sm:$0xff]
        %v4327 = vld [vmem:[#allocation4 + $0xa0] sm:$0xff]
        %v4328 = vld [vmem:[#allocation4 + $0xa8] sm:$0xff]
        %v4329 = vld [vmem:[#allocation4 + $0xb0] sm:$0xff]
        %v4330 = vld [vmem:[#allocation4 + $0xb8] sm:$0xff]
        %v4331 = vld [vmem:[#allocation4 + $0xc0] sm:$0xff]
        %v4332 = vld [vmem:[#allocation4 + $0xc8] sm:$0xff]
        %v4333 = vld [vmem:[#allocation4 + $0xd0] sm:$0xff]
        %v4334 = vld [vmem:[#allocation4 + $0xd8] sm:$0xff]
        %v4335 = vld [vmem:[#allocation4 + $0xe0] sm:$0xff]
        %v4336 = vld [vmem:[#allocation4 + $0xe8] sm:$0xff]
        %v4337 = vld [vmem:[#allocation4 + $0xf0] sm:$0xff]
        %v4338 = vld [vmem:[#allocation4 + $0xf8] sm:$0xff]
        %v4339 = vld [vmem:[#allocation3 + $0x8] sm:$0xff]
        %v4340 = vld [vmem:[#allocation3 + $0x10] sm:$0xff]
        %v4341 = vld [vmem:[#allocation3 + $0x18] sm:$0xff]
        %v4342 = vld [vmem:[#allocation3 + $0x20] sm:$0xff]
        %v4343 = vld [vmem:[#allocation3 + $0x28] sm:$0xff]
        %v4344 = vld [vmem:[#allocation3 + $0x30] sm:$0xff]
        %v4345 = vld [vmem:[#allocation3 + $0x38] sm:$0xff]
        %v4346 = vld [vmem:[#allocation3 + $0x40] sm:$0xff]
        %v4347 = vld [vmem:[#allocation3 + $0x48] sm:$0xff]
        %v4348 = vld [vmem:[#allocation3 + $0x50] sm:$0xff]
        %v4349 = vld [vmem:[#allocation3 + $0x58] sm:$0xff]
        %v4350 = vld [vmem:[#allocation3 + $0x60] sm:$0xff]
        %v4351 = vld [vmem:[#allocation3 + $0x68] sm:$0xff]
        %v4352 = vld [vmem:[#allocation3 + $0x70] sm:$0xff]
        %v4353 = vld [vmem:[#allocation3 + $0x78] sm:$0xff]
        %v4354 = vld [vmem:[#allocation3 + $0x80] sm:$0xff]
        %s4355 = scalar_lea.vmem %s3, 192
        %v4356 = vld [vmem:[%s4355] sm:$0xf]
        %v4357 = vld [vmem:[%s4355 + $0x4] sm:$0xf]
        %v4358 = vld [vmem:[%s4355 + $0x8] sm:$0xf]
        %v4359 = vld [vmem:[%s4355 + $0xc] sm:$0xf]
        %v4360 = vld [vmem:[%s4355 + $0x10] sm:$0xf]
        %v4361 = vld [vmem:[%s4355 + $0x14] sm:$0xf]
        %v4362 = vld [vmem:[%s4355 + $0x18] sm:$0xf]
        %v4363 = vld [vmem:[%s4355 + $0x1c] sm:$0xf]
        %v4364 = vld [vmem:[%s4355 + $0x20] sm:$0xf]
        %v4365 = vld [vmem:[%s4355 + $0x24] sm:$0xf]
        %v4366 = vld [vmem:[%s4355 + $0x28] sm:$0xf]
        %v4367 = vld [vmem:[%s4355 + $0x2c] sm:$0xf]
        %v4368 = vld [vmem:[%s4355 + $0x30] sm:$0xf]
        %v4369 = vld [vmem:[%s4355 + $0x34] sm:$0xf]
        %v4370 = vld [vmem:[%s4355 + $0x38] sm:$0xf]
        %v4371 = vld [vmem:[%s4355 + $0x3c] sm:$0xf]
        %v4388 = vunpack.c.l.b16 %v4356
        %v4389 = vunpack.c.l.b16 %v4357
        %v4390 = vunpack.c.l.b16 %v4358
        %v4391 = vunpack.c.l.b16 %v4359
        %v4392 = vunpack.c.l.b16 %v4360
        %v4393 = vunpack.c.l.b16 %v4361
        %v4394 = vunpack.c.l.b16 %v4362
        %v4395 = vunpack.c.l.b16 %v4363
        %v4396 = vunpack.c.l.b16 %v4364
        %v4397 = vunpack.c.l.b16 %v4365
        %v4398 = vunpack.c.l.b16 %v4366
        %v4399 = vunpack.c.l.b16 %v4367
        %v4400 = vunpack.c.l.b16 %v4368
        %v4401 = vunpack.c.l.b16 %v4369
        %v4402 = vunpack.c.l.b16 %v4370
        %v4403 = vunpack.c.l.b16 %v4371
        %v4404 = vpack.c.b16 %v4389, %v4388
        %v4405 = vpack.c.b16 %v4391, %v4390
        %v4406 = vpack.c.b16 %v4393, %v4392
        %v4407 = vpack.c.b16 %v4395, %v4394
        %v4408 = vpack.c.b16 %v4397, %v4396
        %v4409 = vpack.c.b16 %v4399, %v4398
        %v4410 = vpack.c.b16 %v4401, %v4400
        %v4411 = vpack.c.b16 %v4403, %v4402
        %4420 = vmatprep.subr.bf16.mxu0 0
        %4421 = vmatpush1.bf16.msra.mxu0 %v4404
        %4422 = vmatprep.subr.bf16.mxu0 0
        %4423 = vmatpush1.bf16.msra.mxu0 %v4405
        %4424 = vmatprep.subr.bf16.mxu0 0
        %4425 = vmatpush1.bf16.msra.mxu0 %v4406
        %4426 = vmatprep.subr.bf16.mxu0 0
        %4427 = vmatpush1.bf16.msra.mxu0 %v4407
        %4428 = vmatprep.subr.bf16.mxu0 0
        %4429 = vmatpush1.bf16.msra.mxu0 %v4408
        %4430 = vmatprep.subr.bf16.mxu0 0
        %4431 = vmatpush1.bf16.msra.mxu0 %v4409
        %4432 = vmatprep.subr.bf16.mxu0 0
        %4433 = vmatpush1.bf16.msra.mxu0 %v4410
        %4434 = vmatprep.subr.bf16.mxu0 0
        %4435 = vmatpush1.bf16.msra.mxu0 %v4411
        %4436 = vmatprep.subr.bf16.mxu0 0
        %4437 = vmatpush1.bf16.msra.mxu0 0
        %4438 = vmatprep.subr.bf16.mxu0 0
        %4439 = vmatpush1.bf16.msra.mxu0 0
        %4440 = vmatprep.subr.bf16.mxu0 0
        %4441 = vmatpush1.bf16.msra.mxu0 0
        %4442 = vmatprep.subr.bf16.mxu0 0
        %4443 = vmatpush1.bf16.msra.mxu0 0
        %4444 = vmatprep.subr.bf16.mxu0 0
        %4445 = vmatpush1.bf16.msra.mxu0 0
        %4446 = vmatprep.subr.bf16.mxu0 0
        %4447 = vmatpush1.bf16.msra.mxu0 0
        %4448 = vmatprep.subr.bf16.mxu0 0
        %4449 = vmatpush1.bf16.msra.mxu0 0
        %4450 = vmatprep.subr.bf16.mxu0 0
        %4451 = vmatpush1.bf16.msra.mxu0 0
        %4452 = vmatprep.mubr.bf16.mxu0 0
        %4453 = vmatmul.mubr.bf16.gmra.mrb[0].mxu0 %v4339
        %v4454 = vpop.f32.mrb[0].mxu0
        %v4455 = vadd.f32 0.0, %v4454
        %v4456 = vpop.f32.mrb[0].mxu0
        %v4457 = vpop.f32.mrb[0].mxu0
        %v4458 = vadd.f32 0.0, %v4457
        %v4459 = vpop.f32.mrb[0].mxu0
        %4460 = vmatprep.mubr.bf16.mxu0 0
        %4461 = vmatmul.mubr.bf16.gmra.mrb[0].mxu0 %v4340
        %v4462 = vpop.f32.mrb[0].mxu0
        %v4463 = vadd.f32 0.0, %v4462
        %v4464 = vpop.f32.mrb[0].mxu0
        %v4465 = vpop.f32.mrb[0].mxu0
        %v4466 = vadd.f32 0.0, %v4465
        %v4467 = vpop.f32.mrb[0].mxu0
        %4468 = vmatprep.mubr.bf16.mxu0 0
        %4469 = vmatmul.mubr.bf16.gmra.mrb[0].mxu0 %v4341
        %v4470 = vpop.f32.mrb[0].mxu0
        %v4471 = vadd.f32 0.0, %v4470
        %v4472 = vpop.f32.mrb[0].mxu0
        %v4473 = vpop.f32.mrb[0].mxu0
        %v4474 = vadd.f32 0.0, %v4473
        %v4475 = vpop.f32.mrb[0].mxu0
        %4476 = vmatprep.mubr.bf16.mxu0 0
        %4477 = vmatmul.mubr.bf16.gmra.mrb[0].mxu0 %v4342
        %v4478 = vpop.f32.mrb[0].mxu0
        %v4479 = vadd.f32 0.0, %v4478
        %v4480 = vpop.f32.mrb[0].mxu0
        %v4481 = vpop.f32.mrb[0].mxu0
        %v4482 = vadd.f32 0.0, %v4481
        %v4483 = vpop.f32.mrb[0].mxu0
        %4484 = vmatprep.mubr.bf16.mxu0 0
        %4485 = vmatmul.mubr.bf16.gmra.mrb[0].mxu0 %v4343
        %v4486 = vpop.f32.mrb[0].mxu0
        %v4487 = vadd.f32 0.0, %v4486
        %v4488 = vpop.f32.mrb[0].mxu0
        %v4489 = vpop.f32.mrb[0].mxu0
        %v4490 = vadd.f32 0.0, %v4489
        %v4491 = vpop.f32.mrb[0].mxu0
        %4492 = vmatprep.mubr.bf16.mxu0 0
        %4493 = vmatmul.mubr.bf16.gmra.mrb[0].mxu0 %v4344
        %v4494 = vpop.f32.mrb[0].mxu0
        %v4495 = vadd.f32 0.0, %v4494
        %v4496 = vpop.f32.mrb[0].mxu0
        %v4497 = vpop.f32.mrb[0].mxu0
        %v4498 = vadd.f32 0.0, %v4497
        %v4499 = vpop.f32.mrb[0].mxu0
        %4500 = vmatprep.mubr.bf16.mxu0 0
        %4501 = vmatmul.mubr.bf16.gmra.mrb[0].mxu0 %v4345
        %v4502 = vpop.f32.mrb[0].mxu0
        %v4503 = vadd.f32 0.0, %v4502
        %v4504 = vpop.f32.mrb[0].mxu0
        %v4505 = vpop.f32.mrb[0].mxu0
        %v4506 = vadd.f32 0.0, %v4505
        %v4507 = vpop.f32.mrb[0].mxu0
        %4508 = vmatprep.mubr.bf16.mxu0 0
        %4509 = vmatmul.mubr.bf16.gmra.mrb[0].mxu0 %v4346
        %v4510 = vpop.f32.mrb[0].mxu0
        %v4511 = vadd.f32 0.0, %v4510
        %v4512 = vpop.f32.mrb[0].mxu0
        %v4513 = vpop.f32.mrb[0].mxu0
        %v4514 = vadd.f32 0.0, %v4513
        %v4515 = vpop.f32.mrb[0].mxu0
        %4516 = vmatprep.mubr.bf16.mxu0 0
        %4517 = vmatmul.mubr.bf16.gmra.mrb[0].mxu0 %v4347
        %v4518 = vpop.f32.mrb[0].mxu0
        %v4519 = vadd.f32 0.0, %v4518
        %v4520 = vpop.f32.mrb[0].mxu0
        %v4521 = vpop.f32.mrb[0].mxu0
        %v4522 = vadd.f32 0.0, %v4521
        %v4523 = vpop.f32.mrb[0].mxu0
        %4524 = vmatprep.mubr.bf16.mxu0 0
        %4525 = vmatmul.mubr.bf16.gmra.mrb[0].mxu0 %v4348
        %v4526 = vpop.f32.mrb[0].mxu0
        %v4527 = vadd.f32 0.0, %v4526
        %v4528 = vpop.f32.mrb[0].mxu0
        %v4529 = vpop.f32.mrb[0].mxu0
        %v4530 = vadd.f32 0.0, %v4529
        %v4531 = vpop.f32.mrb[0].mxu0
        %4532 = vmatprep.mubr.bf16.mxu0 0
        %4533 = vmatmul.mubr.bf16.gmra.mrb[0].mxu0 %v4349
        %v4534 = vpop.f32.mrb[0].mxu0
        %v4535 = vadd.f32 0.0, %v4534
        %v4536 = vpop.f32.mrb[0].mxu0
        %v4537 = vpop.f32.mrb[0].mxu0
        %v4538 = vadd.f32 0.0, %v4537
        %v4539 = vpop.f32.mrb[0].mxu0
        %4540 = vmatprep.mubr.bf16.mxu0 0
        %4541 = vmatmul.mubr.bf16.gmra.mrb[0].mxu0 %v4350
        %v4542 = vpop.f32.mrb[0].mxu0
        %v4543 = vadd.f32 0.0, %v4542
        %v4544 = vpop.f32.mrb[0].mxu0
        %v4545 = vpop.f32.mrb[0].mxu0
        %v4546 = vadd.f32 0.0, %v4545
        %v4547 = vpop.f32.mrb[0].mxu0
        %4548 = vmatprep.mubr.bf16.mxu0 0
        %4549 = vmatmul.mubr.bf16.gmra.mrb[0].mxu0 %v4351
        %v4550 = vpop.f32.mrb[0].mxu0
        %v4551 = vadd.f32 0.0, %v4550
        %v4552 = vpop.f32.mrb[0].mxu0
        %v4553 = vpop.f32.mrb[0].mxu0
        %v4554 = vadd.f32 0.0, %v4553
        %v4555 = vpop.f32.mrb[0].mxu0
        %4556 = vmatprep.mubr.bf16.mxu0 0
        %4557 = vmatmul.mubr.bf16.gmra.mrb[0].mxu0 %v4352
        %v4558 = vpop.f32.mrb[0].mxu0
        %v4559 = vadd.f32 0.0, %v4558
        %v4560 = vpop.f32.mrb[0].mxu0
        %v4561 = vpop.f32.mrb[0].mxu0
        %v4562 = vadd.f32 0.0, %v4561
        %v4563 = vpop.f32.mrb[0].mxu0
        %4564 = vmatprep.mubr.bf16.mxu0 0
        %4565 = vmatmul.mubr.bf16.gmra.mrb[0].mxu0 %v4353
        %v4566 = vpop.f32.mrb[0].mxu0
        %v4567 = vadd.f32 0.0, %v4566
        %v4568 = vpop.f32.mrb[0].mxu0
        %v4569 = vpop.f32.mrb[0].mxu0
        %v4570 = vadd.f32 0.0, %v4569
        %v4571 = vpop.f32.mrb[0].mxu0
        %4572 = vmatprep.mubr.bf16.mxu0 0
        %4573 = vmatmul.mubr.bf16.gmra.mrb[0].mxu0 %v4354
        %v4574 = vpop.f32.mrb[0].mxu0
        %v4575 = vadd.f32 0.0, %v4574
        %v4576 = vpop.f32.mrb[0].mxu0
        %v4577 = vpop.f32.mrb[0].mxu0
        %v4578 = vadd.f32 0.0, %v4577
        %v4579 = vpop.f32.mrb[0].mxu0
        %4580 = vdwg.mxu0
        %v4581 = vadd.f32 %v4307, %v4455
        %v4582 = vadd.f32 %v4308, %v4458
        %v4583 = vadd.f32 %v4309, %v4463
        %v4584 = vadd.f32 %v4310, %v4466
        %v4585 = vadd.f32 %v4311, %v4471
        %v4586 = vadd.f32 %v4312, %v4474
        %v4587 = vadd.f32 %v4313, %v4479
        %v4588 = vadd.f32 %v4314, %v4482
        %v4589 = vadd.f32 %v4315, %v4487
        %v4590 = vadd.f32 %v4316, %v4490
        %v4591 = vadd.f32 %v4317, %v4495
        %v4592 = vadd.f32 %v4318, %v4498
        %v4593 = vadd.f32 %v4319, %v4503
        %v4594 = vadd.f32 %v4320, %v4506
        %v4595 = vadd.f32 %v4321, %v4511
        %v4596 = vadd.f32 %v4322, %v4514
        %v4597 = vadd.f32 %v4323, %v4519
        %v4598 = vadd.f32 %v4324, %v4522
        %v4599 = vadd.f32 %v4325, %v4527
        %v4600 = vadd.f32 %v4326, %v4530
        %v4601 = vadd.f32 %v4327, %v4535
        %v4602 = vadd.f32 %v4328, %v4538
        %v4603 = vadd.f32 %v4329, %v4543
        %v4604 = vadd.f32 %v4330, %v4546
        %v4605 = vadd.f32 %v4331, %v4551
        %v4606 = vadd.f32 %v4332, %v4554
        %v4607 = vadd.f32 %v4333, %v4559
        %v4608 = vadd.f32 %v4334, %v4562
        %v4609 = vadd.f32 %v4335, %v4567
        %v4610 = vadd.f32 %v4336, %v4570
        %v4611 = vadd.f32 %v4337, %v4575
        %v4612 = vadd.f32 %v4338, %v4578
        %4613 = vst [vmem:[#allocation4] sm:$0xff] %v4581
        %4614 = vst [vmem:[#allocation4 + $0x8] sm:$0xff] %v4582
        %4615 = vst [vmem:[#allocation4 + $0x10] sm:$0xff] %v4583
        %4616 = vst [vmem:[#allocation4 + $0x18] sm:$0xff] %v4584
        %4617 = vst [vmem:[#allocation4 + $0x20] sm:$0xff] %v4585
        %4618 = vst [vmem:[#allocation4 + $0x28] sm:$0xff] %v4586
        %4619 = vst [vmem:[#allocation4 + $0x30] sm:$0xff] %v4587
        %4620 = vst [vmem:[#allocation4 + $0x38] sm:$0xff] %v4588
        %4621 = vst [vmem:[#allocation4 + $0x40] sm:$0xff] %v4589
        %4622 = vst [vmem:[#allocation4 + $0x48] sm:$0xff] %v4590
        %4623 = vst [vmem:[#allocation4 + $0x50] sm:$0xff] %v4591
        %4624 = vst [vmem:[#allocation4 + $0x58] sm:$0xff] %v4592
        %4625 = vst [vmem:[#allocation4 + $0x60] sm:$0xff] %v4593
        %4626 = vst [vmem:[#allocation4 + $0x68] sm:$0xff] %v4594
        %4627 = vst [vmem:[#allocation4 + $0x70] sm:$0xff] %v4595
        %4628 = vst [vmem:[#allocation4 + $0x78] sm:$0xff] %v4596
        %4629 = vst [vmem:[#allocation4 + $0x80] sm:$0xff] %v4597
        %4630 = vst [vmem:[#allocation4 + $0x88] sm:$0xff] %v4598
        %4631 = vst [vmem:[#allocation4 + $0x90] sm:$0xff] %v4599
        %4632 = vst [vmem:[#allocation4 + $0x98] sm:$0xff] %v4600
        %4633 = vst [vmem:[#allocation4 + $0xa0] sm:$0xff] %v4601
        %4634 = vst [vmem:[#allocation4 + $0xa8] sm:$0xff] %v4602
        %4635 = vst [vmem:[#allocation4 + $0xb0] sm:$0xff] %v4603
        %4636 = vst [vmem:[#allocation4 + $0xb8] sm:$0xff] %v4604
        %4637 = vst [vmem:[#allocation4 + $0xc0] sm:$0xff] %v4605
        %4638 = vst [vmem:[#allocation4 + $0xc8] sm:$0xff] %v4606
        %4639 = vst [vmem:[#allocation4 + $0xd0] sm:$0xff] %v4607
        %4640 = vst [vmem:[#allocation4 + $0xd8] sm:$0xff] %v4608
        %4641 = vst [vmem:[#allocation4 + $0xe0] sm:$0xff] %v4609
        %4642 = vst [vmem:[#allocation4 + $0xe8] sm:$0xff] %v4610
        %4643 = vst [vmem:[#allocation4 + $0xf0] sm:$0xff] %v4611
        %4644 = vst [vmem:[#allocation4 + $0xf8] sm:$0xff] %v4612
        %v4645 = vld [vmem:[#allocation4] sm:$0xff]
        %v4646 = vld [vmem:[#allocation4 + $0x8] sm:$0xff]
        %v4647 = vld [vmem:[#allocation4 + $0x10] sm:$0xff]
        %v4648 = vld [vmem:[#allocation4 + $0x18] sm:$0xff]
        %v4649 = vld [vmem:[#allocation4 + $0x20] sm:$0xff]
        %v4650 = vld [vmem:[#allocation4 + $0x28] sm:$0xff]
        %v4651 = vld [vmem:[#allocation4 + $0x30] sm:$0xff]
        %v4652 = vld [vmem:[#allocation4 + $0x38] sm:$0xff]
        %v4653 = vld [vmem:[#allocation4 + $0x40] sm:$0xff]
        %v4654 = vld [vmem:[#allocation4 + $0x48] sm:$0xff]
        %v4655 = vld [vmem:[#allocation4 + $0x50] sm:$0xff]
        %v4656 = vld [vmem:[#allocation4 + $0x58] sm:$0xff]
        %v4657 = vld [vmem:[#allocation4 + $0x60] sm:$0xff]
        %v4658 = vld [vmem:[#allocation4 + $0x68] sm:$0xff]
        %v4659 = vld [vmem:[#allocation4 + $0x70] sm:$0xff]
        %v4660 = vld [vmem:[#allocation4 + $0x78] sm:$0xff]
        %v4661 = vld [vmem:[#allocation4 + $0x80] sm:$0xff]
        %v4662 = vld [vmem:[#allocation4 + $0x88] sm:$0xff]
        %v4663 = vld [vmem:[#allocation4 + $0x90] sm:$0xff]
        %v4664 = vld [vmem:[#allocation4 + $0x98] sm:$0xff]
        %v4665 = vld [vmem:[#allocation4 + $0xa0] sm:$0xff]
        %v4666 = vld [vmem:[#allocation4 + $0xa8] sm:$0xff]
        %v4667 = vld [vmem:[#allocation4 + $0xb0] sm:$0xff]
        %v4668 = vld [vmem:[#allocation4 + $0xb8] sm:$0xff]
        %v4669 = vld [vmem:[#allocation4 + $0xc0] sm:$0xff]
        %v4670 = vld [vmem:[#allocation4 + $0xc8] sm:$0xff]
        %v4671 = vld [vmem:[#allocation4 + $0xd0] sm:$0xff]
        %v4672 = vld [vmem:[#allocation4 + $0xd8] sm:$0xff]
        %v4673 = vld [vmem:[#allocation4 + $0xe0] sm:$0xff]
        %v4674 = vld [vmem:[#allocation4 + $0xe8] sm:$0xff]
        %v4675 = vld [vmem:[#allocation4 + $0xf0] sm:$0xff]
        %v4676 = vld [vmem:[#allocation4 + $0xf8] sm:$0xff]
        %v4677 = vld [vmem:[#allocation3 + $0x10] sm:$0xff]
        %v4678 = vld [vmem:[#allocation3 + $0x18] sm:$0xff]
        %v4679 = vld [vmem:[#allocation3 + $0x20] sm:$0xff]
        %v4680 = vld [vmem:[#allocation3 + $0x28] sm:$0xff]
        %v4681 = vld [vmem:[#allocation3 + $0x30] sm:$0xff]
        %v4682 = vld [vmem:[#allocation3 + $0x38] sm:$0xff]
        %v4683 = vld [vmem:[#allocation3 + $0x40] sm:$0xff]
        %v4684 = vld [vmem:[#allocation3 + $0x48] sm:$0xff]
        %v4685 = vld [vmem:[#allocation3 + $0x50] sm:$0xff]
        %v4686 = vld [vmem:[#allocation3 + $0x58] sm:$0xff]
        %v4687 = vld [vmem:[#allocation3 + $0x60] sm:$0xff]
        %v4688 = vld [vmem:[#allocation3 + $0x68] sm:$0xff]
        %v4689 = vld [vmem:[#allocation3 + $0x70] sm:$0xff]
        %v4690 = vld [vmem:[#allocation3 + $0x78] sm:$0xff]
        %v4691 = vld [vmem:[#allocation3 + $0x80] sm:$0xff]
        %v4692 = vld [vmem:[#allocation3 + $0x88] sm:$0xff]
        %s4693 = scalar_lea.vmem %s3, 384
        %v4694 = vld [vmem:[%s4693] sm:$0xf]
        %v4695 = vld [vmem:[%s4693 + $0x4] sm:$0xf]
        %v4696 = vld [vmem:[%s4693 + $0x8] sm:$0xf]
        %v4697 = vld [vmem:[%s4693 + $0xc] sm:$0xf]
        %v4698 = vld [vmem:[%s4693 + $0x10] sm:$0xf]
        %v4699 = vld [vmem:[%s4693 + $0x14] sm:$0xf]
        %v4700 = vld [vmem:[%s4693 + $0x18] sm:$0xf]
        %v4701 = vld [vmem:[%s4693 + $0x1c] sm:$0xf]
        %v4702 = vld [vmem:[%s4693 + $0x20] sm:$0xf]
        %v4703 = vld [vmem:[%s4693 + $0x24] sm:$0xf]
        %v4704 = vld [vmem:[%s4693 + $0x28] sm:$0xf]
        %v4705 = vld [vmem:[%s4693 + $0x2c] sm:$0xf]
        %v4706 = vld [vmem:[%s4693 + $0x30] sm:$0xf]
        %v4707 = vld [vmem:[%s4693 + $0x34] sm:$0xf]
        %v4708 = vld [vmem:[%s4693 + $0x38] sm:$0xf]
        %v4709 = vld [vmem:[%s4693 + $0x3c] sm:$0xf]
        %v4726 = vunpack.c.l.b16 %v4694
        %v4727 = vunpack.c.l.b16 %v4695
        %v4728 = vunpack.c.l.b16 %v4696
        %v4729 = vunpack.c.l.b16 %v4697
        %v4730 = vunpack.c.l.b16 %v4698
        %v4731 = vunpack.c.l.b16 %v4699
        %v4732 = vunpack.c.l.b16 %v4700
        %v4733 = vunpack.c.l.b16 %v4701
        %v4734 = vunpack.c.l.b16 %v4702
        %v4735 = vunpack.c.l.b16 %v4703
        %v4736 = vunpack.c.l.b16 %v4704
        %v4737 = vunpack.c.l.b16 %v4705
        %v4738 = vunpack.c.l.b16 %v4706
        %v4739 = vunpack.c.l.b16 %v4707
        %v4740 = vunpack.c.l.b16 %v4708
        %v4741 = vunpack.c.l.b16 %v4709
        %v4742 = vpack.c.b16 %v4727, %v4726
        %v4743 = vpack.c.b16 %v4729, %v4728
        %v4744 = vpack.c.b16 %v4731, %v4730
        %v4745 = vpack.c.b16 %v4733, %v4732
        %v4746 = vpack.c.b16 %v4735, %v4734
        %v4747 = vpack.c.b16 %v4737, %v4736
        %v4748 = vpack.c.b16 %v4739, %v4738
        %v4749 = vpack.c.b16 %v4741, %v4740
        %4758 = vmatprep.subr.bf16.mxu0 0
        %4759 = vmatpush1.bf16.msra.mxu0 %v4742
        %4760 = vmatprep.subr.bf16.mxu0 0
        %4761 = vmatpush1.bf16.msra.mxu0 %v4743
        %4762 = vmatprep.subr.bf16.mxu0 0
        %4763 = vmatpush1.bf16.msra.mxu0 %v4744
        %4764 = vmatprep.subr.bf16.mxu0 0
        %4765 = vmatpush1.bf16.msra.mxu0 %v4745
        %4766 = vmatprep.subr.bf16.mxu0 0
        %4767 = vmatpush1.bf16.msra.mxu0 %v4746
        %4768 = vmatprep.subr.bf16.mxu0 0
        %4769 = vmatpush1.bf16.msra.mxu0 %v4747
        %4770 = vmatprep.subr.bf16.mxu0 0
        %4771 = vmatpush1.bf16.msra.mxu0 %v4748
        %4772 = vmatprep.subr.bf16.mxu0 0
        %4773 = vmatpush1.bf16.msra.mxu0 %v4749
        %4774 = vmatprep.subr.bf16.mxu0 0
        %4775 = vmatpush1.bf16.msra.mxu0 0
        %4776 = vmatprep.subr.bf16.mxu0 0
        %4777 = vmatpush1.bf16.msra.mxu0 0
        %4778 = vmatprep.subr.bf16.mxu0 0
        %4779 = vmatpush1.bf16.msra.mxu0 0
        %4780 = vmatprep.subr.bf16.mxu0 0
        %4781 = vmatpush1.bf16.msra.mxu0 0
        %4782 = vmatprep.subr.bf16.mxu0 0
        %4783 = vmatpush1.bf16.msra.mxu0 0
        %4784 = vmatprep.subr.bf16.mxu0 0
        %4785 = vmatpush1.bf16.msra.mxu0 0
        %4786 = vmatprep.subr.bf16.mxu0 0
        %4787 = vmatpush1.bf16.msra.mxu0 0
        %4788 = vmatprep.subr.bf16.mxu0 0
        %4789 = vmatpush1.bf16.msra.mxu0 0
        %4790 = vmatprep.mubr.bf16.mxu0 0
        %4791 = vmatmul.mubr.bf16.gmra.mrb[0].mxu0 %v4677
        %v4792 = vpop.f32.mrb[0].mxu0
        %v4793 = vadd.f32 0.0, %v4792
        %v4794 = vpop.f32.mrb[0].mxu0
        %v4795 = vpop.f32.mrb[0].mxu0
        %v4796 = vadd.f32 0.0, %v4795
        %v4797 = vpop.f32.mrb[0].mxu0
        %4798 = vmatprep.mubr.bf16.mxu0 0
        %4799 = vmatmul.mubr.bf16.gmra.mrb[0].mxu0 %v4678
        %v4800 = vpop.f32.mrb[0].mxu0
        %v4801 = vadd.f32 0.0, %v4800
        %v4802 = vpop.f32.mrb[0].mxu0
        %v4803 = vpop.f32.mrb[0].mxu0
        %v4804 = vadd.f32 0.0, %v4803
        %v4805 = vpop.f32.mrb[0].mxu0
        %4806 = vmatprep.mubr.bf16.mxu0 0
        %4807 = vmatmul.mubr.bf16.gmra.mrb[0].mxu0 %v4679
        %v4808 = vpop.f32.mrb[0].mxu0
        %v4809 = vadd.f32 0.0, %v4808
        %v4810 = vpop.f32.mrb[0].mxu0
        %v4811 = vpop.f32.mrb[0].mxu0
        %v4812 = vadd.f32 0.0, %v4811
        %v4813 = vpop.f32.mrb[0].mxu0
        %4814 = vmatprep.mubr.bf16.mxu0 0
        %4815 = vmatmul.mubr.bf16.gmra.mrb[0].mxu0 %v4680
        %v4816 = vpop.f32.mrb[0].mxu0
        %v4817 = vadd.f32 0.0, %v4816
        %v4818 = vpop.f32.mrb[0].mxu0
        %v4819 = vpop.f32.mrb[0].mxu0
        %v4820 = vadd.f32 0.0, %v4819
        %v4821 = vpop.f32.mrb[0].mxu0
        %4822 = vmatprep.mubr.bf16.mxu0 0
        %4823 = vmatmul.mubr.bf16.gmra.mrb[0].mxu0 %v4681
        %v4824 = vpop.f32.mrb[0].mxu0
        %v4825 = vadd.f32 0.0, %v4824
        %v4826 = vpop.f32.mrb[0].mxu0
        %v4827 = vpop.f32.mrb[0].mxu0
        %v4828 = vadd.f32 0.0, %v4827
        %v4829 = vpop.f32.mrb[0].mxu0
        %4830 = vmatprep.mubr.bf16.mxu0 0
        %4831 = vmatmul.mubr.bf16.gmra.mrb[0].mxu0 %v4682
        %v4832 = vpop.f32.mrb[0].mxu0
        %v4833 = vadd.f32 0.0, %v4832
        %v4834 = vpop.f32.mrb[0].mxu0
        %v4835 = vpop.f32.mrb[0].mxu0
        %v4836 = vadd.f32 0.0, %v4835
        %v4837 = vpop.f32.mrb[0].mxu0
        %4838 = vmatprep.mubr.bf16.mxu0 0
        %4839 = vmatmul.mubr.bf16.gmra.mrb[0].mxu0 %v4683
        %v4840 = vpop.f32.mrb[0].mxu0
        %v4841 = vadd.f32 0.0, %v4840
        %v4842 = vpop.f32.mrb[0].mxu0
        %v4843 = vpop.f32.mrb[0].mxu0
        %v4844 = vadd.f32 0.0, %v4843
        %v4845 = vpop.f32.mrb[0].mxu0
        %4846 = vmatprep.mubr.bf16.mxu0 0
        %4847 = vmatmul.mubr.bf16.gmra.mrb[0].mxu0 %v4684
        %v4848 = vpop.f32.mrb[0].mxu0
        %v4849 = vadd.f32 0.0, %v4848
        %v4850 = vpop.f32.mrb[0].mxu0
        %v4851 = vpop.f32.mrb[0].mxu0
        %v4852 = vadd.f32 0.0, %v4851
        %v4853 = vpop.f32.mrb[0].mxu0
        %4854 = vmatprep.mubr.bf16.mxu0 0
        %4855 = vmatmul.mubr.bf16.gmra.mrb[0].mxu0 %v4685
        %v4856 = vpop.f32.mrb[0].mxu0
        %v4857 = vadd.f32 0.0, %v4856
        %v4858 = vpop.f32.mrb[0].mxu0
        %v4859 = vpop.f32.mrb[0].mxu0
        %v4860 = vadd.f32 0.0, %v4859
        %v4861 = vpop.f32.mrb[0].mxu0
        %4862 = vmatprep.mubr.bf16.mxu0 0
        %4863 = vmatmul.mubr.bf16.gmra.mrb[0].mxu0 %v4686
        %v4864 = vpop.f32.mrb[0].mxu0
        %v4865 = vadd.f32 0.0, %v4864
        %v4866 = vpop.f32.mrb[0].mxu0
        %v4867 = vpop.f32.mrb[0].mxu0
        %v4868 = vadd.f32 0.0, %v4867
        %v4869 = vpop.f32.mrb[0].mxu0
        %4870 = vmatprep.mubr.bf16.mxu0 0
        %4871 = vmatmul.mubr.bf16.gmra.mrb[0].mxu0 %v4687
        %v4872 = vpop.f32.mrb[0].mxu0
        %v4873 = vadd.f32 0.0, %v4872
        %v4874 = vpop.f32.mrb[0].mxu0
        %v4875 = vpop.f32.mrb[0].mxu0
        %v4876 = vadd.f32 0.0, %v4875
        %v4877 = vpop.f32.mrb[0].mxu0
        %4878 = vmatprep.mubr.bf16.mxu0 0
        %4879 = vmatmul.mubr.bf16.gmra.mrb[0].mxu0 %v4688
        %v4880 = vpop.f32.mrb[0].mxu0
        %v4881 = vadd.f32 0.0, %v4880
        %v4882 = vpop.f32.mrb[0].mxu0
        %v4883 = vpop.f32.mrb[0].mxu0
        %v4884 = vadd.f32 0.0, %v4883
        %v4885 = vpop.f32.mrb[0].mxu0
        %4886 = vmatprep.mubr.bf16.mxu0 0
        %4887 = vmatmul.mubr.bf16.gmra.mrb[0].mxu0 %v4689
        %v4888 = vpop.f32.mrb[0].mxu0
        %v4889 = vadd.f32 0.0, %v4888
        %v4890 = vpop.f32.mrb[0].mxu0
        %v4891 = vpop.f32.mrb[0].mxu0
        %v4892 = vadd.f32 0.0, %v4891
        %v4893 = vpop.f32.mrb[0].mxu0
        %4894 = vmatprep.mubr.bf16.mxu0 0
        %4895 = vmatmul.mubr.bf16.gmra.mrb[0].mxu0 %v4690
        %v4896 = vpop.f32.mrb[0].mxu0
        %v4897 = vadd.f32 0.0, %v4896
        %v4898 = vpop.f32.mrb[0].mxu0
        %v4899 = vpop.f32.mrb[0].mxu0
        %v4900 = vadd.f32 0.0, %v4899
        %v4901 = vpop.f32.mrb[0].mxu0
        %4902 = vmatprep.mubr.bf16.mxu0 0
        %4903 = vmatmul.mubr.bf16.gmra.mrb[0].mxu0 %v4691
        %v4904 = vpop.f32.mrb[0].mxu0
        %v4905 = vadd.f32 0.0, %v4904
        %v4906 = vpop.f32.mrb[0].mxu0
        %v4907 = vpop.f32.mrb[0].mxu0
        %v4908 = vadd.f32 0.0, %v4907
        %v4909 = vpop.f32.mrb[0].mxu0
        %4910 = vmatprep.mubr.bf16.mxu0 0
        %4911 = vmatmul.mubr.bf16.gmra.mrb[0].mxu0 %v4692
        %v4912 = vpop.f32.mrb[0].mxu0
        %v4913 = vadd.f32 0.0, %v4912
        %v4914 = vpop.f32.mrb[0].mxu0
        %v4915 = vpop.f32.mrb[0].mxu0
        %v4916 = vadd.f32 0.0, %v4915
        %v4917 = vpop.f32.mrb[0].mxu0
        %4918 = vdwg.mxu0
        %v4919 = vadd.f32 %v4645, %v4793
        %v4920 = vadd.f32 %v4646, %v4796
        %v4921 = vadd.f32 %v4647, %v4801
        %v4922 = vadd.f32 %v4648, %v4804
        %v4923 = vadd.f32 %v4649, %v4809
        %v4924 = vadd.f32 %v4650, %v4812
        %v4925 = vadd.f32 %v4651, %v4817
        %v4926 = vadd.f32 %v4652, %v4820
        %v4927 = vadd.f32 %v4653, %v4825
        %v4928 = vadd.f32 %v4654, %v4828
        %v4929 = vadd.f32 %v4655, %v4833
        %v4930 = vadd.f32 %v4656, %v4836
        %v4931 = vadd.f32 %v4657, %v4841
        %v4932 = vadd.f32 %v4658, %v4844
        %v4933 = vadd.f32 %v4659, %v4849
        %v4934 = vadd.f32 %v4660, %v4852
        %v4935 = vadd.f32 %v4661, %v4857
        %v4936 = vadd.f32 %v4662, %v4860
        %v4937 = vadd.f32 %v4663, %v4865
        %v4938 = vadd.f32 %v4664, %v4868
        %v4939 = vadd.f32 %v4665, %v4873
        %v4940 = vadd.f32 %v4666, %v4876
        %v4941 = vadd.f32 %v4667, %v4881
        %v4942 = vadd.f32 %v4668, %v4884
        %v4943 = vadd.f32 %v4669, %v4889
        %v4944 = vadd.f32 %v4670, %v4892
        %v4945 = vadd.f32 %v4671, %v4897
        %v4946 = vadd.f32 %v4672, %v4900
        %v4947 = vadd.f32 %v4673, %v4905
        %v4948 = vadd.f32 %v4674, %v4908
        %v4949 = vadd.f32 %v4675, %v4913
        %v4950 = vadd.f32 %v4676, %v4916
        %4951 = vst [vmem:[#allocation4] sm:$0xff] %v4919
        %4952 = vst [vmem:[#allocation4 + $0x8] sm:$0xff] %v4920
        %4953 = vst [vmem:[#allocation4 + $0x10] sm:$0xff] %v4921
        %4954 = vst [vmem:[#allocation4 + $0x18] sm:$0xff] %v4922
        %4955 = vst [vmem:[#allocation4 + $0x20] sm:$0xff] %v4923
        %4956 = vst [vmem:[#allocation4 + $0x28] sm:$0xff] %v4924
        %4957 = vst [vmem:[#allocation4 + $0x30] sm:$0xff] %v4925
        %4958 = vst [vmem:[#allocation4 + $0x38] sm:$0xff] %v4926
        %4959 = vst [vmem:[#allocation4 + $0x40] sm:$0xff] %v4927
        %4960 = vst [vmem:[#allocation4 + $0x48] sm:$0xff] %v4928
        %4961 = vst [vmem:[#allocation4 + $0x50] sm:$0xff] %v4929
        %4962 = vst [vmem:[#allocation4 + $0x58] sm:$0xff] %v4930
        %4963 = vst [vmem:[#allocation4 + $0x60] sm:$0xff] %v4931
        %4964 = vst [vmem:[#allocation4 + $0x68] sm:$0xff] %v4932
        %4965 = vst [vmem:[#allocation4 + $0x70] sm:$0xff] %v4933
        %4966 = vst [vmem:[#allocation4 + $0x78] sm:$0xff] %v4934
        %4967 = vst [vmem:[#allocation4 + $0x80] sm:$0xff] %v4935
        %4968 = vst [vmem:[#allocation4 + $0x88] sm:$0xff] %v4936
        %4969 = vst [vmem:[#allocation4 + $0x90] sm:$0xff] %v4937
        %4970 = vst [vmem:[#allocation4 + $0x98] sm:$0xff] %v4938
        %4971 = vst [vmem:[#allocation4 + $0xa0] sm:$0xff] %v4939
        %4972 = vst [vmem:[#allocation4 + $0xa8] sm:$0xff] %v4940
        %4973 = vst [vmem:[#allocation4 + $0xb0] sm:$0xff] %v4941
        %4974 = vst [vmem:[#allocation4 + $0xb8] sm:$0xff] %v4942
        %4975 = vst [vmem:[#allocation4 + $0xc0] sm:$0xff] %v4943
        %4976 = vst [vmem:[#allocation4 + $0xc8] sm:$0xff] %v4944
        %4977 = vst [vmem:[#allocation4 + $0xd0] sm:$0xff] %v4945
        %4978 = vst [vmem:[#allocation4 + $0xd8] sm:$0xff] %v4946
        %4979 = vst [vmem:[#allocation4 + $0xe0] sm:$0xff] %v4947
        %4980 = vst [vmem:[#allocation4 + $0xe8] sm:$0xff] %v4948
        %4981 = vst [vmem:[#allocation4 + $0xf0] sm:$0xff] %v4949
        %4982 = vst [vmem:[#allocation4 + $0xf8] sm:$0xff] %v4950
        %v4983 = vld [vmem:[#allocation2 + $0x1] sm:$0xff]
        %v4984 = vld [vmem:[#allocation2 + $0x9] sm:$0xff]
        %v4985 = vld [vmem:[#allocation2 + $0x19] sm:$0xff]
        %v4986 = vld [vmem:[#allocation2 + $0x21] sm:$0xff]
        %v4987 = vld [vmem:[#allocation2 + $0x31] sm:$0xff]
        %v4988 = vld [vmem:[#allocation2 + $0x39] sm:$0xff]
        %v4989 = vld [vmem:[#allocation2 + $0x49] sm:$0xff]
        %v4990 = vld [vmem:[#allocation2 + $0x51] sm:$0xff]
        %v4991 = vld [vmem:[#allocation2 + $0x61] sm:$0xff]
        %v4992 = vld [vmem:[#allocation2 + $0x69] sm:$0xff]
        %v4993 = vld [vmem:[#allocation2 + $0x79] sm:$0xff]
        %v4994 = vld [vmem:[#allocation2 + $0x81] sm:$0xff]
        %v4995 = vld [vmem:[#allocation2 + $0x91] sm:$0xff]
        %v4996 = vld [vmem:[#allocation2 + $0x99] sm:$0xff]
        %v4997 = vld [vmem:[#allocation2 + $0xa9] sm:$0xff]
        %v4998 = vld [vmem:[#allocation2 + $0xb1] sm:$0xff]
        %v4999 = vld [vmem:[#allocation2 + $0xc1] sm:$0xff]
        %v5000 = vld [vmem:[#allocation2 + $0xc9] sm:$0xff]
        %v5001 = vld [vmem:[#allocation2 + $0xd9] sm:$0xff]
        %v5002 = vld [vmem:[#allocation2 + $0xe1] sm:$0xff]
        %v5003 = vld [vmem:[#allocation2 + $0xf1] sm:$0xff]
        %v5004 = vld [vmem:[#allocation2 + $0xf9] sm:$0xff]
        %v5005 = vld [vmem:[#allocation2 + $0x109] sm:$0xff]
        %v5006 = vld [vmem:[#allocation2 + $0x111] sm:$0xff]
        %v5007 = vld [vmem:[#allocation2 + $0x121] sm:$0xff]
        %v5008 = vld [vmem:[#allocation2 + $0x129] sm:$0xff]
        %v5009 = vld [vmem:[#allocation2 + $0x139] sm:$0xff]
        %v5010 = vld [vmem:[#allocation2 + $0x141] sm:$0xff]
        %v5011 = vld [vmem:[#allocation2 + $0x151] sm:$0xff]
        %v5012 = vld [vmem:[#allocation2 + $0x159] sm:$0xff]
        %v5013 = vld [vmem:[#allocation2 + $0x169] sm:$0xff]
        %v5014 = vld [vmem:[#allocation2 + $0x171] sm:$0xff]
        %v5015 = vld [vmem:[#allocation2 + $0x181] sm:$0xff]
        %v5016 = vld [vmem:[#allocation2 + $0x189] sm:$0xff]
        %v5017 = vld [vmem:[#allocation2 + $0x199] sm:$0xff]
        %v5018 = vld [vmem:[#allocation2 + $0x1a1] sm:$0xff]
        %v5019 = vpack.c.bf16 %v4984, %v4983
        %v5020 = vpack.c.bf16 %v4986, %v4985
        %v5021 = vpack.c.bf16 %v4988, %v4987
        %v5022 = vpack.c.bf16 %v4990, %v4989
        %v5023 = vpack.c.bf16 %v4992, %v4991
        %v5024 = vpack.c.bf16 %v4994, %v4993
        %v5025 = vpack.c.bf16 %v4996, %v4995
        %v5026 = vpack.c.bf16 %v4998, %v4997
        %v5027 = vpack.c.bf16 %v5000, %v4999
        %v5028 = vpack.c.bf16 %v5002, %v5001
        %v5029 = vpack.c.bf16 %v5004, %v5003
        %v5030 = vpack.c.bf16 %v5006, %v5005
        %v5031 = vpack.c.bf16 %v5008, %v5007
        %v5032 = vpack.c.bf16 %v5010, %v5009
        %v5033 = vpack.c.bf16 %v5012, %v5011
        %v5034 = vpack.c.bf16 %v5014, %v5013
        %v5035 = vpack.c.bf16 %v5016, %v5015
        %v5036 = vpack.c.bf16 %v5018, %v5017
        %5037 = vst [vmem:[#allocation3] sm:$0xff] %v5019
        %5038 = vst [vmem:[#allocation3 + $0x8] sm:$0xff] %v5020
        %5039 = vst [vmem:[#allocation3 + $0x10] sm:$0xff] %v5021
        %5040 = vst [vmem:[#allocation3 + $0x18] sm:$0xff] %v5022
        %5041 = vst [vmem:[#allocation3 + $0x20] sm:$0xff] %v5023
        %5042 = vst [vmem:[#allocation3 + $0x28] sm:$0xff] %v5024
        %5043 = vst [vmem:[#allocation3 + $0x30] sm:$0xff] %v5025
        %5044 = vst [vmem:[#allocation3 + $0x38] sm:$0xff] %v5026
        %5045 = vst [vmem:[#allocation3 + $0x40] sm:$0xff] %v5027
        %5046 = vst [vmem:[#allocation3 + $0x48] sm:$0xff] %v5028
        %5047 = vst [vmem:[#allocation3 + $0x50] sm:$0xff] %v5029
        %5048 = vst [vmem:[#allocation3 + $0x58] sm:$0xff] %v5030
        %5049 = vst [vmem:[#allocation3 + $0x60] sm:$0xff] %v5031
        %5050 = vst [vmem:[#allocation3 + $0x68] sm:$0xff] %v5032
        %5051 = vst [vmem:[#allocation3 + $0x70] sm:$0xff] %v5033
        %5052 = vst [vmem:[#allocation3 + $0x78] sm:$0xff] %v5034
        %5053 = vst [vmem:[#allocation3 + $0x80] sm:$0xff] %v5035
        %5054 = vst [vmem:[#allocation3 + $0x88] sm:$0xff] %v5036
        %v5055 = vld [vmem:[#allocation4] sm:$0xff]
        %v5056 = vld [vmem:[#allocation4 + $0x8] sm:$0xff]
        %v5057 = vld [vmem:[#allocation4 + $0x10] sm:$0xff]
        %v5058 = vld [vmem:[#allocation4 + $0x18] sm:$0xff]
        %v5059 = vld [vmem:[#allocation4 + $0x20] sm:$0xff]
        %v5060 = vld [vmem:[#allocation4 + $0x28] sm:$0xff]
        %v5061 = vld [vmem:[#allocation4 + $0x30] sm:$0xff]
        %v5062 = vld [vmem:[#allocation4 + $0x38] sm:$0xff]
        %v5063 = vld [vmem:[#allocation4 + $0x40] sm:$0xff]
        %v5064 = vld [vmem:[#allocation4 + $0x48] sm:$0xff]
        %v5065 = vld [vmem:[#allocation4 + $0x50] sm:$0xff]
        %v5066 = vld [vmem:[#allocation4 + $0x58] sm:$0xff]
        %v5067 = vld [vmem:[#allocation4 + $0x60] sm:$0xff]
        %v5068 = vld [vmem:[#allocation4 + $0x68] sm:$0xff]
        %v5069 = vld [vmem:[#allocation4 + $0x70] sm:$0xff]
        %v5070 = vld [vmem:[#allocation4 + $0x78] sm:$0xff]
        %v5071 = vld [vmem:[#allocation4 + $0x80] sm:$0xff]
        %v5072 = vld [vmem:[#allocation4 + $0x88] sm:$0xff]
        %v5073 = vld [vmem:[#allocation4 + $0x90] sm:$0xff]
        %v5074 = vld [vmem:[#allocation4 + $0x98] sm:$0xff]
        %v5075 = vld [vmem:[#allocation4 + $0xa0] sm:$0xff]
        %v5076 = vld [vmem:[#allocation4 + $0xa8] sm:$0xff]
        %v5077 = vld [vmem:[#allocation4 + $0xb0] sm:$0xff]
        %v5078 = vld [vmem:[#allocation4 + $0xb8] sm:$0xff]
        %v5079 = vld [vmem:[#allocation4 + $0xc0] sm:$0xff]
        %v5080 = vld [vmem:[#allocation4 + $0xc8] sm:$0xff]
        %v5081 = vld [vmem:[#allocation4 + $0xd0] sm:$0xff]
        %v5082 = vld [vmem:[#allocation4 + $0xd8] sm:$0xff]
        %v5083 = vld [vmem:[#allocation4 + $0xe0] sm:$0xff]
        %v5084 = vld [vmem:[#allocation4 + $0xe8] sm:$0xff]
        %v5085 = vld [vmem:[#allocation4 + $0xf0] sm:$0xff]
        %v5086 = vld [vmem:[#allocation4 + $0xf8] sm:$0xff]
        %v5087 = vld [vmem:[#allocation3] sm:$0xff]
        %v5088 = vld [vmem:[#allocation3 + $0x8] sm:$0xff]
        %v5089 = vld [vmem:[#allocation3 + $0x10] sm:$0xff]
        %v5090 = vld [vmem:[#allocation3 + $0x18] sm:$0xff]
        %v5091 = vld [vmem:[#allocation3 + $0x20] sm:$0xff]
        %v5092 = vld [vmem:[#allocation3 + $0x28] sm:$0xff]
        %v5093 = vld [vmem:[#allocation3 + $0x30] sm:$0xff]
        %v5094 = vld [vmem:[#allocation3 + $0x38] sm:$0xff]
        %v5095 = vld [vmem:[#allocation3 + $0x40] sm:$0xff]
        %v5096 = vld [vmem:[#allocation3 + $0x48] sm:$0xff]
        %v5097 = vld [vmem:[#allocation3 + $0x50] sm:$0xff]
        %v5098 = vld [vmem:[#allocation3 + $0x58] sm:$0xff]
        %v5099 = vld [vmem:[#allocation3 + $0x60] sm:$0xff]
        %v5100 = vld [vmem:[#allocation3 + $0x68] sm:$0xff]
        %v5101 = vld [vmem:[#allocation3 + $0x70] sm:$0xff]
        %v5102 = vld [vmem:[#allocation3 + $0x78] sm:$0xff]
        %s5103 = scalar_lea.vmem %s3, 64
        %v5104 = vld [vmem:[%s5103] sm:$0xf]
        %v5105 = vld [vmem:[%s5103 + $0x4] sm:$0xf]
        %v5106 = vld [vmem:[%s5103 + $0x8] sm:$0xf]
        %v5107 = vld [vmem:[%s5103 + $0xc] sm:$0xf]
        %v5108 = vld [vmem:[%s5103 + $0x10] sm:$0xf]
        %v5109 = vld [vmem:[%s5103 + $0x14] sm:$0xf]
        %v5110 = vld [vmem:[%s5103 + $0x18] sm:$0xf]
        %v5111 = vld [vmem:[%s5103 + $0x1c] sm:$0xf]
        %v5112 = vld [vmem:[%s5103 + $0x20] sm:$0xf]
        %v5113 = vld [vmem:[%s5103 + $0x24] sm:$0xf]
        %v5114 = vld [vmem:[%s5103 + $0x28] sm:$0xf]
        %v5115 = vld [vmem:[%s5103 + $0x2c] sm:$0xf]
        %v5116 = vld [vmem:[%s5103 + $0x30] sm:$0xf]
        %v5117 = vld [vmem:[%s5103 + $0x34] sm:$0xf]
        %v5118 = vld [vmem:[%s5103 + $0x38] sm:$0xf]
        %v5119 = vld [vmem:[%s5103 + $0x3c] sm:$0xf]
        %v5136 = vunpack.c.l.b16 %v5104
        %v5137 = vunpack.c.l.b16 %v5105
        %v5138 = vunpack.c.l.b16 %v5106
        %v5139 = vunpack.c.l.b16 %v5107
        %v5140 = vunpack.c.l.b16 %v5108
        %v5141 = vunpack.c.l.b16 %v5109
        %v5142 = vunpack.c.l.b16 %v5110
        %v5143 = vunpack.c.l.b16 %v5111
        %v5144 = vunpack.c.l.b16 %v5112
        %v5145 = vunpack.c.l.b16 %v5113
        %v5146 = vunpack.c.l.b16 %v5114
        %v5147 = vunpack.c.l.b16 %v5115
        %v5148 = vunpack.c.l.b16 %v5116
        %v5149 = vunpack.c.l.b16 %v5117
        %v5150 = vunpack.c.l.b16 %v5118
        %v5151 = vunpack.c.l.b16 %v5119
        %v5152 = vpack.c.b16 %v5137, %v5136
        %v5153 = vpack.c.b16 %v5139, %v5138
        %v5154 = vpack.c.b16 %v5141, %v5140
        %v5155 = vpack.c.b16 %v5143, %v5142
        %v5156 = vpack.c.b16 %v5145, %v5144
        %v5157 = vpack.c.b16 %v5147, %v5146
        %v5158 = vpack.c.b16 %v5149, %v5148
        %v5159 = vpack.c.b16 %v5151, %v5150
        %5168 = vmatprep.subr.bf16.mxu0 0
        %5169 = vmatpush1.bf16.msra.mxu0 %v5152
        %5170 = vmatprep.subr.bf16.mxu0 0
        %5171 = vmatpush1.bf16.msra.mxu0 %v5153
        %5172 = vmatprep.subr.bf16.mxu0 0
        %5173 = vmatpush1.bf16.msra.mxu0 %v5154
        %5174 = vmatprep.subr.bf16.mxu0 0
        %5175 = vmatpush1.bf16.msra.mxu0 %v5155
        %5176 = vmatprep.subr.bf16.mxu0 0
        %5177 = vmatpush1.bf16.msra.mxu0 %v5156
        %5178 = vmatprep.subr.bf16.mxu0 0
        %5179 = vmatpush1.bf16.msra.mxu0 %v5157
        %5180 = vmatprep.subr.bf16.mxu0 0
        %5181 = vmatpush1.bf16.msra.mxu0 %v5158
        %5182 = vmatprep.subr.bf16.mxu0 0
        %5183 = vmatpush1.bf16.msra.mxu0 %v5159
        %5184 = vmatprep.subr.bf16.mxu0 0
        %5185 = vmatpush1.bf16.msra.mxu0 0
        %5186 = vmatprep.subr.bf16.mxu0 0
        %5187 = vmatpush1.bf16.msra.mxu0 0
        %5188 = vmatprep.subr.bf16.mxu0 0
        %5189 = vmatpush1.bf16.msra.mxu0 0
        %5190 = vmatprep.subr.bf16.mxu0 0
        %5191 = vmatpush1.bf16.msra.mxu0 0
        %5192 = vmatprep.subr.bf16.mxu0 0
        %5193 = vmatpush1.bf16.msra.mxu0 0
        %5194 = vmatprep.subr.bf16.mxu0 0
        %5195 = vmatpush1.bf16.msra.mxu0 0
        %5196 = vmatprep.subr.bf16.mxu0 0
        %5197 = vmatpush1.bf16.msra.mxu0 0
        %5198 = vmatprep.subr.bf16.mxu0 0
        %5199 = vmatpush1.bf16.msra.mxu0 0
        %5200 = vmatprep.mubr.bf16.mxu0 0
        %5201 = vmatmul.mubr.bf16.gmra.mrb[0].mxu0 %v5087
        %v5202 = vpop.f32.mrb[0].mxu0
        %v5203 = vadd.f32 0.0, %v5202
        %v5204 = vpop.f32.mrb[0].mxu0
        %v5205 = vpop.f32.mrb[0].mxu0
        %v5206 = vadd.f32 0.0, %v5205
        %v5207 = vpop.f32.mrb[0].mxu0
        %5208 = vmatprep.mubr.bf16.mxu0 0
        %5209 = vmatmul.mubr.bf16.gmra.mrb[0].mxu0 %v5088
        %v5210 = vpop.f32.mrb[0].mxu0
        %v5211 = vadd.f32 0.0, %v5210
        %v5212 = vpop.f32.mrb[0].mxu0
        %v5213 = vpop.f32.mrb[0].mxu0
        %v5214 = vadd.f32 0.0, %v5213
        %v5215 = vpop.f32.mrb[0].mxu0
        %5216 = vmatprep.mubr.bf16.mxu0 0
        %5217 = vmatmul.mubr.bf16.gmra.mrb[0].mxu0 %v5089
        %v5218 = vpop.f32.mrb[0].mxu0
        %v5219 = vadd.f32 0.0, %v5218
        %v5220 = vpop.f32.mrb[0].mxu0
        %v5221 = vpop.f32.mrb[0].mxu0
        %v5222 = vadd.f32 0.0, %v5221
        %v5223 = vpop.f32.mrb[0].mxu0
        %5224 = vmatprep.mubr.bf16.mxu0 0
        %5225 = vmatmul.mubr.bf16.gmra.mrb[0].mxu0 %v5090
        %v5226 = vpop.f32.mrb[0].mxu0
        %v5227 = vadd.f32 0.0, %v5226
        %v5228 = vpop.f32.mrb[0].mxu0
        %v5229 = vpop.f32.mrb[0].mxu0
        %v5230 = vadd.f32 0.0, %v5229
        %v5231 = vpop.f32.mrb[0].mxu0
        %5232 = vmatprep.mubr.bf16.mxu0 0
        %5233 = vmatmul.mubr.bf16.gmra.mrb[0].mxu0 %v5091
        %v5234 = vpop.f32.mrb[0].mxu0
        %v5235 = vadd.f32 0.0, %v5234
        %v5236 = vpop.f32.mrb[0].mxu0
        %v5237 = vpop.f32.mrb[0].mxu0
        %v5238 = vadd.f32 0.0, %v5237
        %v5239 = vpop.f32.mrb[0].mxu0
        %5240 = vmatprep.mubr.bf16.mxu0 0
        %5241 = vmatmul.mubr.bf16.gmra.mrb[0].mxu0 %v5092
        %v5242 = vpop.f32.mrb[0].mxu0
        %v5243 = vadd.f32 0.0, %v5242
        %v5244 = vpop.f32.mrb[0].mxu0
        %v5245 = vpop.f32.mrb[0].mxu0
        %v5246 = vadd.f32 0.0, %v5245
        %v5247 = vpop.f32.mrb[0].mxu0
        %5248 = vmatprep.mubr.bf16.mxu0 0
        %5249 = vmatmul.mubr.bf16.gmra.mrb[0].mxu0 %v5093
        %v5250 = vpop.f32.mrb[0].mxu0
        %v5251 = vadd.f32 0.0, %v5250
        %v5252 = vpop.f32.mrb[0].mxu0
        %v5253 = vpop.f32.mrb[0].mxu0
        %v5254 = vadd.f32 0.0, %v5253
        %v5255 = vpop.f32.mrb[0].mxu0
        %5256 = vmatprep.mubr.bf16.mxu0 0
        %5257 = vmatmul.mubr.bf16.gmra.mrb[0].mxu0 %v5094
        %v5258 = vpop.f32.mrb[0].mxu0
        %v5259 = vadd.f32 0.0, %v5258
        %v5260 = vpop.f32.mrb[0].mxu0
        %v5261 = vpop.f32.mrb[0].mxu0
        %v5262 = vadd.f32 0.0, %v5261
        %v5263 = vpop.f32.mrb[0].mxu0
        %5264 = vmatprep.mubr.bf16.mxu0 0
        %5265 = vmatmul.mubr.bf16.gmra.mrb[0].mxu0 %v5095
        %v5266 = vpop.f32.mrb[0].mxu0
        %v5267 = vadd.f32 0.0, %v5266
        %v5268 = vpop.f32.mrb[0].mxu0
        %v5269 = vpop.f32.mrb[0].mxu0
        %v5270 = vadd.f32 0.0, %v5269
        %v5271 = vpop.f32.mrb[0].mxu0
        %5272 = vmatprep.mubr.bf16.mxu0 0
        %5273 = vmatmul.mubr.bf16.gmra.mrb[0].mxu0 %v5096
        %v5274 = vpop.f32.mrb[0].mxu0
        %v5275 = vadd.f32 0.0, %v5274
        %v5276 = vpop.f32.mrb[0].mxu0
        %v5277 = vpop.f32.mrb[0].mxu0
        %v5278 = vadd.f32 0.0, %v5277
        %v5279 = vpop.f32.mrb[0].mxu0
        %5280 = vmatprep.mubr.bf16.mxu0 0
        %5281 = vmatmul.mubr.bf16.gmra.mrb[0].mxu0 %v5097
        %v5282 = vpop.f32.mrb[0].mxu0
        %v5283 = vadd.f32 0.0, %v5282
        %v5284 = vpop.f32.mrb[0].mxu0
        %v5285 = vpop.f32.mrb[0].mxu0
        %v5286 = vadd.f32 0.0, %v5285
        %v5287 = vpop.f32.mrb[0].mxu0
        %5288 = vmatprep.mubr.bf16.mxu0 0
        %5289 = vmatmul.mubr.bf16.gmra.mrb[0].mxu0 %v5098
        %v5290 = vpop.f32.mrb[0].mxu0
        %v5291 = vadd.f32 0.0, %v5290
        %v5292 = vpop.f32.mrb[0].mxu0
        %v5293 = vpop.f32.mrb[0].mxu0
        %v5294 = vadd.f32 0.0, %v5293
        %v5295 = vpop.f32.mrb[0].mxu0
        %5296 = vmatprep.mubr.bf16.mxu0 0
        %5297 = vmatmul.mubr.bf16.gmra.mrb[0].mxu0 %v5099
        %v5298 = vpop.f32.mrb[0].mxu0
        %v5299 = vadd.f32 0.0, %v5298
        %v5300 = vpop.f32.mrb[0].mxu0
        %v5301 = vpop.f32.mrb[0].mxu0
        %v5302 = vadd.f32 0.0, %v5301
        %v5303 = vpop.f32.mrb[0].mxu0
        %5304 = vmatprep.mubr.bf16.mxu0 0
        %5305 = vmatmul.mubr.bf16.gmra.mrb[0].mxu0 %v5100
        %v5306 = vpop.f32.mrb[0].mxu0
        %v5307 = vadd.f32 0.0, %v5306
        %v5308 = vpop.f32.mrb[0].mxu0
        %v5309 = vpop.f32.mrb[0].mxu0
        %v5310 = vadd.f32 0.0, %v5309
        %v5311 = vpop.f32.mrb[0].mxu0
        %5312 = vmatprep.mubr.bf16.mxu0 0
        %5313 = vmatmul.mubr.bf16.gmra.mrb[0].mxu0 %v5101
        %v5314 = vpop.f32.mrb[0].mxu0
        %v5315 = vadd.f32 0.0, %v5314
        %v5316 = vpop.f32.mrb[0].mxu0
        %v5317 = vpop.f32.mrb[0].mxu0
        %v5318 = vadd.f32 0.0, %v5317
        %v5319 = vpop.f32.mrb[0].mxu0
        %5320 = vmatprep.mubr.bf16.mxu0 0
        %5321 = vmatmul.mubr.bf16.gmra.mrb[0].mxu0 %v5102
        %v5322 = vpop.f32.mrb[0].mxu0
        %v5323 = vadd.f32 0.0, %v5322
        %v5324 = vpop.f32.mrb[0].mxu0
        %v5325 = vpop.f32.mrb[0].mxu0
        %v5326 = vadd.f32 0.0, %v5325
        %v5327 = vpop.f32.mrb[0].mxu0
        %5328 = vdwg.mxu0
        %v5329 = vadd.f32 %v5055, %v5203
        %v5330 = vadd.f32 %v5056, %v5206
        %v5331 = vadd.f32 %v5057, %v5211
        %v5332 = vadd.f32 %v5058, %v5214
        %v5333 = vadd.f32 %v5059, %v5219
        %v5334 = vadd.f32 %v5060, %v5222
        %v5335 = vadd.f32 %v5061, %v5227
        %v5336 = vadd.f32 %v5062, %v5230
        %v5337 = vadd.f32 %v5063, %v5235
        %v5338 = vadd.f32 %v5064, %v5238
        %v5339 = vadd.f32 %v5065, %v5243
        %v5340 = vadd.f32 %v5066, %v5246
        %v5341 = vadd.f32 %v5067, %v5251
        %v5342 = vadd.f32 %v5068, %v5254
        %v5343 = vadd.f32 %v5069, %v5259
        %v5344 = vadd.f32 %v5070, %v5262
        %v5345 = vadd.f32 %v5071, %v5267
        %v5346 = vadd.f32 %v5072, %v5270
        %v5347 = vadd.f32 %v5073, %v5275
        %v5348 = vadd.f32 %v5074, %v5278
        %v5349 = vadd.f32 %v5075, %v5283
        %v5350 = vadd.f32 %v5076, %v5286
        %v5351 = vadd.f32 %v5077, %v5291
        %v5352 = vadd.f32 %v5078, %v5294
        %v5353 = vadd.f32 %v5079, %v5299
        %v5354 = vadd.f32 %v5080, %v5302
        %v5355 = vadd.f32 %v5081, %v5307
        %v5356 = vadd.f32 %v5082, %v5310
        %v5357 = vadd.f32 %v5083, %v5315
        %v5358 = vadd.f32 %v5084, %v5318
        %v5359 = vadd.f32 %v5085, %v5323
        %v5360 = vadd.f32 %v5086, %v5326
        %5361 = vst [vmem:[#allocation4] sm:$0xff] %v5329
        %5362 = vst [vmem:[#allocation4 + $0x8] sm:$0xff] %v5330
        %5363 = vst [vmem:[#allocation4 + $0x10] sm:$0xff] %v5331
        %5364 = vst [vmem:[#allocation4 + $0x18] sm:$0xff] %v5332
        %5365 = vst [vmem:[#allocation4 + $0x20] sm:$0xff] %v5333
        %5366 = vst [vmem:[#allocation4 + $0x28] sm:$0xff] %v5334
        %5367 = vst [vmem:[#allocation4 + $0x30] sm:$0xff] %v5335
        %5368 = vst [vmem:[#allocation4 + $0x38] sm:$0xff] %v5336
        %5369 = vst [vmem:[#allocation4 + $0x40] sm:$0xff] %v5337
        %5370 = vst [vmem:[#allocation4 + $0x48] sm:$0xff] %v5338
        %5371 = vst [vmem:[#allocation4 + $0x50] sm:$0xff] %v5339
        %5372 = vst [vmem:[#allocation4 + $0x58] sm:$0xff] %v5340
        %5373 = vst [vmem:[#allocation4 + $0x60] sm:$0xff] %v5341
        %5374 = vst [vmem:[#allocation4 + $0x68] sm:$0xff] %v5342
        %5375 = vst [vmem:[#allocation4 + $0x70] sm:$0xff] %v5343
        %5376 = vst [vmem:[#allocation4 + $0x78] sm:$0xff] %v5344
        %5377 = vst [vmem:[#allocation4 + $0x80] sm:$0xff] %v5345
        %5378 = vst [vmem:[#allocation4 + $0x88] sm:$0xff] %v5346
        %5379 = vst [vmem:[#allocation4 + $0x90] sm:$0xff] %v5347
        %5380 = vst [vmem:[#allocation4 + $0x98] sm:$0xff] %v5348
        %5381 = vst [vmem:[#allocation4 + $0xa0] sm:$0xff] %v5349
        %5382 = vst [vmem:[#allocation4 + $0xa8] sm:$0xff] %v5350
        %5383 = vst [vmem:[#allocation4 + $0xb0] sm:$0xff] %v5351
        %5384 = vst [vmem:[#allocation4 + $0xb8] sm:$0xff] %v5352
        %5385 = vst [vmem:[#allocation4 + $0xc0] sm:$0xff] %v5353
        %5386 = vst [vmem:[#allocation4 + $0xc8] sm:$0xff] %v5354
        %5387 = vst [vmem:[#allocation4 + $0xd0] sm:$0xff] %v5355
        %5388 = vst [vmem:[#allocation4 + $0xd8] sm:$0xff] %v5356
        %5389 = vst [vmem:[#allocation4 + $0xe0] sm:$0xff] %v5357
        %5390 = vst [vmem:[#allocation4 + $0xe8] sm:$0xff] %v5358
        %5391 = vst [vmem:[#allocation4 + $0xf0] sm:$0xff] %v5359
        %5392 = vst [vmem:[#allocation4 + $0xf8] sm:$0xff] %v5360
        %v5393 = vld [vmem:[#allocation4] sm:$0xff]
        %v5394 = vld [vmem:[#allocation4 + $0x8] sm:$0xff]
        %v5395 = vld [vmem:[#allocation4 + $0x10] sm:$0xff]
        %v5396 = vld [vmem:[#allocation4 + $0x18] sm:$0xff]
        %v5397 = vld [vmem:[#allocation4 + $0x20] sm:$0xff]
        %v5398 = vld [vmem:[#allocation4 + $0x28] sm:$0xff]
        %v5399 = vld [vmem:[#allocation4 + $0x30] sm:$0xff]
        %v5400 = vld [vmem:[#allocation4 + $0x38] sm:$0xff]
        %v5401 = vld [vmem:[#allocation4 + $0x40] sm:$0xff]
        %v5402 = vld [vmem:[#allocation4 + $0x48] sm:$0xff]
        %v5403 = vld [vmem:[#allocation4 + $0x50] sm:$0xff]
        %v5404 = vld [vmem:[#allocation4 + $0x58] sm:$0xff]
        %v5405 = vld [vmem:[#allocation4 + $0x60] sm:$0xff]
        %v5406 = vld [vmem:[#allocation4 + $0x68] sm:$0xff]
        %v5407 = vld [vmem:[#allocation4 + $0x70] sm:$0xff]
        %v5408 = vld [vmem:[#allocation4 + $0x78] sm:$0xff]
        %v5409 = vld [vmem:[#allocation4 + $0x80] sm:$0xff]
        %v5410 = vld [vmem:[#allocation4 + $0x88] sm:$0xff]
        %v5411 = vld [vmem:[#allocation4 + $0x90] sm:$0xff]
        %v5412 = vld [vmem:[#allocation4 + $0x98] sm:$0xff]
        %v5413 = vld [vmem:[#allocation4 + $0xa0] sm:$0xff]
        %v5414 = vld [vmem:[#allocation4 + $0xa8] sm:$0xff]
        %v5415 = vld [vmem:[#allocation4 + $0xb0] sm:$0xff]
        %v5416 = vld [vmem:[#allocation4 + $0xb8] sm:$0xff]
        %v5417 = vld [vmem:[#allocation4 + $0xc0] sm:$0xff]
        %v5418 = vld [vmem:[#allocation4 + $0xc8] sm:$0xff]
        %v5419 = vld [vmem:[#allocation4 + $0xd0] sm:$0xff]
        %v5420 = vld [vmem:[#allocation4 + $0xd8] sm:$0xff]
        %v5421 = vld [vmem:[#allocation4 + $0xe0] sm:$0xff]
        %v5422 = vld [vmem:[#allocation4 + $0xe8] sm:$0xff]
        %v5423 = vld [vmem:[#allocation4 + $0xf0] sm:$0xff]
        %v5424 = vld [vmem:[#allocation4 + $0xf8] sm:$0xff]
        %v5425 = vld [vmem:[#allocation3 + $0x8] sm:$0xff]
        %v5426 = vld [vmem:[#allocation3 + $0x10] sm:$0xff]
        %v5427 = vld [vmem:[#allocation3 + $0x18] sm:$0xff]
        %v5428 = vld [vmem:[#allocation3 + $0x20] sm:$0xff]
        %v5429 = vld [vmem:[#allocation3 + $0x28] sm:$0xff]
        %v5430 = vld [vmem:[#allocation3 + $0x30] sm:$0xff]
        %v5431 = vld [vmem:[#allocation3 + $0x38] sm:$0xff]
        %v5432 = vld [vmem:[#allocation3 + $0x40] sm:$0xff]
        %v5433 = vld [vmem:[#allocation3 + $0x48] sm:$0xff]
        %v5434 = vld [vmem:[#allocation3 + $0x50] sm:$0xff]
        %v5435 = vld [vmem:[#allocation3 + $0x58] sm:$0xff]
        %v5436 = vld [vmem:[#allocation3 + $0x60] sm:$0xff]
        %v5437 = vld [vmem:[#allocation3 + $0x68] sm:$0xff]
        %v5438 = vld [vmem:[#allocation3 + $0x70] sm:$0xff]
        %v5439 = vld [vmem:[#allocation3 + $0x78] sm:$0xff]
        %v5440 = vld [vmem:[#allocation3 + $0x80] sm:$0xff]
        %s5441 = scalar_lea.vmem %s3, 256
        %v5442 = vld [vmem:[%s5441] sm:$0xf]
        %v5443 = vld [vmem:[%s5441 + $0x4] sm:$0xf]
        %v5444 = vld [vmem:[%s5441 + $0x8] sm:$0xf]
        %v5445 = vld [vmem:[%s5441 + $0xc] sm:$0xf]
        %v5446 = vld [vmem:[%s5441 + $0x10] sm:$0xf]
        %v5447 = vld [vmem:[%s5441 + $0x14] sm:$0xf]
        %v5448 = vld [vmem:[%s5441 + $0x18] sm:$0xf]
        %v5449 = vld [vmem:[%s5441 + $0x1c] sm:$0xf]
        %v5450 = vld [vmem:[%s5441 + $0x20] sm:$0xf]
        %v5451 = vld [vmem:[%s5441 + $0x24] sm:$0xf]
        %v5452 = vld [vmem:[%s5441 + $0x28] sm:$0xf]
        %v5453 = vld [vmem:[%s5441 + $0x2c] sm:$0xf]
        %v5454 = vld [vmem:[%s5441 + $0x30] sm:$0xf]
        %v5455 = vld [vmem:[%s5441 + $0x34] sm:$0xf]
        %v5456 = vld [vmem:[%s5441 + $0x38] sm:$0xf]
        %v5457 = vld [vmem:[%s5441 + $0x3c] sm:$0xf]
        %v5474 = vunpack.c.l.b16 %v5442
        %v5475 = vunpack.c.l.b16 %v5443
        %v5476 = vunpack.c.l.b16 %v5444
        %v5477 = vunpack.c.l.b16 %v5445
        %v5478 = vunpack.c.l.b16 %v5446
        %v5479 = vunpack.c.l.b16 %v5447
        %v5480 = vunpack.c.l.b16 %v5448
        %v5481 = vunpack.c.l.b16 %v5449
        %v5482 = vunpack.c.l.b16 %v5450
        %v5483 = vunpack.c.l.b16 %v5451
        %v5484 = vunpack.c.l.b16 %v5452
        %v5485 = vunpack.c.l.b16 %v5453
        %v5486 = vunpack.c.l.b16 %v5454
        %v5487 = vunpack.c.l.b16 %v5455
        %v5488 = vunpack.c.l.b16 %v5456
        %v5489 = vunpack.c.l.b16 %v5457
        %v5490 = vpack.c.b16 %v5475, %v5474
        %v5491 = vpack.c.b16 %v5477, %v5476
        %v5492 = vpack.c.b16 %v5479, %v5478
        %v5493 = vpack.c.b16 %v5481, %v5480
        %v5494 = vpack.c.b16 %v5483, %v5482
        %v5495 = vpack.c.b16 %v5485, %v5484
        %v5496 = vpack.c.b16 %v5487, %v5486
        %v5497 = vpack.c.b16 %v5489, %v5488
        %5506 = vmatprep.subr.bf16.mxu0 0
        %5507 = vmatpush1.bf16.msra.mxu0 %v5490
        %5508 = vmatprep.subr.bf16.mxu0 0
        %5509 = vmatpush1.bf16.msra.mxu0 %v5491
        %5510 = vmatprep.subr.bf16.mxu0 0
        %5511 = vmatpush1.bf16.msra.mxu0 %v5492
        %5512 = vmatprep.subr.bf16.mxu0 0
        %5513 = vmatpush1.bf16.msra.mxu0 %v5493
        %5514 = vmatprep.subr.bf16.mxu0 0
        %5515 = vmatpush1.bf16.msra.mxu0 %v5494
        %5516 = vmatprep.subr.bf16.mxu0 0
        %5517 = vmatpush1.bf16.msra.mxu0 %v5495
        %5518 = vmatprep.subr.bf16.mxu0 0
        %5519 = vmatpush1.bf16.msra.mxu0 %v5496
        %5520 = vmatprep.subr.bf16.mxu0 0
        %5521 = vmatpush1.bf16.msra.mxu0 %v5497
        %5522 = vmatprep.subr.bf16.mxu0 0
        %5523 = vmatpush1.bf16.msra.mxu0 0
        %5524 = vmatprep.subr.bf16.mxu0 0
        %5525 = vmatpush1.bf16.msra.mxu0 0
        %5526 = vmatprep.subr.bf16.mxu0 0
        %5527 = vmatpush1.bf16.msra.mxu0 0
        %5528 = vmatprep.subr.bf16.mxu0 0
        %5529 = vmatpush1.bf16.msra.mxu0 0
        %5530 = vmatprep.subr.bf16.mxu0 0
        %5531 = vmatpush1.bf16.msra.mxu0 0
        %5532 = vmatprep.subr.bf16.mxu0 0
        %5533 = vmatpush1.bf16.msra.mxu0 0
        %5534 = vmatprep.subr.bf16.mxu0 0
        %5535 = vmatpush1.bf16.msra.mxu0 0
        %5536 = vmatprep.subr.bf16.mxu0 0
        %5537 = vmatpush1.bf16.msra.mxu0 0
        %5538 = vmatprep.mubr.bf16.mxu0 0
        %5539 = vmatmul.mubr.bf16.gmra.mrb[0].mxu0 %v5425
        %v5540 = vpop.f32.mrb[0].mxu0
        %v5541 = vadd.f32 0.0, %v5540
        %v5542 = vpop.f32.mrb[0].mxu0
        %v5543 = vpop.f32.mrb[0].mxu0
        %v5544 = vadd.f32 0.0, %v5543
        %v5545 = vpop.f32.mrb[0].mxu0
        %5546 = vmatprep.mubr.bf16.mxu0 0
        %5547 = vmatmul.mubr.bf16.gmra.mrb[0].mxu0 %v5426
        %v5548 = vpop.f32.mrb[0].mxu0
        %v5549 = vadd.f32 0.0, %v5548
        %v5550 = vpop.f32.mrb[0].mxu0
        %v5551 = vpop.f32.mrb[0].mxu0
        %v5552 = vadd.f32 0.0, %v5551
        %v5553 = vpop.f32.mrb[0].mxu0
        %5554 = vmatprep.mubr.bf16.mxu0 0
        %5555 = vmatmul.mubr.bf16.gmra.mrb[0].mxu0 %v5427
        %v5556 = vpop.f32.mrb[0].mxu0
        %v5557 = vadd.f32 0.0, %v5556
        %v5558 = vpop.f32.mrb[0].mxu0
        %v5559 = vpop.f32.mrb[0].mxu0
        %v5560 = vadd.f32 0.0, %v5559
        %v5561 = vpop.f32.mrb[0].mxu0
        %5562 = vmatprep.mubr.bf16.mxu0 0
        %5563 = vmatmul.mubr.bf16.gmra.mrb[0].mxu0 %v5428
        %v5564 = vpop.f32.mrb[0].mxu0
        %v5565 = vadd.f32 0.0, %v5564
        %v5566 = vpop.f32.mrb[0].mxu0
        %v5567 = vpop.f32.mrb[0].mxu0
        %v5568 = vadd.f32 0.0, %v5567
        %v5569 = vpop.f32.mrb[0].mxu0
        %5570 = vmatprep.mubr.bf16.mxu0 0
        %5571 = vmatmul.mubr.bf16.gmra.mrb[0].mxu0 %v5429
        %v5572 = vpop.f32.mrb[0].mxu0
        %v5573 = vadd.f32 0.0, %v5572
        %v5574 = vpop.f32.mrb[0].mxu0
        %v5575 = vpop.f32.mrb[0].mxu0
        %v5576 = vadd.f32 0.0, %v5575
        %v5577 = vpop.f32.mrb[0].mxu0
        %5578 = vmatprep.mubr.bf16.mxu0 0
        %5579 = vmatmul.mubr.bf16.gmra.mrb[0].mxu0 %v5430
        %v5580 = vpop.f32.mrb[0].mxu0
        %v5581 = vadd.f32 0.0, %v5580
        %v5582 = vpop.f32.mrb[0].mxu0
        %v5583 = vpop.f32.mrb[0].mxu0
        %v5584 = vadd.f32 0.0, %v5583
        %v5585 = vpop.f32.mrb[0].mxu0
        %5586 = vmatprep.mubr.bf16.mxu0 0
        %5587 = vmatmul.mubr.bf16.gmra.mrb[0].mxu0 %v5431
        %v5588 = vpop.f32.mrb[0].mxu0
        %v5589 = vadd.f32 0.0, %v5588
        %v5590 = vpop.f32.mrb[0].mxu0
        %v5591 = vpop.f32.mrb[0].mxu0
        %v5592 = vadd.f32 0.0, %v5591
        %v5593 = vpop.f32.mrb[0].mxu0
        %5594 = vmatprep.mubr.bf16.mxu0 0
        %5595 = vmatmul.mubr.bf16.gmra.mrb[0].mxu0 %v5432
        %v5596 = vpop.f32.mrb[0].mxu0
        %v5597 = vadd.f32 0.0, %v5596
        %v5598 = vpop.f32.mrb[0].mxu0
        %v5599 = vpop.f32.mrb[0].mxu0
        %v5600 = vadd.f32 0.0, %v5599
        %v5601 = vpop.f32.mrb[0].mxu0
        %5602 = vmatprep.mubr.bf16.mxu0 0
        %5603 = vmatmul.mubr.bf16.gmra.mrb[0].mxu0 %v5433
        %v5604 = vpop.f32.mrb[0].mxu0
        %v5605 = vadd.f32 0.0, %v5604
        %v5606 = vpop.f32.mrb[0].mxu0
        %v5607 = vpop.f32.mrb[0].mxu0
        %v5608 = vadd.f32 0.0, %v5607
        %v5609 = vpop.f32.mrb[0].mxu0
        %5610 = vmatprep.mubr.bf16.mxu0 0
        %5611 = vmatmul.mubr.bf16.gmra.mrb[0].mxu0 %v5434
        %v5612 = vpop.f32.mrb[0].mxu0
        %v5613 = vadd.f32 0.0, %v5612
        %v5614 = vpop.f32.mrb[0].mxu0
        %v5615 = vpop.f32.mrb[0].mxu0
        %v5616 = vadd.f32 0.0, %v5615
        %v5617 = vpop.f32.mrb[0].mxu0
        %5618 = vmatprep.mubr.bf16.mxu0 0
        %5619 = vmatmul.mubr.bf16.gmra.mrb[0].mxu0 %v5435
        %v5620 = vpop.f32.mrb[0].mxu0
        %v5621 = vadd.f32 0.0, %v5620
        %v5622 = vpop.f32.mrb[0].mxu0
        %v5623 = vpop.f32.mrb[0].mxu0
        %v5624 = vadd.f32 0.0, %v5623
        %v5625 = vpop.f32.mrb[0].mxu0
        %5626 = vmatprep.mubr.bf16.mxu0 0
        %5627 = vmatmul.mubr.bf16.gmra.mrb[0].mxu0 %v5436
        %v5628 = vpop.f32.mrb[0].mxu0
        %v5629 = vadd.f32 0.0, %v5628
        %v5630 = vpop.f32.mrb[0].mxu0
        %v5631 = vpop.f32.mrb[0].mxu0
        %v5632 = vadd.f32 0.0, %v5631
        %v5633 = vpop.f32.mrb[0].mxu0
        %5634 = vmatprep.mubr.bf16.mxu0 0
        %5635 = vmatmul.mubr.bf16.gmra.mrb[0].mxu0 %v5437
        %v5636 = vpop.f32.mrb[0].mxu0
        %v5637 = vadd.f32 0.0, %v5636
        %v5638 = vpop.f32.mrb[0].mxu0
        %v5639 = vpop.f32.mrb[0].mxu0
        %v5640 = vadd.f32 0.0, %v5639
        %v5641 = vpop.f32.mrb[0].mxu0
        %5642 = vmatprep.mubr.bf16.mxu0 0
        %5643 = vmatmul.mubr.bf16.gmra.mrb[0].mxu0 %v5438
        %v5644 = vpop.f32.mrb[0].mxu0
        %v5645 = vadd.f32 0.0, %v5644
        %v5646 = vpop.f32.mrb[0].mxu0
        %v5647 = vpop.f32.mrb[0].mxu0
        %v5648 = vadd.f32 0.0, %v5647
        %v5649 = vpop.f32.mrb[0].mxu0
        %5650 = vmatprep.mubr.bf16.mxu0 0
        %5651 = vmatmul.mubr.bf16.gmra.mrb[0].mxu0 %v5439
        %v5652 = vpop.f32.mrb[0].mxu0
        %v5653 = vadd.f32 0.0, %v5652
        %v5654 = vpop.f32.mrb[0].mxu0
        %v5655 = vpop.f32.mrb[0].mxu0
        %v5656 = vadd.f32 0.0, %v5655
        %v5657 = vpop.f32.mrb[0].mxu0
        %5658 = vmatprep.mubr.bf16.mxu0 0
        %5659 = vmatmul.mubr.bf16.gmra.mrb[0].mxu0 %v5440
        %v5660 = vpop.f32.mrb[0].mxu0
        %v5661 = vadd.f32 0.0, %v5660
        %v5662 = vpop.f32.mrb[0].mxu0
        %v5663 = vpop.f32.mrb[0].mxu0
        %v5664 = vadd.f32 0.0, %v5663
        %v5665 = vpop.f32.mrb[0].mxu0
        %5666 = vdwg.mxu0
        %v5667 = vadd.f32 %v5393, %v5541
        %v5668 = vadd.f32 %v5394, %v5544
        %v5669 = vadd.f32 %v5395, %v5549
        %v5670 = vadd.f32 %v5396, %v5552
        %v5671 = vadd.f32 %v5397, %v5557
        %v5672 = vadd.f32 %v5398, %v5560
        %v5673 = vadd.f32 %v5399, %v5565
        %v5674 = vadd.f32 %v5400, %v5568
        %v5675 = vadd.f32 %v5401, %v5573
        %v5676 = vadd.f32 %v5402, %v5576
        %v5677 = vadd.f32 %v5403, %v5581
        %v5678 = vadd.f32 %v5404, %v5584
        %v5679 = vadd.f32 %v5405, %v5589
        %v5680 = vadd.f32 %v5406, %v5592
        %v5681 = vadd.f32 %v5407, %v5597
        %v5682 = vadd.f32 %v5408, %v5600
        %v5683 = vadd.f32 %v5409, %v5605
        %v5684 = vadd.f32 %v5410, %v5608
        %v5685 = vadd.f32 %v5411, %v5613
        %v5686 = vadd.f32 %v5412, %v5616
        %v5687 = vadd.f32 %v5413, %v5621
        %v5688 = vadd.f32 %v5414, %v5624
        %v5689 = vadd.f32 %v5415, %v5629
        %v5690 = vadd.f32 %v5416, %v5632
        %v5691 = vadd.f32 %v5417, %v5637
        %v5692 = vadd.f32 %v5418, %v5640
        %v5693 = vadd.f32 %v5419, %v5645
        %v5694 = vadd.f32 %v5420, %v5648
        %v5695 = vadd.f32 %v5421, %v5653
        %v5696 = vadd.f32 %v5422, %v5656
        %v5697 = vadd.f32 %v5423, %v5661
        %v5698 = vadd.f32 %v5424, %v5664
        %5699 = vst [vmem:[#allocation4] sm:$0xff] %v5667
        %5700 = vst [vmem:[#allocation4 + $0x8] sm:$0xff] %v5668
        %5701 = vst [vmem:[#allocation4 + $0x10] sm:$0xff] %v5669
        %5702 = vst [vmem:[#allocation4 + $0x18] sm:$0xff] %v5670
        %5703 = vst [vmem:[#allocation4 + $0x20] sm:$0xff] %v5671
        %5704 = vst [vmem:[#allocation4 + $0x28] sm:$0xff] %v5672
        %5705 = vst [vmem:[#allocation4 + $0x30] sm:$0xff] %v5673
        %5706 = vst [vmem:[#allocation4 + $0x38] sm:$0xff] %v5674
        %5707 = vst [vmem:[#allocation4 + $0x40] sm:$0xff] %v5675
        %5708 = vst [vmem:[#allocation4 + $0x48] sm:$0xff] %v5676
        %5709 = vst [vmem:[#allocation4 + $0x50] sm:$0xff] %v5677
        %5710 = vst [vmem:[#allocation4 + $0x58] sm:$0xff] %v5678
        %5711 = vst [vmem:[#allocation4 + $0x60] sm:$0xff] %v5679
        %5712 = vst [vmem:[#allocation4 + $0x68] sm:$0xff] %v5680
        %5713 = vst [vmem:[#allocation4 + $0x70] sm:$0xff] %v5681
        %5714 = vst [vmem:[#allocation4 + $0x78] sm:$0xff] %v5682
        %5715 = vst [vmem:[#allocation4 + $0x80] sm:$0xff] %v5683
        %5716 = vst [vmem:[#allocation4 + $0x88] sm:$0xff] %v5684
        %5717 = vst [vmem:[#allocation4 + $0x90] sm:$0xff] %v5685
        %5718 = vst [vmem:[#allocation4 + $0x98] sm:$0xff] %v5686
        %5719 = vst [vmem:[#allocation4 + $0xa0] sm:$0xff] %v5687
        %5720 = vst [vmem:[#allocation4 + $0xa8] sm:$0xff] %v5688
        %5721 = vst [vmem:[#allocation4 + $0xb0] sm:$0xff] %v5689
        %5722 = vst [vmem:[#allocation4 + $0xb8] sm:$0xff] %v5690
        %5723 = vst [vmem:[#allocation4 + $0xc0] sm:$0xff] %v5691
        %5724 = vst [vmem:[#allocation4 + $0xc8] sm:$0xff] %v5692
        %5725 = vst [vmem:[#allocation4 + $0xd0] sm:$0xff] %v5693
        %5726 = vst [vmem:[#allocation4 + $0xd8] sm:$0xff] %v5694
        %5727 = vst [vmem:[#allocation4 + $0xe0] sm:$0xff] %v5695
        %5728 = vst [vmem:[#allocation4 + $0xe8] sm:$0xff] %v5696
        %5729 = vst [vmem:[#allocation4 + $0xf0] sm:$0xff] %v5697
        %5730 = vst [vmem:[#allocation4 + $0xf8] sm:$0xff] %v5698
        %v5731 = vld [vmem:[#allocation4] sm:$0xff]
        %v5732 = vld [vmem:[#allocation4 + $0x8] sm:$0xff]
        %v5733 = vld [vmem:[#allocation4 + $0x10] sm:$0xff]
        %v5734 = vld [vmem:[#allocation4 + $0x18] sm:$0xff]
        %v5735 = vld [vmem:[#allocation4 + $0x20] sm:$0xff]
        %v5736 = vld [vmem:[#allocation4 + $0x28] sm:$0xff]
        %v5737 = vld [vmem:[#allocation4 + $0x30] sm:$0xff]
        %v5738 = vld [vmem:[#allocation4 + $0x38] sm:$0xff]
        %v5739 = vld [vmem:[#allocation4 + $0x40] sm:$0xff]
        %v5740 = vld [vmem:[#allocation4 + $0x48] sm:$0xff]
        %v5741 = vld [vmem:[#allocation4 + $0x50] sm:$0xff]
        %v5742 = vld [vmem:[#allocation4 + $0x58] sm:$0xff]
        %v5743 = vld [vmem:[#allocation4 + $0x60] sm:$0xff]
        %v5744 = vld [vmem:[#allocation4 + $0x68] sm:$0xff]
        %v5745 = vld [vmem:[#allocation4 + $0x70] sm:$0xff]
        %v5746 = vld [vmem:[#allocation4 + $0x78] sm:$0xff]
        %v5747 = vld [vmem:[#allocation4 + $0x80] sm:$0xff]
        %v5748 = vld [vmem:[#allocation4 + $0x88] sm:$0xff]
        %v5749 = vld [vmem:[#allocation4 + $0x90] sm:$0xff]
        %v5750 = vld [vmem:[#allocation4 + $0x98] sm:$0xff]
        %v5751 = vld [vmem:[#allocation4 + $0xa0] sm:$0xff]
        %v5752 = vld [vmem:[#allocation4 + $0xa8] sm:$0xff]
        %v5753 = vld [vmem:[#allocation4 + $0xb0] sm:$0xff]
        %v5754 = vld [vmem:[#allocation4 + $0xb8] sm:$0xff]
        %v5755 = vld [vmem:[#allocation4 + $0xc0] sm:$0xff]
        %v5756 = vld [vmem:[#allocation4 + $0xc8] sm:$0xff]
        %v5757 = vld [vmem:[#allocation4 + $0xd0] sm:$0xff]
        %v5758 = vld [vmem:[#allocation4 + $0xd8] sm:$0xff]
        %v5759 = vld [vmem:[#allocation4 + $0xe0] sm:$0xff]
        %v5760 = vld [vmem:[#allocation4 + $0xe8] sm:$0xff]
        %v5761 = vld [vmem:[#allocation4 + $0xf0] sm:$0xff]
        %v5762 = vld [vmem:[#allocation4 + $0xf8] sm:$0xff]
        %v5763 = vld [vmem:[#allocation3 + $0x10] sm:$0xff]
        %v5764 = vld [vmem:[#allocation3 + $0x18] sm:$0xff]
        %v5765 = vld [vmem:[#allocation3 + $0x20] sm:$0xff]
        %v5766 = vld [vmem:[#allocation3 + $0x28] sm:$0xff]
        %v5767 = vld [vmem:[#allocation3 + $0x30] sm:$0xff]
        %v5768 = vld [vmem:[#allocation3 + $0x38] sm:$0xff]
        %v5769 = vld [vmem:[#allocation3 + $0x40] sm:$0xff]
        %v5770 = vld [vmem:[#allocation3 + $0x48] sm:$0xff]
        %v5771 = vld [vmem:[#allocation3 + $0x50] sm:$0xff]
        %v5772 = vld [vmem:[#allocation3 + $0x58] sm:$0xff]
        %v5773 = vld [vmem:[#allocation3 + $0x60] sm:$0xff]
        %v5774 = vld [vmem:[#allocation3 + $0x68] sm:$0xff]
        %v5775 = vld [vmem:[#allocation3 + $0x70] sm:$0xff]
        %v5776 = vld [vmem:[#allocation3 + $0x78] sm:$0xff]
        %v5777 = vld [vmem:[#allocation3 + $0x80] sm:$0xff]
        %v5778 = vld [vmem:[#allocation3 + $0x88] sm:$0xff]
        %s5779 = scalar_lea.vmem %s3, 448
        %v5780 = vld [vmem:[%s5779] sm:$0xf]
        %v5781 = vld [vmem:[%s5779 + $0x4] sm:$0xf]
        %v5782 = vld [vmem:[%s5779 + $0x8] sm:$0xf]
        %v5783 = vld [vmem:[%s5779 + $0xc] sm:$0xf]
        %v5784 = vld [vmem:[%s5779 + $0x10] sm:$0xf]
        %v5785 = vld [vmem:[%s5779 + $0x14] sm:$0xf]
        %v5786 = vld [vmem:[%s5779 + $0x18] sm:$0xf]
        %v5787 = vld [vmem:[%s5779 + $0x1c] sm:$0xf]
        %v5788 = vld [vmem:[%s5779 + $0x20] sm:$0xf]
        %v5789 = vld [vmem:[%s5779 + $0x24] sm:$0xf]
        %v5790 = vld [vmem:[%s5779 + $0x28] sm:$0xf]
        %v5791 = vld [vmem:[%s5779 + $0x2c] sm:$0xf]
        %v5792 = vld [vmem:[%s5779 + $0x30] sm:$0xf]
        %v5793 = vld [vmem:[%s5779 + $0x34] sm:$0xf]
        %v5794 = vld [vmem:[%s5779 + $0x38] sm:$0xf]
        %v5795 = vld [vmem:[%s5779 + $0x3c] sm:$0xf]
        %v5812 = vunpack.c.l.b16 %v5780
        %v5813 = vunpack.c.l.b16 %v5781
        %v5814 = vunpack.c.l.b16 %v5782
        %v5815 = vunpack.c.l.b16 %v5783
        %v5816 = vunpack.c.l.b16 %v5784
        %v5817 = vunpack.c.l.b16 %v5785
        %v5818 = vunpack.c.l.b16 %v5786
        %v5819 = vunpack.c.l.b16 %v5787
        %v5820 = vunpack.c.l.b16 %v5788
        %v5821 = vunpack.c.l.b16 %v5789
        %v5822 = vunpack.c.l.b16 %v5790
        %v5823 = vunpack.c.l.b16 %v5791
        %v5824 = vunpack.c.l.b16 %v5792
        %v5825 = vunpack.c.l.b16 %v5793
        %v5826 = vunpack.c.l.b16 %v5794
        %v5827 = vunpack.c.l.b16 %v5795
        %v5828 = vpack.c.b16 %v5813, %v5812
        %v5829 = vpack.c.b16 %v5815, %v5814
        %v5830 = vpack.c.b16 %v5817, %v5816
        %v5831 = vpack.c.b16 %v5819, %v5818
        %v5832 = vpack.c.b16 %v5821, %v5820
        %v5833 = vpack.c.b16 %v5823, %v5822
        %v5834 = vpack.c.b16 %v5825, %v5824
        %v5835 = vpack.c.b16 %v5827, %v5826
        %5844 = vmatprep.subr.bf16.mxu0 0
        %5845 = vmatpush1.bf16.msra.mxu0 %v5828
        %5846 = vmatprep.subr.bf16.mxu0 0
        %5847 = vmatpush1.bf16.msra.mxu0 %v5829
        %5848 = vmatprep.subr.bf16.mxu0 0
        %5849 = vmatpush1.bf16.msra.mxu0 %v5830
        %5850 = vmatprep.subr.bf16.mxu0 0
        %5851 = vmatpush1.bf16.msra.mxu0 %v5831
        %5852 = vmatprep.subr.bf16.mxu0 0
        %5853 = vmatpush1.bf16.msra.mxu0 %v5832
        %5854 = vmatprep.subr.bf16.mxu0 0
        %5855 = vmatpush1.bf16.msra.mxu0 %v5833
        %5856 = vmatprep.subr.bf16.mxu0 0
        %5857 = vmatpush1.bf16.msra.mxu0 %v5834
        %5858 = vmatprep.subr.bf16.mxu0 0
        %5859 = vmatpush1.bf16.msra.mxu0 %v5835
        %5860 = vmatprep.subr.bf16.mxu0 0
        %5861 = vmatpush1.bf16.msra.mxu0 0
        %5862 = vmatprep.subr.bf16.mxu0 0
        %5863 = vmatpush1.bf16.msra.mxu0 0
        %5864 = vmatprep.subr.bf16.mxu0 0
        %5865 = vmatpush1.bf16.msra.mxu0 0
        %5866 = vmatprep.subr.bf16.mxu0 0
        %5867 = vmatpush1.bf16.msra.mxu0 0
        %5868 = vmatprep.subr.bf16.mxu0 0
        %5869 = vmatpush1.bf16.msra.mxu0 0
        %5870 = vmatprep.subr.bf16.mxu0 0
        %5871 = vmatpush1.bf16.msra.mxu0 0
        %5872 = vmatprep.subr.bf16.mxu0 0
        %5873 = vmatpush1.bf16.msra.mxu0 0
        %5874 = vmatprep.subr.bf16.mxu0 0
        %5875 = vmatpush1.bf16.msra.mxu0 0
        %5876 = vmatprep.mubr.bf16.mxu0 0
        %5877 = vmatmul.mubr.bf16.gmra.mrb[0].mxu0 %v5763
        %v5878 = vpop.f32.mrb[0].mxu0
        %v5879 = vadd.f32 0.0, %v5878
        %v5880 = vpop.f32.mrb[0].mxu0
        %v5881 = vpop.f32.mrb[0].mxu0
        %v5882 = vadd.f32 0.0, %v5881
        %v5883 = vpop.f32.mrb[0].mxu0
        %5884 = vmatprep.mubr.bf16.mxu0 0
        %5885 = vmatmul.mubr.bf16.gmra.mrb[0].mxu0 %v5764
        %v5886 = vpop.f32.mrb[0].mxu0
        %v5887 = vadd.f32 0.0, %v5886
        %v5888 = vpop.f32.mrb[0].mxu0
        %v5889 = vpop.f32.mrb[0].mxu0
        %v5890 = vadd.f32 0.0, %v5889
        %v5891 = vpop.f32.mrb[0].mxu0
        %5892 = vmatprep.mubr.bf16.mxu0 0
        %5893 = vmatmul.mubr.bf16.gmra.mrb[0].mxu0 %v5765
        %v5894 = vpop.f32.mrb[0].mxu0
        %v5895 = vadd.f32 0.0, %v5894
        %v5896 = vpop.f32.mrb[0].mxu0
        %v5897 = vpop.f32.mrb[0].mxu0
        %v5898 = vadd.f32 0.0, %v5897
        %v5899 = vpop.f32.mrb[0].mxu0
        %5900 = vmatprep.mubr.bf16.mxu0 0
        %5901 = vmatmul.mubr.bf16.gmra.mrb[0].mxu0 %v5766
        %v5902 = vpop.f32.mrb[0].mxu0
        %v5903 = vadd.f32 0.0, %v5902
        %v5904 = vpop.f32.mrb[0].mxu0
        %v5905 = vpop.f32.mrb[0].mxu0
        %v5906 = vadd.f32 0.0, %v5905
        %v5907 = vpop.f32.mrb[0].mxu0
        %5908 = vmatprep.mubr.bf16.mxu0 0
        %5909 = vmatmul.mubr.bf16.gmra.mrb[0].mxu0 %v5767
        %v5910 = vpop.f32.mrb[0].mxu0
        %v5911 = vadd.f32 0.0, %v5910
        %v5912 = vpop.f32.mrb[0].mxu0
        %v5913 = vpop.f32.mrb[0].mxu0
        %v5914 = vadd.f32 0.0, %v5913
        %v5915 = vpop.f32.mrb[0].mxu0
        %5916 = vmatprep.mubr.bf16.mxu0 0
        %5917 = vmatmul.mubr.bf16.gmra.mrb[0].mxu0 %v5768
        %v5918 = vpop.f32.mrb[0].mxu0
        %v5919 = vadd.f32 0.0, %v5918
        %v5920 = vpop.f32.mrb[0].mxu0
        %v5921 = vpop.f32.mrb[0].mxu0
        %v5922 = vadd.f32 0.0, %v5921
        %v5923 = vpop.f32.mrb[0].mxu0
        %5924 = vmatprep.mubr.bf16.mxu0 0
        %5925 = vmatmul.mubr.bf16.gmra.mrb[0].mxu0 %v5769
        %v5926 = vpop.f32.mrb[0].mxu0
        %v5927 = vadd.f32 0.0, %v5926
        %v5928 = vpop.f32.mrb[0].mxu0
        %v5929 = vpop.f32.mrb[0].mxu0
        %v5930 = vadd.f32 0.0, %v5929
        %v5931 = vpop.f32.mrb[0].mxu0
        %5932 = vmatprep.mubr.bf16.mxu0 0
        %5933 = vmatmul.mubr.bf16.gmra.mrb[0].mxu0 %v5770
        %v5934 = vpop.f32.mrb[0].mxu0
        %v5935 = vadd.f32 0.0, %v5934
        %v5936 = vpop.f32.mrb[0].mxu0
        %v5937 = vpop.f32.mrb[0].mxu0
        %v5938 = vadd.f32 0.0, %v5937
        %v5939 = vpop.f32.mrb[0].mxu0
        %5940 = vmatprep.mubr.bf16.mxu0 0
        %5941 = vmatmul.mubr.bf16.gmra.mrb[0].mxu0 %v5771
        %v5942 = vpop.f32.mrb[0].mxu0
        %v5943 = vadd.f32 0.0, %v5942
        %v5944 = vpop.f32.mrb[0].mxu0
        %v5945 = vpop.f32.mrb[0].mxu0
        %v5946 = vadd.f32 0.0, %v5945
        %v5947 = vpop.f32.mrb[0].mxu0
        %5948 = vmatprep.mubr.bf16.mxu0 0
        %5949 = vmatmul.mubr.bf16.gmra.mrb[0].mxu0 %v5772
        %v5950 = vpop.f32.mrb[0].mxu0
        %v5951 = vadd.f32 0.0, %v5950
        %v5952 = vpop.f32.mrb[0].mxu0
        %v5953 = vpop.f32.mrb[0].mxu0
        %v5954 = vadd.f32 0.0, %v5953
        %v5955 = vpop.f32.mrb[0].mxu0
        %5956 = vmatprep.mubr.bf16.mxu0 0
        %5957 = vmatmul.mubr.bf16.gmra.mrb[0].mxu0 %v5773
        %v5958 = vpop.f32.mrb[0].mxu0
        %v5959 = vadd.f32 0.0, %v5958
        %v5960 = vpop.f32.mrb[0].mxu0
        %v5961 = vpop.f32.mrb[0].mxu0
        %v5962 = vadd.f32 0.0, %v5961
        %v5963 = vpop.f32.mrb[0].mxu0
        %5964 = vmatprep.mubr.bf16.mxu0 0
        %5965 = vmatmul.mubr.bf16.gmra.mrb[0].mxu0 %v5774
        %v5966 = vpop.f32.mrb[0].mxu0
        %v5967 = vadd.f32 0.0, %v5966
        %v5968 = vpop.f32.mrb[0].mxu0
        %v5969 = vpop.f32.mrb[0].mxu0
        %v5970 = vadd.f32 0.0, %v5969
        %v5971 = vpop.f32.mrb[0].mxu0
        %5972 = vmatprep.mubr.bf16.mxu0 0
        %5973 = vmatmul.mubr.bf16.gmra.mrb[0].mxu0 %v5775
        %v5974 = vpop.f32.mrb[0].mxu0
        %v5975 = vadd.f32 0.0, %v5974
        %v5976 = vpop.f32.mrb[0].mxu0
        %v5977 = vpop.f32.mrb[0].mxu0
        %v5978 = vadd.f32 0.0, %v5977
        %v5979 = vpop.f32.mrb[0].mxu0
        %5980 = vmatprep.mubr.bf16.mxu0 0
        %5981 = vmatmul.mubr.bf16.gmra.mrb[0].mxu0 %v5776
        %v5982 = vpop.f32.mrb[0].mxu0
        %v5983 = vadd.f32 0.0, %v5982
        %v5984 = vpop.f32.mrb[0].mxu0
        %v5985 = vpop.f32.mrb[0].mxu0
        %v5986 = vadd.f32 0.0, %v5985
        %v5987 = vpop.f32.mrb[0].mxu0
        %5988 = vmatprep.mubr.bf16.mxu0 0
        %5989 = vmatmul.mubr.bf16.gmra.mrb[0].mxu0 %v5777
        %v5990 = vpop.f32.mrb[0].mxu0
        %v5991 = vadd.f32 0.0, %v5990
        %v5992 = vpop.f32.mrb[0].mxu0
        %v5993 = vpop.f32.mrb[0].mxu0
        %v5994 = vadd.f32 0.0, %v5993
        %v5995 = vpop.f32.mrb[0].mxu0
        %5996 = vmatprep.mubr.bf16.mxu0 0
        %5997 = vmatmul.mubr.bf16.gmra.mrb[0].mxu0 %v5778
        %v5998 = vpop.f32.mrb[0].mxu0
        %v5999 = vadd.f32 0.0, %v5998
        %v6000 = vpop.f32.mrb[0].mxu0
        %v6001 = vpop.f32.mrb[0].mxu0
        %v6002 = vadd.f32 0.0, %v6001
        %v6003 = vpop.f32.mrb[0].mxu0
        %6004 = vdwg.mxu0
        %v6005 = vadd.f32 %v5731, %v5879
        %v6006 = vadd.f32 %v5732, %v5882
        %v6007 = vadd.f32 %v5733, %v5887
        %v6008 = vadd.f32 %v5734, %v5890
        %v6009 = vadd.f32 %v5735, %v5895
        %v6010 = vadd.f32 %v5736, %v5898
        %v6011 = vadd.f32 %v5737, %v5903
        %v6012 = vadd.f32 %v5738, %v5906
        %v6013 = vadd.f32 %v5739, %v5911
        %v6014 = vadd.f32 %v5740, %v5914
        %v6015 = vadd.f32 %v5741, %v5919
        %v6016 = vadd.f32 %v5742, %v5922
        %v6017 = vadd.f32 %v5743, %v5927
        %v6018 = vadd.f32 %v5744, %v5930
        %v6019 = vadd.f32 %v5745, %v5935
        %v6020 = vadd.f32 %v5746, %v5938
        %v6021 = vadd.f32 %v5747, %v5943
        %v6022 = vadd.f32 %v5748, %v5946
        %v6023 = vadd.f32 %v5749, %v5951
        %v6024 = vadd.f32 %v5750, %v5954
        %v6025 = vadd.f32 %v5751, %v5959
        %v6026 = vadd.f32 %v5752, %v5962
        %v6027 = vadd.f32 %v5753, %v5967
        %v6028 = vadd.f32 %v5754, %v5970
        %v6029 = vadd.f32 %v5755, %v5975
        %v6030 = vadd.f32 %v5756, %v5978
        %v6031 = vadd.f32 %v5757, %v5983
        %v6032 = vadd.f32 %v5758, %v5986
        %v6033 = vadd.f32 %v5759, %v5991
        %v6034 = vadd.f32 %v5760, %v5994
        %v6035 = vadd.f32 %v5761, %v5999
        %v6036 = vadd.f32 %v5762, %v6002
        %6037 = vst [vmem:[#allocation4] sm:$0xff] %v6005
        %6038 = vst [vmem:[#allocation4 + $0x8] sm:$0xff] %v6006
        %6039 = vst [vmem:[#allocation4 + $0x10] sm:$0xff] %v6007
        %6040 = vst [vmem:[#allocation4 + $0x18] sm:$0xff] %v6008
        %6041 = vst [vmem:[#allocation4 + $0x20] sm:$0xff] %v6009
        %6042 = vst [vmem:[#allocation4 + $0x28] sm:$0xff] %v6010
        %6043 = vst [vmem:[#allocation4 + $0x30] sm:$0xff] %v6011
        %6044 = vst [vmem:[#allocation4 + $0x38] sm:$0xff] %v6012
        %6045 = vst [vmem:[#allocation4 + $0x40] sm:$0xff] %v6013
        %6046 = vst [vmem:[#allocation4 + $0x48] sm:$0xff] %v6014
        %6047 = vst [vmem:[#allocation4 + $0x50] sm:$0xff] %v6015
        %6048 = vst [vmem:[#allocation4 + $0x58] sm:$0xff] %v6016
        %6049 = vst [vmem:[#allocation4 + $0x60] sm:$0xff] %v6017
        %6050 = vst [vmem:[#allocation4 + $0x68] sm:$0xff] %v6018
        %6051 = vst [vmem:[#allocation4 + $0x70] sm:$0xff] %v6019
        %6052 = vst [vmem:[#allocation4 + $0x78] sm:$0xff] %v6020
        %6053 = vst [vmem:[#allocation4 + $0x80] sm:$0xff] %v6021
        %6054 = vst [vmem:[#allocation4 + $0x88] sm:$0xff] %v6022
        %6055 = vst [vmem:[#allocation4 + $0x90] sm:$0xff] %v6023
        %6056 = vst [vmem:[#allocation4 + $0x98] sm:$0xff] %v6024
        %6057 = vst [vmem:[#allocation4 + $0xa0] sm:$0xff] %v6025
        %6058 = vst [vmem:[#allocation4 + $0xa8] sm:$0xff] %v6026
        %6059 = vst [vmem:[#allocation4 + $0xb0] sm:$0xff] %v6027
        %6060 = vst [vmem:[#allocation4 + $0xb8] sm:$0xff] %v6028
        %6061 = vst [vmem:[#allocation4 + $0xc0] sm:$0xff] %v6029
        %6062 = vst [vmem:[#allocation4 + $0xc8] sm:$0xff] %v6030
        %6063 = vst [vmem:[#allocation4 + $0xd0] sm:$0xff] %v6031
        %6064 = vst [vmem:[#allocation4 + $0xd8] sm:$0xff] %v6032
        %6065 = vst [vmem:[#allocation4 + $0xe0] sm:$0xff] %v6033
        %6066 = vst [vmem:[#allocation4 + $0xe8] sm:$0xff] %v6034
        %6067 = vst [vmem:[#allocation4 + $0xf0] sm:$0xff] %v6035
        %6068 = vst [vmem:[#allocation4 + $0xf8] sm:$0xff] %v6036
        %v6069 = vld [vmem:[#allocation2 + $0x2] sm:$0xff]
        %v6070 = vld [vmem:[#allocation2 + $0xa] sm:$0xff]
        %v6071 = vld [vmem:[#allocation2 + $0x1a] sm:$0xff]
        %v6072 = vld [vmem:[#allocation2 + $0x22] sm:$0xff]
        %v6073 = vld [vmem:[#allocation2 + $0x32] sm:$0xff]
        %v6074 = vld [vmem:[#allocation2 + $0x3a] sm:$0xff]
        %v6075 = vld [vmem:[#allocation2 + $0x4a] sm:$0xff]
        %v6076 = vld [vmem:[#allocation2 + $0x52] sm:$0xff]
        %v6077 = vld [vmem:[#allocation2 + $0x62] sm:$0xff]
        %v6078 = vld [vmem:[#allocation2 + $0x6a] sm:$0xff]
        %v6079 = vld [vmem:[#allocation2 + $0x7a] sm:$0xff]
        %v6080 = vld [vmem:[#allocation2 + $0x82] sm:$0xff]
        %v6081 = vld [vmem:[#allocation2 + $0x92] sm:$0xff]
        %v6082 = vld [vmem:[#allocation2 + $0x9a] sm:$0xff]
        %v6083 = vld [vmem:[#allocation2 + $0xaa] sm:$0xff]
        %v6084 = vld [vmem:[#allocation2 + $0xb2] sm:$0xff]
        %v6085 = vld [vmem:[#allocation2 + $0xc2] sm:$0xff]
        %v6086 = vld [vmem:[#allocation2 + $0xca] sm:$0xff]
        %v6087 = vld [vmem:[#allocation2 + $0xda] sm:$0xff]
        %v6088 = vld [vmem:[#allocation2 + $0xe2] sm:$0xff]
        %v6089 = vld [vmem:[#allocation2 + $0xf2] sm:$0xff]
        %v6090 = vld [vmem:[#allocation2 + $0xfa] sm:$0xff]
        %v6091 = vld [vmem:[#allocation2 + $0x10a] sm:$0xff]
        %v6092 = vld [vmem:[#allocation2 + $0x112] sm:$0xff]
        %v6093 = vld [vmem:[#allocation2 + $0x122] sm:$0xff]
        %v6094 = vld [vmem:[#allocation2 + $0x12a] sm:$0xff]
        %v6095 = vld [vmem:[#allocation2 + $0x13a] sm:$0xff]
        %v6096 = vld [vmem:[#allocation2 + $0x142] sm:$0xff]
        %v6097 = vld [vmem:[#allocation2 + $0x152] sm:$0xff]
        %v6098 = vld [vmem:[#allocation2 + $0x15a] sm:$0xff]
        %v6099 = vld [vmem:[#allocation2 + $0x16a] sm:$0xff]
        %v6100 = vld [vmem:[#allocation2 + $0x172] sm:$0xff]
        %v6101 = vld [vmem:[#allocation2 + $0x182] sm:$0xff]
        %v6102 = vld [vmem:[#allocation2 + $0x18a] sm:$0xff]
        %v6103 = vld [vmem:[#allocation2 + $0x19a] sm:$0xff]
        %v6104 = vld [vmem:[#allocation2 + $0x1a2] sm:$0xff]
        %v6105 = vpack.c.bf16 %v6070, %v6069
        %v6106 = vpack.c.bf16 %v6072, %v6071
        %v6107 = vpack.c.bf16 %v6074, %v6073
        %v6108 = vpack.c.bf16 %v6076, %v6075
        %v6109 = vpack.c.bf16 %v6078, %v6077
        %v6110 = vpack.c.bf16 %v6080, %v6079
        %v6111 = vpack.c.bf16 %v6082, %v6081
        %v6112 = vpack.c.bf16 %v6084, %v6083
        %v6113 = vpack.c.bf16 %v6086, %v6085
        %v6114 = vpack.c.bf16 %v6088, %v6087
        %v6115 = vpack.c.bf16 %v6090, %v6089
        %v6116 = vpack.c.bf16 %v6092, %v6091
        %v6117 = vpack.c.bf16 %v6094, %v6093
        %v6118 = vpack.c.bf16 %v6096, %v6095
        %v6119 = vpack.c.bf16 %v6098, %v6097
        %v6120 = vpack.c.bf16 %v6100, %v6099
        %v6121 = vpack.c.bf16 %v6102, %v6101
        %v6122 = vpack.c.bf16 %v6104, %v6103
        %6123 = vst [vmem:[#allocation3] sm:$0xff] %v6105
        %6124 = vst [vmem:[#allocation3 + $0x8] sm:$0xff] %v6106
        %6125 = vst [vmem:[#allocation3 + $0x10] sm:$0xff] %v6107
        %6126 = vst [vmem:[#allocation3 + $0x18] sm:$0xff] %v6108
        %6127 = vst [vmem:[#allocation3 + $0x20] sm:$0xff] %v6109
        %6128 = vst [vmem:[#allocation3 + $0x28] sm:$0xff] %v6110
        %6129 = vst [vmem:[#allocation3 + $0x30] sm:$0xff] %v6111
        %6130 = vst [vmem:[#allocation3 + $0x38] sm:$0xff] %v6112
        %6131 = vst [vmem:[#allocation3 + $0x40] sm:$0xff] %v6113
        %6132 = vst [vmem:[#allocation3 + $0x48] sm:$0xff] %v6114
        %6133 = vst [vmem:[#allocation3 + $0x50] sm:$0xff] %v6115
        %6134 = vst [vmem:[#allocation3 + $0x58] sm:$0xff] %v6116
        %6135 = vst [vmem:[#allocation3 + $0x60] sm:$0xff] %v6117
        %6136 = vst [vmem:[#allocation3 + $0x68] sm:$0xff] %v6118
        %6137 = vst [vmem:[#allocation3 + $0x70] sm:$0xff] %v6119
        %6138 = vst [vmem:[#allocation3 + $0x78] sm:$0xff] %v6120
        %6139 = vst [vmem:[#allocation3 + $0x80] sm:$0xff] %v6121
        %6140 = vst [vmem:[#allocation3 + $0x88] sm:$0xff] %v6122
        %v6141 = vld [vmem:[#allocation4] sm:$0xff]
        %v6142 = vld [vmem:[#allocation4 + $0x8] sm:$0xff]
        %v6143 = vld [vmem:[#allocation4 + $0x10] sm:$0xff]
        %v6144 = vld [vmem:[#allocation4 + $0x18] sm:$0xff]
        %v6145 = vld [vmem:[#allocation4 + $0x20] sm:$0xff]
        %v6146 = vld [vmem:[#allocation4 + $0x28] sm:$0xff]
        %v6147 = vld [vmem:[#allocation4 + $0x30] sm:$0xff]
        %v6148 = vld [vmem:[#allocation4 + $0x38] sm:$0xff]
        %v6149 = vld [vmem:[#allocation4 + $0x40] sm:$0xff]
        %v6150 = vld [vmem:[#allocation4 + $0x48] sm:$0xff]
        %v6151 = vld [vmem:[#allocation4 + $0x50] sm:$0xff]
        %v6152 = vld [vmem:[#allocation4 + $0x58] sm:$0xff]
        %v6153 = vld [vmem:[#allocation4 + $0x60] sm:$0xff]
        %v6154 = vld [vmem:[#allocation4 + $0x68] sm:$0xff]
        %v6155 = vld [vmem:[#allocation4 + $0x70] sm:$0xff]
        %v6156 = vld [vmem:[#allocation4 + $0x78] sm:$0xff]
        %v6157 = vld [vmem:[#allocation4 + $0x80] sm:$0xff]
        %v6158 = vld [vmem:[#allocation4 + $0x88] sm:$0xff]
        %v6159 = vld [vmem:[#allocation4 + $0x90] sm:$0xff]
        %v6160 = vld [vmem:[#allocation4 + $0x98] sm:$0xff]
        %v6161 = vld [vmem:[#allocation4 + $0xa0] sm:$0xff]
        %v6162 = vld [vmem:[#allocation4 + $0xa8] sm:$0xff]
        %v6163 = vld [vmem:[#allocation4 + $0xb0] sm:$0xff]
        %v6164 = vld [vmem:[#allocation4 + $0xb8] sm:$0xff]
        %v6165 = vld [vmem:[#allocation4 + $0xc0] sm:$0xff]
        %v6166 = vld [vmem:[#allocation4 + $0xc8] sm:$0xff]
        %v6167 = vld [vmem:[#allocation4 + $0xd0] sm:$0xff]
        %v6168 = vld [vmem:[#allocation4 + $0xd8] sm:$0xff]
        %v6169 = vld [vmem:[#allocation4 + $0xe0] sm:$0xff]
        %v6170 = vld [vmem:[#allocation4 + $0xe8] sm:$0xff]
        %v6171 = vld [vmem:[#allocation4 + $0xf0] sm:$0xff]
        %v6172 = vld [vmem:[#allocation4 + $0xf8] sm:$0xff]
        %v6173 = vld [vmem:[#allocation3] sm:$0xff]
        %v6174 = vld [vmem:[#allocation3 + $0x8] sm:$0xff]
        %v6175 = vld [vmem:[#allocation3 + $0x10] sm:$0xff]
        %v6176 = vld [vmem:[#allocation3 + $0x18] sm:$0xff]
        %v6177 = vld [vmem:[#allocation3 + $0x20] sm:$0xff]
        %v6178 = vld [vmem:[#allocation3 + $0x28] sm:$0xff]
        %v6179 = vld [vmem:[#allocation3 + $0x30] sm:$0xff]
        %v6180 = vld [vmem:[#allocation3 + $0x38] sm:$0xff]
        %v6181 = vld [vmem:[#allocation3 + $0x40] sm:$0xff]
        %v6182 = vld [vmem:[#allocation3 + $0x48] sm:$0xff]
        %v6183 = vld [vmem:[#allocation3 + $0x50] sm:$0xff]
        %v6184 = vld [vmem:[#allocation3 + $0x58] sm:$0xff]
        %v6185 = vld [vmem:[#allocation3 + $0x60] sm:$0xff]
        %v6186 = vld [vmem:[#allocation3 + $0x68] sm:$0xff]
        %v6187 = vld [vmem:[#allocation3 + $0x70] sm:$0xff]
        %v6188 = vld [vmem:[#allocation3 + $0x78] sm:$0xff]
        %s6189 = scalar_lea.vmem %s3, 128
        %v6190 = vld [vmem:[%s6189] sm:$0xf]
        %v6191 = vld [vmem:[%s6189 + $0x4] sm:$0xf]
        %v6192 = vld [vmem:[%s6189 + $0x8] sm:$0xf]
        %v6193 = vld [vmem:[%s6189 + $0xc] sm:$0xf]
        %v6194 = vld [vmem:[%s6189 + $0x10] sm:$0xf]
        %v6195 = vld [vmem:[%s6189 + $0x14] sm:$0xf]
        %v6196 = vld [vmem:[%s6189 + $0x18] sm:$0xf]
        %v6197 = vld [vmem:[%s6189 + $0x1c] sm:$0xf]
        %v6198 = vld [vmem:[%s6189 + $0x20] sm:$0xf]
        %v6199 = vld [vmem:[%s6189 + $0x24] sm:$0xf]
        %v6200 = vld [vmem:[%s6189 + $0x28] sm:$0xf]
        %v6201 = vld [vmem:[%s6189 + $0x2c] sm:$0xf]
        %v6202 = vld [vmem:[%s6189 + $0x30] sm:$0xf]
        %v6203 = vld [vmem:[%s6189 + $0x34] sm:$0xf]
        %v6204 = vld [vmem:[%s6189 + $0x38] sm:$0xf]
        %v6205 = vld [vmem:[%s6189 + $0x3c] sm:$0xf]
        %v6222 = vunpack.c.l.b16 %v6190
        %v6223 = vunpack.c.l.b16 %v6191
        %v6224 = vunpack.c.l.b16 %v6192
        %v6225 = vunpack.c.l.b16 %v6193
        %v6226 = vunpack.c.l.b16 %v6194
        %v6227 = vunpack.c.l.b16 %v6195
        %v6228 = vunpack.c.l.b16 %v6196
        %v6229 = vunpack.c.l.b16 %v6197
        %v6230 = vunpack.c.l.b16 %v6198
        %v6231 = vunpack.c.l.b16 %v6199
        %v6232 = vunpack.c.l.b16 %v6200
        %v6233 = vunpack.c.l.b16 %v6201
        %v6234 = vunpack.c.l.b16 %v6202
        %v6235 = vunpack.c.l.b16 %v6203
        %v6236 = vunpack.c.l.b16 %v6204
        %v6237 = vunpack.c.l.b16 %v6205
        %v6238 = vpack.c.b16 %v6223, %v6222
        %v6239 = vpack.c.b16 %v6225, %v6224
        %v6240 = vpack.c.b16 %v6227, %v6226
        %v6241 = vpack.c.b16 %v6229, %v6228
        %v6242 = vpack.c.b16 %v6231, %v6230
        %v6243 = vpack.c.b16 %v6233, %v6232
        %v6244 = vpack.c.b16 %v6235, %v6234
        %v6245 = vpack.c.b16 %v6237, %v6236
        %6254 = vmatprep.subr.bf16.mxu0 0
        %6255 = vmatpush1.bf16.msra.mxu0 %v6238
        %6256 = vmatprep.subr.bf16.mxu0 0
        %6257 = vmatpush1.bf16.msra.mxu0 %v6239
        %6258 = vmatprep.subr.bf16.mxu0 0
        %6259 = vmatpush1.bf16.msra.mxu0 %v6240
        %6260 = vmatprep.subr.bf16.mxu0 0
        %6261 = vmatpush1.bf16.msra.mxu0 %v6241
        %6262 = vmatprep.subr.bf16.mxu0 0
        %6263 = vmatpush1.bf16.msra.mxu0 %v6242
        %6264 = vmatprep.subr.bf16.mxu0 0
        %6265 = vmatpush1.bf16.msra.mxu0 %v6243
        %6266 = vmatprep.subr.bf16.mxu0 0
        %6267 = vmatpush1.bf16.msra.mxu0 %v6244
        %6268 = vmatprep.subr.bf16.mxu0 0
        %6269 = vmatpush1.bf16.msra.mxu0 %v6245
        %6270 = vmatprep.subr.bf16.mxu0 0
        %6271 = vmatpush1.bf16.msra.mxu0 0
        %6272 = vmatprep.subr.bf16.mxu0 0
        %6273 = vmatpush1.bf16.msra.mxu0 0
        %6274 = vmatprep.subr.bf16.mxu0 0
        %6275 = vmatpush1.bf16.msra.mxu0 0
        %6276 = vmatprep.subr.bf16.mxu0 0
        %6277 = vmatpush1.bf16.msra.mxu0 0
        %6278 = vmatprep.subr.bf16.mxu0 0
        %6279 = vmatpush1.bf16.msra.mxu0 0
        %6280 = vmatprep.subr.bf16.mxu0 0
        %6281 = vmatpush1.bf16.msra.mxu0 0
        %6282 = vmatprep.subr.bf16.mxu0 0
        %6283 = vmatpush1.bf16.msra.mxu0 0
        %6284 = vmatprep.subr.bf16.mxu0 0
        %6285 = vmatpush1.bf16.msra.mxu0 0
        %6286 = vmatprep.mubr.bf16.mxu0 0
        %6287 = vmatmul.mubr.bf16.gmra.mrb[0].mxu0 %v6173
        %v6288 = vpop.f32.mrb[0].mxu0
        %v6289 = vadd.f32 0.0, %v6288
        %v6290 = vpop.f32.mrb[0].mxu0
        %v6291 = vpop.f32.mrb[0].mxu0
        %v6292 = vadd.f32 0.0, %v6291
        %v6293 = vpop.f32.mrb[0].mxu0
        %6294 = vmatprep.mubr.bf16.mxu0 0
        %6295 = vmatmul.mubr.bf16.gmra.mrb[0].mxu0 %v6174
        %v6296 = vpop.f32.mrb[0].mxu0
        %v6297 = vadd.f32 0.0, %v6296
        %v6298 = vpop.f32.mrb[0].mxu0
        %v6299 = vpop.f32.mrb[0].mxu0
        %v6300 = vadd.f32 0.0, %v6299
        %v6301 = vpop.f32.mrb[0].mxu0
        %6302 = vmatprep.mubr.bf16.mxu0 0
        %6303 = vmatmul.mubr.bf16.gmra.mrb[0].mxu0 %v6175
        %v6304 = vpop.f32.mrb[0].mxu0
        %v6305 = vadd.f32 0.0, %v6304
        %v6306 = vpop.f32.mrb[0].mxu0
        %v6307 = vpop.f32.mrb[0].mxu0
        %v6308 = vadd.f32 0.0, %v6307
        %v6309 = vpop.f32.mrb[0].mxu0
        %6310 = vmatprep.mubr.bf16.mxu0 0
        %6311 = vmatmul.mubr.bf16.gmra.mrb[0].mxu0 %v6176
        %v6312 = vpop.f32.mrb[0].mxu0
        %v6313 = vadd.f32 0.0, %v6312
        %v6314 = vpop.f32.mrb[0].mxu0
        %v6315 = vpop.f32.mrb[0].mxu0
        %v6316 = vadd.f32 0.0, %v6315
        %v6317 = vpop.f32.mrb[0].mxu0
        %6318 = vmatprep.mubr.bf16.mxu0 0
        %6319 = vmatmul.mubr.bf16.gmra.mrb[0].mxu0 %v6177
        %v6320 = vpop.f32.mrb[0].mxu0
        %v6321 = vadd.f32 0.0, %v6320
        %v6322 = vpop.f32.mrb[0].mxu0
        %v6323 = vpop.f32.mrb[0].mxu0
        %v6324 = vadd.f32 0.0, %v6323
        %v6325 = vpop.f32.mrb[0].mxu0
        %6326 = vmatprep.mubr.bf16.mxu0 0
        %6327 = vmatmul.mubr.bf16.gmra.mrb[0].mxu0 %v6178
        %v6328 = vpop.f32.mrb[0].mxu0
        %v6329 = vadd.f32 0.0, %v6328
        %v6330 = vpop.f32.mrb[0].mxu0
        %v6331 = vpop.f32.mrb[0].mxu0
        %v6332 = vadd.f32 0.0, %v6331
        %v6333 = vpop.f32.mrb[0].mxu0
        %6334 = vmatprep.mubr.bf16.mxu0 0
        %6335 = vmatmul.mubr.bf16.gmra.mrb[0].mxu0 %v6179
        %v6336 = vpop.f32.mrb[0].mxu0
        %v6337 = vadd.f32 0.0, %v6336
        %v6338 = vpop.f32.mrb[0].mxu0
        %v6339 = vpop.f32.mrb[0].mxu0
        %v6340 = vadd.f32 0.0, %v6339
        %v6341 = vpop.f32.mrb[0].mxu0
        %6342 = vmatprep.mubr.bf16.mxu0 0
        %6343 = vmatmul.mubr.bf16.gmra.mrb[0].mxu0 %v6180
        %v6344 = vpop.f32.mrb[0].mxu0
        %v6345 = vadd.f32 0.0, %v6344
        %v6346 = vpop.f32.mrb[0].mxu0
        %v6347 = vpop.f32.mrb[0].mxu0
        %v6348 = vadd.f32 0.0, %v6347
        %v6349 = vpop.f32.mrb[0].mxu0
        %6350 = vmatprep.mubr.bf16.mxu0 0
        %6351 = vmatmul.mubr.bf16.gmra.mrb[0].mxu0 %v6181
        %v6352 = vpop.f32.mrb[0].mxu0
        %v6353 = vadd.f32 0.0, %v6352
        %v6354 = vpop.f32.mrb[0].mxu0
        %v6355 = vpop.f32.mrb[0].mxu0
        %v6356 = vadd.f32 0.0, %v6355
        %v6357 = vpop.f32.mrb[0].mxu0
        %6358 = vmatprep.mubr.bf16.mxu0 0
        %6359 = vmatmul.mubr.bf16.gmra.mrb[0].mxu0 %v6182
        %v6360 = vpop.f32.mrb[0].mxu0
        %v6361 = vadd.f32 0.0, %v6360
        %v6362 = vpop.f32.mrb[0].mxu0
        %v6363 = vpop.f32.mrb[0].mxu0
        %v6364 = vadd.f32 0.0, %v6363
        %v6365 = vpop.f32.mrb[0].mxu0
        %6366 = vmatprep.mubr.bf16.mxu0 0
        %6367 = vmatmul.mubr.bf16.gmra.mrb[0].mxu0 %v6183
        %v6368 = vpop.f32.mrb[0].mxu0
        %v6369 = vadd.f32 0.0, %v6368
        %v6370 = vpop.f32.mrb[0].mxu0
        %v6371 = vpop.f32.mrb[0].mxu0
        %v6372 = vadd.f32 0.0, %v6371
        %v6373 = vpop.f32.mrb[0].mxu0
        %6374 = vmatprep.mubr.bf16.mxu0 0
        %6375 = vmatmul.mubr.bf16.gmra.mrb[0].mxu0 %v6184
        %v6376 = vpop.f32.mrb[0].mxu0
        %v6377 = vadd.f32 0.0, %v6376
        %v6378 = vpop.f32.mrb[0].mxu0
        %v6379 = vpop.f32.mrb[0].mxu0
        %v6380 = vadd.f32 0.0, %v6379
        %v6381 = vpop.f32.mrb[0].mxu0
        %6382 = vmatprep.mubr.bf16.mxu0 0
        %6383 = vmatmul.mubr.bf16.gmra.mrb[0].mxu0 %v6185
        %v6384 = vpop.f32.mrb[0].mxu0
        %v6385 = vadd.f32 0.0, %v6384
        %v6386 = vpop.f32.mrb[0].mxu0
        %v6387 = vpop.f32.mrb[0].mxu0
        %v6388 = vadd.f32 0.0, %v6387
        %v6389 = vpop.f32.mrb[0].mxu0
        %6390 = vmatprep.mubr.bf16.mxu0 0
        %6391 = vmatmul.mubr.bf16.gmra.mrb[0].mxu0 %v6186
        %v6392 = vpop.f32.mrb[0].mxu0
        %v6393 = vadd.f32 0.0, %v6392
        %v6394 = vpop.f32.mrb[0].mxu0
        %v6395 = vpop.f32.mrb[0].mxu0
        %v6396 = vadd.f32 0.0, %v6395
        %v6397 = vpop.f32.mrb[0].mxu0
        %6398 = vmatprep.mubr.bf16.mxu0 0
        %6399 = vmatmul.mubr.bf16.gmra.mrb[0].mxu0 %v6187
        %v6400 = vpop.f32.mrb[0].mxu0
        %v6401 = vadd.f32 0.0, %v6400
        %v6402 = vpop.f32.mrb[0].mxu0
        %v6403 = vpop.f32.mrb[0].mxu0
        %v6404 = vadd.f32 0.0, %v6403
        %v6405 = vpop.f32.mrb[0].mxu0
        %6406 = vmatprep.mubr.bf16.mxu0 0
        %6407 = vmatmul.mubr.bf16.gmra.mrb[0].mxu0 %v6188
        %v6408 = vpop.f32.mrb[0].mxu0
        %v6409 = vadd.f32 0.0, %v6408
        %v6410 = vpop.f32.mrb[0].mxu0
        %v6411 = vpop.f32.mrb[0].mxu0
        %v6412 = vadd.f32 0.0, %v6411
        %v6413 = vpop.f32.mrb[0].mxu0
        %6414 = vdwg.mxu0
        %v6415 = vadd.f32 %v6141, %v6289
        %v6416 = vadd.f32 %v6142, %v6292
        %v6417 = vadd.f32 %v6143, %v6297
        %v6418 = vadd.f32 %v6144, %v6300
        %v6419 = vadd.f32 %v6145, %v6305
        %v6420 = vadd.f32 %v6146, %v6308
        %v6421 = vadd.f32 %v6147, %v6313
        %v6422 = vadd.f32 %v6148, %v6316
        %v6423 = vadd.f32 %v6149, %v6321
        %v6424 = vadd.f32 %v6150, %v6324
        %v6425 = vadd.f32 %v6151, %v6329
        %v6426 = vadd.f32 %v6152, %v6332
        %v6427 = vadd.f32 %v6153, %v6337
        %v6428 = vadd.f32 %v6154, %v6340
        %v6429 = vadd.f32 %v6155, %v6345
        %v6430 = vadd.f32 %v6156, %v6348
        %v6431 = vadd.f32 %v6157, %v6353
        %v6432 = vadd.f32 %v6158, %v6356
        %v6433 = vadd.f32 %v6159, %v6361
        %v6434 = vadd.f32 %v6160, %v6364
        %v6435 = vadd.f32 %v6161, %v6369
        %v6436 = vadd.f32 %v6162, %v6372
        %v6437 = vadd.f32 %v6163, %v6377
        %v6438 = vadd.f32 %v6164, %v6380
        %v6439 = vadd.f32 %v6165, %v6385
        %v6440 = vadd.f32 %v6166, %v6388
        %v6441 = vadd.f32 %v6167, %v6393
        %v6442 = vadd.f32 %v6168, %v6396
        %v6443 = vadd.f32 %v6169, %v6401
        %v6444 = vadd.f32 %v6170, %v6404
        %v6445 = vadd.f32 %v6171, %v6409
        %v6446 = vadd.f32 %v6172, %v6412
        %6447 = vst [vmem:[#allocation4] sm:$0xff] %v6415
        %6448 = vst [vmem:[#allocation4 + $0x8] sm:$0xff] %v6416
        %6449 = vst [vmem:[#allocation4 + $0x10] sm:$0xff] %v6417
        %6450 = vst [vmem:[#allocation4 + $0x18] sm:$0xff] %v6418
        %6451 = vst [vmem:[#allocation4 + $0x20] sm:$0xff] %v6419
        %6452 = vst [vmem:[#allocation4 + $0x28] sm:$0xff] %v6420
        %6453 = vst [vmem:[#allocation4 + $0x30] sm:$0xff] %v6421
        %6454 = vst [vmem:[#allocation4 + $0x38] sm:$0xff] %v6422
        %6455 = vst [vmem:[#allocation4 + $0x40] sm:$0xff] %v6423
        %6456 = vst [vmem:[#allocation4 + $0x48] sm:$0xff] %v6424
        %6457 = vst [vmem:[#allocation4 + $0x50] sm:$0xff] %v6425
        %6458 = vst [vmem:[#allocation4 + $0x58] sm:$0xff] %v6426
        %6459 = vst [vmem:[#allocation4 + $0x60] sm:$0xff] %v6427
        %6460 = vst [vmem:[#allocation4 + $0x68] sm:$0xff] %v6428
        %6461 = vst [vmem:[#allocation4 + $0x70] sm:$0xff] %v6429
        %6462 = vst [vmem:[#allocation4 + $0x78] sm:$0xff] %v6430
        %6463 = vst [vmem:[#allocation4 + $0x80] sm:$0xff] %v6431
        %6464 = vst [vmem:[#allocation4 + $0x88] sm:$0xff] %v6432
        %6465 = vst [vmem:[#allocation4 + $0x90] sm:$0xff] %v6433
        %6466 = vst [vmem:[#allocation4 + $0x98] sm:$0xff] %v6434
        %6467 = vst [vmem:[#allocation4 + $0xa0] sm:$0xff] %v6435
        %6468 = vst [vmem:[#allocation4 + $0xa8] sm:$0xff] %v6436
        %6469 = vst [vmem:[#allocation4 + $0xb0] sm:$0xff] %v6437
        %6470 = vst [vmem:[#allocation4 + $0xb8] sm:$0xff] %v6438
        %6471 = vst [vmem:[#allocation4 + $0xc0] sm:$0xff] %v6439
        %6472 = vst [vmem:[#allocation4 + $0xc8] sm:$0xff] %v6440
        %6473 = vst [vmem:[#allocation4 + $0xd0] sm:$0xff] %v6441
        %6474 = vst [vmem:[#allocation4 + $0xd8] sm:$0xff] %v6442
        %6475 = vst [vmem:[#allocation4 + $0xe0] sm:$0xff] %v6443
        %6476 = vst [vmem:[#allocation4 + $0xe8] sm:$0xff] %v6444
        %6477 = vst [vmem:[#allocation4 + $0xf0] sm:$0xff] %v6445
        %6478 = vst [vmem:[#allocation4 + $0xf8] sm:$0xff] %v6446
        %v6479 = vld [vmem:[#allocation4] sm:$0xff]
        %v6480 = vld [vmem:[#allocation4 + $0x8] sm:$0xff]
        %v6481 = vld [vmem:[#allocation4 + $0x10] sm:$0xff]
        %v6482 = vld [vmem:[#allocation4 + $0x18] sm:$0xff]
        %v6483 = vld [vmem:[#allocation4 + $0x20] sm:$0xff]
        %v6484 = vld [vmem:[#allocation4 + $0x28] sm:$0xff]
        %v6485 = vld [vmem:[#allocation4 + $0x30] sm:$0xff]
        %v6486 = vld [vmem:[#allocation4 + $0x38] sm:$0xff]
        %v6487 = vld [vmem:[#allocation4 + $0x40] sm:$0xff]
        %v6488 = vld [vmem:[#allocation4 + $0x48] sm:$0xff]
        %v6489 = vld [vmem:[#allocation4 + $0x50] sm:$0xff]
        %v6490 = vld [vmem:[#allocation4 + $0x58] sm:$0xff]
        %v6491 = vld [vmem:[#allocation4 + $0x60] sm:$0xff]
        %v6492 = vld [vmem:[#allocation4 + $0x68] sm:$0xff]
        %v6493 = vld [vmem:[#allocation4 + $0x70] sm:$0xff]
        %v6494 = vld [vmem:[#allocation4 + $0x78] sm:$0xff]
        %v6495 = vld [vmem:[#allocation4 + $0x80] sm:$0xff]
        %v6496 = vld [vmem:[#allocation4 + $0x88] sm:$0xff]
        %v6497 = vld [vmem:[#allocation4 + $0x90] sm:$0xff]
        %v6498 = vld [vmem:[#allocation4 + $0x98] sm:$0xff]
        %v6499 = vld [vmem:[#allocation4 + $0xa0] sm:$0xff]
        %v6500 = vld [vmem:[#allocation4 + $0xa8] sm:$0xff]
        %v6501 = vld [vmem:[#allocation4 + $0xb0] sm:$0xff]
        %v6502 = vld [vmem:[#allocation4 + $0xb8] sm:$0xff]
        %v6503 = vld [vmem:[#allocation4 + $0xc0] sm:$0xff]
        %v6504 = vld [vmem:[#allocation4 + $0xc8] sm:$0xff]
        %v6505 = vld [vmem:[#allocation4 + $0xd0] sm:$0xff]
        %v6506 = vld [vmem:[#allocation4 + $0xd8] sm:$0xff]
        %v6507 = vld [vmem:[#allocation4 + $0xe0] sm:$0xff]
        %v6508 = vld [vmem:[#allocation4 + $0xe8] sm:$0xff]
        %v6509 = vld [vmem:[#allocation4 + $0xf0] sm:$0xff]
        %v6510 = vld [vmem:[#allocation4 + $0xf8] sm:$0xff]
        %v6511 = vld [vmem:[#allocation3 + $0x8] sm:$0xff]
        %v6512 = vld [vmem:[#allocation3 + $0x10] sm:$0xff]
        %v6513 = vld [vmem:[#allocation3 + $0x18] sm:$0xff]
        %v6514 = vld [vmem:[#allocation3 + $0x20] sm:$0xff]
        %v6515 = vld [vmem:[#allocation3 + $0x28] sm:$0xff]
        %v6516 = vld [vmem:[#allocation3 + $0x30] sm:$0xff]
        %v6517 = vld [vmem:[#allocation3 + $0x38] sm:$0xff]
        %v6518 = vld [vmem:[#allocation3 + $0x40] sm:$0xff]
        %v6519 = vld [vmem:[#allocation3 + $0x48] sm:$0xff]
        %v6520 = vld [vmem:[#allocation3 + $0x50] sm:$0xff]
        %v6521 = vld [vmem:[#allocation3 + $0x58] sm:$0xff]
        %v6522 = vld [vmem:[#allocation3 + $0x60] sm:$0xff]
        %v6523 = vld [vmem:[#allocation3 + $0x68] sm:$0xff]
        %v6524 = vld [vmem:[#allocation3 + $0x70] sm:$0xff]
        %v6525 = vld [vmem:[#allocation3 + $0x78] sm:$0xff]
        %v6526 = vld [vmem:[#allocation3 + $0x80] sm:$0xff]
        %s6527 = scalar_lea.vmem %s3, 320
        %v6528 = vld [vmem:[%s6527] sm:$0xf]
        %v6529 = vld [vmem:[%s6527 + $0x4] sm:$0xf]
        %v6530 = vld [vmem:[%s6527 + $0x8] sm:$0xf]
        %v6531 = vld [vmem:[%s6527 + $0xc] sm:$0xf]
        %v6532 = vld [vmem:[%s6527 + $0x10] sm:$0xf]
        %v6533 = vld [vmem:[%s6527 + $0x14] sm:$0xf]
        %v6534 = vld [vmem:[%s6527 + $0x18] sm:$0xf]
        %v6535 = vld [vmem:[%s6527 + $0x1c] sm:$0xf]
        %v6536 = vld [vmem:[%s6527 + $0x20] sm:$0xf]
        %v6537 = vld [vmem:[%s6527 + $0x24] sm:$0xf]
        %v6538 = vld [vmem:[%s6527 + $0x28] sm:$0xf]
        %v6539 = vld [vmem:[%s6527 + $0x2c] sm:$0xf]
        %v6540 = vld [vmem:[%s6527 + $0x30] sm:$0xf]
        %v6541 = vld [vmem:[%s6527 + $0x34] sm:$0xf]
        %v6542 = vld [vmem:[%s6527 + $0x38] sm:$0xf]
        %v6543 = vld [vmem:[%s6527 + $0x3c] sm:$0xf]
        %v6560 = vunpack.c.l.b16 %v6528
        %v6561 = vunpack.c.l.b16 %v6529
        %v6562 = vunpack.c.l.b16 %v6530
        %v6563 = vunpack.c.l.b16 %v6531
        %v6564 = vunpack.c.l.b16 %v6532
        %v6565 = vunpack.c.l.b16 %v6533
        %v6566 = vunpack.c.l.b16 %v6534
        %v6567 = vunpack.c.l.b16 %v6535
        %v6568 = vunpack.c.l.b16 %v6536
        %v6569 = vunpack.c.l.b16 %v6537
        %v6570 = vunpack.c.l.b16 %v6538
        %v6571 = vunpack.c.l.b16 %v6539
        %v6572 = vunpack.c.l.b16 %v6540
        %v6573 = vunpack.c.l.b16 %v6541
        %v6574 = vunpack.c.l.b16 %v6542
        %v6575 = vunpack.c.l.b16 %v6543
        %v6576 = vpack.c.b16 %v6561, %v6560
        %v6577 = vpack.c.b16 %v6563, %v6562
        %v6578 = vpack.c.b16 %v6565, %v6564
        %v6579 = vpack.c.b16 %v6567, %v6566
        %v6580 = vpack.c.b16 %v6569, %v6568
        %v6581 = vpack.c.b16 %v6571, %v6570
        %v6582 = vpack.c.b16 %v6573, %v6572
        %v6583 = vpack.c.b16 %v6575, %v6574
        %6592 = vmatprep.subr.bf16.mxu0 0
        %6593 = vmatpush1.bf16.msra.mxu0 %v6576
        %6594 = vmatprep.subr.bf16.mxu0 0
        %6595 = vmatpush1.bf16.msra.mxu0 %v6577
        %6596 = vmatprep.subr.bf16.mxu0 0
        %6597 = vmatpush1.bf16.msra.mxu0 %v6578
        %6598 = vmatprep.subr.bf16.mxu0 0
        %6599 = vmatpush1.bf16.msra.mxu0 %v6579
        %6600 = vmatprep.subr.bf16.mxu0 0
        %6601 = vmatpush1.bf16.msra.mxu0 %v6580
        %6602 = vmatprep.subr.bf16.mxu0 0
        %6603 = vmatpush1.bf16.msra.mxu0 %v6581
        %6604 = vmatprep.subr.bf16.mxu0 0
        %6605 = vmatpush1.bf16.msra.mxu0 %v6582
        %6606 = vmatprep.subr.bf16.mxu0 0
        %6607 = vmatpush1.bf16.msra.mxu0 %v6583
        %6608 = vmatprep.subr.bf16.mxu0 0
        %6609 = vmatpush1.bf16.msra.mxu0 0
        %6610 = vmatprep.subr.bf16.mxu0 0
        %6611 = vmatpush1.bf16.msra.mxu0 0
        %6612 = vmatprep.subr.bf16.mxu0 0
        %6613 = vmatpush1.bf16.msra.mxu0 0
        %6614 = vmatprep.subr.bf16.mxu0 0
        %6615 = vmatpush1.bf16.msra.mxu0 0
        %6616 = vmatprep.subr.bf16.mxu0 0
        %6617 = vmatpush1.bf16.msra.mxu0 0
        %6618 = vmatprep.subr.bf16.mxu0 0
        %6619 = vmatpush1.bf16.msra.mxu0 0
        %6620 = vmatprep.subr.bf16.mxu0 0
        %6621 = vmatpush1.bf16.msra.mxu0 0
        %6622 = vmatprep.subr.bf16.mxu0 0
        %6623 = vmatpush1.bf16.msra.mxu0 0
        %6624 = vmatprep.mubr.bf16.mxu0 0
        %6625 = vmatmul.mubr.bf16.gmra.mrb[0].mxu0 %v6511
        %v6626 = vpop.f32.mrb[0].mxu0
        %v6627 = vadd.f32 0.0, %v6626
        %v6628 = vpop.f32.mrb[0].mxu0
        %v6629 = vpop.f32.mrb[0].mxu0
        %v6630 = vadd.f32 0.0, %v6629
        %v6631 = vpop.f32.mrb[0].mxu0
        %6632 = vmatprep.mubr.bf16.mxu0 0
        %6633 = vmatmul.mubr.bf16.gmra.mrb[0].mxu0 %v6512
        %v6634 = vpop.f32.mrb[0].mxu0
        %v6635 = vadd.f32 0.0, %v6634
        %v6636 = vpop.f32.mrb[0].mxu0
        %v6637 = vpop.f32.mrb[0].mxu0
        %v6638 = vadd.f32 0.0, %v6637
        %v6639 = vpop.f32.mrb[0].mxu0
        %6640 = vmatprep.mubr.bf16.mxu0 0
        %6641 = vmatmul.mubr.bf16.gmra.mrb[0].mxu0 %v6513
        %v6642 = vpop.f32.mrb[0].mxu0
        %v6643 = vadd.f32 0.0, %v6642
        %v6644 = vpop.f32.mrb[0].mxu0
        %v6645 = vpop.f32.mrb[0].mxu0
        %v6646 = vadd.f32 0.0, %v6645
        %v6647 = vpop.f32.mrb[0].mxu0
        %6648 = vmatprep.mubr.bf16.mxu0 0
        %6649 = vmatmul.mubr.bf16.gmra.mrb[0].mxu0 %v6514
        %v6650 = vpop.f32.mrb[0].mxu0
        %v6651 = vadd.f32 0.0, %v6650
        %v6652 = vpop.f32.mrb[0].mxu0
        %v6653 = vpop.f32.mrb[0].mxu0
        %v6654 = vadd.f32 0.0, %v6653
        %v6655 = vpop.f32.mrb[0].mxu0
        %6656 = vmatprep.mubr.bf16.mxu0 0
        %6657 = vmatmul.mubr.bf16.gmra.mrb[0].mxu0 %v6515
        %v6658 = vpop.f32.mrb[0].mxu0
        %v6659 = vadd.f32 0.0, %v6658
        %v6660 = vpop.f32.mrb[0].mxu0
        %v6661 = vpop.f32.mrb[0].mxu0
        %v6662 = vadd.f32 0.0, %v6661
        %v6663 = vpop.f32.mrb[0].mxu0
        %6664 = vmatprep.mubr.bf16.mxu0 0
        %6665 = vmatmul.mubr.bf16.gmra.mrb[0].mxu0 %v6516
        %v6666 = vpop.f32.mrb[0].mxu0
        %v6667 = vadd.f32 0.0, %v6666
        %v6668 = vpop.f32.mrb[0].mxu0
        %v6669 = vpop.f32.mrb[0].mxu0
        %v6670 = vadd.f32 0.0, %v6669
        %v6671 = vpop.f32.mrb[0].mxu0
        %6672 = vmatprep.mubr.bf16.mxu0 0
        %6673 = vmatmul.mubr.bf16.gmra.mrb[0].mxu0 %v6517
        %v6674 = vpop.f32.mrb[0].mxu0
        %v6675 = vadd.f32 0.0, %v6674
        %v6676 = vpop.f32.mrb[0].mxu0
        %v6677 = vpop.f32.mrb[0].mxu0
        %v6678 = vadd.f32 0.0, %v6677
        %v6679 = vpop.f32.mrb[0].mxu0
        %6680 = vmatprep.mubr.bf16.mxu0 0
        %6681 = vmatmul.mubr.bf16.gmra.mrb[0].mxu0 %v6518
        %v6682 = vpop.f32.mrb[0].mxu0
        %v6683 = vadd.f32 0.0, %v6682
        %v6684 = vpop.f32.mrb[0].mxu0
        %v6685 = vpop.f32.mrb[0].mxu0
        %v6686 = vadd.f32 0.0, %v6685
        %v6687 = vpop.f32.mrb[0].mxu0
        %6688 = vmatprep.mubr.bf16.mxu0 0
        %6689 = vmatmul.mubr.bf16.gmra.mrb[0].mxu0 %v6519
        %v6690 = vpop.f32.mrb[0].mxu0
        %v6691 = vadd.f32 0.0, %v6690
        %v6692 = vpop.f32.mrb[0].mxu0
        %v6693 = vpop.f32.mrb[0].mxu0
        %v6694 = vadd.f32 0.0, %v6693
        %v6695 = vpop.f32.mrb[0].mxu0
        %6696 = vmatprep.mubr.bf16.mxu0 0
        %6697 = vmatmul.mubr.bf16.gmra.mrb[0].mxu0 %v6520
        %v6698 = vpop.f32.mrb[0].mxu0
        %v6699 = vadd.f32 0.0, %v6698
        %v6700 = vpop.f32.mrb[0].mxu0
        %v6701 = vpop.f32.mrb[0].mxu0
        %v6702 = vadd.f32 0.0, %v6701
        %v6703 = vpop.f32.mrb[0].mxu0
        %6704 = vmatprep.mubr.bf16.mxu0 0
        %6705 = vmatmul.mubr.bf16.gmra.mrb[0].mxu0 %v6521
        %v6706 = vpop.f32.mrb[0].mxu0
        %v6707 = vadd.f32 0.0, %v6706
        %v6708 = vpop.f32.mrb[0].mxu0
        %v6709 = vpop.f32.mrb[0].mxu0
        %v6710 = vadd.f32 0.0, %v6709
        %v6711 = vpop.f32.mrb[0].mxu0
        %6712 = vmatprep.mubr.bf16.mxu0 0
        %6713 = vmatmul.mubr.bf16.gmra.mrb[0].mxu0 %v6522
        %v6714 = vpop.f32.mrb[0].mxu0
        %v6715 = vadd.f32 0.0, %v6714
        %v6716 = vpop.f32.mrb[0].mxu0
        %v6717 = vpop.f32.mrb[0].mxu0
        %v6718 = vadd.f32 0.0, %v6717
        %v6719 = vpop.f32.mrb[0].mxu0
        %6720 = vmatprep.mubr.bf16.mxu0 0
        %6721 = vmatmul.mubr.bf16.gmra.mrb[0].mxu0 %v6523
        %v6722 = vpop.f32.mrb[0].mxu0
        %v6723 = vadd.f32 0.0, %v6722
        %v6724 = vpop.f32.mrb[0].mxu0
        %v6725 = vpop.f32.mrb[0].mxu0
        %v6726 = vadd.f32 0.0, %v6725
        %v6727 = vpop.f32.mrb[0].mxu0
        %6728 = vmatprep.mubr.bf16.mxu0 0
        %6729 = vmatmul.mubr.bf16.gmra.mrb[0].mxu0 %v6524
        %v6730 = vpop.f32.mrb[0].mxu0
        %v6731 = vadd.f32 0.0, %v6730
        %v6732 = vpop.f32.mrb[0].mxu0
        %v6733 = vpop.f32.mrb[0].mxu0
        %v6734 = vadd.f32 0.0, %v6733
        %v6735 = vpop.f32.mrb[0].mxu0
        %6736 = vmatprep.mubr.bf16.mxu0 0
        %6737 = vmatmul.mubr.bf16.gmra.mrb[0].mxu0 %v6525
        %v6738 = vpop.f32.mrb[0].mxu0
        %v6739 = vadd.f32 0.0, %v6738
        %v6740 = vpop.f32.mrb[0].mxu0
        %v6741 = vpop.f32.mrb[0].mxu0
        %v6742 = vadd.f32 0.0, %v6741
        %v6743 = vpop.f32.mrb[0].mxu0
        %6744 = vmatprep.mubr.bf16.mxu0 0
        %6745 = vmatmul.mubr.bf16.gmra.mrb[0].mxu0 %v6526
        %v6746 = vpop.f32.mrb[0].mxu0
        %v6747 = vadd.f32 0.0, %v6746
        %v6748 = vpop.f32.mrb[0].mxu0
        %v6749 = vpop.f32.mrb[0].mxu0
        %v6750 = vadd.f32 0.0, %v6749
        %v6751 = vpop.f32.mrb[0].mxu0
        %6752 = vdwg.mxu0
        %v6753 = vadd.f32 %v6479, %v6627
        %v6754 = vadd.f32 %v6480, %v6630
        %v6755 = vadd.f32 %v6481, %v6635
        %v6756 = vadd.f32 %v6482, %v6638
        %v6757 = vadd.f32 %v6483, %v6643
        %v6758 = vadd.f32 %v6484, %v6646
        %v6759 = vadd.f32 %v6485, %v6651
        %v6760 = vadd.f32 %v6486, %v6654
        %v6761 = vadd.f32 %v6487, %v6659
        %v6762 = vadd.f32 %v6488, %v6662
        %v6763 = vadd.f32 %v6489, %v6667
        %v6764 = vadd.f32 %v6490, %v6670
        %v6765 = vadd.f32 %v6491, %v6675
        %v6766 = vadd.f32 %v6492, %v6678
        %v6767 = vadd.f32 %v6493, %v6683
        %v6768 = vadd.f32 %v6494, %v6686
        %v6769 = vadd.f32 %v6495, %v6691
        %v6770 = vadd.f32 %v6496, %v6694
        %v6771 = vadd.f32 %v6497, %v6699
        %v6772 = vadd.f32 %v6498, %v6702
        %v6773 = vadd.f32 %v6499, %v6707
        %v6774 = vadd.f32 %v6500, %v6710
        %v6775 = vadd.f32 %v6501, %v6715
        %v6776 = vadd.f32 %v6502, %v6718
        %v6777 = vadd.f32 %v6503, %v6723
        %v6778 = vadd.f32 %v6504, %v6726
        %v6779 = vadd.f32 %v6505, %v6731
        %v6780 = vadd.f32 %v6506, %v6734
        %v6781 = vadd.f32 %v6507, %v6739
        %v6782 = vadd.f32 %v6508, %v6742
        %v6783 = vadd.f32 %v6509, %v6747
        %v6784 = vadd.f32 %v6510, %v6750
        %6785 = vst [vmem:[#allocation4] sm:$0xff] %v6753
        %6786 = vst [vmem:[#allocation4 + $0x8] sm:$0xff] %v6754
        %6787 = vst [vmem:[#allocation4 + $0x10] sm:$0xff] %v6755
        %6788 = vst [vmem:[#allocation4 + $0x18] sm:$0xff] %v6756
        %6789 = vst [vmem:[#allocation4 + $0x20] sm:$0xff] %v6757
        %6790 = vst [vmem:[#allocation4 + $0x28] sm:$0xff] %v6758
        %6791 = vst [vmem:[#allocation4 + $0x30] sm:$0xff] %v6759
        %6792 = vst [vmem:[#allocation4 + $0x38] sm:$0xff] %v6760
        %6793 = vst [vmem:[#allocation4 + $0x40] sm:$0xff] %v6761
        %6794 = vst [vmem:[#allocation4 + $0x48] sm:$0xff] %v6762
        %6795 = vst [vmem:[#allocation4 + $0x50] sm:$0xff] %v6763
        %6796 = vst [vmem:[#allocation4 + $0x58] sm:$0xff] %v6764
        %6797 = vst [vmem:[#allocation4 + $0x60] sm:$0xff] %v6765
        %6798 = vst [vmem:[#allocation4 + $0x68] sm:$0xff] %v6766
        %6799 = vst [vmem:[#allocation4 + $0x70] sm:$0xff] %v6767
        %6800 = vst [vmem:[#allocation4 + $0x78] sm:$0xff] %v6768
        %6801 = vst [vmem:[#allocation4 + $0x80] sm:$0xff] %v6769
        %6802 = vst [vmem:[#allocation4 + $0x88] sm:$0xff] %v6770
        %6803 = vst [vmem:[#allocation4 + $0x90] sm:$0xff] %v6771
        %6804 = vst [vmem:[#allocation4 + $0x98] sm:$0xff] %v6772
        %6805 = vst [vmem:[#allocation4 + $0xa0] sm:$0xff] %v6773
        %6806 = vst [vmem:[#allocation4 + $0xa8] sm:$0xff] %v6774
        %6807 = vst [vmem:[#allocation4 + $0xb0] sm:$0xff] %v6775
        %6808 = vst [vmem:[#allocation4 + $0xb8] sm:$0xff] %v6776
        %6809 = vst [vmem:[#allocation4 + $0xc0] sm:$0xff] %v6777
        %6810 = vst [vmem:[#allocation4 + $0xc8] sm:$0xff] %v6778
        %6811 = vst [vmem:[#allocation4 + $0xd0] sm:$0xff] %v6779
        %6812 = vst [vmem:[#allocation4 + $0xd8] sm:$0xff] %v6780
        %6813 = vst [vmem:[#allocation4 + $0xe0] sm:$0xff] %v6781
        %6814 = vst [vmem:[#allocation4 + $0xe8] sm:$0xff] %v6782
        %6815 = vst [vmem:[#allocation4 + $0xf0] sm:$0xff] %v6783
        %6816 = vst [vmem:[#allocation4 + $0xf8] sm:$0xff] %v6784
        %v6817 = vld [vmem:[#allocation4] sm:$0xff]
        %v6818 = vld [vmem:[#allocation4 + $0x8] sm:$0xff]
        %v6819 = vld [vmem:[#allocation4 + $0x10] sm:$0xff]
        %v6820 = vld [vmem:[#allocation4 + $0x18] sm:$0xff]
        %v6821 = vld [vmem:[#allocation4 + $0x20] sm:$0xff]
        %v6822 = vld [vmem:[#allocation4 + $0x28] sm:$0xff]
        %v6823 = vld [vmem:[#allocation4 + $0x30] sm:$0xff]
        %v6824 = vld [vmem:[#allocation4 + $0x38] sm:$0xff]
        %v6825 = vld [vmem:[#allocation4 + $0x40] sm:$0xff]
        %v6826 = vld [vmem:[#allocation4 + $0x48] sm:$0xff]
        %v6827 = vld [vmem:[#allocation4 + $0x50] sm:$0xff]
        %v6828 = vld [vmem:[#allocation4 + $0x58] sm:$0xff]
        %v6829 = vld [vmem:[#allocation4 + $0x60] sm:$0xff]
        %v6830 = vld [vmem:[#allocation4 + $0x68] sm:$0xff]
        %v6831 = vld [vmem:[#allocation4 + $0x70] sm:$0xff]
        %v6832 = vld [vmem:[#allocation4 + $0x78] sm:$0xff]
        %v6833 = vld [vmem:[#allocation4 + $0x80] sm:$0xff]
        %v6834 = vld [vmem:[#allocation4 + $0x88] sm:$0xff]
        %v6835 = vld [vmem:[#allocation4 + $0x90] sm:$0xff]
        %v6836 = vld [vmem:[#allocation4 + $0x98] sm:$0xff]
        %v6837 = vld [vmem:[#allocation4 + $0xa0] sm:$0xff]
        %v6838 = vld [vmem:[#allocation4 + $0xa8] sm:$0xff]
        %v6839 = vld [vmem:[#allocation4 + $0xb0] sm:$0xff]
        %v6840 = vld [vmem:[#allocation4 + $0xb8] sm:$0xff]
        %v6841 = vld [vmem:[#allocation4 + $0xc0] sm:$0xff]
        %v6842 = vld [vmem:[#allocation4 + $0xc8] sm:$0xff]
        %v6843 = vld [vmem:[#allocation4 + $0xd0] sm:$0xff]
        %v6844 = vld [vmem:[#allocation4 + $0xd8] sm:$0xff]
        %v6845 = vld [vmem:[#allocation4 + $0xe0] sm:$0xff]
        %v6846 = vld [vmem:[#allocation4 + $0xe8] sm:$0xff]
        %v6847 = vld [vmem:[#allocation4 + $0xf0] sm:$0xff]
        %v6848 = vld [vmem:[#allocation4 + $0xf8] sm:$0xff]
        %v6849 = vld [vmem:[#allocation3 + $0x10] sm:$0xff]
        %v6850 = vld [vmem:[#allocation3 + $0x18] sm:$0xff]
        %v6851 = vld [vmem:[#allocation3 + $0x20] sm:$0xff]
        %v6852 = vld [vmem:[#allocation3 + $0x28] sm:$0xff]
        %v6853 = vld [vmem:[#allocation3 + $0x30] sm:$0xff]
        %v6854 = vld [vmem:[#allocation3 + $0x38] sm:$0xff]
        %v6855 = vld [vmem:[#allocation3 + $0x40] sm:$0xff]
        %v6856 = vld [vmem:[#allocation3 + $0x48] sm:$0xff]
        %v6857 = vld [vmem:[#allocation3 + $0x50] sm:$0xff]
        %v6858 = vld [vmem:[#allocation3 + $0x58] sm:$0xff]
        %v6859 = vld [vmem:[#allocation3 + $0x60] sm:$0xff]
        %v6860 = vld [vmem:[#allocation3 + $0x68] sm:$0xff]
        %v6861 = vld [vmem:[#allocation3 + $0x70] sm:$0xff]
        %v6862 = vld [vmem:[#allocation3 + $0x78] sm:$0xff]
        %v6863 = vld [vmem:[#allocation3 + $0x80] sm:$0xff]
        %v6864 = vld [vmem:[#allocation3 + $0x88] sm:$0xff]
        %s6865 = scalar_lea.vmem %s3, 512
        %v6866 = vld [vmem:[%s6865] sm:$0xf]
        %v6867 = vld [vmem:[%s6865 + $0x4] sm:$0xf]
        %v6868 = vld [vmem:[%s6865 + $0x8] sm:$0xf]
        %v6869 = vld [vmem:[%s6865 + $0xc] sm:$0xf]
        %v6870 = vld [vmem:[%s6865 + $0x10] sm:$0xf]
        %v6871 = vld [vmem:[%s6865 + $0x14] sm:$0xf]
        %v6872 = vld [vmem:[%s6865 + $0x18] sm:$0xf]
        %v6873 = vld [vmem:[%s6865 + $0x1c] sm:$0xf]
        %v6874 = vld [vmem:[%s6865 + $0x20] sm:$0xf]
        %v6875 = vld [vmem:[%s6865 + $0x24] sm:$0xf]
        %v6876 = vld [vmem:[%s6865 + $0x28] sm:$0xf]
        %v6877 = vld [vmem:[%s6865 + $0x2c] sm:$0xf]
        %v6878 = vld [vmem:[%s6865 + $0x30] sm:$0xf]
        %v6879 = vld [vmem:[%s6865 + $0x34] sm:$0xf]
        %v6880 = vld [vmem:[%s6865 + $0x38] sm:$0xf]
        %v6881 = vld [vmem:[%s6865 + $0x3c] sm:$0xf]
        %v6898 = vunpack.c.l.b16 %v6866
        %v6899 = vunpack.c.l.b16 %v6867
        %v6900 = vunpack.c.l.b16 %v6868
        %v6901 = vunpack.c.l.b16 %v6869
        %v6902 = vunpack.c.l.b16 %v6870
        %v6903 = vunpack.c.l.b16 %v6871
        %v6904 = vunpack.c.l.b16 %v6872
        %v6905 = vunpack.c.l.b16 %v6873
        %v6906 = vunpack.c.l.b16 %v6874
        %v6907 = vunpack.c.l.b16 %v6875
        %v6908 = vunpack.c.l.b16 %v6876
        %v6909 = vunpack.c.l.b16 %v6877
        %v6910 = vunpack.c.l.b16 %v6878
        %v6911 = vunpack.c.l.b16 %v6879
        %v6912 = vunpack.c.l.b16 %v6880
        %v6913 = vunpack.c.l.b16 %v6881
        %v6914 = vpack.c.b16 %v6899, %v6898
        %v6915 = vpack.c.b16 %v6901, %v6900
        %v6916 = vpack.c.b16 %v6903, %v6902
        %v6917 = vpack.c.b16 %v6905, %v6904
        %v6918 = vpack.c.b16 %v6907, %v6906
        %v6919 = vpack.c.b16 %v6909, %v6908
        %v6920 = vpack.c.b16 %v6911, %v6910
        %v6921 = vpack.c.b16 %v6913, %v6912
        %6930 = vmatprep.subr.bf16.mxu0 0
        %6931 = vmatpush1.bf16.msra.mxu0 %v6914
        %6932 = vmatprep.subr.bf16.mxu0 0
        %6933 = vmatpush1.bf16.msra.mxu0 %v6915
        %6934 = vmatprep.subr.bf16.mxu0 0
        %6935 = vmatpush1.bf16.msra.mxu0 %v6916
        %6936 = vmatprep.subr.bf16.mxu0 0
        %6937 = vmatpush1.bf16.msra.mxu0 %v6917
        %6938 = vmatprep.subr.bf16.mxu0 0
        %6939 = vmatpush1.bf16.msra.mxu0 %v6918
        %6940 = vmatprep.subr.bf16.mxu0 0
        %6941 = vmatpush1.bf16.msra.mxu0 %v6919
        %6942 = vmatprep.subr.bf16.mxu0 0
        %6943 = vmatpush1.bf16.msra.mxu0 %v6920
        %6944 = vmatprep.subr.bf16.mxu0 0
        %6945 = vmatpush1.bf16.msra.mxu0 %v6921
        %6946 = vmatprep.subr.bf16.mxu0 0
        %6947 = vmatpush1.bf16.msra.mxu0 0
        %6948 = vmatprep.subr.bf16.mxu0 0
        %6949 = vmatpush1.bf16.msra.mxu0 0
        %6950 = vmatprep.subr.bf16.mxu0 0
        %6951 = vmatpush1.bf16.msra.mxu0 0
        %6952 = vmatprep.subr.bf16.mxu0 0
        %6953 = vmatpush1.bf16.msra.mxu0 0
        %6954 = vmatprep.subr.bf16.mxu0 0
        %6955 = vmatpush1.bf16.msra.mxu0 0
        %6956 = vmatprep.subr.bf16.mxu0 0
        %6957 = vmatpush1.bf16.msra.mxu0 0
        %6958 = vmatprep.subr.bf16.mxu0 0
        %6959 = vmatpush1.bf16.msra.mxu0 0
        %6960 = vmatprep.subr.bf16.mxu0 0
        %6961 = vmatpush1.bf16.msra.mxu0 0
        %6962 = vmatprep.mubr.bf16.mxu0 0
        %6963 = vmatmul.mubr.bf16.gmra.mrb[0].mxu0 %v6849
        %v6964 = vpop.f32.mrb[0].mxu0
        %v6965 = vadd.f32 0.0, %v6964
        %v6966 = vpop.f32.mrb[0].mxu0
        %v6967 = vpop.f32.mrb[0].mxu0
        %v6968 = vadd.f32 0.0, %v6967
        %v6969 = vpop.f32.mrb[0].mxu0
        %6970 = vmatprep.mubr.bf16.mxu0 0
        %6971 = vmatmul.mubr.bf16.gmra.mrb[0].mxu0 %v6850
        %v6972 = vpop.f32.mrb[0].mxu0
        %v6973 = vadd.f32 0.0, %v6972
        %v6974 = vpop.f32.mrb[0].mxu0
        %v6975 = vpop.f32.mrb[0].mxu0
        %v6976 = vadd.f32 0.0, %v6975
        %v6977 = vpop.f32.mrb[0].mxu0
        %6978 = vmatprep.mubr.bf16.mxu0 0
        %6979 = vmatmul.mubr.bf16.gmra.mrb[0].mxu0 %v6851
        %v6980 = vpop.f32.mrb[0].mxu0
        %v6981 = vadd.f32 0.0, %v6980
        %v6982 = vpop.f32.mrb[0].mxu0
        %v6983 = vpop.f32.mrb[0].mxu0
        %v6984 = vadd.f32 0.0, %v6983
        %v6985 = vpop.f32.mrb[0].mxu0
        %6986 = vmatprep.mubr.bf16.mxu0 0
        %6987 = vmatmul.mubr.bf16.gmra.mrb[0].mxu0 %v6852
        %v6988 = vpop.f32.mrb[0].mxu0
        %v6989 = vadd.f32 0.0, %v6988
        %v6990 = vpop.f32.mrb[0].mxu0
        %v6991 = vpop.f32.mrb[0].mxu0
        %v6992 = vadd.f32 0.0, %v6991
        %v6993 = vpop.f32.mrb[0].mxu0
        %6994 = vmatprep.mubr.bf16.mxu0 0
        %6995 = vmatmul.mubr.bf16.gmra.mrb[0].mxu0 %v6853
        %v6996 = vpop.f32.mrb[0].mxu0
        %v6997 = vadd.f32 0.0, %v6996
        %v6998 = vpop.f32.mrb[0].mxu0
        %v6999 = vpop.f32.mrb[0].mxu0
        %v7000 = vadd.f32 0.0, %v6999
        %v7001 = vpop.f32.mrb[0].mxu0
        %7002 = vmatprep.mubr.bf16.mxu0 0
        %7003 = vmatmul.mubr.bf16.gmra.mrb[0].mxu0 %v6854
        %v7004 = vpop.f32.mrb[0].mxu0
        %v7005 = vadd.f32 0.0, %v7004
        %v7006 = vpop.f32.mrb[0].mxu0
        %v7007 = vpop.f32.mrb[0].mxu0
        %v7008 = vadd.f32 0.0, %v7007
        %v7009 = vpop.f32.mrb[0].mxu0
        %7010 = vmatprep.mubr.bf16.mxu0 0
        %7011 = vmatmul.mubr.bf16.gmra.mrb[0].mxu0 %v6855
        %v7012 = vpop.f32.mrb[0].mxu0
        %v7013 = vadd.f32 0.0, %v7012
        %v7014 = vpop.f32.mrb[0].mxu0
        %v7015 = vpop.f32.mrb[0].mxu0
        %v7016 = vadd.f32 0.0, %v7015
        %v7017 = vpop.f32.mrb[0].mxu0
        %7018 = vmatprep.mubr.bf16.mxu0 0
        %7019 = vmatmul.mubr.bf16.gmra.mrb[0].mxu0 %v6856
        %v7020 = vpop.f32.mrb[0].mxu0
        %v7021 = vadd.f32 0.0, %v7020
        %v7022 = vpop.f32.mrb[0].mxu0
        %v7023 = vpop.f32.mrb[0].mxu0
        %v7024 = vadd.f32 0.0, %v7023
        %v7025 = vpop.f32.mrb[0].mxu0
        %7026 = vmatprep.mubr.bf16.mxu0 0
        %7027 = vmatmul.mubr.bf16.gmra.mrb[0].mxu0 %v6857
        %v7028 = vpop.f32.mrb[0].mxu0
        %v7029 = vadd.f32 0.0, %v7028
        %v7030 = vpop.f32.mrb[0].mxu0
        %v7031 = vpop.f32.mrb[0].mxu0
        %v7032 = vadd.f32 0.0, %v7031
        %v7033 = vpop.f32.mrb[0].mxu0
        %7034 = vmatprep.mubr.bf16.mxu0 0
        %7035 = vmatmul.mubr.bf16.gmra.mrb[0].mxu0 %v6858
        %v7036 = vpop.f32.mrb[0].mxu0
        %v7037 = vadd.f32 0.0, %v7036
        %v7038 = vpop.f32.mrb[0].mxu0
        %v7039 = vpop.f32.mrb[0].mxu0
        %v7040 = vadd.f32 0.0, %v7039
        %v7041 = vpop.f32.mrb[0].mxu0
        %7042 = vmatprep.mubr.bf16.mxu0 0
        %7043 = vmatmul.mubr.bf16.gmra.mrb[0].mxu0 %v6859
        %v7044 = vpop.f32.mrb[0].mxu0
        %v7045 = vadd.f32 0.0, %v7044
        %v7046 = vpop.f32.mrb[0].mxu0
        %v7047 = vpop.f32.mrb[0].mxu0
        %v7048 = vadd.f32 0.0, %v7047
        %v7049 = vpop.f32.mrb[0].mxu0
        %7050 = vmatprep.mubr.bf16.mxu0 0
        %7051 = vmatmul.mubr.bf16.gmra.mrb[0].mxu0 %v6860
        %v7052 = vpop.f32.mrb[0].mxu0
        %v7053 = vadd.f32 0.0, %v7052
        %v7054 = vpop.f32.mrb[0].mxu0
        %v7055 = vpop.f32.mrb[0].mxu0
        %v7056 = vadd.f32 0.0, %v7055
        %v7057 = vpop.f32.mrb[0].mxu0
        %7058 = vmatprep.mubr.bf16.mxu0 0
        %7059 = vmatmul.mubr.bf16.gmra.mrb[0].mxu0 %v6861
        %v7060 = vpop.f32.mrb[0].mxu0
        %v7061 = vadd.f32 0.0, %v7060
        %v7062 = vpop.f32.mrb[0].mxu0
        %v7063 = vpop.f32.mrb[0].mxu0
        %v7064 = vadd.f32 0.0, %v7063
        %v7065 = vpop.f32.mrb[0].mxu0
        %7066 = vmatprep.mubr.bf16.mxu0 0
        %7067 = vmatmul.mubr.bf16.gmra.mrb[0].mxu0 %v6862
        %v7068 = vpop.f32.mrb[0].mxu0
        %v7069 = vadd.f32 0.0, %v7068
        %v7070 = vpop.f32.mrb[0].mxu0
        %v7071 = vpop.f32.mrb[0].mxu0
        %v7072 = vadd.f32 0.0, %v7071
        %v7073 = vpop.f32.mrb[0].mxu0
        %7074 = vmatprep.mubr.bf16.mxu0 0
        %7075 = vmatmul.mubr.bf16.gmra.mrb[0].mxu0 %v6863
        %v7076 = vpop.f32.mrb[0].mxu0
        %v7077 = vadd.f32 0.0, %v7076
        %v7078 = vpop.f32.mrb[0].mxu0
        %v7079 = vpop.f32.mrb[0].mxu0
        %v7080 = vadd.f32 0.0, %v7079
        %v7081 = vpop.f32.mrb[0].mxu0
        %7082 = vmatprep.mubr.bf16.mxu0 0
        %7083 = vmatmul.mubr.bf16.gmra.mrb[0].mxu0 %v6864
        %v7084 = vpop.f32.mrb[0].mxu0
        %v7085 = vadd.f32 0.0, %v7084
        %v7086 = vpop.f32.mrb[0].mxu0
        %v7087 = vpop.f32.mrb[0].mxu0
        %v7088 = vadd.f32 0.0, %v7087
        %v7089 = vpop.f32.mrb[0].mxu0
        %7090 = vdwg.mxu0
        %v7091 = vadd.f32 %v6817, %v6965
        %v7092 = vadd.f32 %v6818, %v6968
        %v7093 = vadd.f32 %v6819, %v6973
        %v7094 = vadd.f32 %v6820, %v6976
        %v7095 = vadd.f32 %v6821, %v6981
        %v7096 = vadd.f32 %v6822, %v6984
        %v7097 = vadd.f32 %v6823, %v6989
        %v7098 = vadd.f32 %v6824, %v6992
        %v7099 = vadd.f32 %v6825, %v6997
        %v7100 = vadd.f32 %v6826, %v7000
        %v7101 = vadd.f32 %v6827, %v7005
        %v7102 = vadd.f32 %v6828, %v7008
        %v7103 = vadd.f32 %v6829, %v7013
        %v7104 = vadd.f32 %v6830, %v7016
        %v7105 = vadd.f32 %v6831, %v7021
        %v7106 = vadd.f32 %v6832, %v7024
        %v7107 = vadd.f32 %v6833, %v7029
        %v7108 = vadd.f32 %v6834, %v7032
        %v7109 = vadd.f32 %v6835, %v7037
        %v7110 = vadd.f32 %v6836, %v7040
        %v7111 = vadd.f32 %v6837, %v7045
        %v7112 = vadd.f32 %v6838, %v7048
        %v7113 = vadd.f32 %v6839, %v7053
        %v7114 = vadd.f32 %v6840, %v7056
        %v7115 = vadd.f32 %v6841, %v7061
        %v7116 = vadd.f32 %v6842, %v7064
        %v7117 = vadd.f32 %v6843, %v7069
        %v7118 = vadd.f32 %v6844, %v7072
        %v7119 = vadd.f32 %v6845, %v7077
        %v7120 = vadd.f32 %v6846, %v7080
        %v7121 = vadd.f32 %v6847, %v7085
        %v7122 = vadd.f32 %v6848, %v7088
        %7123 = vst [vmem:[#allocation4] sm:$0xff] %v7091
        %7124 = vst [vmem:[#allocation4 + $0x8] sm:$0xff] %v7092
        %7125 = vst [vmem:[#allocation4 + $0x10] sm:$0xff] %v7093
        %7126 = vst [vmem:[#allocation4 + $0x18] sm:$0xff] %v7094
        %7127 = vst [vmem:[#allocation4 + $0x20] sm:$0xff] %v7095
        %7128 = vst [vmem:[#allocation4 + $0x28] sm:$0xff] %v7096
        %7129 = vst [vmem:[#allocation4 + $0x30] sm:$0xff] %v7097
        %7130 = vst [vmem:[#allocation4 + $0x38] sm:$0xff] %v7098
        %7131 = vst [vmem:[#allocation4 + $0x40] sm:$0xff] %v7099
        %7132 = vst [vmem:[#allocation4 + $0x48] sm:$0xff] %v7100
        %7133 = vst [vmem:[#allocation4 + $0x50] sm:$0xff] %v7101
        %7134 = vst [vmem:[#allocation4 + $0x58] sm:$0xff] %v7102
        %7135 = vst [vmem:[#allocation4 + $0x60] sm:$0xff] %v7103
        %7136 = vst [vmem:[#allocation4 + $0x68] sm:$0xff] %v7104
        %7137 = vst [vmem:[#allocation4 + $0x70] sm:$0xff] %v7105
        %7138 = vst [vmem:[#allocation4 + $0x78] sm:$0xff] %v7106
        %7139 = vst [vmem:[#allocation4 + $0x80] sm:$0xff] %v7107
        %7140 = vst [vmem:[#allocation4 + $0x88] sm:$0xff] %v7108
        %7141 = vst [vmem:[#allocation4 + $0x90] sm:$0xff] %v7109
        %7142 = vst [vmem:[#allocation4 + $0x98] sm:$0xff] %v7110
        %7143 = vst [vmem:[#allocation4 + $0xa0] sm:$0xff] %v7111
        %7144 = vst [vmem:[#allocation4 + $0xa8] sm:$0xff] %v7112
        %7145 = vst [vmem:[#allocation4 + $0xb0] sm:$0xff] %v7113
        %7146 = vst [vmem:[#allocation4 + $0xb8] sm:$0xff] %v7114
        %7147 = vst [vmem:[#allocation4 + $0xc0] sm:$0xff] %v7115
        %7148 = vst [vmem:[#allocation4 + $0xc8] sm:$0xff] %v7116
        %7149 = vst [vmem:[#allocation4 + $0xd0] sm:$0xff] %v7117
        %7150 = vst [vmem:[#allocation4 + $0xd8] sm:$0xff] %v7118
        %7151 = vst [vmem:[#allocation4 + $0xe0] sm:$0xff] %v7119
        %7152 = vst [vmem:[#allocation4 + $0xe8] sm:$0xff] %v7120
        %7153 = vst [vmem:[#allocation4 + $0xf0] sm:$0xff] %v7121
        %7154 = vst [vmem:[#allocation4 + $0xf8] sm:$0xff] %v7122
        %v7155 = vld [vmem:[%s222] sm:$0xff]
        %v7156 = vld [vmem:[%s222 + $0x8] sm:$0xff]
        %v7157 = vld [vmem:[%s222 + $0x10] sm:$0xff]
        %v7158 = vld [vmem:[%s222 + $0x18] sm:$0xff]
        %v7159 = vld [vmem:[%s222 + $0x20] sm:$0xff]
        %v7160 = vld [vmem:[%s222 + $0x28] sm:$0xff]
        %v7161 = vld [vmem:[%s222 + $0x30] sm:$0xff]
        %v7162 = vld [vmem:[%s222 + $0x38] sm:$0xff]
        %v7163 = vld [vmem:[%s222 + $0x40] sm:$0xff]
        %v7164 = vld [vmem:[%s222 + $0x48] sm:$0xff]
        %v7165 = vld [vmem:[%s222 + $0x50] sm:$0xff]
        %v7166 = vld [vmem:[%s222 + $0x58] sm:$0xff]
        %v7167 = vld [vmem:[%s222 + $0x60] sm:$0xff]
        %v7168 = vld [vmem:[%s222 + $0x68] sm:$0xff]
        %v7169 = vld [vmem:[%s222 + $0x70] sm:$0xff]
        %v7170 = vld [vmem:[%s222 + $0x78] sm:$0xff]
        %v7171 = vld [vmem:[%s222 + $0x80] sm:$0xff]
        %v7172 = vld [vmem:[%s222 + $0x88] sm:$0xff]
        %v7173 = vld [vmem:[%s222 + $0x90] sm:$0xff]
        %v7174 = vld [vmem:[%s222 + $0x98] sm:$0xff]
        %v7175 = vld [vmem:[%s222 + $0xa0] sm:$0xff]
        %v7176 = vld [vmem:[%s222 + $0xa8] sm:$0xff]
        %v7177 = vld [vmem:[%s222 + $0xb0] sm:$0xff]
        %v7178 = vld [vmem:[%s222 + $0xb8] sm:$0xff]
        %v7179 = vld [vmem:[%s222 + $0xc0] sm:$0xff]
        %v7180 = vld [vmem:[%s222 + $0xc8] sm:$0xff]
        %v7181 = vld [vmem:[%s222 + $0xd0] sm:$0xff]
        %v7182 = vld [vmem:[%s222 + $0xd8] sm:$0xff]
        %v7183 = vld [vmem:[%s222 + $0xe0] sm:$0xff]
        %v7184 = vld [vmem:[%s222 + $0xe8] sm:$0xff]
        %v7185 = vld [vmem:[%s222 + $0xf0] sm:$0xff]
        %v7186 = vld [vmem:[%s222 + $0xf8] sm:$0xff]
        %v7187 = vld [vmem:[#allocation4] sm:$0xff]
        %v7188 = vld [vmem:[#allocation4 + $0x8] sm:$0xff]
        %v7189 = vld [vmem:[#allocation4 + $0x10] sm:$0xff]
        %v7190 = vld [vmem:[#allocation4 + $0x18] sm:$0xff]
        %v7191 = vld [vmem:[#allocation4 + $0x20] sm:$0xff]
        %v7192 = vld [vmem:[#allocation4 + $0x28] sm:$0xff]
        %v7193 = vld [vmem:[#allocation4 + $0x30] sm:$0xff]
        %v7194 = vld [vmem:[#allocation4 + $0x38] sm:$0xff]
        %v7195 = vld [vmem:[#allocation4 + $0x40] sm:$0xff]
        %v7196 = vld [vmem:[#allocation4 + $0x48] sm:$0xff]
        %v7197 = vld [vmem:[#allocation4 + $0x50] sm:$0xff]
        %v7198 = vld [vmem:[#allocation4 + $0x58] sm:$0xff]
        %v7199 = vld [vmem:[#allocation4 + $0x60] sm:$0xff]
        %v7200 = vld [vmem:[#allocation4 + $0x68] sm:$0xff]
        %v7201 = vld [vmem:[#allocation4 + $0x70] sm:$0xff]
        %v7202 = vld [vmem:[#allocation4 + $0x78] sm:$0xff]
        %v7203 = vld [vmem:[#allocation4 + $0x80] sm:$0xff]
        %v7204 = vld [vmem:[#allocation4 + $0x88] sm:$0xff]
        %v7205 = vld [vmem:[#allocation4 + $0x90] sm:$0xff]
        %v7206 = vld [vmem:[#allocation4 + $0x98] sm:$0xff]
        %v7207 = vld [vmem:[#allocation4 + $0xa0] sm:$0xff]
        %v7208 = vld [vmem:[#allocation4 + $0xa8] sm:$0xff]
        %v7209 = vld [vmem:[#allocation4 + $0xb0] sm:$0xff]
        %v7210 = vld [vmem:[#allocation4 + $0xb8] sm:$0xff]
        %v7211 = vld [vmem:[#allocation4 + $0xc0] sm:$0xff]
        %v7212 = vld [vmem:[#allocation4 + $0xc8] sm:$0xff]
        %v7213 = vld [vmem:[#allocation4 + $0xd0] sm:$0xff]
        %v7214 = vld [vmem:[#allocation4 + $0xd8] sm:$0xff]
        %v7215 = vld [vmem:[#allocation4 + $0xe0] sm:$0xff]
        %v7216 = vld [vmem:[#allocation4 + $0xe8] sm:$0xff]
        %v7217 = vld [vmem:[#allocation4 + $0xf0] sm:$0xff]
        %v7218 = vld [vmem:[#allocation4 + $0xf8] sm:$0xff]
        %v7219 = vld [vmem:[%s4] sm:$0x1]
        %v7221 = vlaneseq
        %v7222 = vshrl.u32 %v7221, 7
        %v7223 = vsub.s32 0, %v7222
        %v7224 = vrot.slane %v7219, %v7223
        %v7226 = vadd.f32 %v7187, %v7224
        %v7227 = vadd.f32 %v7188, %v7224
        %v7228 = vadd.f32 %v7189, %v7224
        %v7229 = vadd.f32 %v7190, %v7224
        %v7230 = vadd.f32 %v7191, %v7224
        %v7231 = vadd.f32 %v7192, %v7224
        %v7232 = vadd.f32 %v7193, %v7224
        %v7233 = vadd.f32 %v7194, %v7224
        %v7234 = vadd.f32 %v7195, %v7224
        %v7235 = vadd.f32 %v7196, %v7224
        %v7236 = vadd.f32 %v7197, %v7224
        %v7237 = vadd.f32 %v7198, %v7224
        %v7238 = vadd.f32 %v7199, %v7224
        %v7239 = vadd.f32 %v7200, %v7224
        %v7240 = vadd.f32 %v7201, %v7224
        %v7241 = vadd.f32 %v7202, %v7224
        %v7242 = vadd.f32 %v7203, %v7224
        %v7243 = vadd.f32 %v7204, %v7224
        %v7244 = vadd.f32 %v7205, %v7224
        %v7245 = vadd.f32 %v7206, %v7224
        %v7246 = vadd.f32 %v7207, %v7224
        %v7247 = vadd.f32 %v7208, %v7224
        %v7248 = vadd.f32 %v7209, %v7224
        %v7249 = vadd.f32 %v7210, %v7224
        %v7250 = vadd.f32 %v7211, %v7224
        %v7251 = vadd.f32 %v7212, %v7224
        %v7252 = vadd.f32 %v7213, %v7224
        %v7253 = vadd.f32 %v7214, %v7224
        %v7254 = vadd.f32 %v7215, %v7224
        %v7255 = vadd.f32 %v7216, %v7224
        %v7256 = vadd.f32 %v7217, %v7224
        %v7257 = vadd.f32 %v7218, %v7224
        %v7258 = vadd.f32 %v7155, %v7226
        %v7259 = vadd.f32 %v7156, %v7227
        %v7260 = vadd.f32 %v7157, %v7228
        %v7261 = vadd.f32 %v7158, %v7229
        %v7262 = vadd.f32 %v7159, %v7230
        %v7263 = vadd.f32 %v7160, %v7231
        %v7264 = vadd.f32 %v7161, %v7232
        %v7265 = vadd.f32 %v7162, %v7233
        %v7266 = vadd.f32 %v7163, %v7234
        %v7267 = vadd.f32 %v7164, %v7235
        %v7268 = vadd.f32 %v7165, %v7236
        %v7269 = vadd.f32 %v7166, %v7237
        %v7270 = vadd.f32 %v7167, %v7238
        %v7271 = vadd.f32 %v7168, %v7239
        %v7272 = vadd.f32 %v7169, %v7240
        %v7273 = vadd.f32 %v7170, %v7241
        %v7274 = vadd.f32 %v7171, %v7242
        %v7275 = vadd.f32 %v7172, %v7243
        %v7276 = vadd.f32 %v7173, %v7244
        %v7277 = vadd.f32 %v7174, %v7245
        %v7278 = vadd.f32 %v7175, %v7246
        %v7279 = vadd.f32 %v7176, %v7247
        %v7280 = vadd.f32 %v7177, %v7248
        %v7281 = vadd.f32 %v7178, %v7249
        %v7282 = vadd.f32 %v7179, %v7250
        %v7283 = vadd.f32 %v7180, %v7251
        %v7284 = vadd.f32 %v7181, %v7252
        %v7285 = vadd.f32 %v7182, %v7253
        %v7286 = vadd.f32 %v7183, %v7254
        %v7287 = vadd.f32 %v7184, %v7255
        %v7288 = vadd.f32 %v7185, %v7256
        %v7289 = vadd.f32 %v7186, %v7257
        %7290 = vst [vmem:[%s217] sm:$0xff] %v7258
        %7291 = vst [vmem:[%s217 + $0x8] sm:$0xff] %v7259
        %7292 = vst [vmem:[%s217 + $0x10] sm:$0xff] %v7260
        %7293 = vst [vmem:[%s217 + $0x18] sm:$0xff] %v7261
        %7294 = vst [vmem:[%s217 + $0x20] sm:$0xff] %v7262
        %7295 = vst [vmem:[%s217 + $0x28] sm:$0xff] %v7263
        %7296 = vst [vmem:[%s217 + $0x30] sm:$0xff] %v7264
        %7297 = vst [vmem:[%s217 + $0x38] sm:$0xff] %v7265
        %7298 = vst [vmem:[%s217 + $0x40] sm:$0xff] %v7266
        %7299 = vst [vmem:[%s217 + $0x48] sm:$0xff] %v7267
        %7300 = vst [vmem:[%s217 + $0x50] sm:$0xff] %v7268
        %7301 = vst [vmem:[%s217 + $0x58] sm:$0xff] %v7269
        %7302 = vst [vmem:[%s217 + $0x60] sm:$0xff] %v7270
        %7303 = vst [vmem:[%s217 + $0x68] sm:$0xff] %v7271
        %7304 = vst [vmem:[%s217 + $0x70] sm:$0xff] %v7272
        %7305 = vst [vmem:[%s217 + $0x78] sm:$0xff] %v7273
        %7306 = vst [vmem:[%s217 + $0x80] sm:$0xff] %v7274
        %7307 = vst [vmem:[%s217 + $0x88] sm:$0xff] %v7275
        %7308 = vst [vmem:[%s217 + $0x90] sm:$0xff] %v7276
        %7309 = vst [vmem:[%s217 + $0x98] sm:$0xff] %v7277
        %7310 = vst [vmem:[%s217 + $0xa0] sm:$0xff] %v7278
        %7311 = vst [vmem:[%s217 + $0xa8] sm:$0xff] %v7279
        %7312 = vst [vmem:[%s217 + $0xb0] sm:$0xff] %v7280
        %7313 = vst [vmem:[%s217 + $0xb8] sm:$0xff] %v7281
        %7314 = vst [vmem:[%s217 + $0xc0] sm:$0xff] %v7282
        %7315 = vst [vmem:[%s217 + $0xc8] sm:$0xff] %v7283
        %7316 = vst [vmem:[%s217 + $0xd0] sm:$0xff] %v7284
        %7317 = vst [vmem:[%s217 + $0xd8] sm:$0xff] %v7285
        %7318 = vst [vmem:[%s217 + $0xe0] sm:$0xff] %v7286
        %7319 = vst [vmem:[%s217 + $0xe8] sm:$0xff] %v7287
        %7320 = vst [vmem:[%s217 + $0xf0] sm:$0xff] %v7288
        %7321 = vst [vmem:[%s217 + $0xf8] sm:$0xff] %v7289
        %s7322 = sand.u32 %s137, 1
        %s7323 = scalar_lea.sflag [#allocation6], %s7322
        %s7324 = sand.u32 %s137, 1
        %s7325 = smul.addr %s7324, 256
        %s7326 = scalar_lea.vmem [#allocation5], %s7325
        // Predicated region
        $region41: #{resnet_block_forward.1} parent=39 // pred_check
          %p7327 = pneg %p147
        $region42: #{resnet_block_forward.1} parent=39 // pred_check_branch
          %7329 = sbr.rel (%p7327) target = $region44
        $region43: #{resnet_block_forward.1} parent=39 // pred_region
          %s7331 = ssub.s32 4096, 4096
          %7332 = vsyncadd %s7323, %s7331
          %s7333 = smul.addr %s19, 32
          %s7334 = smul.addr %s7333, 128
          %s7335 = scalar_lea.hbm %s5, %s7334
          %s7336 = sshll.u32 %s7326, 4
          %s7337 = int_to_ptr.vmem [resolvable:$true] %s7336
          %7342 = dma.vmem_to_hbm [thread:$0]  %s7337, 4096, %s7335, %s7323, 128, 128, 8
        $region44: #{resnet_block_forward.1} parent=39 // pred_fallthru
          _
      $region40: #{resnet_block_forward.1} parent=5 // pred_fallthru
        _
      %p7343 = scmp.le.s32.totalorder 2, %s14
      // Predicated region
      $region45: #{resnet_block_forward.1} parent=5 // pred_check
        %p7344 = pneg %p7343
      $region46: #{resnet_block_forward.1} parent=5 // pred_check_branch
        %7346 = sbr.rel (%p7344) target = $region48
      $region47: #{resnet_block_forward.1} parent=5 // pred_region
        %s7347 = ssub.s32 %s14, 2
        // Predicated region
        $region49: #{resnet_block_forward.1} parent=47 // pred_check
          %p7348 = pneg %p153
        $region50: #{resnet_block_forward.1} parent=47 // pred_check_branch
          %7350 = sbr.rel (%p7348) target = $region52
        $region51: #{resnet_block_forward.1} parent=47 // pred_region
          %s7351 = sand.u32 %s138, 1
          %s7352 = scalar_lea.sflag [#allocation6], %s7351
          %s7353 = sand.u32 %s138, 1
          %s7354 = smul.addr %s7353, 256
          %s7355 = scalar_lea.vmem [#allocation5], %s7354
          %7356 = dma.done %s7352, 4096
        $region52: #{resnet_block_forward.1} parent=47 // pred_fallthru
          _
      $region48: #{resnet_block_forward.1} parent=5 // pred_fallthru
        _
    $region6: #{resnet_block_forward.1} parent=1 // loop_footer
      %s18 = sadd.s32 1, %s14
    $region7: #{resnet_block_forward.1} parent=1 // loop_footer_branch
      %13 = sbr.rel target = $region3
    $region8: #{resnet_block_forward.1} parent=1 // loop_exit
      _
    %7357 = vsyncpa [#allocation6], 1
    %s7358 = scalar_lea.sflag [#allocation6], 1
    %7359 = vsyncpa %s7358, 1

</llo_original>
